<compile_context>
chip_gen: v5e
topology: v5e:2x2
jax: 0.10.0
libtpu: 0.0.40
codegen_flags: <defaults>
</compile_context>

<pallas_src>
import functools

import jax
import jax.numpy as jnp
from jax import lax
from jax.experimental import pallas as pl
from jax.experimental.pallas import tpu as pltpu


# ---------------------------------------------------------------------------
# helpers
# ---------------------------------------------------------------------------
def _pick_tm(M):
    """Largest row-tile that divides M (keeps blocks sublane-aligned)."""
    for t in (1024, 512, 256, 128, 64, 32, 16, 8):
        if M % t == 0:
            return t
    return M


# ---------------------------------------------------------------------------
# Kernel 1: tiled matmul (all 1x1 Conv2d), optional fused residual add
# ---------------------------------------------------------------------------
def _matmul_kernel(x_ref, w_ref, o_ref):
    o_ref[...] = jnp.dot(x_ref[...], w_ref[...],
                         preferred_element_type=jnp.float32).astype(o_ref.dtype)


def _matmul_res_kernel(x_ref, w_ref, r_ref, o_ref):
    acc = jnp.dot(x_ref[...], w_ref[...], preferred_element_type=jnp.float32)
    o_ref[...] = (acc + r_ref[...].astype(jnp.float32)).astype(o_ref.dtype)


def matmul(x, w, res=None):
    """x: (M, K) @ w: (K, N) -> (M, N); optionally += res (M, N)."""
    M, K = x.shape
    N = w.shape[1]
    tm = _pick_tm(M)
    in_specs = [pl.BlockSpec((tm, K), lambda i: (i, 0)),
                pl.BlockSpec((K, N), lambda i: (0, 0))]
    args = [x, w]
    kern = _matmul_kernel
    if res is not None:
        in_specs.append(pl.BlockSpec((tm, N), lambda i: (i, 0)))
        args.append(res)
        kern = _matmul_res_kernel
    return pl.pallas_call(
        kern,
        out_shape=jax.ShapeDtypeStruct((M, N), jnp.float32),
        grid=(M // tm,),
        in_specs=in_specs,
        out_specs=pl.BlockSpec((tm, N), lambda i: (i, 0)),
        compiler_params=pltpu.CompilerParams(dimension_semantics=("parallel",)),
    )(*args)


# ---------------------------------------------------------------------------
# Kernel 2: per-pixel channel LayerNorm (weight + bias, eps=1e-5)
# ---------------------------------------------------------------------------
def _layernorm_kernel(x_ref, w_ref, b_ref, o_ref):
    x = x_ref[...].astype(jnp.float32)
    mu = jnp.mean(x, axis=-1, keepdims=True)
    xc = x - mu
    var = jnp.mean(xc * xc, axis=-1, keepdims=True)
    inv = lax.rsqrt(var + 1e-5)
    o_ref[...] = (xc * inv * w_ref[...] + b_ref[...]).astype(o_ref.dtype)


def layernorm(x2d, w, b):
    """x2d: (M, C), w/b: (1, C)."""
    M, C = x2d.shape
    tm = _pick_tm(M)
    return pl.pallas_call(
        _layernorm_kernel,
        out_shape=jax.ShapeDtypeStruct((M, C), jnp.float32),
        grid=(M // tm,),
        in_specs=[pl.BlockSpec((tm, C), lambda i: (i, 0)),
                  pl.BlockSpec((1, C), lambda i: (0, 0)),
                  pl.BlockSpec((1, C), lambda i: (0, 0))],
        out_specs=pl.BlockSpec((tm, C), lambda i: (i, 0)),
        compiler_params=pltpu.CompilerParams(dimension_semantics=("parallel",)),
    )(x2d, w, b)


# ---------------------------------------------------------------------------
# Kernel 3: depthwise 3x3 conv (groups=C, padding=1, no bias), NHWC
# ---------------------------------------------------------------------------
def _dwconv3x3_kernel(xp_ref, w_ref, o_ref):
    # xp: (H+2, W+2, C) zero-padded; w: (3, 3, C); o: (H, W, C)
    H, W = o_ref.shape[0], o_ref.shape[1]
    w = w_ref[...].astype(jnp.float32)
    acc = jnp.zeros(o_ref.shape, jnp.float32)
    for ky in range(3):
        for kx in range(3):
            acc = acc + xp_ref[ky:ky + H, kx:kx + W, :].astype(jnp.float32) * w[ky, kx, :]
    o_ref[...] = acc.astype(o_ref.dtype)


def dwconv3x3(x, w):
    # x: (B, H, W, C), w: (3, 3, C)
    B, H, W, C = x.shape
    xp = jnp.pad(x, ((0, 0), (1, 1), (1, 1), (0, 0)))
    return pl.pallas_call(
        _dwconv3x3_kernel,
        out_shape=jax.ShapeDtypeStruct((B, H, W, C), jnp.float32),
        grid=(B,),
        in_specs=[pl.BlockSpec((None, H + 2, W + 2, C), lambda b: (b, 0, 0, 0)),
                  pl.BlockSpec((3, 3, C), lambda b: (0, 0, 0))],
        out_specs=pl.BlockSpec((None, H, W, C), lambda b: (b, 0, 0, 0)),
        compiler_params=pltpu.CompilerParams(dimension_semantics=("parallel",)),
    )(xp, w)


# ---------------------------------------------------------------------------
# Kernel 4: CAB channel attention core (per batch, per head)
#   q,k,v: (ch, L); L2-normalize over L; attn = softmax(q@k^T * temp); out=attn@v
# ---------------------------------------------------------------------------
def _cab_attn_kernel(q_ref, k_ref, v_ref, temp_ref, o_ref):
    q = q_ref[...].astype(jnp.float32)
    k = k_ref[...].astype(jnp.float32)
    v = v_ref[...].astype(jnp.float32)
    # torch.nn.functional.normalize(dim=-1, eps=1e-12)
    qn = q / jnp.maximum(jnp.sqrt(jnp.sum(q * q, axis=-1, keepdims=True)), 1e-12)
    kn = k / jnp.maximum(jnp.sqrt(jnp.sum(k * k, axis=-1, keepdims=True)), 1e-12)
    attn = lax.dot_general(qn, kn, (((1,), (1,)), ((), ())),
                           preferred_element_type=jnp.float32)       # (ch, ch)
    attn = attn * temp_ref[...]                                       # (1,1) broadcast
    attn = attn - jnp.max(attn, axis=-1, keepdims=True)
    p = jnp.exp(attn)
    p = p / jnp.sum(p, axis=-1, keepdims=True)
    o_ref[...] = jnp.dot(p, v, preferred_element_type=jnp.float32).astype(o_ref.dtype)


def cab_attention(q, k, v, temperature):
    # q/k/v: (B, nh, ch, L); temperature: (nh, 1, 1)
    B, nh, ch, L = q.shape
    spec = pl.BlockSpec((None, None, ch, L), lambda b, h: (b, h, 0, 0))
    return pl.pallas_call(
        _cab_attn_kernel,
        out_shape=jax.ShapeDtypeStruct((B, nh, ch, L), jnp.float32),
        grid=(B, nh),
        in_specs=[spec, spec, spec,
                  pl.BlockSpec((None, 1, 1), lambda b, h: (h, 0, 0))],
        out_specs=spec,
        compiler_params=pltpu.CompilerParams(
            dimension_semantics=("parallel", "parallel")),
    )(q, k, v, temperature)


# ---------------------------------------------------------------------------
# Kernel 5: IEL gate epilogue: x1 = tanh(d1)+c1; x2 = tanh(d2)+c2; out = x1*x2
# ---------------------------------------------------------------------------
def _gdfn_gate_kernel(d_ref, c_ref, o_ref):
    hf = o_ref.shape[-1]
    g = jnp.tanh(d_ref[...].astype(jnp.float32)) + c_ref[...].astype(jnp.float32)
    o_ref[...] = (g[:, :hf] * g[:, hf:]).astype(o_ref.dtype)


def gdfn_gate(d12, dbase):
    # d12, dbase: (M, 2*hf) -> (M, hf)
    M, C2 = d12.shape
    hf = C2 // 2
    tm = _pick_tm(M)
    return pl.pallas_call(
        _gdfn_gate_kernel,
        out_shape=jax.ShapeDtypeStruct((M, hf), jnp.float32),
        grid=(M // tm,),
        in_specs=[pl.BlockSpec((tm, C2), lambda i: (i, 0)),
                  pl.BlockSpec((tm, C2), lambda i: (i, 0))],
        out_specs=pl.BlockSpec((tm, hf), lambda i: (i, 0)),
        compiler_params=pltpu.CompilerParams(dimension_semantics=("parallel",)),
    )(d12, dbase)


# ---------------------------------------------------------------------------
# HV_LCA forward: x = x + CAB(norm(x), norm(y)); x = IEL(norm(x))
# ---------------------------------------------------------------------------
def hv_lca_forward(x_nchw, y_nchw, p, num_heads):
    B, C, H, W = x_nchw.shape
    L = H * W
    ch = C // num_heads

    x_seq = jnp.transpose(x_nchw, (0, 2, 3, 1)).reshape(B * L, C)
    y_seq = jnp.transpose(y_nchw, (0, 2, 3, 1)).reshape(B * L, C)

    xn = layernorm(x_seq, p['ln_w'], p['ln_b'])
    yn = layernorm(y_seq, p['ln_w'], p['ln_b'])

    # ---- CAB ----
    q0 = matmul(xn, p['q_w'])                         # (BL, C)
    kv0 = matmul(yn, p['kv_w'])                       # (BL, 2C)
    # fused depthwise conv on concatenated q|k|v channels (exact: dw is per-channel)
    qkv = jnp.concatenate([q0, kv0], axis=-1).reshape(B, H, W, 3 * C)
    qkv_dw_w = jnp.concatenate([p['q_dw_w'], p['kv_dw_w']], axis=-1)   # (3,3,3C)
    qkv = dwconv3x3(qkv, qkv_dw_w)                    # (B,H,W,3C)
    q_img, k_img, v_img = qkv[..., :C], qkv[..., C:2 * C], qkv[..., 2 * C:]

    def to_heads(t):  # (B,H,W,C) -> (B, nh, ch, L), head-major channel split
        return jnp.transpose(t.reshape(B, L, C), (0, 2, 1)).reshape(B, num_heads, ch, L)

    attn_out = cab_attention(to_heads(q_img), to_heads(k_img), to_heads(v_img),
                             p['temperature'])        # (B, nh, ch, L)
    attn_seq = jnp.transpose(attn_out.reshape(B, C, L), (0, 2, 1)).reshape(B * L, C)

    # project_out fused with the outer residual:  x = x + ffn(norm(x), norm(y))
    x_res = matmul(attn_seq, p['proj_out_w'], res=x_seq)              # (BL, C)

    # ---- IEL (gdfn) on norm(x) ----
    xn2 = layernorm(x_res, p['ln_w'], p['ln_b'])
    h0 = matmul(xn2, p['iel_in_w'])                   # (BL, 2*hf)
    hf = p['iel_out_w'].shape[0]
    d = dwconv3x3(h0.reshape(B, H, W, 2 * hf), p['iel_dw_w'])         # (B,H,W,2hf)
    # fused dwconv1 | dwconv2 on the chunked halves (exact: depthwise, per-channel)
    dw12_w = jnp.concatenate([p['iel_dw1_w'], p['iel_dw2_w']], axis=-1)
    d12 = dwconv3x3(d, dw12_w)                        # (B,H,W,2hf)
    g = gdfn_gate(d12.reshape(B * L, 2 * hf), d.reshape(B * L, 2 * hf))  # (BL, hf)
    out = matmul(g, p['iel_out_w'])                   # (BL, C)

    return jnp.transpose(out.reshape(B, H, W, C), (0, 3, 1, 2))       # NCHW


# ---------------------------------------------------------------------------
# Deterministic synthetic parameters (shapes follow the PyTorch module)
# ---------------------------------------------------------------------------
def init_params(key, dim, num_heads, ffn_expansion_factor=2.66):
    hf = int(dim * ffn_expansion_factor)
    ks = jax.random.split(key, 10)

    def nrm(k, shape, scale=0.1):
        return (scale * jax.random.normal(k, shape)).astype(jnp.float32)

    return dict(
        # LayerNorm(dim)
        ln_w=jnp.ones((1, dim), jnp.float32),
        ln_b=jnp.zeros((1, dim), jnp.float32),
        # CAB
        temperature=jnp.ones((num_heads, 1, 1), jnp.float32),
        q_w=nrm(ks[0], (dim, dim)),               # 1x1 conv, (Cin, Cout)
        q_dw_w=nrm(ks[1], (3, 3, dim)),           # depthwise 3x3
        kv_w=nrm(ks[2], (dim, 2 * dim)),
        kv_dw_w=nrm(ks[3], (3, 3, 2 * dim)),
        proj_out_w=nrm(ks[4], (dim, dim)),
        # IEL
        iel_in_w=nrm(ks[5], (dim, 2 * hf)),
        iel_dw_w=nrm(ks[6], (3, 3, 2 * hf)),
        iel_dw1_w=nrm(ks[7], (3, 3, hf)),
        iel_dw2_w=nrm(ks[8], (3, 3, hf)),
        iel_out_w=nrm(ks[9], (hf, dim)),
    )


if __name__ == "__main__":
    key = jax.random.PRNGKey(0)
    kx, ky_, kp = jax.random.split(key, 3)
    B, C, H, W = 2, 4, 16, 16
    NUM_HEADS = 2

    x = jax.random.normal(kx, (B, C, H, W), jnp.float32)
    y = jax.random.normal(ky_, (B, C, H, W), jnp.float32)
    params = init_params(kp, C, NUM_HEADS)

    fwd = jax.jit(functools.partial(hv_lca_forward, num_heads=NUM_HEADS))
    out = jax.block_until_ready(fwd(x, y, params))

    assert out.shape == (B, C, H, W)
    assert bool(jnp.all(jnp.isfinite(out)))
    print("KERNEL_OK")
</pallas_src>

<mosaic_0001>
module attributes {stable_mosaic.version = 11 : i64} {
  func.func @_matmul_kernel(%arg0: i32, %arg1: memref<512x4xf32, #tpu.memory_space<vmem>>, %arg2: memref<4x4xf32, #tpu.memory_space<vmem>>, %arg3: memref<512x4xf32, #tpu.memory_space<vmem>>) attributes {dimension_semantics = [#tpu.dimension_semantics<parallel>], iteration_bounds = array<i64: 1>, scalar_prefetch = 0 : i64, scratch_operands = 0 : i64, tpu.core_type = #tpu.core_type<tc>, window_params = [{transform_indices = @transform_0, window_bounds = array<i64: 512, 4>}, {pipeline_mode = #tpu.pipeline_mode<synchronous>, transform_indices = @transform_1, window_bounds = array<i64: 4, 4>}, {transform_indices = @transform_2, window_bounds = array<i64: 512, 4>}]} {
    %c0 = arith.constant 0 : index
    %c0_0 = arith.constant 0 : index
    %0 = vector.load %arg1[%c0, %c0_0] : memref<512x4xf32, #tpu.memory_space<vmem>>, vector<512x4xf32>
    %c0_1 = arith.constant 0 : index
    %c0_2 = arith.constant 0 : index
    %1 = vector.load %arg2[%c0_1, %c0_2] : memref<4x4xf32, #tpu.memory_space<vmem>>, vector<4x4xf32>
    %cst = arith.constant dense<0.000000e+00> : vector<512x4xf32>
    %2 = tpu.matmul %0, %1, %cst {dimension_numbers = #tpu.dot_dimension_numbers<[1], [0], [0], [1], [0, 0, 1, 1], [], []>} : vector<512x4xf32>, vector<4x4xf32>, vector<512x4xf32> -> vector<512x4xf32>
    %c0_3 = arith.constant 0 : index
    %c0_4 = arith.constant 0 : index
    %3 = vector.load %arg3[%c0_3, %c0_4] : memref<512x4xf32, #tpu.memory_space<vmem>>, vector<512x4xf32>
    tpu.vector_store %arg3[%c0_3, %c0_4], %2 {strides = array<i32>} : memref<512x4xf32, #tpu.memory_space<vmem>>, vector<512x4xf32>,
    return
  }
  func.func @transform_0(%arg0: i32) -> (i32, i32) {
    %c0_i32 = arith.constant 0 : i32
    %c0_i32_0 = arith.constant 0 : i32
    return %arg0, %c0_i32 : i32, i32
  }
  func.func @transform_1(%arg0: i32) -> (i32, i32) {
    %c0_i32 = arith.constant 0 : i32
    %c0_i32_0 = arith.constant 0 : i32
    %c0_i32_1 = arith.constant 0 : i32
    return %c0_i32, %c0_i32_0 : i32, i32
  }
  func.func @transform_2(%arg0: i32) -> (i32, i32) {
    %c0_i32 = arith.constant 0 : i32
    %c0_i32_0 = arith.constant 0 : i32
    return %arg0, %c0_i32 : i32, i32
  }
}

module attributes {stable_mosaic.version = 11 : i64} {
  func.func @_layernorm_kernel(%arg0: i32, %arg1: memref<512x4xf32, #tpu.memory_space<vmem>>, %arg2: memref<1x4xf32, #tpu.memory_space<vmem>>, %arg3: memref<1x4xf32, #tpu.memory_space<vmem>>, %arg4: memref<512x4xf32, #tpu.memory_space<vmem>>) attributes {dimension_semantics = [#tpu.dimension_semantics<parallel>], iteration_bounds = array<i64: 1>, scalar_prefetch = 0 : i64, scratch_operands = 0 : i64, tpu.core_type = #tpu.core_type<tc>, window_params = [{transform_indices = @transform_0, window_bounds = array<i64: 512, 4>}, {pipeline_mode = #tpu.pipeline_mode<synchronous>, transform_indices = @transform_1, window_bounds = array<i64: 1, 4>}, {pipeline_mode = #tpu.pipeline_mode<synchronous>, transform_indices = @transform_2, window_bounds = array<i64: 1, 4>}, {transform_indices = @transform_3, window_bounds = array<i64: 512, 4>}]} {
    %c0 = arith.constant 0 : index
    %c0_0 = arith.constant 0 : index
    %0 = vector.load %arg1[%c0, %c0_0] : memref<512x4xf32, #tpu.memory_space<vmem>>, vector<512x4xf32>
    %cst = arith.constant dense<0.000000e+00> : vector<512xf32>
    %1 = vector.multi_reduction <add>, %0, %cst [1] : vector<512x4xf32> to vector<512xf32>
    %2 = vector.shape_cast %1 : vector<512xf32> to vector<512x1xf32>
    %cst_1 = arith.constant 4.000000e+00 : f32
    %3 = vector.broadcast %cst_1 : f32 to vector<512x1xf32>
    %4 = arith.divf %2, %3 : vector<512x1xf32>
    %5 = vector.broadcast %4 : vector<512x1xf32> to vector<512x4xf32>
    %6 = arith.subf %0, %5 : vector<512x4xf32>
    %7 = arith.mulf %6, %6 : vector<512x4xf32>
    %cst_2 = arith.constant dense<0.000000e+00> : vector<512xf32>
    %8 = vector.multi_reduction <add>, %7, %cst_2 [1] : vector<512x4xf32> to vector<512xf32>
    %9 = vector.shape_cast %8 : vector<512xf32> to vector<512x1xf32>
    %cst_3 = arith.constant 4.000000e+00 : f32
    %10 = vector.broadcast %cst_3 : f32 to vector<512x1xf32>
    %11 = arith.divf %9, %10 : vector<512x1xf32>
    %cst_4 = arith.constant 9.99999974E-6 : f32
    %12 = vector.broadcast %cst_4 : f32 to vector<512x1xf32>
    %13 = arith.addf %11, %12 : vector<512x1xf32>
    %14 = math.rsqrt %13 : vector<512x1xf32>
    %15 = vector.broadcast %14 : vector<512x1xf32> to vector<512x4xf32>
    %16 = arith.mulf %6, %15 : vector<512x4xf32>
    %c0_5 = arith.constant 0 : index
    %c0_6 = arith.constant 0 : index
    %17 = vector.load %arg2[%c0_5, %c0_6] : memref<1x4xf32, #tpu.memory_space<vmem>>, vector<1x4xf32>
    %18 = vector.broadcast %17 : vector<1x4xf32> to vector<512x4xf32>
    %19 = arith.mulf %16, %18 : vector<512x4xf32>
    %c0_7 = arith.constant 0 : index
    %c0_8 = arith.constant 0 : index
    %20 = vector.load %arg3[%c0_7, %c0_8] : memref<1x4xf32, #tpu.memory_space<vmem>>, vector<1x4xf32>
    %21 = vector.broadcast %20 : vector<1x4xf32> to vector<512x4xf32>
    %22 = arith.addf %19, %21 : vector<512x4xf32>
    %c0_9 = arith.constant 0 : index
    %c0_10 = arith.constant 0 : index
    %23 = vector.load %arg4[%c0_9, %c0_10] : memref<512x4xf32, #tpu.memory_space<vmem>>, vector<512x4xf32>
    tpu.vector_store %arg4[%c0_9, %c0_10], %22 {strides = array<i32>} : memref<512x4xf32, #tpu.memory_space<vmem>>, vector<512x4xf32>,
    return
  }
  func.func @transform_0(%arg0: i32) -> (i32, i32) {
    %c0_i32 = arith.constant 0 : i32
    %c0_i32_0 = arith.constant 0 : i32
    return %arg0, %c0_i32 : i32, i32
  }
  func.func @transform_1(%arg0: i32) -> (i32, i32) {
    %c0_i32 = arith.constant 0 : i32
    %c0_i32_0 = arith.constant 0 : i32
    %c0_i32_1 = arith.constant 0 : i32
    return %c0_i32, %c0_i32_0 : i32, i32
  }
  func.func @transform_2(%arg0: i32) -> (i32, i32) {
    %c0_i32 = arith.constant 0 : i32
    %c0_i32_0 = arith.constant 0 : i32
    %c0_i32_1 = arith.constant 0 : i32
    return %c0_i32, %c0_i32_0 : i32, i32
  }
  func.func @transform_3(%arg0: i32) -> (i32, i32) {
    %c0_i32 = arith.constant 0 : i32
    %c0_i32_0 = arith.constant 0 : i32
    return %arg0, %c0_i32 : i32, i32
  }
}

module attributes {stable_mosaic.version = 11 : i64} {
  func.func @_matmul_kernel(%arg0: i32, %arg1: memref<512x4xf32, #tpu.memory_space<vmem>>, %arg2: memref<4x8xf32, #tpu.memory_space<vmem>>, %arg3: memref<512x8xf32, #tpu.memory_space<vmem>>) attributes {dimension_semantics = [#tpu.dimension_semantics<parallel>], iteration_bounds = array<i64: 1>, scalar_prefetch = 0 : i64, scratch_operands = 0 : i64, tpu.core_type = #tpu.core_type<tc>, window_params = [{transform_indices = @transform_0, window_bounds = array<i64: 512, 4>}, {pipeline_mode = #tpu.pipeline_mode<synchronous>, transform_indices = @transform_1, window_bounds = array<i64: 4, 8>}, {transform_indices = @transform_2, window_bounds = array<i64: 512, 8>}]} {
    %c0 = arith.constant 0 : index
    %c0_0 = arith.constant 0 : index
    %0 = vector.load %arg1[%c0, %c0_0] : memref<512x4xf32, #tpu.memory_space<vmem>>, vector<512x4xf32>
    %c0_1 = arith.constant 0 : index
    %c0_2 = arith.constant 0 : index
    %1 = vector.load %arg2[%c0_1, %c0_2] : memref<4x8xf32, #tpu.memory_space<vmem>>, vector<4x8xf32>
    %cst = arith.constant dense<0.000000e+00> : vector<512x8xf32>
    %2 = tpu.matmul %0, %1, %cst {dimension_numbers = #tpu.dot_dimension_numbers<[1], [0], [0], [1], [0, 0, 1, 1], [], []>} : vector<512x4xf32>, vector<4x8xf32>, vector<512x8xf32> -> vector<512x8xf32>
    %c0_3 = arith.constant 0 : index
    %c0_4 = arith.constant 0 : index
    %3 = vector.load %arg3[%c0_3, %c0_4] : memref<512x8xf32, #tpu.memory_space<vmem>>, vector<512x8xf32>
    tpu.vector_store %arg3[%c0_3, %c0_4], %2 {strides = array<i32>} : memref<512x8xf32, #tpu.memory_space<vmem>>, vector<512x8xf32>,
    return
  }
  func.func @transform_0(%arg0: i32) -> (i32, i32) {
    %c0_i32 = arith.constant 0 : i32
    %c0_i32_0 = arith.constant 0 : i32
    return %arg0, %c0_i32 : i32, i32
  }
  func.func @transform_1(%arg0: i32) -> (i32, i32) {
    %c0_i32 = arith.constant 0 : i32
    %c0_i32_0 = arith.constant 0 : i32
    %c0_i32_1 = arith.constant 0 : i32
    return %c0_i32, %c0_i32_0 : i32, i32
  }
  func.func @transform_2(%arg0: i32) -> (i32, i32) {
    %c0_i32 = arith.constant 0 : i32
    %c0_i32_0 = arith.constant 0 : i32
    return %arg0, %c0_i32 : i32, i32
  }
}

module attributes {stable_mosaic.version = 11 : i64} {
  func.func @_dwconv3x3_kernel(%arg0: i32, %arg1: memref<1x18x18x12xf32, #tpu.memory_space<vmem>>, %arg2: memref<3x3x12xf32, #tpu.memory_space<vmem>>, %arg3: memref<1x16x16x12xf32, #tpu.memory_space<vmem>>) attributes {dimension_semantics = [#tpu.dimension_semantics<parallel>], iteration_bounds = array<i64: 2>, scalar_prefetch = 0 : i64, scratch_operands = 0 : i64, tpu.core_type = #tpu.core_type<tc>, window_params = [{transform_indices = @transform_0, window_bounds = array<i64: 1, 18, 18, 12>}, {pipeline_mode = #tpu.pipeline_mode<synchronous>, transform_indices = @transform_1, window_bounds = array<i64: 3, 3, 12>}, {transform_indices = @transform_2, window_bounds = array<i64: 1, 16, 16, 12>}]} {
    %c0 = arith.constant 0 : index
    %c0_0 = arith.constant 0 : index
    %c0_1 = arith.constant 0 : index
    %0 = vector.load %arg2[%c0, %c0_0, %c0_1] : memref<3x3x12xf32, #tpu.memory_space<vmem>>, vector<3x3x12xf32>
    %cst = arith.constant 0.000000e+00 : f32
    %1 = vector.broadcast %cst : f32 to vector<16x16x12xf32>
    %c0_2 = arith.constant 0 : index
    %c0_3 = arith.constant 0 : index
    %c0_4 = arith.constant 0 : index
    %c0_5 = arith.constant 0 : index
    %2 = vector.load %arg1[%c0_2, %c0_3, %c0_4, %c0_5] : memref<1x18x18x12xf32, #tpu.memory_space<vmem>>, vector<1x16x16x12xf32>
    %3 = vector.shape_cast %2 : vector<1x16x16x12xf32> to vector<16x16x12xf32>
    %4 = vector.extract_strided_slice %0 {offsets = [0, 0, 0], sizes = [1, 1, 12], strides = [1, 1, 1]} : vector<3x3x12xf32> to vector<1x1x12xf32>
    %5 = vector.shape_cast %4 : vector<1x1x12xf32> to vector<12xf32>
    %6 = vector.shape_cast %5 : vector<12xf32> to vector<1x1x12xf32>
    %7 = vector.broadcast %6 : vector<1x1x12xf32> to vector<16x16x12xf32>
    %8 = arith.mulf %3, %7 : vector<16x16x12xf32>
    %9 = arith.addf %1, %8 : vector<16x16x12xf32>
    %c0_6 = arith.constant 0 : index
    %c0_7 = arith.constant 0 : index
    %c1 = arith.constant 1 : index
    %c0_8 = arith.constant 0 : index
    %10 = vector.load %arg1[%c0_6, %c0_7, %c1, %c0_8] : memref<1x18x18x12xf32, #tpu.memory_space<vmem>>, vector<1x16x16x12xf32>
    %11 = vector.shape_cast %10 : vector<1x16x16x12xf32> to vector<16x16x12xf32>
    %12 = vector.extract_strided_slice %0 {offsets = [0, 1, 0], sizes = [1, 1, 12], strides = [1, 1, 1]} : vector<3x3x12xf32> to vector<1x1x12xf32>
    %13 = vector.shape_cast %12 : vector<1x1x12xf32> to vector<12xf32>
    %14 = vector.shape_cast %13 : vector<12xf32> to vector<1x1x12xf32>
    %15 = vector.broadcast %14 : vector<1x1x12xf32> to vector<16x16x12xf32>
    %16 = arith.mulf %11, %15 : vector<16x16x12xf32>
    %17 = arith.addf %9, %16 : vector<16x16x12xf32>
    %c0_9 = arith.constant 0 : index
    %c0_10 = arith.constant 0 : index
    %c2 = arith.constant 2 : index
    %c0_11 = arith.constant 0 : index
    %18 = vector.load %arg1[%c0_9, %c0_10, %c2, %c0_11] : memref<1x18x18x12xf32, #tpu.memory_space<vmem>>, vector<1x16x16x12xf32>
    %19 = vector.shape_cast %18 : vector<1x16x16x12xf32> to vector<16x16x12xf32>
    %20 = vector.extract_strided_slice %0 {offsets = [0, 2, 0], sizes = [1, 1, 12], strides = [1, 1, 1]} : vector<3x3x12xf32> to vector<1x1x12xf32>
    %21 = vector.shape_cast %20 : vector<1x1x12xf32> to vector<12xf32>
    %22 = vector.shape_cast %21 : vector<12xf32> to vector<1x1x12xf32>
    %23 = vector.broadcast %22 : vector<1x1x12xf32> to vector<16x16x12xf32>
    %24 = arith.mulf %19, %23 : vector<16x16x12xf32>
    %25 = arith.addf %17, %24 : vector<16x16x12xf32>
    %c0_12 = arith.constant 0 : index
    %c1_13 = arith.constant 1 : index
    %c0_14 = arith.constant 0 : index
    %c0_15 = arith.constant 0 : index
    %26 = vector.load %arg1[%c0_12, %c1_13, %c0_14, %c0_15] : memref<1x18x18x12xf32, #tpu.memory_space<vmem>>, vector<1x16x16x12xf32>
    %27 = vector.shape_cast %26 : vector<1x16x16x12xf32> to vector<16x16x12xf32>
    %28 = vector.extract_strided_slice %0 {offsets = [1, 0, 0], sizes = [1, 1, 12], strides = [1, 1, 1]} : vector<3x3x12xf32> to vector<1x1x12xf32>
    %29 = vector.shape_cast %28 : vector<1x1x12xf32> to vector<12xf32>
    %30 = vector.shape_cast %29 : vector<12xf32> to vector<1x1x12xf32>
    %31 = vector.broadcast %30 : vector<1x1x12xf32> to vector<16x16x12xf32>
    %32 = arith.mulf %27, %31 : vector<16x16x12xf32>
    %33 = arith.addf %25, %32 : vector<16x16x12xf32>
    %c0_16 = arith.constant 0 : index
    %c1_17 = arith.constant 1 : index
    %c1_18 = arith.constant 1 : index
    %c0_19 = arith.constant 0 : index
    %34 = vector.load %arg1[%c0_16, %c1_17, %c1_18, %c0_19] : memref<1x18x18x12xf32, #tpu.memory_space<vmem>>, vector<1x16x16x12xf32>
    %35 = vector.shape_cast %34 : vector<1x16x16x12xf32> to vector<16x16x12xf32>
    %36 = vector.extract_strided_slice %0 {offsets = [1, 1, 0], sizes = [1, 1, 12], strides = [1, 1, 1]} : vector<3x3x12xf32> to vector<1x1x12xf32>
    %37 = vector.shape_cast %36 : vector<1x1x12xf32> to vector<12xf32>
    %38 = vector.shape_cast %37 : vector<12xf32> to vector<1x1x12xf32>
    %39 = vector.broadcast %38 : vector<1x1x12xf32> to vector<16x16x12xf32>
    %40 = arith.mulf %35, %39 : vector<16x16x12xf32>
    %41 = arith.addf %33, %40 : vector<16x16x12xf32>
    %c0_20 = arith.constant 0 : index
    %c1_21 = arith.constant 1 : index
    %c2_22 = arith.constant 2 : index
    %c0_23 = arith.constant 0 : index
    %42 = vector.load %arg1[%c0_20, %c1_21, %c2_22, %c0_23] : memref<1x18x18x12xf32, #tpu.memory_space<vmem>>, vector<1x16x16x12xf32>
    %43 = vector.shape_cast %42 : vector<1x16x16x12xf32> to vector<16x16x12xf32>
    %44 = vector.extract_strided_slice %0 {offsets = [1, 2, 0], sizes = [1, 1, 12], strides = [1, 1, 1]} : vector<3x3x12xf32> to vector<1x1x12xf32>
    %45 = vector.shape_cast %44 : vector<1x1x12xf32> to vector<12xf32>
    %46 = vector.shape_cast %45 : vector<12xf32> to vector<1x1x12xf32>
    %47 = vector.broadcast %46 : vector<1x1x12xf32> to vector<16x16x12xf32>
    %48 = arith.mulf %43, %47 : vector<16x16x12xf32>
    %49 = arith.addf %41, %48 : vector<16x16x12xf32>
    %c0_24 = arith.constant 0 : index
    %c2_25 = arith.constant 2 : index
    %c0_26 = arith.constant 0 : index
    %c0_27 = arith.constant 0 : index
    %50 = vector.load %arg1[%c0_24, %c2_25, %c0_26, %c0_27] : memref<1x18x18x12xf32, #tpu.memory_space<vmem>>, vector<1x16x16x12xf32>
    %51 = vector.shape_cast %50 : vector<1x16x16x12xf32> to vector<16x16x12xf32>
    %52 = vector.extract_strided_slice %0 {offsets = [2, 0, 0], sizes = [1, 1, 12], strides = [1, 1, 1]} : vector<3x3x12xf32> to vector<1x1x12xf32>
    %53 = vector.shape_cast %52 : vector<1x1x12xf32> to vector<12xf32>
    %54 = vector.shape_cast %53 : vector<12xf32> to vector<1x1x12xf32>
    %55 = vector.broadcast %54 : vector<1x1x12xf32> to vector<16x16x12xf32>
    %56 = arith.mulf %51, %55 : vector<16x16x12xf32>
    %57 = arith.addf %49, %56 : vector<16x16x12xf32>
    %c0_28 = arith.constant 0 : index
    %c2_29 = arith.constant 2 : index
    %c1_30 = arith.constant 1 : index
    %c0_31 = arith.constant 0 : index
    %58 = vector.load %arg1[%c0_28, %c2_29, %c1_30, %c0_31] : memref<1x18x18x12xf32, #tpu.memory_space<vmem>>, vector<1x16x16x12xf32>
    %59 = vector.shape_cast %58 : vector<1x16x16x12xf32> to vector<16x16x12xf32>
    %60 = vector.extract_strided_slice %0 {offsets = [2, 1, 0], sizes = [1, 1, 12], strides = [1, 1, 1]} : vector<3x3x12xf32> to vector<1x1x12xf32>
    %61 = vector.shape_cast %60 : vector<1x1x12xf32> to vector<12xf32>
    %62 = vector.shape_cast %61 : vector<12xf32> to vector<1x1x12xf32>
    %63 = vector.broadcast %62 : vector<1x1x12xf32> to vector<16x16x12xf32>
    %64 = arith.mulf %59, %63 : vector<16x16x12xf32>
    %65 = arith.addf %57, %64 : vector<16x16x12xf32>
    %c0_32 = arith.constant 0 : index
    %c2_33 = arith.constant 2 : index
    %c2_34 = arith.constant 2 : index
    %c0_35 = arith.constant 0 : index
    %66 = vector.load %arg1[%c0_32, %c2_33, %c2_34, %c0_35] : memref<1x18x18x12xf32, #tpu.memory_space<vmem>>, vector<1x16x16x12xf32>
    %67 = vector.shape_cast %66 : vector<1x16x16x12xf32> to vector<16x16x12xf32>
    %68 = vector.extract_strided_slice %0 {offsets = [2, 2, 0], sizes = [1, 1, 12], strides = [1, 1, 1]} : vector<3x3x12xf32> to vector<1x1x12xf32>
    %69 = vector.shape_cast %68 : vector<1x1x12xf32> to vector<12xf32>
    %70 = vector.shape_cast %69 : vector<12xf32> to vector<1x1x12xf32>
    %71 = vector.broadcast %70 : vector<1x1x12xf32> to vector<16x16x12xf32>
    %72 = arith.mulf %67, %71 : vector<16x16x12xf32>
    %73 = arith.addf %65, %72 : vector<16x16x12xf32>
    %c0_36 = arith.constant 0 : index
    %c0_37 = arith.constant 0 : index
    %c0_38 = arith.constant 0 : index
    %c0_39 = arith.constant 0 : index
    %74 = vector.load %arg3[%c0_36, %c0_37, %c0_38, %c0_39] : memref<1x16x16x12xf32, #tpu.memory_space<vmem>>, vector<1x16x16x12xf32>
    %75 = vector.shape_cast %74 : vector<1x16x16x12xf32> to vector<16x16x12xf32>
    %76 = vector.shape_cast %73 : vector<16x16x12xf32> to vector<1x16x16x12xf32>
    tpu.vector_store %arg3[%c0_36, %c0_37, %c0_38, %c0_39], %76 {strides = array<i32>} : memref<1x16x16x12xf32, #tpu.memory_space<vmem>>, vector<1x16x16x12xf32>,
    return
  }
  func.func @transform_0(%arg0: i32) -> (i32, i32, i32, i32) {
    %c0_i32 = arith.constant 0 : i32
    %c0_i32_0 = arith.constant 0 : i32
    %c0_i32_1 = arith.constant 0 : i32
    %c0_i32_2 = arith.constant 0 : i32
    return %arg0, %c0_i32, %c0_i32_0, %c0_i32_1 : i32, i32, i32, i32
  }
  func.func @transform_1(%arg0: i32) -> (i32, i32, i32) {
    %c0_i32 = arith.constant 0 : i32
    %c0_i32_0 = arith.constant 0 : i32
    %c0_i32_1 = arith.constant 0 : i32
    %c0_i32_2 = arith.constant 0 : i32
    return %c0_i32, %c0_i32_0, %c0_i32_1 : i32, i32, i32
  }
  func.func @transform_2(%arg0: i32) -> (i32, i32, i32, i32) {
    %c0_i32 = arith.constant 0 : i32
    %c0_i32_0 = arith.constant 0 : i32
    %c0_i32_1 = arith.constant 0 : i32
    %c0_i32_2 = arith.constant 0 : i32
    return %arg0, %c0_i32, %c0_i32_0, %c0_i32_1 : i32, i32, i32, i32
  }
}

module attributes {stable_mosaic.version = 11 : i64} {
  func.func @_cab_attn_kernel(%arg0: i32, %arg1: i32, %arg2: memref<1x1x2x256xf32, #tpu.memory_space<vmem>>, %arg3: memref<1x1x2x256xf32, #tpu.memory_space<vmem>>, %arg4: memref<1x1x2x256xf32, #tpu.memory_space<vmem>>, %arg5: memref<1x1x1xf32, #tpu.memory_space<vmem>>, %arg6: memref<1x1x2x256xf32, #tpu.memory_space<vmem>>) attributes {dimension_semantics = [#tpu.dimension_semantics<parallel>, #tpu.dimension_semantics<parallel>], iteration_bounds = array<i64: 2, 2>, scalar_prefetch = 0 : i64, scratch_operands = 0 : i64, tpu.core_type = #tpu.core_type<tc>, window_params = [{transform_indices = @transform_0, window_bounds = array<i64: 1, 1, 2, 256>}, {transform_indices = @transform_1, window_bounds = array<i64: 1, 1, 2, 256>}, {transform_indices = @transform_2, window_bounds = array<i64: 1, 1, 2, 256>}, {transform_indices = @transform_3, window_bounds = array<i64: 1, 1, 1>}, {transform_indices = @transform_4, window_bounds = array<i64: 1, 1, 2, 256>}]} {
    %c0 = arith.constant 0 : index
    %c0_0 = arith.constant 0 : index
    %c0_1 = arith.constant 0 : index
    %c0_2 = arith.constant 0 : index
    %0 = vector.load %arg2[%c0, %c0_0, %c0_1, %c0_2] : memref<1x1x2x256xf32, #tpu.memory_space<vmem>>, vector<1x1x2x256xf32>
    %1 = vector.shape_cast %0 : vector<1x1x2x256xf32> to vector<2x256xf32>
    %c0_3 = arith.constant 0 : index
    %c0_4 = arith.constant 0 : index
    %c0_5 = arith.constant 0 : index
    %c0_6 = arith.constant 0 : index
    %2 = vector.load %arg3[%c0_3, %c0_4, %c0_5, %c0_6] : memref<1x1x2x256xf32, #tpu.memory_space<vmem>>, vector<1x1x2x256xf32>
    %3 = vector.shape_cast %2 : vector<1x1x2x256xf32> to vector<2x256xf32>
    %c0_7 = arith.constant 0 : index
    %c0_8 = arith.constant 0 : index
    %c0_9 = arith.constant 0 : index
    %c0_10 = arith.constant 0 : index
    %4 = vector.load %arg4[%c0_7, %c0_8, %c0_9, %c0_10] : memref<1x1x2x256xf32, #tpu.memory_space<vmem>>, vector<1x1x2x256xf32>
    %5 = vector.shape_cast %4 : vector<1x1x2x256xf32> to vector<2x256xf32>
    %6 = arith.mulf %1, %1 : vector<2x256xf32>
    %cst = arith.constant dense<0.000000e+00> : vector<2xf32>
    %7 = vector.multi_reduction <add>, %6, %cst [1] : vector<2x256xf32> to vector<2xf32>
    %8 = vector.shape_cast %7 : vector<2xf32> to vector<2x1xf32>
    %9 = math.sqrt %8 : vector<2x1xf32>
    %cst_11 = arith.constant 9.99999996E-13 : f32
    %10 = vector.broadcast %cst_11 : f32 to vector<2x1xf32>
    %11 = arith.maximumf %9, %10 : vector<2x1xf32>
    %12 = vector.broadcast %11 : vector<2x1xf32> to vector<2x256xf32>
    %13 = arith.divf %1, %12 : vector<2x256xf32>
    %14 = arith.mulf %3, %3 : vector<2x256xf32>
    %cst_12 = arith.constant dense<0.000000e+00> : vector<2xf32>
    %15 = vector.multi_reduction <add>, %14, %cst_12 [1] : vector<2x256xf32> to vector<2xf32>
    %16 = vector.shape_cast %15 : vector<2xf32> to vector<2x1xf32>
    %17 = math.sqrt %16 : vector<2x1xf32>
    %cst_13 = arith.constant 9.99999996E-13 : f32
    %18 = vector.broadcast %cst_13 : f32 to vector<2x1xf32>
    %19 = arith.maximumf %17, %18 : vector<2x1xf32>
    %20 = vector.broadcast %19 : vector<2x1xf32> to vector<2x256xf32>
    %21 = arith.divf %3, %20 : vector<2x256xf32>
    %cst_14 = arith.constant dense<0.000000e+00> : vector<2x2xf32>
    %22 = tpu.matmul %13, %21, %cst_14 {dimension_numbers = #tpu.dot_dimension_numbers<[1], [1], [0], [0], [0, 0, 1, 0], [], []>} : vector<2x256xf32>, vector<2x256xf32>, vector<2x2xf32> -> vector<2x2xf32>
    %c0_15 = arith.constant 0 : index
    %c0_16 = arith.constant 0 : index
    %c0_17 = arith.constant 0 : index
    %23 = vector.load %arg5[%c0_15, %c0_16, %c0_17] : memref<1x1x1xf32, #tpu.memory_space<vmem>>, vector<1x1x1xf32>
    %24 = vector.shape_cast %23 : vector<1x1x1xf32> to vector<1x1xf32>
    %25 = vector.broadcast %24 : vector<1x1xf32> to vector<2x2xf32>
    %26 = arith.mulf %22, %25 : vector<2x2xf32>
    %cst_18 = arith.constant dense<0xFF800000> : vector<2xf32>
    %27 = vector.multi_reduction <maximumf>, %26, %cst_18 [1] : vector<2x2xf32> to vector<2xf32>
    %28 = vector.shape_cast %27 : vector<2xf32> to vector<2x1xf32>
    %29 = vector.broadcast %28 : vector<2x1xf32> to vector<2x2xf32>
    %30 = arith.subf %26, %29 : vector<2x2xf32>
    %31 = math.exp %30 : vector<2x2xf32>
    %cst_19 = arith.constant dense<0.000000e+00> : vector<2xf32>
    %32 = vector.multi_reduction <add>, %31, %cst_19 [1] : vector<2x2xf32> to vector<2xf32>
    %33 = vector.shape_cast %32 : vector<2xf32> to vector<2x1xf32>
    %34 = vector.broadcast %33 : vector<2x1xf32> to vector<2x2xf32>
    %35 = arith.divf %31, %34 : vector<2x2xf32>
    %cst_20 = arith.constant dense<0.000000e+00> : vector<2x256xf32>
    %36 = tpu.matmul %35, %5, %cst_20 {dimension_numbers = #tpu.dot_dimension_numbers<[1], [0], [0], [1], [0, 0, 1, 1], [], []>} : vector<2x2xf32>, vector<2x256xf32>, vector<2x256xf32> -> vector<2x256xf32>
    %c0_21 = arith.constant 0 : index
    %c0_22 = arith.constant 0 : index
    %c0_23 = arith.constant 0 : index
    %c0_24 = arith.constant 0 : index
    %37 = vector.load %arg6[%c0_21, %c0_22, %c0_23, %c0_24] : memref<1x1x2x256xf32, #tpu.memory_space<vmem>>, vector<1x1x2x256xf32>
    %38 = vector.shape_cast %37 : vector<1x1x2x256xf32> to vector<2x256xf32>
    %39 = vector.shape_cast %36 : vector<2x256xf32> to vector<1x1x2x256xf32>
    tpu.vector_store %arg6[%c0_21, %c0_22, %c0_23, %c0_24], %39 {strides = array<i32>} : memref<1x1x2x256xf32, #tpu.memory_space<vmem>>, vector<1x1x2x256xf32>,
    return
  }
  func.func @transform_0(%arg0: i32, %arg1: i32) -> (i32, i32, i32, i32) {
    %c0_i32 = arith.constant 0 : i32
    %c0_i32_0 = arith.constant 0 : i32
    %c0_i32_1 = arith.constant 0 : i32
    return %arg0, %arg1, %c0_i32, %c0_i32_0 : i32, i32, i32, i32
  }
  func.func @transform_1(%arg0: i32, %arg1: i32) -> (i32, i32, i32, i32) {
    %c0_i32 = arith.constant 0 : i32
    %c0_i32_0 = arith.constant 0 : i32
    %c0_i32_1 = arith.constant 0 : i32
    return %arg0, %arg1, %c0_i32, %c0_i32_0 : i32, i32, i32, i32
  }
  func.func @transform_2(%arg0: i32, %arg1: i32) -> (i32, i32, i32, i32) {
    %c0_i32 = arith.constant 0 : i32
    %c0_i32_0 = arith.constant 0 : i32
    %c0_i32_1 = arith.constant 0 : i32
    return %arg0, %arg1, %c0_i32, %c0_i32_0 : i32, i32, i32, i32
  }
  func.func @transform_3(%arg0: i32, %arg1: i32) -> (i32, i32, i32) {
    %c0_i32 = arith.constant 0 : i32
    %c0_i32_0 = arith.constant 0 : i32
    %c0_i32_1 = arith.constant 0 : i32
    return %arg1, %c0_i32, %c0_i32_0 : i32, i32, i32
  }
  func.func @transform_4(%arg0: i32, %arg1: i32) -> (i32, i32, i32, i32) {
    %c0_i32 = arith.constant 0 : i32
    %c0_i32_0 = arith.constant 0 : i32
    %c0_i32_1 = arith.constant 0 : i32
    return %arg0, %arg1, %c0_i32, %c0_i32_0 : i32, i32, i32, i32
  }
}

module attributes {stable_mosaic.version = 11 : i64} {
  func.func @_matmul_res_kernel(%arg0: i32, %arg1: memref<512x4xf32, #tpu.memory_space<vmem>>, %arg2: memref<4x4xf32, #tpu.memory_space<vmem>>, %arg3: memref<512x4xf32, #tpu.memory_space<vmem>>, %arg4: memref<512x4xf32, #tpu.memory_space<vmem>>) attributes {dimension_semantics = [#tpu.dimension_semantics<parallel>], iteration_bounds = array<i64: 1>, scalar_prefetch = 0 : i64, scratch_operands = 0 : i64, tpu.core_type = #tpu.core_type<tc>, window_params = [{transform_indices = @transform_0, window_bounds = array<i64: 512, 4>}, {pipeline_mode = #tpu.pipeline_mode<synchronous>, transform_indices = @transform_1, window_bounds = array<i64: 4, 4>}, {transform_indices = @transform_2, window_bounds = array<i64: 512, 4>}, {transform_indices = @transform_3, window_bounds = array<i64: 512, 4>}]} {
    %c0 = arith.constant 0 : index
    %c0_0 = arith.constant 0 : index
    %0 = vector.load %arg1[%c0, %c0_0] : memref<512x4xf32, #tpu.memory_space<vmem>>, vector<512x4xf32>
    %c0_1 = arith.constant 0 : index
    %c0_2 = arith.constant 0 : index
    %1 = vector.load %arg2[%c0_1, %c0_2] : memref<4x4xf32, #tpu.memory_space<vmem>>, vector<4x4xf32>
    %cst = arith.constant dense<0.000000e+00> : vector<512x4xf32>
    %2 = tpu.matmul %0, %1, %cst {dimension_numbers = #tpu.dot_dimension_numbers<[1], [0], [0], [1], [0, 0, 1, 1], [], []>} : vector<512x4xf32>, vector<4x4xf32>, vector<512x4xf32> -> vector<512x4xf32>
    %c0_3 = arith.constant 0 : index
    %c0_4 = arith.constant 0 : index
    %3 = vector.load %arg3[%c0_3, %c0_4] : memref<512x4xf32, #tpu.memory_space<vmem>>, vector<512x4xf32>
    %4 = arith.addf %2, %3 : vector<512x4xf32>
    %c0_5 = arith.constant 0 : index
    %c0_6 = arith.constant 0 : index
    %5 = vector.load %arg4[%c0_5, %c0_6] : memref<512x4xf32, #tpu.memory_space<vmem>>, vector<512x4xf32>
    tpu.vector_store %arg4[%c0_5, %c0_6], %4 {strides = array<i32>} : memref<512x4xf32, #tpu.memory_space<vmem>>, vector<512x4xf32>,
    return
  }
  func.func @transform_0(%arg0: i32) -> (i32, i32) {
    %c0_i32 = arith.constant 0 : i32
    %c0_i32_0 = arith.constant 0 : i32
    return %arg0, %c0_i32 : i32, i32
  }
  func.func @transform_1(%arg0: i32) -> (i32, i32) {
    %c0_i32 = arith.constant 0 : i32
    %c0_i32_0 = arith.constant 0 : i32
    %c0_i32_1 = arith.constant 0 : i32
    return %c0_i32, %c0_i32_0 : i32, i32
  }
  func.func @transform_2(%arg0: i32) -> (i32, i32) {
    %c0_i32 = arith.constant 0 : i32
    %c0_i32_0 = arith.constant 0 : i32
    return %arg0, %c0_i32 : i32, i32
  }
  func.func @transform_3(%arg0: i32) -> (i32, i32) {
    %c0_i32 = arith.constant 0 : i32
    %c0_i32_0 = arith.constant 0 : i32
    return %arg0, %c0_i32 : i32, i32
  }
}

module attributes {stable_mosaic.version = 11 : i64} {
  func.func @_matmul_kernel(%arg0: i32, %arg1: memref<512x4xf32, #tpu.memory_space<vmem>>, %arg2: memref<4x20xf32, #tpu.memory_space<vmem>>, %arg3: memref<512x20xf32, #tpu.memory_space<vmem>>) attributes {dimension_semantics = [#tpu.dimension_semantics<parallel>], iteration_bounds = array<i64: 1>, scalar_prefetch = 0 : i64, scratch_operands = 0 : i64, tpu.core_type = #tpu.core_type<tc>, window_params = [{transform_indices = @transform_0, window_bounds = array<i64: 512, 4>}, {pipeline_mode = #tpu.pipeline_mode<synchronous>, transform_indices = @transform_1, window_bounds = array<i64: 4, 20>}, {transform_indices = @transform_2, window_bounds = array<i64: 512, 20>}]} {
    %c0 = arith.constant 0 : index
    %c0_0 = arith.constant 0 : index
    %0 = vector.load %arg1[%c0, %c0_0] : memref<512x4xf32, #tpu.memory_space<vmem>>, vector<512x4xf32>
    %c0_1 = arith.constant 0 : index
    %c0_2 = arith.constant 0 : index
    %1 = vector.load %arg2[%c0_1, %c0_2] : memref<4x20xf32, #tpu.memory_space<vmem>>, vector<4x20xf32>
    %cst = arith.constant dense<0.000000e+00> : vector<512x20xf32>
    %2 = tpu.matmul %0, %1, %cst {dimension_numbers = #tpu.dot_dimension_numbers<[1], [0], [0], [1], [0, 0, 1, 1], [], []>} : vector<512x4xf32>, vector<4x20xf32>, vector<512x20xf32> -> vector<512x20xf32>
    %c0_3 = arith.constant 0 : index
    %c0_4 = arith.constant 0 : index
    %3 = vector.load %arg3[%c0_3, %c0_4] : memref<512x20xf32, #tpu.memory_space<vmem>>, vector<512x20xf32>
    tpu.vector_store %arg3[%c0_3, %c0_4], %2 {strides = array<i32>} : memref<512x20xf32, #tpu.memory_space<vmem>>, vector<512x20xf32>,
    return
  }
  func.func @transform_0(%arg0: i32) -> (i32, i32) {
    %c0_i32 = arith.constant 0 : i32
    %c0_i32_0 = arith.constant 0 : i32
    return %arg0, %c0_i32 : i32, i32
  }
  func.func @transform_1(%arg0: i32) -> (i32, i32) {
    %c0_i32 = arith.constant 0 : i32
    %c0_i32_0 = arith.constant 0 : i32
    %c0_i32_1 = arith.constant 0 : i32
    return %c0_i32, %c0_i32_0 : i32, i32
  }
  func.func @transform_2(%arg0: i32) -> (i32, i32) {
    %c0_i32 = arith.constant 0 : i32
    %c0_i32_0 = arith.constant 0 : i32
    return %arg0, %c0_i32 : i32, i32
  }
}

module attributes {stable_mosaic.version = 11 : i64} {
  func.func @_dwconv3x3_kernel(%arg0: i32, %arg1: memref<1x18x18x20xf32, #tpu.memory_space<vmem>>, %arg2: memref<3x3x20xf32, #tpu.memory_space<vmem>>, %arg3: memref<1x16x16x20xf32, #tpu.memory_space<vmem>>) attributes {dimension_semantics = [#tpu.dimension_semantics<parallel>], iteration_bounds = array<i64: 2>, scalar_prefetch = 0 : i64, scratch_operands = 0 : i64, tpu.core_type = #tpu.core_type<tc>, window_params = [{transform_indices = @transform_0, window_bounds = array<i64: 1, 18, 18, 20>}, {pipeline_mode = #tpu.pipeline_mode<synchronous>, transform_indices = @transform_1, window_bounds = array<i64: 3, 3, 20>}, {transform_indices = @transform_2, window_bounds = array<i64: 1, 16, 16, 20>}]} {
    %c0 = arith.constant 0 : index
    %c0_0 = arith.constant 0 : index
    %c0_1 = arith.constant 0 : index
    %0 = vector.load %arg2[%c0, %c0_0, %c0_1] : memref<3x3x20xf32, #tpu.memory_space<vmem>>, vector<3x3x20xf32>
    %cst = arith.constant 0.000000e+00 : f32
    %1 = vector.broadcast %cst : f32 to vector<16x16x20xf32>
    %c0_2 = arith.constant 0 : index
    %c0_3 = arith.constant 0 : index
    %c0_4 = arith.constant 0 : index
    %c0_5 = arith.constant 0 : index
    %2 = vector.load %arg1[%c0_2, %c0_3, %c0_4, %c0_5] : memref<1x18x18x20xf32, #tpu.memory_space<vmem>>, vector<1x16x16x20xf32>
    %3 = vector.shape_cast %2 : vector<1x16x16x20xf32> to vector<16x16x20xf32>
    %4 = vector.extract_strided_slice %0 {offsets = [0, 0, 0], sizes = [1, 1, 20], strides = [1, 1, 1]} : vector<3x3x20xf32> to vector<1x1x20xf32>
    %5 = vector.shape_cast %4 : vector<1x1x20xf32> to vector<20xf32>
    %6 = vector.shape_cast %5 : vector<20xf32> to vector<1x1x20xf32>
    %7 = vector.broadcast %6 : vector<1x1x20xf32> to vector<16x16x20xf32>
    %8 = arith.mulf %3, %7 : vector<16x16x20xf32>
    %9 = arith.addf %1, %8 : vector<16x16x20xf32>
    %c0_6 = arith.constant 0 : index
    %c0_7 = arith.constant 0 : index
    %c1 = arith.constant 1 : index
    %c0_8 = arith.constant 0 : index
    %10 = vector.load %arg1[%c0_6, %c0_7, %c1, %c0_8] : memref<1x18x18x20xf32, #tpu.memory_space<vmem>>, vector<1x16x16x20xf32>
    %11 = vector.shape_cast %10 : vector<1x16x16x20xf32> to vector<16x16x20xf32>
    %12 = vector.extract_strided_slice %0 {offsets = [0, 1, 0], sizes = [1, 1, 20], strides = [1, 1, 1]} : vector<3x3x20xf32> to vector<1x1x20xf32>
    %13 = vector.shape_cast %12 : vector<1x1x20xf32> to vector<20xf32>
    %14 = vector.shape_cast %13 : vector<20xf32> to vector<1x1x20xf32>
    %15 = vector.broadcast %14 : vector<1x1x20xf32> to vector<16x16x20xf32>
    %16 = arith.mulf %11, %15 : vector<16x16x20xf32>
    %17 = arith.addf %9, %16 : vector<16x16x20xf32>
    %c0_9 = arith.constant 0 : index
    %c0_10 = arith.constant 0 : index
    %c2 = arith.constant 2 : index
    %c0_11 = arith.constant 0 : index
    %18 = vector.load %arg1[%c0_9, %c0_10, %c2, %c0_11] : memref<1x18x18x20xf32, #tpu.memory_space<vmem>>, vector<1x16x16x20xf32>
    %19 = vector.shape_cast %18 : vector<1x16x16x20xf32> to vector<16x16x20xf32>
    %20 = vector.extract_strided_slice %0 {offsets = [0, 2, 0], sizes = [1, 1, 20], strides = [1, 1, 1]} : vector<3x3x20xf32> to vector<1x1x20xf32>
    %21 = vector.shape_cast %20 : vector<1x1x20xf32> to vector<20xf32>
    %22 = vector.shape_cast %21 : vector<20xf32> to vector<1x1x20xf32>
    %23 = vector.broadcast %22 : vector<1x1x20xf32> to vector<16x16x20xf32>
    %24 = arith.mulf %19, %23 : vector<16x16x20xf32>
    %25 = arith.addf %17, %24 : vector<16x16x20xf32>
    %c0_12 = arith.constant 0 : index
    %c1_13 = arith.constant 1 : index
    %c0_14 = arith.constant 0 : index
    %c0_15 = arith.constant 0 : index
    %26 = vector.load %arg1[%c0_12, %c1_13, %c0_14, %c0_15] : memref<1x18x18x20xf32, #tpu.memory_space<vmem>>, vector<1x16x16x20xf32>
    %27 = vector.shape_cast %26 : vector<1x16x16x20xf32> to vector<16x16x20xf32>
    %28 = vector.extract_strided_slice %0 {offsets = [1, 0, 0], sizes = [1, 1, 20], strides = [1, 1, 1]} : vector<3x3x20xf32> to vector<1x1x20xf32>
    %29 = vector.shape_cast %28 : vector<1x1x20xf32> to vector<20xf32>
    %30 = vector.shape_cast %29 : vector<20xf32> to vector<1x1x20xf32>
    %31 = vector.broadcast %30 : vector<1x1x20xf32> to vector<16x16x20xf32>
    %32 = arith.mulf %27, %31 : vector<16x16x20xf32>
    %33 = arith.addf %25, %32 : vector<16x16x20xf32>
    %c0_16 = arith.constant 0 : index
    %c1_17 = arith.constant 1 : index
    %c1_18 = arith.constant 1 : index
    %c0_19 = arith.constant 0 : index
    %34 = vector.load %arg1[%c0_16, %c1_17, %c1_18, %c0_19] : memref<1x18x18x20xf32, #tpu.memory_space<vmem>>, vector<1x16x16x20xf32>
    %35 = vector.shape_cast %34 : vector<1x16x16x20xf32> to vector<16x16x20xf32>
    %36 = vector.extract_strided_slice %0 {offsets = [1, 1, 0], sizes = [1, 1, 20], strides = [1, 1, 1]} : vector<3x3x20xf32> to vector<1x1x20xf32>
    %37 = vector.shape_cast %36 : vector<1x1x20xf32> to vector<20xf32>
    %38 = vector.shape_cast %37 : vector<20xf32> to vector<1x1x20xf32>
    %39 = vector.broadcast %38 : vector<1x1x20xf32> to vector<16x16x20xf32>
    %40 = arith.mulf %35, %39 : vector<16x16x20xf32>
    %41 = arith.addf %33, %40 : vector<16x16x20xf32>
    %c0_20 = arith.constant 0 : index
    %c1_21 = arith.constant 1 : index
    %c2_22 = arith.constant 2 : index
    %c0_23 = arith.constant 0 : index
    %42 = vector.load %arg1[%c0_20, %c1_21, %c2_22, %c0_23] : memref<1x18x18x20xf32, #tpu.memory_space<vmem>>, vector<1x16x16x20xf32>
    %43 = vector.shape_cast %42 : vector<1x16x16x20xf32> to vector<16x16x20xf32>
    %44 = vector.extract_strided_slice %0 {offsets = [1, 2, 0], sizes = [1, 1, 20], strides = [1, 1, 1]} : vector<3x3x20xf32> to vector<1x1x20xf32>
    %45 = vector.shape_cast %44 : vector<1x1x20xf32> to vector<20xf32>
    %46 = vector.shape_cast %45 : vector<20xf32> to vector<1x1x20xf32>
    %47 = vector.broadcast %46 : vector<1x1x20xf32> to vector<16x16x20xf32>
    %48 = arith.mulf %43, %47 : vector<16x16x20xf32>
    %49 = arith.addf %41, %48 : vector<16x16x20xf32>
    %c0_24 = arith.constant 0 : index
    %c2_25 = arith.constant 2 : index
    %c0_26 = arith.constant 0 : index
    %c0_27 = arith.constant 0 : index
    %50 = vector.load %arg1[%c0_24, %c2_25, %c0_26, %c0_27] : memref<1x18x18x20xf32, #tpu.memory_space<vmem>>, vector<1x16x16x20xf32>
    %51 = vector.shape_cast %50 : vector<1x16x16x20xf32> to vector<16x16x20xf32>
    %52 = vector.extract_strided_slice %0 {offsets = [2, 0, 0], sizes = [1, 1, 20], strides = [1, 1, 1]} : vector<3x3x20xf32> to vector<1x1x20xf32>
    %53 = vector.shape_cast %52 : vector<1x1x20xf32> to vector<20xf32>
    %54 = vector.shape_cast %53 : vector<20xf32> to vector<1x1x20xf32>
    %55 = vector.broadcast %54 : vector<1x1x20xf32> to vector<16x16x20xf32>
    %56 = arith.mulf %51, %55 : vector<16x16x20xf32>
    %57 = arith.addf %49, %56 : vector<16x16x20xf32>
    %c0_28 = arith.constant 0 : index
    %c2_29 = arith.constant 2 : index
    %c1_30 = arith.constant 1 : index
    %c0_31 = arith.constant 0 : index
    %58 = vector.load %arg1[%c0_28, %c2_29, %c1_30, %c0_31] : memref<1x18x18x20xf32, #tpu.memory_space<vmem>>, vector<1x16x16x20xf32>
    %59 = vector.shape_cast %58 : vector<1x16x16x20xf32> to vector<16x16x20xf32>
    %60 = vector.extract_strided_slice %0 {offsets = [2, 1, 0], sizes = [1, 1, 20], strides = [1, 1, 1]} : vector<3x3x20xf32> to vector<1x1x20xf32>
    %61 = vector.shape_cast %60 : vector<1x1x20xf32> to vector<20xf32>
    %62 = vector.shape_cast %61 : vector<20xf32> to vector<1x1x20xf32>
    %63 = vector.broadcast %62 : vector<1x1x20xf32> to vector<16x16x20xf32>
    %64 = arith.mulf %59, %63 : vector<16x16x20xf32>
    %65 = arith.addf %57, %64 : vector<16x16x20xf32>
    %c0_32 = arith.constant 0 : index
    %c2_33 = arith.constant 2 : index
    %c2_34 = arith.constant 2 : index
    %c0_35 = arith.constant 0 : index
    %66 = vector.load %arg1[%c0_32, %c2_33, %c2_34, %c0_35] : memref<1x18x18x20xf32, #tpu.memory_space<vmem>>, vector<1x16x16x20xf32>
    %67 = vector.shape_cast %66 : vector<1x16x16x20xf32> to vector<16x16x20xf32>
    %68 = vector.extract_strided_slice %0 {offsets = [2, 2, 0], sizes = [1, 1, 20], strides = [1, 1, 1]} : vector<3x3x20xf32> to vector<1x1x20xf32>
    %69 = vector.shape_cast %68 : vector<1x1x20xf32> to vector<20xf32>
    %70 = vector.shape_cast %69 : vector<20xf32> to vector<1x1x20xf32>
    %71 = vector.broadcast %70 : vector<1x1x20xf32> to vector<16x16x20xf32>
    %72 = arith.mulf %67, %71 : vector<16x16x20xf32>
    %73 = arith.addf %65, %72 : vector<16x16x20xf32>
    %c0_36 = arith.constant 0 : index
    %c0_37 = arith.constant 0 : index
    %c0_38 = arith.constant 0 : index
    %c0_39 = arith.constant 0 : index
    %74 = vector.load %arg3[%c0_36, %c0_37, %c0_38, %c0_39] : memref<1x16x16x20xf32, #tpu.memory_space<vmem>>, vector<1x16x16x20xf32>
    %75 = vector.shape_cast %74 : vector<1x16x16x20xf32> to vector<16x16x20xf32>
    %76 = vector.shape_cast %73 : vector<16x16x20xf32> to vector<1x16x16x20xf32>
    tpu.vector_store %arg3[%c0_36, %c0_37, %c0_38, %c0_39], %76 {strides = array<i32>} : memref<1x16x16x20xf32, #tpu.memory_space<vmem>>, vector<1x16x16x20xf32>,
    return
  }
  func.func @transform_0(%arg0: i32) -> (i32, i32, i32, i32) {
    %c0_i32 = arith.constant 0 : i32
    %c0_i32_0 = arith.constant 0 : i32
    %c0_i32_1 = arith.constant 0 : i32
    %c0_i32_2 = arith.constant 0 : i32
    return %arg0, %c0_i32, %c0_i32_0, %c0_i32_1 : i32, i32, i32, i32
  }
  func.func @transform_1(%arg0: i32) -> (i32, i32, i32) {
    %c0_i32 = arith.constant 0 : i32
    %c0_i32_0 = arith.constant 0 : i32
    %c0_i32_1 = arith.constant 0 : i32
    %c0_i32_2 = arith.constant 0 : i32
    return %c0_i32, %c0_i32_0, %c0_i32_1 : i32, i32, i32
  }
  func.func @transform_2(%arg0: i32) -> (i32, i32, i32, i32) {
    %c0_i32 = arith.constant 0 : i32
    %c0_i32_0 = arith.constant 0 : i32
    %c0_i32_1 = arith.constant 0 : i32
    %c0_i32_2 = arith.constant 0 : i32
    return %arg0, %c0_i32, %c0_i32_0, %c0_i32_1 : i32, i32, i32, i32
  }
}

module attributes {stable_mosaic.version = 11 : i64} {
  func.func @_gdfn_gate_kernel(%arg0: i32, %arg1: memref<512x20xf32, #tpu.memory_space<vmem>>, %arg2: memref<512x20xf32, #tpu.memory_space<vmem>>, %arg3: memref<512x10xf32, #tpu.memory_space<vmem>>) attributes {dimension_semantics = [#tpu.dimension_semantics<parallel>], iteration_bounds = array<i64: 1>, scalar_prefetch = 0 : i64, scratch_operands = 0 : i64, tpu.core_type = #tpu.core_type<tc>, window_params = [{transform_indices = @transform_0, window_bounds = array<i64: 512, 20>}, {transform_indices = @transform_1, window_bounds = array<i64: 512, 20>}, {transform_indices = @transform_2, window_bounds = array<i64: 512, 10>}]} {
    %c0 = arith.constant 0 : index
    %c0_0 = arith.constant 0 : index
    %0 = vector.load %arg1[%c0, %c0_0] : memref<512x20xf32, #tpu.memory_space<vmem>>, vector<512x20xf32>
    %1 = math.tanh %0 : vector<512x20xf32>
    %c0_1 = arith.constant 0 : index
    %c0_2 = arith.constant 0 : index
    %2 = vector.load %arg2[%c0_1, %c0_2] : memref<512x20xf32, #tpu.memory_space<vmem>>, vector<512x20xf32>
    %3 = arith.addf %1, %2 : vector<512x20xf32>
    %4 = vector.extract_strided_slice %3 {offsets = [0, 0], sizes = [512, 10], strides = [1, 1]} : vector<512x20xf32> to vector<512x10xf32>
    %5 = vector.extract_strided_slice %3 {offsets = [0, 10], sizes = [512, 10], strides = [1, 1]} : vector<512x20xf32> to vector<512x10xf32>
    %6 = arith.mulf %4, %5 : vector<512x10xf32>
    %c0_3 = arith.constant 0 : index
    %c0_4 = arith.constant 0 : index
    %7 = vector.load %arg3[%c0_3, %c0_4] : memref<512x10xf32, #tpu.memory_space<vmem>>, vector<512x10xf32>
    tpu.vector_store %arg3[%c0_3, %c0_4], %6 {strides = array<i32>} : memref<512x10xf32, #tpu.memory_space<vmem>>, vector<512x10xf32>,
    return
  }
  func.func @transform_0(%arg0: i32) -> (i32, i32) {
    %c0_i32 = arith.constant 0 : i32
    %c0_i32_0 = arith.constant 0 : i32
    return %arg0, %c0_i32 : i32, i32
  }
  func.func @transform_1(%arg0: i32) -> (i32, i32) {
    %c0_i32 = arith.constant 0 : i32
    %c0_i32_0 = arith.constant 0 : i32
    return %arg0, %c0_i32 : i32, i32
  }
  func.func @transform_2(%arg0: i32) -> (i32, i32) {
    %c0_i32 = arith.constant 0 : i32
    %c0_i32_0 = arith.constant 0 : i32
    return %arg0, %c0_i32 : i32, i32
  }
}

module attributes {stable_mosaic.version = 11 : i64} {
  func.func @_matmul_kernel(%arg0: i32, %arg1: memref<512x10xf32, #tpu.memory_space<vmem>>, %arg2: memref<10x4xf32, #tpu.memory_space<vmem>>, %arg3: memref<512x4xf32, #tpu.memory_space<vmem>>) attributes {dimension_semantics = [#tpu.dimension_semantics<parallel>], iteration_bounds = array<i64: 1>, scalar_prefetch = 0 : i64, scratch_operands = 0 : i64, tpu.core_type = #tpu.core_type<tc>, window_params = [{transform_indices = @transform_0, window_bounds = array<i64: 512, 10>}, {pipeline_mode = #tpu.pipeline_mode<synchronous>, transform_indices = @transform_1, window_bounds = array<i64: 10, 4>}, {transform_indices = @transform_2, window_bounds = array<i64: 512, 4>}]} {
    %c0 = arith.constant 0 : index
    %c0_0 = arith.constant 0 : index
    %0 = vector.load %arg1[%c0, %c0_0] : memref<512x10xf32, #tpu.memory_space<vmem>>, vector<512x10xf32>
    %c0_1 = arith.constant 0 : index
    %c0_2 = arith.constant 0 : index
    %1 = vector.load %arg2[%c0_1, %c0_2] : memref<10x4xf32, #tpu.memory_space<vmem>>, vector<10x4xf32>
    %cst = arith.constant dense<0.000000e+00> : vector<512x4xf32>
    %2 = tpu.matmul %0, %1, %cst {dimension_numbers = #tpu.dot_dimension_numbers<[1], [0], [0], [1], [0, 0, 1, 1], [], []>} : vector<512x10xf32>, vector<10x4xf32>, vector<512x4xf32> -> vector<512x4xf32>
    %c0_3 = arith.constant 0 : index
    %c0_4 = arith.constant 0 : index
    %3 = vector.load %arg3[%c0_3, %c0_4] : memref<512x4xf32, #tpu.memory_space<vmem>>, vector<512x4xf32>
    tpu.vector_store %arg3[%c0_3, %c0_4], %2 {strides = array<i32>} : memref<512x4xf32, #tpu.memory_space<vmem>>, vector<512x4xf32>,
    return
  }
  func.func @transform_0(%arg0: i32) -> (i32, i32) {
    %c0_i32 = arith.constant 0 : i32
    %c0_i32_0 = arith.constant 0 : i32
    return %arg0, %c0_i32 : i32, i32
  }
  func.func @transform_1(%arg0: i32) -> (i32, i32) {
    %c0_i32 = arith.constant 0 : i32
    %c0_i32_0 = arith.constant 0 : i32
    %c0_i32_1 = arith.constant 0 : i32
    return %c0_i32, %c0_i32_0 : i32, i32
  }
  func.func @transform_2(%arg0: i32) -> (i32, i32) {
    %c0_i32 = arith.constant 0 : i32
    %c0_i32_0 = arith.constant 0 : i32
    return %arg0, %c0_i32 : i32, i32
  }
}

</mosaic_0001>

<llo_original>
// kernel: hv_lca_forward.15
$region0: #{hv_lca_forward.15}
  #allocation0 [shape = 'u32[]', space=smem, size = 0x4, offset = 0x4, fixed_abs, tag = 'smem constant byte address 0x4 - core index']
  #allocation1 [shape = 'u32[72,128]{1,0:T(1,128)}', space=vmem, size = 0x9000, scoped, tag = 'internal scratch']
  %s0 = inlined_call_operand.vmem [shape: f32[512,4], index: 0, kind: input, shape index: {}]
  %s1 = inlined_call_operand.vmem [shape: f32[4,4], index: 1, kind: input, shape index: {}]
  %s2 = inlined_call_operand.vmem [shape: f32[512,4], index: 2, kind: output, shape index: {}]
  %s3 = sld [smem:[#allocation0]]
  $region18: #{hv_lca_forward.15} parent=0
    _
  %s5 = ssub.s32 1, %s3
  %s6 = scalar_select 0, %s5, %s3
  // Predicated region
  $region2: #{hv_lca_forward.15} parent=0 // pred_check
    _
  $region3: #{hv_lca_forward.15} parent=0 // pred_check_branch
    %8 = sbr.rel (0) target = $region5
  $region4: #{hv_lca_forward.15} parent=0 // pred_region
    _
  $region5: #{hv_lca_forward.15} parent=0 // pred_fallthru
    _
  // Predicated region
  $region6: #{hv_lca_forward.15} parent=0 // pred_check
    _
  $region7: #{hv_lca_forward.15} parent=0 // pred_check_branch
    %10 = sbr.rel (0) target = $region9
  $region8: #{hv_lca_forward.15} parent=0 // pred_region
    _
  $region9: #{hv_lca_forward.15} parent=0 // pred_fallthru
    _
  %v11 = vld [vmem:[%s0] sm:$0xff]
  %v12 = vld [vmem:[%s0 + $0x8] sm:$0xff]
  %v13 = vld [vmem:[%s0 + $0x10] sm:$0xff]
  %v14 = vld [vmem:[%s0 + $0x18] sm:$0xff]
  %v15 = vld [vmem:[%s0 + $0x20] sm:$0xff]
  %v16 = vld [vmem:[%s0 + $0x28] sm:$0xff]
  %v17 = vld [vmem:[%s0 + $0x30] sm:$0xff]
  %v18 = vld [vmem:[%s0 + $0x38] sm:$0xff]
  %v19 = vld [vmem:[%s0 + $0x40] sm:$0xff]
  %v20 = vld [vmem:[%s0 + $0x48] sm:$0xff]
  %v21 = vld [vmem:[%s0 + $0x50] sm:$0xff]
  %v22 = vld [vmem:[%s0 + $0x58] sm:$0xff]
  %v23 = vld [vmem:[%s0 + $0x60] sm:$0xff]
  %v24 = vld [vmem:[%s0 + $0x68] sm:$0xff]
  %v25 = vld [vmem:[%s0 + $0x70] sm:$0xff]
  %v26 = vld [vmem:[%s0 + $0x78] sm:$0xff]
  %v27 = vld [vmem:[%s0 + $0x80] sm:$0xff]
  %v28 = vld [vmem:[%s0 + $0x88] sm:$0xff]
  %v29 = vld [vmem:[%s0 + $0x90] sm:$0xff]
  %v30 = vld [vmem:[%s0 + $0x98] sm:$0xff]
  %v31 = vld [vmem:[%s0 + $0xa0] sm:$0xff]
  %v32 = vld [vmem:[%s0 + $0xa8] sm:$0xff]
  %v33 = vld [vmem:[%s0 + $0xb0] sm:$0xff]
  %v34 = vld [vmem:[%s0 + $0xb8] sm:$0xff]
  %v35 = vld [vmem:[%s0 + $0xc0] sm:$0xff]
  %v36 = vld [vmem:[%s0 + $0xc8] sm:$0xff]
  %v37 = vld [vmem:[%s0 + $0xd0] sm:$0xff]
  %v38 = vld [vmem:[%s0 + $0xd8] sm:$0xff]
  %v39 = vld [vmem:[%s0 + $0xe0] sm:$0xff]
  %v40 = vld [vmem:[%s0 + $0xe8] sm:$0xff]
  %v41 = vld [vmem:[%s0 + $0xf0] sm:$0xff]
  %v42 = vld [vmem:[%s0 + $0xf8] sm:$0xff]
  %v43 = vld [vmem:[%s0 + $0x100] sm:$0xff]
  %v44 = vld [vmem:[%s0 + $0x108] sm:$0xff]
  %v45 = vld [vmem:[%s0 + $0x110] sm:$0xff]
  %v46 = vld [vmem:[%s0 + $0x118] sm:$0xff]
  %v47 = vld [vmem:[%s0 + $0x120] sm:$0xff]
  %v48 = vld [vmem:[%s0 + $0x128] sm:$0xff]
  %v49 = vld [vmem:[%s0 + $0x130] sm:$0xff]
  %v50 = vld [vmem:[%s0 + $0x138] sm:$0xff]
  %v51 = vld [vmem:[%s0 + $0x140] sm:$0xff]
  %v52 = vld [vmem:[%s0 + $0x148] sm:$0xff]
  %v53 = vld [vmem:[%s0 + $0x150] sm:$0xff]
  %v54 = vld [vmem:[%s0 + $0x158] sm:$0xff]
  %v55 = vld [vmem:[%s0 + $0x160] sm:$0xff]
  %v56 = vld [vmem:[%s0 + $0x168] sm:$0xff]
  %v57 = vld [vmem:[%s0 + $0x170] sm:$0xff]
  %v58 = vld [vmem:[%s0 + $0x178] sm:$0xff]
  %v59 = vld [vmem:[%s0 + $0x180] sm:$0xff]
  %v60 = vld [vmem:[%s0 + $0x188] sm:$0xff]
  %v61 = vld [vmem:[%s0 + $0x190] sm:$0xff]
  %v62 = vld [vmem:[%s0 + $0x198] sm:$0xff]
  %v63 = vld [vmem:[%s0 + $0x1a0] sm:$0xff]
  %v64 = vld [vmem:[%s0 + $0x1a8] sm:$0xff]
  %v65 = vld [vmem:[%s0 + $0x1b0] sm:$0xff]
  %v66 = vld [vmem:[%s0 + $0x1b8] sm:$0xff]
  %v67 = vld [vmem:[%s0 + $0x1c0] sm:$0xff]
  %v68 = vld [vmem:[%s0 + $0x1c8] sm:$0xff]
  %v69 = vld [vmem:[%s0 + $0x1d0] sm:$0xff]
  %v70 = vld [vmem:[%s0 + $0x1d8] sm:$0xff]
  %v71 = vld [vmem:[%s0 + $0x1e0] sm:$0xff]
  %v72 = vld [vmem:[%s0 + $0x1e8] sm:$0xff]
  %v73 = vld [vmem:[%s0 + $0x1f0] sm:$0xff]
  %v74 = vld [vmem:[%s0 + $0x1f8] sm:$0xff]
  %v75 = vld [vmem:[%s1] sm:$0xf]
  %vm76 = vcmask 31744
  %v78 = vsel %vm76, %v11, 0
  %v81 = vsel %vm76, %v12, 0
  %v84 = vsel %vm76, %v13, 0
  %v87 = vsel %vm76, %v14, 0
  %v90 = vsel %vm76, %v15, 0
  %v93 = vsel %vm76, %v16, 0
  %v96 = vsel %vm76, %v17, 0
  %v99 = vsel %vm76, %v18, 0
  %v102 = vsel %vm76, %v19, 0
  %v105 = vsel %vm76, %v20, 0
  %v108 = vsel %vm76, %v21, 0
  %v111 = vsel %vm76, %v22, 0
  %v114 = vsel %vm76, %v23, 0
  %v117 = vsel %vm76, %v24, 0
  %v120 = vsel %vm76, %v25, 0
  %v123 = vsel %vm76, %v26, 0
  %v126 = vsel %vm76, %v27, 0
  %v129 = vsel %vm76, %v28, 0
  %v132 = vsel %vm76, %v29, 0
  %v135 = vsel %vm76, %v30, 0
  %v138 = vsel %vm76, %v31, 0
  %v141 = vsel %vm76, %v32, 0
  %v144 = vsel %vm76, %v33, 0
  %v147 = vsel %vm76, %v34, 0
  %v150 = vsel %vm76, %v35, 0
  %v153 = vsel %vm76, %v36, 0
  %v156 = vsel %vm76, %v37, 0
  %v159 = vsel %vm76, %v38, 0
  %v162 = vsel %vm76, %v39, 0
  %v165 = vsel %vm76, %v40, 0
  %v168 = vsel %vm76, %v41, 0
  %v171 = vsel %vm76, %v42, 0
  %v174 = vsel %vm76, %v43, 0
  %v177 = vsel %vm76, %v44, 0
  %v180 = vsel %vm76, %v45, 0
  %v183 = vsel %vm76, %v46, 0
  %v186 = vsel %vm76, %v47, 0
  %v189 = vsel %vm76, %v48, 0
  %v192 = vsel %vm76, %v49, 0
  %v195 = vsel %vm76, %v50, 0
  %v198 = vsel %vm76, %v51, 0
  %v201 = vsel %vm76, %v52, 0
  %v204 = vsel %vm76, %v53, 0
  %v207 = vsel %vm76, %v54, 0
  %v210 = vsel %vm76, %v55, 0
  %v213 = vsel %vm76, %v56, 0
  %v216 = vsel %vm76, %v57, 0
  %v219 = vsel %vm76, %v58, 0
  %v222 = vsel %vm76, %v59, 0
  %v225 = vsel %vm76, %v60, 0
  %v228 = vsel %vm76, %v61, 0
  %v231 = vsel %vm76, %v62, 0
  %v234 = vsel %vm76, %v63, 0
  %v237 = vsel %vm76, %v64, 0
  %v240 = vsel %vm76, %v65, 0
  %v243 = vsel %vm76, %v66, 0
  %v246 = vsel %vm76, %v67, 0
  %v249 = vsel %vm76, %v68, 0
  %v252 = vsel %vm76, %v69, 0
  %v255 = vsel %vm76, %v70, 0
  %v258 = vsel %vm76, %v71, 0
  %v261 = vsel %vm76, %v72, 0
  %v264 = vsel %vm76, %v73, 0
  %v267 = vsel %vm76, %v74, 0
  %vm269 = vcmask 1043456
  %v271 = vsel %vm269, %v75, 0
  %273 = vmatpush.msra.mxu0 0.0
  %274 = vmatpush.msra.mxu0 0.0
  %275 = vmatpush.msra.mxu0 0.0
  %276 = vmatpush.msra.mxu0 0.0
  %277 = vmatpush.msra.mxu0 0.0
  %278 = vmatpush.msra.mxu0 0.0
  %279 = vmatpush.msra.mxu0 0.0
  %280 = vmatpush.msra.mxu0 0.0
  %281 = vmatpush.msra.mxu0 0.0
  %282 = vmatpush.msra.mxu0 0.0
  %283 = vmatpush.msra.mxu0 0.0
  %284 = vmatpush.msra.mxu0 0.0
  %285 = vmatpush.msra.mxu0 0.0
  %286 = vmatpush.msra.mxu0 0.0
  %287 = vmatpush.msra.mxu0 0.0
  %288 = vmatpush.msra.mxu0 %v271
  %289 = vmatmul.f32.gmra.mxu0 %v78
  %v290 = vpop.f32.mrf.mxu0
  %v291 = vadd.f32 0.0, %v290
  %292 = vmatmul.f32.gmra.mxu0 %v81
  %v293 = vpop.f32.mrf.mxu0
  %v294 = vadd.f32 0.0, %v293
  %295 = vmatmul.f32.gmra.mxu0 %v84
  %v296 = vpop.f32.mrf.mxu0
  %v297 = vadd.f32 0.0, %v296
  %298 = vmatmul.f32.gmra.mxu0 %v87
  %v299 = vpop.f32.mrf.mxu0
  %v300 = vadd.f32 0.0, %v299
  %301 = vmatmul.f32.gmra.mxu0 %v90
  %v302 = vpop.f32.mrf.mxu0
  %v303 = vadd.f32 0.0, %v302
  %304 = vmatmul.f32.gmra.mxu0 %v93
  %v305 = vpop.f32.mrf.mxu0
  %v306 = vadd.f32 0.0, %v305
  %307 = vmatmul.f32.gmra.mxu0 %v96
  %v308 = vpop.f32.mrf.mxu0
  %v309 = vadd.f32 0.0, %v308
  %310 = vmatmul.f32.gmra.mxu0 %v99
  %v311 = vpop.f32.mrf.mxu0
  %v312 = vadd.f32 0.0, %v311
  %313 = vmatmul.f32.gmra.mxu0 %v102
  %v314 = vpop.f32.mrf.mxu0
  %v315 = vadd.f32 0.0, %v314
  %316 = vmatmul.f32.gmra.mxu0 %v105
  %v317 = vpop.f32.mrf.mxu0
  %v318 = vadd.f32 0.0, %v317
  %319 = vmatmul.f32.gmra.mxu0 %v108
  %v320 = vpop.f32.mrf.mxu0
  %v321 = vadd.f32 0.0, %v320
  %322 = vmatmul.f32.gmra.mxu0 %v111
  %v323 = vpop.f32.mrf.mxu0
  %v324 = vadd.f32 0.0, %v323
  %325 = vmatmul.f32.gmra.mxu0 %v114
  %v326 = vpop.f32.mrf.mxu0
  %v327 = vadd.f32 0.0, %v326
  %328 = vmatmul.f32.gmra.mxu0 %v117
  %v329 = vpop.f32.mrf.mxu0
  %v330 = vadd.f32 0.0, %v329
  %331 = vmatmul.f32.gmra.mxu0 %v120
  %v332 = vpop.f32.mrf.mxu0
  %v333 = vadd.f32 0.0, %v332
  %334 = vmatmul.f32.gmra.mxu0 %v123
  %v335 = vpop.f32.mrf.mxu0
  %v336 = vadd.f32 0.0, %v335
  %337 = vmatmul.f32.gmra.mxu0 %v126
  %v338 = vpop.f32.mrf.mxu0
  %v339 = vadd.f32 0.0, %v338
  %340 = vmatmul.f32.gmra.mxu0 %v129
  %v341 = vpop.f32.mrf.mxu0
  %v342 = vadd.f32 0.0, %v341
  %343 = vmatmul.f32.gmra.mxu0 %v132
  %v344 = vpop.f32.mrf.mxu0
  %v345 = vadd.f32 0.0, %v344
  %346 = vmatmul.f32.gmra.mxu0 %v135
  %v347 = vpop.f32.mrf.mxu0
  %v348 = vadd.f32 0.0, %v347
  %349 = vmatmul.f32.gmra.mxu0 %v138
  %v350 = vpop.f32.mrf.mxu0
  %v351 = vadd.f32 0.0, %v350
  %352 = vmatmul.f32.gmra.mxu0 %v141
  %v353 = vpop.f32.mrf.mxu0
  %v354 = vadd.f32 0.0, %v353
  %355 = vmatmul.f32.gmra.mxu0 %v144
  %v356 = vpop.f32.mrf.mxu0
  %v357 = vadd.f32 0.0, %v356
  %358 = vmatmul.f32.gmra.mxu0 %v147
  %v359 = vpop.f32.mrf.mxu0
  %v360 = vadd.f32 0.0, %v359
  %361 = vmatmul.f32.gmra.mxu0 %v150
  %v362 = vpop.f32.mrf.mxu0
  %v363 = vadd.f32 0.0, %v362
  %364 = vmatmul.f32.gmra.mxu0 %v153
  %v365 = vpop.f32.mrf.mxu0
  %v366 = vadd.f32 0.0, %v365
  %367 = vmatmul.f32.gmra.mxu0 %v156
  %v368 = vpop.f32.mrf.mxu0
  %v369 = vadd.f32 0.0, %v368
  %370 = vmatmul.f32.gmra.mxu0 %v159
  %v371 = vpop.f32.mrf.mxu0
  %v372 = vadd.f32 0.0, %v371
  %373 = vmatmul.f32.gmra.mxu0 %v162
  %v374 = vpop.f32.mrf.mxu0
  %v375 = vadd.f32 0.0, %v374
  %376 = vmatmul.f32.gmra.mxu0 %v165
  %v377 = vpop.f32.mrf.mxu0
  %v378 = vadd.f32 0.0, %v377
  %379 = vmatmul.f32.gmra.mxu0 %v168
  %v380 = vpop.f32.mrf.mxu0
  %v381 = vadd.f32 0.0, %v380
  %382 = vmatmul.f32.gmra.mxu0 %v171
  %v383 = vpop.f32.mrf.mxu0
  %v384 = vadd.f32 0.0, %v383
  %385 = vmatmul.f32.gmra.mxu0 %v174
  %v386 = vpop.f32.mrf.mxu0
  %v387 = vadd.f32 0.0, %v386
  %388 = vmatmul.f32.gmra.mxu0 %v177
  %v389 = vpop.f32.mrf.mxu0
  %v390 = vadd.f32 0.0, %v389
  %391 = vmatmul.f32.gmra.mxu0 %v180
  %v392 = vpop.f32.mrf.mxu0
  %v393 = vadd.f32 0.0, %v392
  %394 = vmatmul.f32.gmra.mxu0 %v183
  %v395 = vpop.f32.mrf.mxu0
  %v396 = vadd.f32 0.0, %v395
  %397 = vmatmul.f32.gmra.mxu0 %v186
  %v398 = vpop.f32.mrf.mxu0
  %v399 = vadd.f32 0.0, %v398
  %400 = vmatmul.f32.gmra.mxu0 %v189
  %v401 = vpop.f32.mrf.mxu0
  %v402 = vadd.f32 0.0, %v401
  %403 = vmatmul.f32.gmra.mxu0 %v192
  %v404 = vpop.f32.mrf.mxu0
  %v405 = vadd.f32 0.0, %v404
  %406 = vmatmul.f32.gmra.mxu0 %v195
  %v407 = vpop.f32.mrf.mxu0
  %v408 = vadd.f32 0.0, %v407
  %409 = vmatmul.f32.gmra.mxu0 %v198
  %v410 = vpop.f32.mrf.mxu0
  %v411 = vadd.f32 0.0, %v410
  %412 = vmatmul.f32.gmra.mxu0 %v201
  %v413 = vpop.f32.mrf.mxu0
  %v414 = vadd.f32 0.0, %v413
  %415 = vmatmul.f32.gmra.mxu0 %v204
  %v416 = vpop.f32.mrf.mxu0
  %v417 = vadd.f32 0.0, %v416
  %418 = vmatmul.f32.gmra.mxu0 %v207
  %v419 = vpop.f32.mrf.mxu0
  %v420 = vadd.f32 0.0, %v419
  %421 = vmatmul.f32.gmra.mxu0 %v210
  %v422 = vpop.f32.mrf.mxu0
  %v423 = vadd.f32 0.0, %v422
  %424 = vmatmul.f32.gmra.mxu0 %v213
  %v425 = vpop.f32.mrf.mxu0
  %v426 = vadd.f32 0.0, %v425
  %427 = vmatmul.f32.gmra.mxu0 %v216
  %v428 = vpop.f32.mrf.mxu0
  %v429 = vadd.f32 0.0, %v428
  %430 = vmatmul.f32.gmra.mxu0 %v219
  %v431 = vpop.f32.mrf.mxu0
  %v432 = vadd.f32 0.0, %v431
  %433 = vmatmul.f32.gmra.mxu0 %v222
  %v434 = vpop.f32.mrf.mxu0
  %v435 = vadd.f32 0.0, %v434
  %436 = vmatmul.f32.gmra.mxu0 %v225
  %v437 = vpop.f32.mrf.mxu0
  %v438 = vadd.f32 0.0, %v437
  %439 = vmatmul.f32.gmra.mxu0 %v228
  %v440 = vpop.f32.mrf.mxu0
  %v441 = vadd.f32 0.0, %v440
  %442 = vmatmul.f32.gmra.mxu0 %v231
  %v443 = vpop.f32.mrf.mxu0
  %v444 = vadd.f32 0.0, %v443
  %445 = vmatmul.f32.gmra.mxu0 %v234
  %v446 = vpop.f32.mrf.mxu0
  %v447 = vadd.f32 0.0, %v446
  %448 = vmatmul.f32.gmra.mxu0 %v237
  %v449 = vpop.f32.mrf.mxu0
  %v450 = vadd.f32 0.0, %v449
  %451 = vmatmul.f32.gmra.mxu0 %v240
  %v452 = vpop.f32.mrf.mxu0
  %v453 = vadd.f32 0.0, %v452
  %454 = vmatmul.f32.gmra.mxu0 %v243
  %v455 = vpop.f32.mrf.mxu0
  %v456 = vadd.f32 0.0, %v455
  %457 = vmatmul.f32.gmra.mxu0 %v246
  %v458 = vpop.f32.mrf.mxu0
  %v459 = vadd.f32 0.0, %v458
  %460 = vmatmul.f32.gmra.mxu0 %v249
  %v461 = vpop.f32.mrf.mxu0
  %v462 = vadd.f32 0.0, %v461
  %463 = vmatmul.f32.gmra.mxu0 %v252
  %v464 = vpop.f32.mrf.mxu0
  %v465 = vadd.f32 0.0, %v464
  %466 = vmatmul.f32.gmra.mxu0 %v255
  %v467 = vpop.f32.mrf.mxu0
  %v468 = vadd.f32 0.0, %v467
  %469 = vmatmul.f32.gmra.mxu0 %v258
  %v470 = vpop.f32.mrf.mxu0
  %v471 = vadd.f32 0.0, %v470
  %472 = vmatmul.f32.gmra.mxu0 %v261
  %v473 = vpop.f32.mrf.mxu0
  %v474 = vadd.f32 0.0, %v473
  %475 = vmatmul.f32.gmra.mxu0 %v264
  %v476 = vpop.f32.mrf.mxu0
  %v477 = vadd.f32 0.0, %v476
  %478 = vmatmul.f32.gmra.mxu0 %v267
  %v479 = vpop.f32.mrf.mxu0
  %v480 = vadd.f32 0.0, %v479
  %481 = vdwg.mxu0
  %482 = vst.msk [vmem:[%s2] sm:$0xff] %vm76, %v291
  %483 = vst.msk [vmem:[%s2 + $0x8] sm:$0xff] %vm76, %v294
  %484 = vst.msk [vmem:[%s2 + $0x10] sm:$0xff] %vm76, %v297
  %485 = vst.msk [vmem:[%s2 + $0x18] sm:$0xff] %vm76, %v300
  %486 = vst.msk [vmem:[%s2 + $0x20] sm:$0xff] %vm76, %v303
  %487 = vst.msk [vmem:[%s2 + $0x28] sm:$0xff] %vm76, %v306
  %488 = vst.msk [vmem:[%s2 + $0x30] sm:$0xff] %vm76, %v309
  %489 = vst.msk [vmem:[%s2 + $0x38] sm:$0xff] %vm76, %v312
  %490 = vst.msk [vmem:[%s2 + $0x40] sm:$0xff] %vm76, %v315
  %491 = vst.msk [vmem:[%s2 + $0x48] sm:$0xff] %vm76, %v318
  %492 = vst.msk [vmem:[%s2 + $0x50] sm:$0xff] %vm76, %v321
  %493 = vst.msk [vmem:[%s2 + $0x58] sm:$0xff] %vm76, %v324
  %494 = vst.msk [vmem:[%s2 + $0x60] sm:$0xff] %vm76, %v327
  %495 = vst.msk [vmem:[%s2 + $0x68] sm:$0xff] %vm76, %v330
  %496 = vst.msk [vmem:[%s2 + $0x70] sm:$0xff] %vm76, %v333
  %497 = vst.msk [vmem:[%s2 + $0x78] sm:$0xff] %vm76, %v336
  %498 = vst.msk [vmem:[%s2 + $0x80] sm:$0xff] %vm76, %v339
  %499 = vst.msk [vmem:[%s2 + $0x88] sm:$0xff] %vm76, %v342
  %500 = vst.msk [vmem:[%s2 + $0x90] sm:$0xff] %vm76, %v345
  %501 = vst.msk [vmem:[%s2 + $0x98] sm:$0xff] %vm76, %v348
  %502 = vst.msk [vmem:[%s2 + $0xa0] sm:$0xff] %vm76, %v351
  %503 = vst.msk [vmem:[%s2 + $0xa8] sm:$0xff] %vm76, %v354
  %504 = vst.msk [vmem:[%s2 + $0xb0] sm:$0xff] %vm76, %v357
  %505 = vst.msk [vmem:[%s2 + $0xb8] sm:$0xff] %vm76, %v360
  %506 = vst.msk [vmem:[%s2 + $0xc0] sm:$0xff] %vm76, %v363
  %507 = vst.msk [vmem:[%s2 + $0xc8] sm:$0xff] %vm76, %v366
  %508 = vst.msk [vmem:[%s2 + $0xd0] sm:$0xff] %vm76, %v369
  %509 = vst.msk [vmem:[%s2 + $0xd8] sm:$0xff] %vm76, %v372
  %510 = vst.msk [vmem:[%s2 + $0xe0] sm:$0xff] %vm76, %v375
  %511 = vst.msk [vmem:[%s2 + $0xe8] sm:$0xff] %vm76, %v378
  %512 = vst.msk [vmem:[%s2 + $0xf0] sm:$0xff] %vm76, %v381
  %513 = vst.msk [vmem:[%s2 + $0xf8] sm:$0xff] %vm76, %v384
  %514 = vst.msk [vmem:[%s2 + $0x100] sm:$0xff] %vm76, %v387
  %515 = vst.msk [vmem:[%s2 + $0x108] sm:$0xff] %vm76, %v390
  %516 = vst.msk [vmem:[%s2 + $0x110] sm:$0xff] %vm76, %v393
  %517 = vst.msk [vmem:[%s2 + $0x118] sm:$0xff] %vm76, %v396
  %518 = vst.msk [vmem:[%s2 + $0x120] sm:$0xff] %vm76, %v399
  %519 = vst.msk [vmem:[%s2 + $0x128] sm:$0xff] %vm76, %v402
  %520 = vst.msk [vmem:[%s2 + $0x130] sm:$0xff] %vm76, %v405
  %521 = vst.msk [vmem:[%s2 + $0x138] sm:$0xff] %vm76, %v408
  %522 = vst.msk [vmem:[%s2 + $0x140] sm:$0xff] %vm76, %v411
  %523 = vst.msk [vmem:[%s2 + $0x148] sm:$0xff] %vm76, %v414
  %524 = vst.msk [vmem:[%s2 + $0x150] sm:$0xff] %vm76, %v417
  %525 = vst.msk [vmem:[%s2 + $0x158] sm:$0xff] %vm76, %v420
  %526 = vst.msk [vmem:[%s2 + $0x160] sm:$0xff] %vm76, %v423
  %527 = vst.msk [vmem:[%s2 + $0x168] sm:$0xff] %vm76, %v426
  %528 = vst.msk [vmem:[%s2 + $0x170] sm:$0xff] %vm76, %v429
  %529 = vst.msk [vmem:[%s2 + $0x178] sm:$0xff] %vm76, %v432
  %530 = vst.msk [vmem:[%s2 + $0x180] sm:$0xff] %vm76, %v435
  %531 = vst.msk [vmem:[%s2 + $0x188] sm:$0xff] %vm76, %v438
  %532 = vst.msk [vmem:[%s2 + $0x190] sm:$0xff] %vm76, %v441
  %533 = vst.msk [vmem:[%s2 + $0x198] sm:$0xff] %vm76, %v444
  %534 = vst.msk [vmem:[%s2 + $0x1a0] sm:$0xff] %vm76, %v447
  %535 = vst.msk [vmem:[%s2 + $0x1a8] sm:$0xff] %vm76, %v450
  %536 = vst.msk [vmem:[%s2 + $0x1b0] sm:$0xff] %vm76, %v453
  %537 = vst.msk [vmem:[%s2 + $0x1b8] sm:$0xff] %vm76, %v456
  %538 = vst.msk [vmem:[%s2 + $0x1c0] sm:$0xff] %vm76, %v459
  %539 = vst.msk [vmem:[%s2 + $0x1c8] sm:$0xff] %vm76, %v462
  %540 = vst.msk [vmem:[%s2 + $0x1d0] sm:$0xff] %vm76, %v465
  %541 = vst.msk [vmem:[%s2 + $0x1d8] sm:$0xff] %vm76, %v468
  %542 = vst.msk [vmem:[%s2 + $0x1e0] sm:$0xff] %vm76, %v471
  %543 = vst.msk [vmem:[%s2 + $0x1e8] sm:$0xff] %vm76, %v474
  %544 = vst.msk [vmem:[%s2 + $0x1f0] sm:$0xff] %vm76, %v477
  %545 = vst.msk [vmem:[%s2 + $0x1f8] sm:$0xff] %vm76, %v480
  // Predicated region
  $region10: #{hv_lca_forward.15} parent=0 // pred_check
    _
  $region11: #{hv_lca_forward.15} parent=0 // pred_check_branch
    %547 = sbr.rel (0) target = $region13
  $region12: #{hv_lca_forward.15} parent=0 // pred_region
    _
  $region13: #{hv_lca_forward.15} parent=0 // pred_fallthru
    _
  // Predicated region
  $region14: #{hv_lca_forward.15} parent=0 // pred_check
    _
  $region15: #{hv_lca_forward.15} parent=0 // pred_check_branch
    %549 = sbr.rel (0) target = $region17
  $region16: #{hv_lca_forward.15} parent=0 // pred_region
    _
  $region17: #{hv_lca_forward.15} parent=0 // pred_fallthru
    _

// kernel: hv_lca_forward.13
$region0: #{hv_lca_forward.13}
  #allocation0 [shape = 'u32[]', space=smem, size = 0x4, offset = 0x4, fixed_abs, tag = 'smem constant byte address 0x4 - core index']
  #allocation1 [shape = 'u32[72,128]{1,0:T(1,128)}', space=vmem, size = 0x9000, scoped, tag = 'internal scratch']
  %s0 = inlined_call_operand.vmem [shape: f32[512,4], index: 0, kind: input, shape index: {}]
  %s1 = inlined_call_operand.vmem [shape: f32[1,4], index: 1, kind: input, shape index: {}]
  %s2 = inlined_call_operand.vmem [shape: f32[1,4], index: 2, kind: input, shape index: {}]
  %s3 = inlined_call_operand.vmem [shape: f32[512,4], index: 3, kind: output, shape index: {}]
  %s4 = sld [smem:[#allocation0]]
  $region22: #{hv_lca_forward.13} parent=0
    _
  %s6 = ssub.s32 1, %s4
  %s7 = scalar_select 0, %s6, %s4
  // Predicated region
  $region2: #{hv_lca_forward.13} parent=0 // pred_check
    _
  $region3: #{hv_lca_forward.13} parent=0 // pred_check_branch
    %9 = sbr.rel (0) target = $region5
  $region4: #{hv_lca_forward.13} parent=0 // pred_region
    _
  $region5: #{hv_lca_forward.13} parent=0 // pred_fallthru
    _
  // Predicated region
  $region6: #{hv_lca_forward.13} parent=0 // pred_check
    _
  $region7: #{hv_lca_forward.13} parent=0 // pred_check_branch
    %11 = sbr.rel (0) target = $region9
  $region8: #{hv_lca_forward.13} parent=0 // pred_region
    _
  $region9: #{hv_lca_forward.13} parent=0 // pred_fallthru
    _
  // Predicated region
  $region10: #{hv_lca_forward.13} parent=0 // pred_check
    _
  $region11: #{hv_lca_forward.13} parent=0 // pred_check_branch
    %13 = sbr.rel (0) target = $region13
  $region12: #{hv_lca_forward.13} parent=0 // pred_region
    _
  $region13: #{hv_lca_forward.13} parent=0 // pred_fallthru
    _
  %v14 = vld [vmem:[%s0] sm:$0xff]
  %v15 = vld [vmem:[%s0 + $0x8] sm:$0xff]
  %v16 = vld [vmem:[%s0 + $0x10] sm:$0xff]
  %v17 = vld [vmem:[%s0 + $0x18] sm:$0xff]
  %v18 = vld [vmem:[%s0 + $0x20] sm:$0xff]
  %v19 = vld [vmem:[%s0 + $0x28] sm:$0xff]
  %v20 = vld [vmem:[%s0 + $0x30] sm:$0xff]
  %v21 = vld [vmem:[%s0 + $0x38] sm:$0xff]
  %v22 = vld [vmem:[%s0 + $0x40] sm:$0xff]
  %v23 = vld [vmem:[%s0 + $0x48] sm:$0xff]
  %v24 = vld [vmem:[%s0 + $0x50] sm:$0xff]
  %v25 = vld [vmem:[%s0 + $0x58] sm:$0xff]
  %v26 = vld [vmem:[%s0 + $0x60] sm:$0xff]
  %v27 = vld [vmem:[%s0 + $0x68] sm:$0xff]
  %v28 = vld [vmem:[%s0 + $0x70] sm:$0xff]
  %v29 = vld [vmem:[%s0 + $0x78] sm:$0xff]
  %v30 = vld [vmem:[%s0 + $0x80] sm:$0xff]
  %v31 = vld [vmem:[%s0 + $0x88] sm:$0xff]
  %v32 = vld [vmem:[%s0 + $0x90] sm:$0xff]
  %v33 = vld [vmem:[%s0 + $0x98] sm:$0xff]
  %v34 = vld [vmem:[%s0 + $0xa0] sm:$0xff]
  %v35 = vld [vmem:[%s0 + $0xa8] sm:$0xff]
  %v36 = vld [vmem:[%s0 + $0xb0] sm:$0xff]
  %v37 = vld [vmem:[%s0 + $0xb8] sm:$0xff]
  %v38 = vld [vmem:[%s0 + $0xc0] sm:$0xff]
  %v39 = vld [vmem:[%s0 + $0xc8] sm:$0xff]
  %v40 = vld [vmem:[%s0 + $0xd0] sm:$0xff]
  %v41 = vld [vmem:[%s0 + $0xd8] sm:$0xff]
  %v42 = vld [vmem:[%s0 + $0xe0] sm:$0xff]
  %v43 = vld [vmem:[%s0 + $0xe8] sm:$0xff]
  %v44 = vld [vmem:[%s0 + $0xf0] sm:$0xff]
  %v45 = vld [vmem:[%s0 + $0xf8] sm:$0xff]
  %v46 = vld [vmem:[%s0 + $0x100] sm:$0xff]
  %v47 = vld [vmem:[%s0 + $0x108] sm:$0xff]
  %v48 = vld [vmem:[%s0 + $0x110] sm:$0xff]
  %v49 = vld [vmem:[%s0 + $0x118] sm:$0xff]
  %v50 = vld [vmem:[%s0 + $0x120] sm:$0xff]
  %v51 = vld [vmem:[%s0 + $0x128] sm:$0xff]
  %v52 = vld [vmem:[%s0 + $0x130] sm:$0xff]
  %v53 = vld [vmem:[%s0 + $0x138] sm:$0xff]
  %v54 = vld [vmem:[%s0 + $0x140] sm:$0xff]
  %v55 = vld [vmem:[%s0 + $0x148] sm:$0xff]
  %v56 = vld [vmem:[%s0 + $0x150] sm:$0xff]
  %v57 = vld [vmem:[%s0 + $0x158] sm:$0xff]
  %v58 = vld [vmem:[%s0 + $0x160] sm:$0xff]
  %v59 = vld [vmem:[%s0 + $0x168] sm:$0xff]
  %v60 = vld [vmem:[%s0 + $0x170] sm:$0xff]
  %v61 = vld [vmem:[%s0 + $0x178] sm:$0xff]
  %v62 = vld [vmem:[%s0 + $0x180] sm:$0xff]
  %v63 = vld [vmem:[%s0 + $0x188] sm:$0xff]
  %v64 = vld [vmem:[%s0 + $0x190] sm:$0xff]
  %v65 = vld [vmem:[%s0 + $0x198] sm:$0xff]
  %v66 = vld [vmem:[%s0 + $0x1a0] sm:$0xff]
  %v67 = vld [vmem:[%s0 + $0x1a8] sm:$0xff]
  %v68 = vld [vmem:[%s0 + $0x1b0] sm:$0xff]
  %v69 = vld [vmem:[%s0 + $0x1b8] sm:$0xff]
  %v70 = vld [vmem:[%s0 + $0x1c0] sm:$0xff]
  %v71 = vld [vmem:[%s0 + $0x1c8] sm:$0xff]
  %v72 = vld [vmem:[%s0 + $0x1d0] sm:$0xff]
  %v73 = vld [vmem:[%s0 + $0x1d8] sm:$0xff]
  %v74 = vld [vmem:[%s0 + $0x1e0] sm:$0xff]
  %v75 = vld [vmem:[%s0 + $0x1e8] sm:$0xff]
  %v76 = vld [vmem:[%s0 + $0x1f0] sm:$0xff]
  %v77 = vld [vmem:[%s0 + $0x1f8] sm:$0xff]
  %vm78 = vcmask 31744
  %v79 = vsel %vm78, %v14, 0.0
  %80 = vadd.xlane.f32.xlu0 %v79
  %v81 = vpop.xlane.xlu0 %80
  %v82 = vsel %vm78, %v15, 0.0
  %83 = vadd.xlane.f32.xlu0 %v82
  %v84 = vpop.xlane.xlu0 %83
  %v85 = vsel %vm78, %v16, 0.0
  %86 = vadd.xlane.f32.xlu0 %v85
  %v87 = vpop.xlane.xlu0 %86
  %v88 = vsel %vm78, %v17, 0.0
  %89 = vadd.xlane.f32.xlu0 %v88
  %v90 = vpop.xlane.xlu0 %89
  %v91 = vsel %vm78, %v18, 0.0
  %92 = vadd.xlane.f32.xlu0 %v91
  %v93 = vpop.xlane.xlu0 %92
  %v94 = vsel %vm78, %v19, 0.0
  %95 = vadd.xlane.f32.xlu0 %v94
  %v96 = vpop.xlane.xlu0 %95
  %v97 = vsel %vm78, %v20, 0.0
  %98 = vadd.xlane.f32.xlu0 %v97
  %v99 = vpop.xlane.xlu0 %98
  %v100 = vsel %vm78, %v21, 0.0
  %101 = vadd.xlane.f32.xlu0 %v100
  %v102 = vpop.xlane.xlu0 %101
  %v103 = vsel %vm78, %v22, 0.0
  %104 = vadd.xlane.f32.xlu0 %v103
  %v105 = vpop.xlane.xlu0 %104
  %v106 = vsel %vm78, %v23, 0.0
  %107 = vadd.xlane.f32.xlu0 %v106
  %v108 = vpop.xlane.xlu0 %107
  %v109 = vsel %vm78, %v24, 0.0
  %110 = vadd.xlane.f32.xlu0 %v109
  %v111 = vpop.xlane.xlu0 %110
  %v112 = vsel %vm78, %v25, 0.0
  %113 = vadd.xlane.f32.xlu0 %v112
  %v114 = vpop.xlane.xlu0 %113
  %v115 = vsel %vm78, %v26, 0.0
  %116 = vadd.xlane.f32.xlu0 %v115
  %v117 = vpop.xlane.xlu0 %116
  %v118 = vsel %vm78, %v27, 0.0
  %119 = vadd.xlane.f32.xlu0 %v118
  %v120 = vpop.xlane.xlu0 %119
  %v121 = vsel %vm78, %v28, 0.0
  %122 = vadd.xlane.f32.xlu0 %v121
  %v123 = vpop.xlane.xlu0 %122
  %v124 = vsel %vm78, %v29, 0.0
  %125 = vadd.xlane.f32.xlu0 %v124
  %v126 = vpop.xlane.xlu0 %125
  %v127 = vsel %vm78, %v30, 0.0
  %128 = vadd.xlane.f32.xlu0 %v127
  %v129 = vpop.xlane.xlu0 %128
  %v130 = vsel %vm78, %v31, 0.0
  %131 = vadd.xlane.f32.xlu0 %v130
  %v132 = vpop.xlane.xlu0 %131
  %v133 = vsel %vm78, %v32, 0.0
  %134 = vadd.xlane.f32.xlu0 %v133
  %v135 = vpop.xlane.xlu0 %134
  %v136 = vsel %vm78, %v33, 0.0
  %137 = vadd.xlane.f32.xlu0 %v136
  %v138 = vpop.xlane.xlu0 %137
  %v139 = vsel %vm78, %v34, 0.0
  %140 = vadd.xlane.f32.xlu0 %v139
  %v141 = vpop.xlane.xlu0 %140
  %v142 = vsel %vm78, %v35, 0.0
  %143 = vadd.xlane.f32.xlu0 %v142
  %v144 = vpop.xlane.xlu0 %143
  %v145 = vsel %vm78, %v36, 0.0
  %146 = vadd.xlane.f32.xlu0 %v145
  %v147 = vpop.xlane.xlu0 %146
  %v148 = vsel %vm78, %v37, 0.0
  %149 = vadd.xlane.f32.xlu0 %v148
  %v150 = vpop.xlane.xlu0 %149
  %v151 = vsel %vm78, %v38, 0.0
  %152 = vadd.xlane.f32.xlu0 %v151
  %v153 = vpop.xlane.xlu0 %152
  %v154 = vsel %vm78, %v39, 0.0
  %155 = vadd.xlane.f32.xlu0 %v154
  %v156 = vpop.xlane.xlu0 %155
  %v157 = vsel %vm78, %v40, 0.0
  %158 = vadd.xlane.f32.xlu0 %v157
  %v159 = vpop.xlane.xlu0 %158
  %v160 = vsel %vm78, %v41, 0.0
  %161 = vadd.xlane.f32.xlu0 %v160
  %v162 = vpop.xlane.xlu0 %161
  %v163 = vsel %vm78, %v42, 0.0
  %164 = vadd.xlane.f32.xlu0 %v163
  %v165 = vpop.xlane.xlu0 %164
  %v166 = vsel %vm78, %v43, 0.0
  %167 = vadd.xlane.f32.xlu0 %v166
  %v168 = vpop.xlane.xlu0 %167
  %v169 = vsel %vm78, %v44, 0.0
  %170 = vadd.xlane.f32.xlu0 %v169
  %v171 = vpop.xlane.xlu0 %170
  %v172 = vsel %vm78, %v45, 0.0
  %173 = vadd.xlane.f32.xlu0 %v172
  %v174 = vpop.xlane.xlu0 %173
  %v175 = vsel %vm78, %v46, 0.0
  %176 = vadd.xlane.f32.xlu0 %v175
  %v177 = vpop.xlane.xlu0 %176
  %v178 = vsel %vm78, %v47, 0.0
  %179 = vadd.xlane.f32.xlu0 %v178
  %v180 = vpop.xlane.xlu0 %179
  %v181 = vsel %vm78, %v48, 0.0
  %182 = vadd.xlane.f32.xlu0 %v181
  %v183 = vpop.xlane.xlu0 %182
  %v184 = vsel %vm78, %v49, 0.0
  %185 = vadd.xlane.f32.xlu0 %v184
  %v186 = vpop.xlane.xlu0 %185
  %v187 = vsel %vm78, %v50, 0.0
  %188 = vadd.xlane.f32.xlu0 %v187
  %v189 = vpop.xlane.xlu0 %188
  %v190 = vsel %vm78, %v51, 0.0
  %191 = vadd.xlane.f32.xlu0 %v190
  %v192 = vpop.xlane.xlu0 %191
  %v193 = vsel %vm78, %v52, 0.0
  %194 = vadd.xlane.f32.xlu0 %v193
  %v195 = vpop.xlane.xlu0 %194
  %v196 = vsel %vm78, %v53, 0.0
  %197 = vadd.xlane.f32.xlu0 %v196
  %v198 = vpop.xlane.xlu0 %197
  %v199 = vsel %vm78, %v54, 0.0
  %200 = vadd.xlane.f32.xlu0 %v199
  %v201 = vpop.xlane.xlu0 %200
  %v202 = vsel %vm78, %v55, 0.0
  %203 = vadd.xlane.f32.xlu0 %v202
  %v204 = vpop.xlane.xlu0 %203
  %v205 = vsel %vm78, %v56, 0.0
  %206 = vadd.xlane.f32.xlu0 %v205
  %v207 = vpop.xlane.xlu0 %206
  %v208 = vsel %vm78, %v57, 0.0
  %209 = vadd.xlane.f32.xlu0 %v208
  %v210 = vpop.xlane.xlu0 %209
  %v211 = vsel %vm78, %v58, 0.0
  %212 = vadd.xlane.f32.xlu0 %v211
  %v213 = vpop.xlane.xlu0 %212
  %v214 = vsel %vm78, %v59, 0.0
  %215 = vadd.xlane.f32.xlu0 %v214
  %v216 = vpop.xlane.xlu0 %215
  %v217 = vsel %vm78, %v60, 0.0
  %218 = vadd.xlane.f32.xlu0 %v217
  %v219 = vpop.xlane.xlu0 %218
  %v220 = vsel %vm78, %v61, 0.0
  %221 = vadd.xlane.f32.xlu0 %v220
  %v222 = vpop.xlane.xlu0 %221
  %v223 = vsel %vm78, %v62, 0.0
  %224 = vadd.xlane.f32.xlu0 %v223
  %v225 = vpop.xlane.xlu0 %224
  %v226 = vsel %vm78, %v63, 0.0
  %227 = vadd.xlane.f32.xlu0 %v226
  %v228 = vpop.xlane.xlu0 %227
  %v229 = vsel %vm78, %v64, 0.0
  %230 = vadd.xlane.f32.xlu0 %v229
  %v231 = vpop.xlane.xlu0 %230
  %v232 = vsel %vm78, %v65, 0.0
  %233 = vadd.xlane.f32.xlu0 %v232
  %v234 = vpop.xlane.xlu0 %233
  %v235 = vsel %vm78, %v66, 0.0
  %236 = vadd.xlane.f32.xlu0 %v235
  %v237 = vpop.xlane.xlu0 %236
  %v238 = vsel %vm78, %v67, 0.0
  %239 = vadd.xlane.f32.xlu0 %v238
  %v240 = vpop.xlane.xlu0 %239
  %v241 = vsel %vm78, %v68, 0.0
  %242 = vadd.xlane.f32.xlu0 %v241
  %v243 = vpop.xlane.xlu0 %242
  %v244 = vsel %vm78, %v69, 0.0
  %245 = vadd.xlane.f32.xlu0 %v244
  %v246 = vpop.xlane.xlu0 %245
  %v247 = vsel %vm78, %v70, 0.0
  %248 = vadd.xlane.f32.xlu0 %v247
  %v249 = vpop.xlane.xlu0 %248
  %v250 = vsel %vm78, %v71, 0.0
  %251 = vadd.xlane.f32.xlu0 %v250
  %v252 = vpop.xlane.xlu0 %251
  %v253 = vsel %vm78, %v72, 0.0
  %254 = vadd.xlane.f32.xlu0 %v253
  %v255 = vpop.xlane.xlu0 %254
  %v256 = vsel %vm78, %v73, 0.0
  %257 = vadd.xlane.f32.xlu0 %v256
  %v258 = vpop.xlane.xlu0 %257
  %v259 = vsel %vm78, %v74, 0.0
  %260 = vadd.xlane.f32.xlu0 %v259
  %v261 = vpop.xlane.xlu0 %260
  %v262 = vsel %vm78, %v75, 0.0
  %263 = vadd.xlane.f32.xlu0 %v262
  %v264 = vpop.xlane.xlu0 %263
  %v265 = vsel %vm78, %v76, 0.0
  %266 = vadd.xlane.f32.xlu0 %v265
  %v267 = vpop.xlane.xlu0 %266
  %v268 = vsel %vm78, %v77, 0.0
  %269 = vadd.xlane.f32.xlu0 %v268
  %v270 = vpop.xlane.xlu0 %269
  %v271 = vrcp.pop 4.0
  %v272 = vmul.f32 4.0, %v271
  %v273 = vsub.f32 1.0, %v272
  %v274 = vmul.f32 %v271, %v273
  %v275 = vadd.f32 %v271, %v274
  %vm276 = vweird.f32 %v271
  %v277 = vsel %vm276, %v271, %v275
  %v278 = vmul.f32 %v81, %v277
  %v279 = vmul.f32 %v84, %v277
  %v280 = vmul.f32 %v87, %v277
  %v281 = vmul.f32 %v90, %v277
  %v282 = vmul.f32 %v93, %v277
  %v283 = vmul.f32 %v96, %v277
  %v284 = vmul.f32 %v99, %v277
  %v285 = vmul.f32 %v102, %v277
  %v286 = vmul.f32 %v105, %v277
  %v287 = vmul.f32 %v108, %v277
  %v288 = vmul.f32 %v111, %v277
  %v289 = vmul.f32 %v114, %v277
  %v290 = vmul.f32 %v117, %v277
  %v291 = vmul.f32 %v120, %v277
  %v292 = vmul.f32 %v123, %v277
  %v293 = vmul.f32 %v126, %v277
  %v294 = vmul.f32 %v129, %v277
  %v295 = vmul.f32 %v132, %v277
  %v296 = vmul.f32 %v135, %v277
  %v297 = vmul.f32 %v138, %v277
  %v298 = vmul.f32 %v141, %v277
  %v299 = vmul.f32 %v144, %v277
  %v300 = vmul.f32 %v147, %v277
  %v301 = vmul.f32 %v150, %v277
  %v302 = vmul.f32 %v153, %v277
  %v303 = vmul.f32 %v156, %v277
  %v304 = vmul.f32 %v159, %v277
  %v305 = vmul.f32 %v162, %v277
  %v306 = vmul.f32 %v165, %v277
  %v307 = vmul.f32 %v168, %v277
  %v308 = vmul.f32 %v171, %v277
  %v309 = vmul.f32 %v174, %v277
  %v310 = vmul.f32 %v177, %v277
  %v311 = vmul.f32 %v180, %v277
  %v312 = vmul.f32 %v183, %v277
  %v313 = vmul.f32 %v186, %v277
  %v314 = vmul.f32 %v189, %v277
  %v315 = vmul.f32 %v192, %v277
  %v316 = vmul.f32 %v195, %v277
  %v317 = vmul.f32 %v198, %v277
  %v318 = vmul.f32 %v201, %v277
  %v319 = vmul.f32 %v204, %v277
  %v320 = vmul.f32 %v207, %v277
  %v321 = vmul.f32 %v210, %v277
  %v322 = vmul.f32 %v213, %v277
  %v323 = vmul.f32 %v216, %v277
  %v324 = vmul.f32 %v219, %v277
  %v325 = vmul.f32 %v222, %v277
  %v326 = vmul.f32 %v225, %v277
  %v327 = vmul.f32 %v228, %v277
  %v328 = vmul.f32 %v231, %v277
  %v329 = vmul.f32 %v234, %v277
  %v330 = vmul.f32 %v237, %v277
  %v331 = vmul.f32 %v240, %v277
  %v332 = vmul.f32 %v243, %v277
  %v333 = vmul.f32 %v246, %v277
  %v334 = vmul.f32 %v249, %v277
  %v335 = vmul.f32 %v252, %v277
  %v336 = vmul.f32 %v255, %v277
  %v337 = vmul.f32 %v258, %v277
  %v338 = vmul.f32 %v261, %v277
  %v339 = vmul.f32 %v264, %v277
  %v340 = vmul.f32 %v267, %v277
  %v341 = vmul.f32 %v270, %v277
  %v342 = vsub.f32 %v14, %v278
  %v343 = vsub.f32 %v15, %v279
  %v344 = vsub.f32 %v16, %v280
  %v345 = vsub.f32 %v17, %v281
  %v346 = vsub.f32 %v18, %v282
  %v347 = vsub.f32 %v19, %v283
  %v348 = vsub.f32 %v20, %v284
  %v349 = vsub.f32 %v21, %v285
  %v350 = vsub.f32 %v22, %v286
  %v351 = vsub.f32 %v23, %v287
  %v352 = vsub.f32 %v24, %v288
  %v353 = vsub.f32 %v25, %v289
  %v354 = vsub.f32 %v26, %v290
  %v355 = vsub.f32 %v27, %v291
  %v356 = vsub.f32 %v28, %v292
  %v357 = vsub.f32 %v29, %v293
  %v358 = vsub.f32 %v30, %v294
  %v359 = vsub.f32 %v31, %v295
  %v360 = vsub.f32 %v32, %v296
  %v361 = vsub.f32 %v33, %v297
  %v362 = vsub.f32 %v34, %v298
  %v363 = vsub.f32 %v35, %v299
  %v364 = vsub.f32 %v36, %v300
  %v365 = vsub.f32 %v37, %v301
  %v366 = vsub.f32 %v38, %v302
  %v367 = vsub.f32 %v39, %v303
  %v368 = vsub.f32 %v40, %v304
  %v369 = vsub.f32 %v41, %v305
  %v370 = vsub.f32 %v42, %v306
  %v371 = vsub.f32 %v43, %v307
  %v372 = vsub.f32 %v44, %v308
  %v373 = vsub.f32 %v45, %v309
  %v374 = vsub.f32 %v46, %v310
  %v375 = vsub.f32 %v47, %v311
  %v376 = vsub.f32 %v48, %v312
  %v377 = vsub.f32 %v49, %v313
  %v378 = vsub.f32 %v50, %v314
  %v379 = vsub.f32 %v51, %v315
  %v380 = vsub.f32 %v52, %v316
  %v381 = vsub.f32 %v53, %v317
  %v382 = vsub.f32 %v54, %v318
  %v383 = vsub.f32 %v55, %v319
  %v384 = vsub.f32 %v56, %v320
  %v385 = vsub.f32 %v57, %v321
  %v386 = vsub.f32 %v58, %v322
  %v387 = vsub.f32 %v59, %v323
  %v388 = vsub.f32 %v60, %v324
  %v389 = vsub.f32 %v61, %v325
  %v390 = vsub.f32 %v62, %v326
  %v391 = vsub.f32 %v63, %v327
  %v392 = vsub.f32 %v64, %v328
  %v393 = vsub.f32 %v65, %v329
  %v394 = vsub.f32 %v66, %v330
  %v395 = vsub.f32 %v67, %v331
  %v396 = vsub.f32 %v68, %v332
  %v397 = vsub.f32 %v69, %v333
  %v398 = vsub.f32 %v70, %v334
  %v399 = vsub.f32 %v71, %v335
  %v400 = vsub.f32 %v72, %v336
  %v401 = vsub.f32 %v73, %v337
  %v402 = vsub.f32 %v74, %v338
  %v403 = vsub.f32 %v75, %v339
  %v404 = vsub.f32 %v76, %v340
  %v405 = vsub.f32 %v77, %v341
  %v406 = vmul.f32 %v342, %v342
  %v407 = vmul.f32 %v343, %v343
  %v408 = vmul.f32 %v344, %v344
  %v409 = vmul.f32 %v345, %v345
  %v410 = vmul.f32 %v346, %v346
  %v411 = vmul.f32 %v347, %v347
  %v412 = vmul.f32 %v348, %v348
  %v413 = vmul.f32 %v349, %v349
  %v414 = vmul.f32 %v350, %v350
  %v415 = vmul.f32 %v351, %v351
  %v416 = vmul.f32 %v352, %v352
  %v417 = vmul.f32 %v353, %v353
  %v418 = vmul.f32 %v354, %v354
  %v419 = vmul.f32 %v355, %v355
  %v420 = vmul.f32 %v356, %v356
  %v421 = vmul.f32 %v357, %v357
  %v422 = vmul.f32 %v358, %v358
  %v423 = vmul.f32 %v359, %v359
  %v424 = vmul.f32 %v360, %v360
  %v425 = vmul.f32 %v361, %v361
  %v426 = vmul.f32 %v362, %v362
  %v427 = vmul.f32 %v363, %v363
  %v428 = vmul.f32 %v364, %v364
  %v429 = vmul.f32 %v365, %v365
  %v430 = vmul.f32 %v366, %v366
  %v431 = vmul.f32 %v367, %v367
  %v432 = vmul.f32 %v368, %v368
  %v433 = vmul.f32 %v369, %v369
  %v434 = vmul.f32 %v370, %v370
  %v435 = vmul.f32 %v371, %v371
  %v436 = vmul.f32 %v372, %v372
  %v437 = vmul.f32 %v373, %v373
  %v438 = vmul.f32 %v374, %v374
  %v439 = vmul.f32 %v375, %v375
  %v440 = vmul.f32 %v376, %v376
  %v441 = vmul.f32 %v377, %v377
  %v442 = vmul.f32 %v378, %v378
  %v443 = vmul.f32 %v379, %v379
  %v444 = vmul.f32 %v380, %v380
  %v445 = vmul.f32 %v381, %v381
  %v446 = vmul.f32 %v382, %v382
  %v447 = vmul.f32 %v383, %v383
  %v448 = vmul.f32 %v384, %v384
  %v449 = vmul.f32 %v385, %v385
  %v450 = vmul.f32 %v386, %v386
  %v451 = vmul.f32 %v387, %v387
  %v452 = vmul.f32 %v388, %v388
  %v453 = vmul.f32 %v389, %v389
  %v454 = vmul.f32 %v390, %v390
  %v455 = vmul.f32 %v391, %v391
  %v456 = vmul.f32 %v392, %v392
  %v457 = vmul.f32 %v393, %v393
  %v458 = vmul.f32 %v394, %v394
  %v459 = vmul.f32 %v395, %v395
  %v460 = vmul.f32 %v396, %v396
  %v461 = vmul.f32 %v397, %v397
  %v462 = vmul.f32 %v398, %v398
  %v463 = vmul.f32 %v399, %v399
  %v464 = vmul.f32 %v400, %v400
  %v465 = vmul.f32 %v401, %v401
  %v466 = vmul.f32 %v402, %v402
  %v467 = vmul.f32 %v403, %v403
  %v468 = vmul.f32 %v404, %v404
  %v469 = vmul.f32 %v405, %v405
  %v470 = vsel %vm78, %v406, 0.0
  %471 = vadd.xlane.f32.xlu0 %v470
  %v472 = vpop.xlane.xlu0 %471
  %v473 = vsel %vm78, %v407, 0.0
  %474 = vadd.xlane.f32.xlu0 %v473
  %v475 = vpop.xlane.xlu0 %474
  %v476 = vsel %vm78, %v408, 0.0
  %477 = vadd.xlane.f32.xlu0 %v476
  %v478 = vpop.xlane.xlu0 %477
  %v479 = vsel %vm78, %v409, 0.0
  %480 = vadd.xlane.f32.xlu0 %v479
  %v481 = vpop.xlane.xlu0 %480
  %v482 = vsel %vm78, %v410, 0.0
  %483 = vadd.xlane.f32.xlu0 %v482
  %v484 = vpop.xlane.xlu0 %483
  %v485 = vsel %vm78, %v411, 0.0
  %486 = vadd.xlane.f32.xlu0 %v485
  %v487 = vpop.xlane.xlu0 %486
  %v488 = vsel %vm78, %v412, 0.0
  %489 = vadd.xlane.f32.xlu0 %v488
  %v490 = vpop.xlane.xlu0 %489
  %v491 = vsel %vm78, %v413, 0.0
  %492 = vadd.xlane.f32.xlu0 %v491
  %v493 = vpop.xlane.xlu0 %492
  %v494 = vsel %vm78, %v414, 0.0
  %495 = vadd.xlane.f32.xlu0 %v494
  %v496 = vpop.xlane.xlu0 %495
  %v497 = vsel %vm78, %v415, 0.0
  %498 = vadd.xlane.f32.xlu0 %v497
  %v499 = vpop.xlane.xlu0 %498
  %v500 = vsel %vm78, %v416, 0.0
  %501 = vadd.xlane.f32.xlu0 %v500
  %v502 = vpop.xlane.xlu0 %501
  %v503 = vsel %vm78, %v417, 0.0
  %504 = vadd.xlane.f32.xlu0 %v503
  %v505 = vpop.xlane.xlu0 %504
  %v506 = vsel %vm78, %v418, 0.0
  %507 = vadd.xlane.f32.xlu0 %v506
  %v508 = vpop.xlane.xlu0 %507
  %v509 = vsel %vm78, %v419, 0.0
  %510 = vadd.xlane.f32.xlu0 %v509
  %v511 = vpop.xlane.xlu0 %510
  %v512 = vsel %vm78, %v420, 0.0
  %513 = vadd.xlane.f32.xlu0 %v512
  %v514 = vpop.xlane.xlu0 %513
  %v515 = vsel %vm78, %v421, 0.0
  %516 = vadd.xlane.f32.xlu0 %v515
  %v517 = vpop.xlane.xlu0 %516
  %v518 = vsel %vm78, %v422, 0.0
  %519 = vadd.xlane.f32.xlu0 %v518
  %v520 = vpop.xlane.xlu0 %519
  %v521 = vsel %vm78, %v423, 0.0
  %522 = vadd.xlane.f32.xlu0 %v521
  %v523 = vpop.xlane.xlu0 %522
  %v524 = vsel %vm78, %v424, 0.0
  %525 = vadd.xlane.f32.xlu0 %v524
  %v526 = vpop.xlane.xlu0 %525
  %v527 = vsel %vm78, %v425, 0.0
  %528 = vadd.xlane.f32.xlu0 %v527
  %v529 = vpop.xlane.xlu0 %528
  %v530 = vsel %vm78, %v426, 0.0
  %531 = vadd.xlane.f32.xlu0 %v530
  %v532 = vpop.xlane.xlu0 %531
  %v533 = vsel %vm78, %v427, 0.0
  %534 = vadd.xlane.f32.xlu0 %v533
  %v535 = vpop.xlane.xlu0 %534
  %v536 = vsel %vm78, %v428, 0.0
  %537 = vadd.xlane.f32.xlu0 %v536
  %v538 = vpop.xlane.xlu0 %537
  %v539 = vsel %vm78, %v429, 0.0
  %540 = vadd.xlane.f32.xlu0 %v539
  %v541 = vpop.xlane.xlu0 %540
  %v542 = vsel %vm78, %v430, 0.0
  %543 = vadd.xlane.f32.xlu0 %v542
  %v544 = vpop.xlane.xlu0 %543
  %v545 = vsel %vm78, %v431, 0.0
  %546 = vadd.xlane.f32.xlu0 %v545
  %v547 = vpop.xlane.xlu0 %546
  %v548 = vsel %vm78, %v432, 0.0
  %549 = vadd.xlane.f32.xlu0 %v548
  %v550 = vpop.xlane.xlu0 %549
  %v551 = vsel %vm78, %v433, 0.0
  %552 = vadd.xlane.f32.xlu0 %v551
  %v553 = vpop.xlane.xlu0 %552
  %v554 = vsel %vm78, %v434, 0.0
  %555 = vadd.xlane.f32.xlu0 %v554
  %v556 = vpop.xlane.xlu0 %555
  %v557 = vsel %vm78, %v435, 0.0
  %558 = vadd.xlane.f32.xlu0 %v557
  %v559 = vpop.xlane.xlu0 %558
  %v560 = vsel %vm78, %v436, 0.0
  %561 = vadd.xlane.f32.xlu0 %v560
  %v562 = vpop.xlane.xlu0 %561
  %v563 = vsel %vm78, %v437, 0.0
  %564 = vadd.xlane.f32.xlu0 %v563
  %v565 = vpop.xlane.xlu0 %564
  %v566 = vsel %vm78, %v438, 0.0
  %567 = vadd.xlane.f32.xlu0 %v566
  %v568 = vpop.xlane.xlu0 %567
  %v569 = vsel %vm78, %v439, 0.0
  %570 = vadd.xlane.f32.xlu0 %v569
  %v571 = vpop.xlane.xlu0 %570
  %v572 = vsel %vm78, %v440, 0.0
  %573 = vadd.xlane.f32.xlu0 %v572
  %v574 = vpop.xlane.xlu0 %573
  %v575 = vsel %vm78, %v441, 0.0
  %576 = vadd.xlane.f32.xlu0 %v575
  %v577 = vpop.xlane.xlu0 %576
  %v578 = vsel %vm78, %v442, 0.0
  %579 = vadd.xlane.f32.xlu0 %v578
  %v580 = vpop.xlane.xlu0 %579
  %v581 = vsel %vm78, %v443, 0.0
  %582 = vadd.xlane.f32.xlu0 %v581
  %v583 = vpop.xlane.xlu0 %582
  %v584 = vsel %vm78, %v444, 0.0
  %585 = vadd.xlane.f32.xlu0 %v584
  %v586 = vpop.xlane.xlu0 %585
  %v587 = vsel %vm78, %v445, 0.0
  %588 = vadd.xlane.f32.xlu0 %v587
  %v589 = vpop.xlane.xlu0 %588
  %v590 = vsel %vm78, %v446, 0.0
  %591 = vadd.xlane.f32.xlu0 %v590
  %v592 = vpop.xlane.xlu0 %591
  %v593 = vsel %vm78, %v447, 0.0
  %594 = vadd.xlane.f32.xlu0 %v593
  %v595 = vpop.xlane.xlu0 %594
  %v596 = vsel %vm78, %v448, 0.0
  %597 = vadd.xlane.f32.xlu0 %v596
  %v598 = vpop.xlane.xlu0 %597
  %v599 = vsel %vm78, %v449, 0.0
  %600 = vadd.xlane.f32.xlu0 %v599
  %v601 = vpop.xlane.xlu0 %600
  %v602 = vsel %vm78, %v450, 0.0
  %603 = vadd.xlane.f32.xlu0 %v602
  %v604 = vpop.xlane.xlu0 %603
  %v605 = vsel %vm78, %v451, 0.0
  %606 = vadd.xlane.f32.xlu0 %v605
  %v607 = vpop.xlane.xlu0 %606
  %v608 = vsel %vm78, %v452, 0.0
  %609 = vadd.xlane.f32.xlu0 %v608
  %v610 = vpop.xlane.xlu0 %609
  %v611 = vsel %vm78, %v453, 0.0
  %612 = vadd.xlane.f32.xlu0 %v611
  %v613 = vpop.xlane.xlu0 %612
  %v614 = vsel %vm78, %v454, 0.0
  %615 = vadd.xlane.f32.xlu0 %v614
  %v616 = vpop.xlane.xlu0 %615
  %v617 = vsel %vm78, %v455, 0.0
  %618 = vadd.xlane.f32.xlu0 %v617
  %v619 = vpop.xlane.xlu0 %618
  %v620 = vsel %vm78, %v456, 0.0
  %621 = vadd.xlane.f32.xlu0 %v620
  %v622 = vpop.xlane.xlu0 %621
  %v623 = vsel %vm78, %v457, 0.0
  %624 = vadd.xlane.f32.xlu0 %v623
  %v625 = vpop.xlane.xlu0 %624
  %v626 = vsel %vm78, %v458, 0.0
  %627 = vadd.xlane.f32.xlu0 %v626
  %v628 = vpop.xlane.xlu0 %627
  %v629 = vsel %vm78, %v459, 0.0
  %630 = vadd.xlane.f32.xlu0 %v629
  %v631 = vpop.xlane.xlu0 %630
  %v632 = vsel %vm78, %v460, 0.0
  %633 = vadd.xlane.f32.xlu0 %v632
  %v634 = vpop.xlane.xlu0 %633
  %v635 = vsel %vm78, %v461, 0.0
  %636 = vadd.xlane.f32.xlu0 %v635
  %v637 = vpop.xlane.xlu0 %636
  %v638 = vsel %vm78, %v462, 0.0
  %639 = vadd.xlane.f32.xlu0 %v638
  %v640 = vpop.xlane.xlu0 %639
  %v641 = vsel %vm78, %v463, 0.0
  %642 = vadd.xlane.f32.xlu0 %v641
  %v643 = vpop.xlane.xlu0 %642
  %v644 = vsel %vm78, %v464, 0.0
  %645 = vadd.xlane.f32.xlu0 %v644
  %v646 = vpop.xlane.xlu0 %645
  %v647 = vsel %vm78, %v465, 0.0
  %648 = vadd.xlane.f32.xlu0 %v647
  %v649 = vpop.xlane.xlu0 %648
  %v650 = vsel %vm78, %v466, 0.0
  %651 = vadd.xlane.f32.xlu0 %v650
  %v652 = vpop.xlane.xlu0 %651
  %v653 = vsel %vm78, %v467, 0.0
  %654 = vadd.xlane.f32.xlu0 %v653
  %v655 = vpop.xlane.xlu0 %654
  %v656 = vsel %vm78, %v468, 0.0
  %657 = vadd.xlane.f32.xlu0 %v656
  %v658 = vpop.xlane.xlu0 %657
  %v659 = vsel %vm78, %v469, 0.0
  %660 = vadd.xlane.f32.xlu0 %v659
  %v661 = vpop.xlane.xlu0 %660
  %v662 = vmul.f32 %v472, %v277
  %v663 = vmul.f32 %v475, %v277
  %v664 = vmul.f32 %v478, %v277
  %v665 = vmul.f32 %v481, %v277
  %v666 = vmul.f32 %v484, %v277
  %v667 = vmul.f32 %v487, %v277
  %v668 = vmul.f32 %v490, %v277
  %v669 = vmul.f32 %v493, %v277
  %v670 = vmul.f32 %v496, %v277
  %v671 = vmul.f32 %v499, %v277
  %v672 = vmul.f32 %v502, %v277
  %v673 = vmul.f32 %v505, %v277
  %v674 = vmul.f32 %v508, %v277
  %v675 = vmul.f32 %v511, %v277
  %v676 = vmul.f32 %v514, %v277
  %v677 = vmul.f32 %v517, %v277
  %v678 = vmul.f32 %v520, %v277
  %v679 = vmul.f32 %v523, %v277
  %v680 = vmul.f32 %v526, %v277
  %v681 = vmul.f32 %v529, %v277
  %v682 = vmul.f32 %v532, %v277
  %v683 = vmul.f32 %v535, %v277
  %v684 = vmul.f32 %v538, %v277
  %v685 = vmul.f32 %v541, %v277
  %v686 = vmul.f32 %v544, %v277
  %v687 = vmul.f32 %v547, %v277
  %v688 = vmul.f32 %v550, %v277
  %v689 = vmul.f32 %v553, %v277
  %v690 = vmul.f32 %v556, %v277
  %v691 = vmul.f32 %v559, %v277
  %v692 = vmul.f32 %v562, %v277
  %v693 = vmul.f32 %v565, %v277
  %v694 = vmul.f32 %v568, %v277
  %v695 = vmul.f32 %v571, %v277
  %v696 = vmul.f32 %v574, %v277
  %v697 = vmul.f32 %v577, %v277
  %v698 = vmul.f32 %v580, %v277
  %v699 = vmul.f32 %v583, %v277
  %v700 = vmul.f32 %v586, %v277
  %v701 = vmul.f32 %v589, %v277
  %v702 = vmul.f32 %v592, %v277
  %v703 = vmul.f32 %v595, %v277
  %v704 = vmul.f32 %v598, %v277
  %v705 = vmul.f32 %v601, %v277
  %v706 = vmul.f32 %v604, %v277
  %v707 = vmul.f32 %v607, %v277
  %v708 = vmul.f32 %v610, %v277
  %v709 = vmul.f32 %v613, %v277
  %v710 = vmul.f32 %v616, %v277
  %v711 = vmul.f32 %v619, %v277
  %v712 = vmul.f32 %v622, %v277
  %v713 = vmul.f32 %v625, %v277
  %v714 = vmul.f32 %v628, %v277
  %v715 = vmul.f32 %v631, %v277
  %v716 = vmul.f32 %v634, %v277
  %v717 = vmul.f32 %v637, %v277
  %v718 = vmul.f32 %v640, %v277
  %v719 = vmul.f32 %v643, %v277
  %v720 = vmul.f32 %v646, %v277
  %v721 = vmul.f32 %v649, %v277
  %v722 = vmul.f32 %v652, %v277
  %v723 = vmul.f32 %v655, %v277
  %v724 = vmul.f32 %v658, %v277
  %v725 = vmul.f32 %v661, %v277
  %v726 = vadd.f32 %v662, 1e-05
  %v727 = vadd.f32 %v663, 1e-05
  %v728 = vadd.f32 %v664, 1e-05
  %v729 = vadd.f32 %v665, 1e-05
  %v730 = vadd.f32 %v666, 1e-05
  %v731 = vadd.f32 %v667, 1e-05
  %v732 = vadd.f32 %v668, 1e-05
  %v733 = vadd.f32 %v669, 1e-05
  %v734 = vadd.f32 %v670, 1e-05
  %v735 = vadd.f32 %v671, 1e-05
  %v736 = vadd.f32 %v672, 1e-05
  %v737 = vadd.f32 %v673, 1e-05
  %v738 = vadd.f32 %v674, 1e-05
  %v739 = vadd.f32 %v675, 1e-05
  %v740 = vadd.f32 %v676, 1e-05
  %v741 = vadd.f32 %v677, 1e-05
  %v742 = vadd.f32 %v678, 1e-05
  %v743 = vadd.f32 %v679, 1e-05
  %v744 = vadd.f32 %v680, 1e-05
  %v745 = vadd.f32 %v681, 1e-05
  %v746 = vadd.f32 %v682, 1e-05
  %v747 = vadd.f32 %v683, 1e-05
  %v748 = vadd.f32 %v684, 1e-05
  %v749 = vadd.f32 %v685, 1e-05
  %v750 = vadd.f32 %v686, 1e-05
  %v751 = vadd.f32 %v687, 1e-05
  %v752 = vadd.f32 %v688, 1e-05
  %v753 = vadd.f32 %v689, 1e-05
  %v754 = vadd.f32 %v690, 1e-05
  %v755 = vadd.f32 %v691, 1e-05
  %v756 = vadd.f32 %v692, 1e-05
  %v757 = vadd.f32 %v693, 1e-05
  %v758 = vadd.f32 %v694, 1e-05
  %v759 = vadd.f32 %v695, 1e-05
  %v760 = vadd.f32 %v696, 1e-05
  %v761 = vadd.f32 %v697, 1e-05
  %v762 = vadd.f32 %v698, 1e-05
  %v763 = vadd.f32 %v699, 1e-05
  %v764 = vadd.f32 %v700, 1e-05
  %v765 = vadd.f32 %v701, 1e-05
  %v766 = vadd.f32 %v702, 1e-05
  %v767 = vadd.f32 %v703, 1e-05
  %v768 = vadd.f32 %v704, 1e-05
  %v769 = vadd.f32 %v705, 1e-05
  %v770 = vadd.f32 %v706, 1e-05
  %v771 = vadd.f32 %v707, 1e-05
  %v772 = vadd.f32 %v708, 1e-05
  %v773 = vadd.f32 %v709, 1e-05
  %v774 = vadd.f32 %v710, 1e-05
  %v775 = vadd.f32 %v711, 1e-05
  %v776 = vadd.f32 %v712, 1e-05
  %v777 = vadd.f32 %v713, 1e-05
  %v778 = vadd.f32 %v714, 1e-05
  %v779 = vadd.f32 %v715, 1e-05
  %v780 = vadd.f32 %v716, 1e-05
  %v781 = vadd.f32 %v717, 1e-05
  %v782 = vadd.f32 %v718, 1e-05
  %v783 = vadd.f32 %v719, 1e-05
  %v784 = vadd.f32 %v720, 1e-05
  %v785 = vadd.f32 %v721, 1e-05
  %v786 = vadd.f32 %v722, 1e-05
  %v787 = vadd.f32 %v723, 1e-05
  %v788 = vadd.f32 %v724, 1e-05
  %v789 = vadd.f32 %v725, 1e-05
  %v790 = vrsqrt.pop %v726
  %v791 = vmul.f32 %v790, %v726
  %v792 = vmul.f32 %v791, %v790
  %v793 = vmul.f32 0.5, %v792
  %v794 = vsub.f32 1.5, %v793
  %v795 = vmul.f32 %v790, %v794
  %vm796 = vweird.f32 %v726
  %vm797 = vweird.f32 %v790
  %vm798 = vmor %vm796, %vm797
  %v799 = vsel %vm798, %v790, %v795
  %v800 = vrsqrt.pop %v727
  %v801 = vmul.f32 %v800, %v727
  %v802 = vmul.f32 %v801, %v800
  %v803 = vmul.f32 0.5, %v802
  %v804 = vsub.f32 1.5, %v803
  %v805 = vmul.f32 %v800, %v804
  %vm806 = vweird.f32 %v727
  %vm807 = vweird.f32 %v800
  %vm808 = vmor %vm806, %vm807
  %v809 = vsel %vm808, %v800, %v805
  %v810 = vrsqrt.pop %v728
  %v811 = vmul.f32 %v810, %v728
  %v812 = vmul.f32 %v811, %v810
  %v813 = vmul.f32 0.5, %v812
  %v814 = vsub.f32 1.5, %v813
  %v815 = vmul.f32 %v810, %v814
  %vm816 = vweird.f32 %v728
  %vm817 = vweird.f32 %v810
  %vm818 = vmor %vm816, %vm817
  %v819 = vsel %vm818, %v810, %v815
  %v820 = vrsqrt.pop %v729
  %v821 = vmul.f32 %v820, %v729
  %v822 = vmul.f32 %v821, %v820
  %v823 = vmul.f32 0.5, %v822
  %v824 = vsub.f32 1.5, %v823
  %v825 = vmul.f32 %v820, %v824
  %vm826 = vweird.f32 %v729
  %vm827 = vweird.f32 %v820
  %vm828 = vmor %vm826, %vm827
  %v829 = vsel %vm828, %v820, %v825
  %v830 = vrsqrt.pop %v730
  %v831 = vmul.f32 %v830, %v730
  %v832 = vmul.f32 %v831, %v830
  %v833 = vmul.f32 0.5, %v832
  %v834 = vsub.f32 1.5, %v833
  %v835 = vmul.f32 %v830, %v834
  %vm836 = vweird.f32 %v730
  %vm837 = vweird.f32 %v830
  %vm838 = vmor %vm836, %vm837
  %v839 = vsel %vm838, %v830, %v835
  %v840 = vrsqrt.pop %v731
  %v841 = vmul.f32 %v840, %v731
  %v842 = vmul.f32 %v841, %v840
  %v843 = vmul.f32 0.5, %v842
  %v844 = vsub.f32 1.5, %v843
  %v845 = vmul.f32 %v840, %v844
  %vm846 = vweird.f32 %v731
  %vm847 = vweird.f32 %v840
  %vm848 = vmor %vm846, %vm847
  %v849 = vsel %vm848, %v840, %v845
  %v850 = vrsqrt.pop %v732
  %v851 = vmul.f32 %v850, %v732
  %v852 = vmul.f32 %v851, %v850
  %v853 = vmul.f32 0.5, %v852
  %v854 = vsub.f32 1.5, %v853
  %v855 = vmul.f32 %v850, %v854
  %vm856 = vweird.f32 %v732
  %vm857 = vweird.f32 %v850
  %vm858 = vmor %vm856, %vm857
  %v859 = vsel %vm858, %v850, %v855
  %v860 = vrsqrt.pop %v733
  %v861 = vmul.f32 %v860, %v733
  %v862 = vmul.f32 %v861, %v860
  %v863 = vmul.f32 0.5, %v862
  %v864 = vsub.f32 1.5, %v863
  %v865 = vmul.f32 %v860, %v864
  %vm866 = vweird.f32 %v733
  %vm867 = vweird.f32 %v860
  %vm868 = vmor %vm866, %vm867
  %v869 = vsel %vm868, %v860, %v865
  %v870 = vrsqrt.pop %v734
  %v871 = vmul.f32 %v870, %v734
  %v872 = vmul.f32 %v871, %v870
  %v873 = vmul.f32 0.5, %v872
  %v874 = vsub.f32 1.5, %v873
  %v875 = vmul.f32 %v870, %v874
  %vm876 = vweird.f32 %v734
  %vm877 = vweird.f32 %v870
  %vm878 = vmor %vm876, %vm877
  %v879 = vsel %vm878, %v870, %v875
  %v880 = vrsqrt.pop %v735
  %v881 = vmul.f32 %v880, %v735
  %v882 = vmul.f32 %v881, %v880
  %v883 = vmul.f32 0.5, %v882
  %v884 = vsub.f32 1.5, %v883
  %v885 = vmul.f32 %v880, %v884
  %vm886 = vweird.f32 %v735
  %vm887 = vweird.f32 %v880
  %vm888 = vmor %vm886, %vm887
  %v889 = vsel %vm888, %v880, %v885
  %v890 = vrsqrt.pop %v736
  %v891 = vmul.f32 %v890, %v736
  %v892 = vmul.f32 %v891, %v890
  %v893 = vmul.f32 0.5, %v892
  %v894 = vsub.f32 1.5, %v893
  %v895 = vmul.f32 %v890, %v894
  %vm896 = vweird.f32 %v736
  %vm897 = vweird.f32 %v890
  %vm898 = vmor %vm896, %vm897
  %v899 = vsel %vm898, %v890, %v895
  %v900 = vrsqrt.pop %v737
  %v901 = vmul.f32 %v900, %v737
  %v902 = vmul.f32 %v901, %v900
  %v903 = vmul.f32 0.5, %v902
  %v904 = vsub.f32 1.5, %v903
  %v905 = vmul.f32 %v900, %v904
  %vm906 = vweird.f32 %v737
  %vm907 = vweird.f32 %v900
  %vm908 = vmor %vm906, %vm907
  %v909 = vsel %vm908, %v900, %v905
  %v910 = vrsqrt.pop %v738
  %v911 = vmul.f32 %v910, %v738
  %v912 = vmul.f32 %v911, %v910
  %v913 = vmul.f32 0.5, %v912
  %v914 = vsub.f32 1.5, %v913
  %v915 = vmul.f32 %v910, %v914
  %vm916 = vweird.f32 %v738
  %vm917 = vweird.f32 %v910
  %vm918 = vmor %vm916, %vm917
  %v919 = vsel %vm918, %v910, %v915
  %v920 = vrsqrt.pop %v739
  %v921 = vmul.f32 %v920, %v739
  %v922 = vmul.f32 %v921, %v920
  %v923 = vmul.f32 0.5, %v922
  %v924 = vsub.f32 1.5, %v923
  %v925 = vmul.f32 %v920, %v924
  %vm926 = vweird.f32 %v739
  %vm927 = vweird.f32 %v920
  %vm928 = vmor %vm926, %vm927
  %v929 = vsel %vm928, %v920, %v925
  %v930 = vrsqrt.pop %v740
  %v931 = vmul.f32 %v930, %v740
  %v932 = vmul.f32 %v931, %v930
  %v933 = vmul.f32 0.5, %v932
  %v934 = vsub.f32 1.5, %v933
  %v935 = vmul.f32 %v930, %v934
  %vm936 = vweird.f32 %v740
  %vm937 = vweird.f32 %v930
  %vm938 = vmor %vm936, %vm937
  %v939 = vsel %vm938, %v930, %v935
  %v940 = vrsqrt.pop %v741
  %v941 = vmul.f32 %v940, %v741
  %v942 = vmul.f32 %v941, %v940
  %v943 = vmul.f32 0.5, %v942
  %v944 = vsub.f32 1.5, %v943
  %v945 = vmul.f32 %v940, %v944
  %vm946 = vweird.f32 %v741
  %vm947 = vweird.f32 %v940
  %vm948 = vmor %vm946, %vm947
  %v949 = vsel %vm948, %v940, %v945
  %v950 = vrsqrt.pop %v742
  %v951 = vmul.f32 %v950, %v742
  %v952 = vmul.f32 %v951, %v950
  %v953 = vmul.f32 0.5, %v952
  %v954 = vsub.f32 1.5, %v953
  %v955 = vmul.f32 %v950, %v954
  %vm956 = vweird.f32 %v742
  %vm957 = vweird.f32 %v950
  %vm958 = vmor %vm956, %vm957
  %v959 = vsel %vm958, %v950, %v955
  %v960 = vrsqrt.pop %v743
  %v961 = vmul.f32 %v960, %v743
  %v962 = vmul.f32 %v961, %v960
  %v963 = vmul.f32 0.5, %v962
  %v964 = vsub.f32 1.5, %v963
  %v965 = vmul.f32 %v960, %v964
  %vm966 = vweird.f32 %v743
  %vm967 = vweird.f32 %v960
  %vm968 = vmor %vm966, %vm967
  %v969 = vsel %vm968, %v960, %v965
  %v970 = vrsqrt.pop %v744
  %v971 = vmul.f32 %v970, %v744
  %v972 = vmul.f32 %v971, %v970
  %v973 = vmul.f32 0.5, %v972
  %v974 = vsub.f32 1.5, %v973
  %v975 = vmul.f32 %v970, %v974
  %vm976 = vweird.f32 %v744
  %vm977 = vweird.f32 %v970
  %vm978 = vmor %vm976, %vm977
  %v979 = vsel %vm978, %v970, %v975
  %v980 = vrsqrt.pop %v745
  %v981 = vmul.f32 %v980, %v745
  %v982 = vmul.f32 %v981, %v980
  %v983 = vmul.f32 0.5, %v982
  %v984 = vsub.f32 1.5, %v983
  %v985 = vmul.f32 %v980, %v984
  %vm986 = vweird.f32 %v745
  %vm987 = vweird.f32 %v980
  %vm988 = vmor %vm986, %vm987
  %v989 = vsel %vm988, %v980, %v985
  %v990 = vrsqrt.pop %v746
  %v991 = vmul.f32 %v990, %v746
  %v992 = vmul.f32 %v991, %v990
  %v993 = vmul.f32 0.5, %v992
  %v994 = vsub.f32 1.5, %v993
  %v995 = vmul.f32 %v990, %v994
  %vm996 = vweird.f32 %v746
  %vm997 = vweird.f32 %v990
  %vm998 = vmor %vm996, %vm997
  %v999 = vsel %vm998, %v990, %v995
  %v1000 = vrsqrt.pop %v747
  %v1001 = vmul.f32 %v1000, %v747
  %v1002 = vmul.f32 %v1001, %v1000
  %v1003 = vmul.f32 0.5, %v1002
  %v1004 = vsub.f32 1.5, %v1003
  %v1005 = vmul.f32 %v1000, %v1004
  %vm1006 = vweird.f32 %v747
  %vm1007 = vweird.f32 %v1000
  %vm1008 = vmor %vm1006, %vm1007
  %v1009 = vsel %vm1008, %v1000, %v1005
  %v1010 = vrsqrt.pop %v748
  %v1011 = vmul.f32 %v1010, %v748
  %v1012 = vmul.f32 %v1011, %v1010
  %v1013 = vmul.f32 0.5, %v1012
  %v1014 = vsub.f32 1.5, %v1013
  %v1015 = vmul.f32 %v1010, %v1014
  %vm1016 = vweird.f32 %v748
  %vm1017 = vweird.f32 %v1010
  %vm1018 = vmor %vm1016, %vm1017
  %v1019 = vsel %vm1018, %v1010, %v1015
  %v1020 = vrsqrt.pop %v749
  %v1021 = vmul.f32 %v1020, %v749
  %v1022 = vmul.f32 %v1021, %v1020
  %v1023 = vmul.f32 0.5, %v1022
  %v1024 = vsub.f32 1.5, %v1023
  %v1025 = vmul.f32 %v1020, %v1024
  %vm1026 = vweird.f32 %v749
  %vm1027 = vweird.f32 %v1020
  %vm1028 = vmor %vm1026, %vm1027
  %v1029 = vsel %vm1028, %v1020, %v1025
  %v1030 = vrsqrt.pop %v750
  %v1031 = vmul.f32 %v1030, %v750
  %v1032 = vmul.f32 %v1031, %v1030
  %v1033 = vmul.f32 0.5, %v1032
  %v1034 = vsub.f32 1.5, %v1033
  %v1035 = vmul.f32 %v1030, %v1034
  %vm1036 = vweird.f32 %v750
  %vm1037 = vweird.f32 %v1030
  %vm1038 = vmor %vm1036, %vm1037
  %v1039 = vsel %vm1038, %v1030, %v1035
  %v1040 = vrsqrt.pop %v751
  %v1041 = vmul.f32 %v1040, %v751
  %v1042 = vmul.f32 %v1041, %v1040
  %v1043 = vmul.f32 0.5, %v1042
  %v1044 = vsub.f32 1.5, %v1043
  %v1045 = vmul.f32 %v1040, %v1044
  %vm1046 = vweird.f32 %v751
  %vm1047 = vweird.f32 %v1040
  %vm1048 = vmor %vm1046, %vm1047
  %v1049 = vsel %vm1048, %v1040, %v1045
  %v1050 = vrsqrt.pop %v752
  %v1051 = vmul.f32 %v1050, %v752
  %v1052 = vmul.f32 %v1051, %v1050
  %v1053 = vmul.f32 0.5, %v1052
  %v1054 = vsub.f32 1.5, %v1053
  %v1055 = vmul.f32 %v1050, %v1054
  %vm1056 = vweird.f32 %v752
  %vm1057 = vweird.f32 %v1050
  %vm1058 = vmor %vm1056, %vm1057
  %v1059 = vsel %vm1058, %v1050, %v1055
  %v1060 = vrsqrt.pop %v753
  %v1061 = vmul.f32 %v1060, %v753
  %v1062 = vmul.f32 %v1061, %v1060
  %v1063 = vmul.f32 0.5, %v1062
  %v1064 = vsub.f32 1.5, %v1063
  %v1065 = vmul.f32 %v1060, %v1064
  %vm1066 = vweird.f32 %v753
  %vm1067 = vweird.f32 %v1060
  %vm1068 = vmor %vm1066, %vm1067
  %v1069 = vsel %vm1068, %v1060, %v1065
  %v1070 = vrsqrt.pop %v754
  %v1071 = vmul.f32 %v1070, %v754
  %v1072 = vmul.f32 %v1071, %v1070
  %v1073 = vmul.f32 0.5, %v1072
  %v1074 = vsub.f32 1.5, %v1073
  %v1075 = vmul.f32 %v1070, %v1074
  %vm1076 = vweird.f32 %v754
  %vm1077 = vweird.f32 %v1070
  %vm1078 = vmor %vm1076, %vm1077
  %v1079 = vsel %vm1078, %v1070, %v1075
  %v1080 = vrsqrt.pop %v755
  %v1081 = vmul.f32 %v1080, %v755
  %v1082 = vmul.f32 %v1081, %v1080
  %v1083 = vmul.f32 0.5, %v1082
  %v1084 = vsub.f32 1.5, %v1083
  %v1085 = vmul.f32 %v1080, %v1084
  %vm1086 = vweird.f32 %v755
  %vm1087 = vweird.f32 %v1080
  %vm1088 = vmor %vm1086, %vm1087
  %v1089 = vsel %vm1088, %v1080, %v1085
  %v1090 = vrsqrt.pop %v756
  %v1091 = vmul.f32 %v1090, %v756
  %v1092 = vmul.f32 %v1091, %v1090
  %v1093 = vmul.f32 0.5, %v1092
  %v1094 = vsub.f32 1.5, %v1093
  %v1095 = vmul.f32 %v1090, %v1094
  %vm1096 = vweird.f32 %v756
  %vm1097 = vweird.f32 %v1090
  %vm1098 = vmor %vm1096, %vm1097
  %v1099 = vsel %vm1098, %v1090, %v1095
  %v1100 = vrsqrt.pop %v757
  %v1101 = vmul.f32 %v1100, %v757
  %v1102 = vmul.f32 %v1101, %v1100
  %v1103 = vmul.f32 0.5, %v1102
  %v1104 = vsub.f32 1.5, %v1103
  %v1105 = vmul.f32 %v1100, %v1104
  %vm1106 = vweird.f32 %v757
  %vm1107 = vweird.f32 %v1100
  %vm1108 = vmor %vm1106, %vm1107
  %v1109 = vsel %vm1108, %v1100, %v1105
  %v1110 = vrsqrt.pop %v758
  %v1111 = vmul.f32 %v1110, %v758
  %v1112 = vmul.f32 %v1111, %v1110
  %v1113 = vmul.f32 0.5, %v1112
  %v1114 = vsub.f32 1.5, %v1113
  %v1115 = vmul.f32 %v1110, %v1114
  %vm1116 = vweird.f32 %v758
  %vm1117 = vweird.f32 %v1110
  %vm1118 = vmor %vm1116, %vm1117
  %v1119 = vsel %vm1118, %v1110, %v1115
  %v1120 = vrsqrt.pop %v759
  %v1121 = vmul.f32 %v1120, %v759
  %v1122 = vmul.f32 %v1121, %v1120
  %v1123 = vmul.f32 0.5, %v1122
  %v1124 = vsub.f32 1.5, %v1123
  %v1125 = vmul.f32 %v1120, %v1124
  %vm1126 = vweird.f32 %v759
  %vm1127 = vweird.f32 %v1120
  %vm1128 = vmor %vm1126, %vm1127
  %v1129 = vsel %vm1128, %v1120, %v1125
  %v1130 = vrsqrt.pop %v760
  %v1131 = vmul.f32 %v1130, %v760
  %v1132 = vmul.f32 %v1131, %v1130
  %v1133 = vmul.f32 0.5, %v1132
  %v1134 = vsub.f32 1.5, %v1133
  %v1135 = vmul.f32 %v1130, %v1134
  %vm1136 = vweird.f32 %v760
  %vm1137 = vweird.f32 %v1130
  %vm1138 = vmor %vm1136, %vm1137
  %v1139 = vsel %vm1138, %v1130, %v1135
  %v1140 = vrsqrt.pop %v761
  %v1141 = vmul.f32 %v1140, %v761
  %v1142 = vmul.f32 %v1141, %v1140
  %v1143 = vmul.f32 0.5, %v1142
  %v1144 = vsub.f32 1.5, %v1143
  %v1145 = vmul.f32 %v1140, %v1144
  %vm1146 = vweird.f32 %v761
  %vm1147 = vweird.f32 %v1140
  %vm1148 = vmor %vm1146, %vm1147
  %v1149 = vsel %vm1148, %v1140, %v1145
  %v1150 = vrsqrt.pop %v762
  %v1151 = vmul.f32 %v1150, %v762
  %v1152 = vmul.f32 %v1151, %v1150
  %v1153 = vmul.f32 0.5, %v1152
  %v1154 = vsub.f32 1.5, %v1153
  %v1155 = vmul.f32 %v1150, %v1154
  %vm1156 = vweird.f32 %v762
  %vm1157 = vweird.f32 %v1150
  %vm1158 = vmor %vm1156, %vm1157
  %v1159 = vsel %vm1158, %v1150, %v1155
  %v1160 = vrsqrt.pop %v763
  %v1161 = vmul.f32 %v1160, %v763
  %v1162 = vmul.f32 %v1161, %v1160
  %v1163 = vmul.f32 0.5, %v1162
  %v1164 = vsub.f32 1.5, %v1163
  %v1165 = vmul.f32 %v1160, %v1164
  %vm1166 = vweird.f32 %v763
  %vm1167 = vweird.f32 %v1160
  %vm1168 = vmor %vm1166, %vm1167
  %v1169 = vsel %vm1168, %v1160, %v1165
  %v1170 = vrsqrt.pop %v764
  %v1171 = vmul.f32 %v1170, %v764
  %v1172 = vmul.f32 %v1171, %v1170
  %v1173 = vmul.f32 0.5, %v1172
  %v1174 = vsub.f32 1.5, %v1173
  %v1175 = vmul.f32 %v1170, %v1174
  %vm1176 = vweird.f32 %v764
  %vm1177 = vweird.f32 %v1170
  %vm1178 = vmor %vm1176, %vm1177
  %v1179 = vsel %vm1178, %v1170, %v1175
  %v1180 = vrsqrt.pop %v765
  %v1181 = vmul.f32 %v1180, %v765
  %v1182 = vmul.f32 %v1181, %v1180
  %v1183 = vmul.f32 0.5, %v1182
  %v1184 = vsub.f32 1.5, %v1183
  %v1185 = vmul.f32 %v1180, %v1184
  %vm1186 = vweird.f32 %v765
  %vm1187 = vweird.f32 %v1180
  %vm1188 = vmor %vm1186, %vm1187
  %v1189 = vsel %vm1188, %v1180, %v1185
  %v1190 = vrsqrt.pop %v766
  %v1191 = vmul.f32 %v1190, %v766
  %v1192 = vmul.f32 %v1191, %v1190
  %v1193 = vmul.f32 0.5, %v1192
  %v1194 = vsub.f32 1.5, %v1193
  %v1195 = vmul.f32 %v1190, %v1194
  %vm1196 = vweird.f32 %v766
  %vm1197 = vweird.f32 %v1190
  %vm1198 = vmor %vm1196, %vm1197
  %v1199 = vsel %vm1198, %v1190, %v1195
  %v1200 = vrsqrt.pop %v767
  %v1201 = vmul.f32 %v1200, %v767
  %v1202 = vmul.f32 %v1201, %v1200
  %v1203 = vmul.f32 0.5, %v1202
  %v1204 = vsub.f32 1.5, %v1203
  %v1205 = vmul.f32 %v1200, %v1204
  %vm1206 = vweird.f32 %v767
  %vm1207 = vweird.f32 %v1200
  %vm1208 = vmor %vm1206, %vm1207
  %v1209 = vsel %vm1208, %v1200, %v1205
  %v1210 = vrsqrt.pop %v768
  %v1211 = vmul.f32 %v1210, %v768
  %v1212 = vmul.f32 %v1211, %v1210
  %v1213 = vmul.f32 0.5, %v1212
  %v1214 = vsub.f32 1.5, %v1213
  %v1215 = vmul.f32 %v1210, %v1214
  %vm1216 = vweird.f32 %v768
  %vm1217 = vweird.f32 %v1210
  %vm1218 = vmor %vm1216, %vm1217
  %v1219 = vsel %vm1218, %v1210, %v1215
  %v1220 = vrsqrt.pop %v769
  %v1221 = vmul.f32 %v1220, %v769
  %v1222 = vmul.f32 %v1221, %v1220
  %v1223 = vmul.f32 0.5, %v1222
  %v1224 = vsub.f32 1.5, %v1223
  %v1225 = vmul.f32 %v1220, %v1224
  %vm1226 = vweird.f32 %v769
  %vm1227 = vweird.f32 %v1220
  %vm1228 = vmor %vm1226, %vm1227
  %v1229 = vsel %vm1228, %v1220, %v1225
  %v1230 = vrsqrt.pop %v770
  %v1231 = vmul.f32 %v1230, %v770
  %v1232 = vmul.f32 %v1231, %v1230
  %v1233 = vmul.f32 0.5, %v1232
  %v1234 = vsub.f32 1.5, %v1233
  %v1235 = vmul.f32 %v1230, %v1234
  %vm1236 = vweird.f32 %v770
  %vm1237 = vweird.f32 %v1230
  %vm1238 = vmor %vm1236, %vm1237
  %v1239 = vsel %vm1238, %v1230, %v1235
  %v1240 = vrsqrt.pop %v771
  %v1241 = vmul.f32 %v1240, %v771
  %v1242 = vmul.f32 %v1241, %v1240
  %v1243 = vmul.f32 0.5, %v1242
  %v1244 = vsub.f32 1.5, %v1243
  %v1245 = vmul.f32 %v1240, %v1244
  %vm1246 = vweird.f32 %v771
  %vm1247 = vweird.f32 %v1240
  %vm1248 = vmor %vm1246, %vm1247
  %v1249 = vsel %vm1248, %v1240, %v1245
  %v1250 = vrsqrt.pop %v772
  %v1251 = vmul.f32 %v1250, %v772
  %v1252 = vmul.f32 %v1251, %v1250
  %v1253 = vmul.f32 0.5, %v1252
  %v1254 = vsub.f32 1.5, %v1253
  %v1255 = vmul.f32 %v1250, %v1254
  %vm1256 = vweird.f32 %v772
  %vm1257 = vweird.f32 %v1250
  %vm1258 = vmor %vm1256, %vm1257
  %v1259 = vsel %vm1258, %v1250, %v1255
  %v1260 = vrsqrt.pop %v773
  %v1261 = vmul.f32 %v1260, %v773
  %v1262 = vmul.f32 %v1261, %v1260
  %v1263 = vmul.f32 0.5, %v1262
  %v1264 = vsub.f32 1.5, %v1263
  %v1265 = vmul.f32 %v1260, %v1264
  %vm1266 = vweird.f32 %v773
  %vm1267 = vweird.f32 %v1260
  %vm1268 = vmor %vm1266, %vm1267
  %v1269 = vsel %vm1268, %v1260, %v1265
  %v1270 = vrsqrt.pop %v774
  %v1271 = vmul.f32 %v1270, %v774
  %v1272 = vmul.f32 %v1271, %v1270
  %v1273 = vmul.f32 0.5, %v1272
  %v1274 = vsub.f32 1.5, %v1273
  %v1275 = vmul.f32 %v1270, %v1274
  %vm1276 = vweird.f32 %v774
  %vm1277 = vweird.f32 %v1270
  %vm1278 = vmor %vm1276, %vm1277
  %v1279 = vsel %vm1278, %v1270, %v1275
  %v1280 = vrsqrt.pop %v775
  %v1281 = vmul.f32 %v1280, %v775
  %v1282 = vmul.f32 %v1281, %v1280
  %v1283 = vmul.f32 0.5, %v1282
  %v1284 = vsub.f32 1.5, %v1283
  %v1285 = vmul.f32 %v1280, %v1284
  %vm1286 = vweird.f32 %v775
  %vm1287 = vweird.f32 %v1280
  %vm1288 = vmor %vm1286, %vm1287
  %v1289 = vsel %vm1288, %v1280, %v1285
  %v1290 = vrsqrt.pop %v776
  %v1291 = vmul.f32 %v1290, %v776
  %v1292 = vmul.f32 %v1291, %v1290
  %v1293 = vmul.f32 0.5, %v1292
  %v1294 = vsub.f32 1.5, %v1293
  %v1295 = vmul.f32 %v1290, %v1294
  %vm1296 = vweird.f32 %v776
  %vm1297 = vweird.f32 %v1290
  %vm1298 = vmor %vm1296, %vm1297
  %v1299 = vsel %vm1298, %v1290, %v1295
  %v1300 = vrsqrt.pop %v777
  %v1301 = vmul.f32 %v1300, %v777
  %v1302 = vmul.f32 %v1301, %v1300
  %v1303 = vmul.f32 0.5, %v1302
  %v1304 = vsub.f32 1.5, %v1303
  %v1305 = vmul.f32 %v1300, %v1304
  %vm1306 = vweird.f32 %v777
  %vm1307 = vweird.f32 %v1300
  %vm1308 = vmor %vm1306, %vm1307
  %v1309 = vsel %vm1308, %v1300, %v1305
  %v1310 = vrsqrt.pop %v778
  %v1311 = vmul.f32 %v1310, %v778
  %v1312 = vmul.f32 %v1311, %v1310
  %v1313 = vmul.f32 0.5, %v1312
  %v1314 = vsub.f32 1.5, %v1313
  %v1315 = vmul.f32 %v1310, %v1314
  %vm1316 = vweird.f32 %v778
  %vm1317 = vweird.f32 %v1310
  %vm1318 = vmor %vm1316, %vm1317
  %v1319 = vsel %vm1318, %v1310, %v1315
  %v1320 = vrsqrt.pop %v779
  %v1321 = vmul.f32 %v1320, %v779
  %v1322 = vmul.f32 %v1321, %v1320
  %v1323 = vmul.f32 0.5, %v1322
  %v1324 = vsub.f32 1.5, %v1323
  %v1325 = vmul.f32 %v1320, %v1324
  %vm1326 = vweird.f32 %v779
  %vm1327 = vweird.f32 %v1320
  %vm1328 = vmor %vm1326, %vm1327
  %v1329 = vsel %vm1328, %v1320, %v1325
  %v1330 = vrsqrt.pop %v780
  %v1331 = vmul.f32 %v1330, %v780
  %v1332 = vmul.f32 %v1331, %v1330
  %v1333 = vmul.f32 0.5, %v1332
  %v1334 = vsub.f32 1.5, %v1333
  %v1335 = vmul.f32 %v1330, %v1334
  %vm1336 = vweird.f32 %v780
  %vm1337 = vweird.f32 %v1330
  %vm1338 = vmor %vm1336, %vm1337
  %v1339 = vsel %vm1338, %v1330, %v1335
  %v1340 = vrsqrt.pop %v781
  %v1341 = vmul.f32 %v1340, %v781
  %v1342 = vmul.f32 %v1341, %v1340
  %v1343 = vmul.f32 0.5, %v1342
  %v1344 = vsub.f32 1.5, %v1343
  %v1345 = vmul.f32 %v1340, %v1344
  %vm1346 = vweird.f32 %v781
  %vm1347 = vweird.f32 %v1340
  %vm1348 = vmor %vm1346, %vm1347
  %v1349 = vsel %vm1348, %v1340, %v1345
  %v1350 = vrsqrt.pop %v782
  %v1351 = vmul.f32 %v1350, %v782
  %v1352 = vmul.f32 %v1351, %v1350
  %v1353 = vmul.f32 0.5, %v1352
  %v1354 = vsub.f32 1.5, %v1353
  %v1355 = vmul.f32 %v1350, %v1354
  %vm1356 = vweird.f32 %v782
  %vm1357 = vweird.f32 %v1350
  %vm1358 = vmor %vm1356, %vm1357
  %v1359 = vsel %vm1358, %v1350, %v1355
  %v1360 = vrsqrt.pop %v783
  %v1361 = vmul.f32 %v1360, %v783
  %v1362 = vmul.f32 %v1361, %v1360
  %v1363 = vmul.f32 0.5, %v1362
  %v1364 = vsub.f32 1.5, %v1363
  %v1365 = vmul.f32 %v1360, %v1364
  %vm1366 = vweird.f32 %v783
  %vm1367 = vweird.f32 %v1360
  %vm1368 = vmor %vm1366, %vm1367
  %v1369 = vsel %vm1368, %v1360, %v1365
  %v1370 = vrsqrt.pop %v784
  %v1371 = vmul.f32 %v1370, %v784
  %v1372 = vmul.f32 %v1371, %v1370
  %v1373 = vmul.f32 0.5, %v1372
  %v1374 = vsub.f32 1.5, %v1373
  %v1375 = vmul.f32 %v1370, %v1374
  %vm1376 = vweird.f32 %v784
  %vm1377 = vweird.f32 %v1370
  %vm1378 = vmor %vm1376, %vm1377
  %v1379 = vsel %vm1378, %v1370, %v1375
  %v1380 = vrsqrt.pop %v785
  %v1381 = vmul.f32 %v1380, %v785
  %v1382 = vmul.f32 %v1381, %v1380
  %v1383 = vmul.f32 0.5, %v1382
  %v1384 = vsub.f32 1.5, %v1383
  %v1385 = vmul.f32 %v1380, %v1384
  %vm1386 = vweird.f32 %v785
  %vm1387 = vweird.f32 %v1380
  %vm1388 = vmor %vm1386, %vm1387
  %v1389 = vsel %vm1388, %v1380, %v1385
  %v1390 = vrsqrt.pop %v786
  %v1391 = vmul.f32 %v1390, %v786
  %v1392 = vmul.f32 %v1391, %v1390
  %v1393 = vmul.f32 0.5, %v1392
  %v1394 = vsub.f32 1.5, %v1393
  %v1395 = vmul.f32 %v1390, %v1394
  %vm1396 = vweird.f32 %v786
  %vm1397 = vweird.f32 %v1390
  %vm1398 = vmor %vm1396, %vm1397
  %v1399 = vsel %vm1398, %v1390, %v1395
  %v1400 = vrsqrt.pop %v787
  %v1401 = vmul.f32 %v1400, %v787
  %v1402 = vmul.f32 %v1401, %v1400
  %v1403 = vmul.f32 0.5, %v1402
  %v1404 = vsub.f32 1.5, %v1403
  %v1405 = vmul.f32 %v1400, %v1404
  %vm1406 = vweird.f32 %v787
  %vm1407 = vweird.f32 %v1400
  %vm1408 = vmor %vm1406, %vm1407
  %v1409 = vsel %vm1408, %v1400, %v1405
  %v1410 = vrsqrt.pop %v788
  %v1411 = vmul.f32 %v1410, %v788
  %v1412 = vmul.f32 %v1411, %v1410
  %v1413 = vmul.f32 0.5, %v1412
  %v1414 = vsub.f32 1.5, %v1413
  %v1415 = vmul.f32 %v1410, %v1414
  %vm1416 = vweird.f32 %v788
  %vm1417 = vweird.f32 %v1410
  %vm1418 = vmor %vm1416, %vm1417
  %v1419 = vsel %vm1418, %v1410, %v1415
  %v1420 = vrsqrt.pop %v789
  %v1421 = vmul.f32 %v1420, %v789
  %v1422 = vmul.f32 %v1421, %v1420
  %v1423 = vmul.f32 0.5, %v1422
  %v1424 = vsub.f32 1.5, %v1423
  %v1425 = vmul.f32 %v1420, %v1424
  %vm1426 = vweird.f32 %v789
  %vm1427 = vweird.f32 %v1420
  %vm1428 = vmor %vm1426, %vm1427
  %v1429 = vsel %vm1428, %v1420, %v1425
  %v1430 = vmul.f32 %v342, %v799
  %v1431 = vmul.f32 %v343, %v809
  %v1432 = vmul.f32 %v344, %v819
  %v1433 = vmul.f32 %v345, %v829
  %v1434 = vmul.f32 %v346, %v839
  %v1435 = vmul.f32 %v347, %v849
  %v1436 = vmul.f32 %v348, %v859
  %v1437 = vmul.f32 %v349, %v869
  %v1438 = vmul.f32 %v350, %v879
  %v1439 = vmul.f32 %v351, %v889
  %v1440 = vmul.f32 %v352, %v899
  %v1441 = vmul.f32 %v353, %v909
  %v1442 = vmul.f32 %v354, %v919
  %v1443 = vmul.f32 %v355, %v929
  %v1444 = vmul.f32 %v356, %v939
  %v1445 = vmul.f32 %v357, %v949
  %v1446 = vmul.f32 %v358, %v959
  %v1447 = vmul.f32 %v359, %v969
  %v1448 = vmul.f32 %v360, %v979
  %v1449 = vmul.f32 %v361, %v989
  %v1450 = vmul.f32 %v362, %v999
  %v1451 = vmul.f32 %v363, %v1009
  %v1452 = vmul.f32 %v364, %v1019
  %v1453 = vmul.f32 %v365, %v1029
  %v1454 = vmul.f32 %v366, %v1039
  %v1455 = vmul.f32 %v367, %v1049
  %v1456 = vmul.f32 %v368, %v1059
  %v1457 = vmul.f32 %v369, %v1069
  %v1458 = vmul.f32 %v370, %v1079
  %v1459 = vmul.f32 %v371, %v1089
  %v1460 = vmul.f32 %v372, %v1099
  %v1461 = vmul.f32 %v373, %v1109
  %v1462 = vmul.f32 %v374, %v1119
  %v1463 = vmul.f32 %v375, %v1129
  %v1464 = vmul.f32 %v376, %v1139
  %v1465 = vmul.f32 %v377, %v1149
  %v1466 = vmul.f32 %v378, %v1159
  %v1467 = vmul.f32 %v379, %v1169
  %v1468 = vmul.f32 %v380, %v1179
  %v1469 = vmul.f32 %v381, %v1189
  %v1470 = vmul.f32 %v382, %v1199
  %v1471 = vmul.f32 %v383, %v1209
  %v1472 = vmul.f32 %v384, %v1219
  %v1473 = vmul.f32 %v385, %v1229
  %v1474 = vmul.f32 %v386, %v1239
  %v1475 = vmul.f32 %v387, %v1249
  %v1476 = vmul.f32 %v388, %v1259
  %v1477 = vmul.f32 %v389, %v1269
  %v1478 = vmul.f32 %v390, %v1279
  %v1479 = vmul.f32 %v391, %v1289
  %v1480 = vmul.f32 %v392, %v1299
  %v1481 = vmul.f32 %v393, %v1309
  %v1482 = vmul.f32 %v394, %v1319
  %v1483 = vmul.f32 %v395, %v1329
  %v1484 = vmul.f32 %v396, %v1339
  %v1485 = vmul.f32 %v397, %v1349
  %v1486 = vmul.f32 %v398, %v1359
  %v1487 = vmul.f32 %v399, %v1369
  %v1488 = vmul.f32 %v400, %v1379
  %v1489 = vmul.f32 %v401, %v1389
  %v1490 = vmul.f32 %v402, %v1399
  %v1491 = vmul.f32 %v403, %v1409
  %v1492 = vmul.f32 %v404, %v1419
  %v1493 = vmul.f32 %v405, %v1429
  %v1494 = vld [vmem:[%s1] sm:$0x1]
  %v1496 = vperm.slane %v1494, 0
  %v1498 = vmul.f32 %v1430, %v1496
  %v1499 = vmul.f32 %v1431, %v1496
  %v1500 = vmul.f32 %v1432, %v1496
  %v1501 = vmul.f32 %v1433, %v1496
  %v1502 = vmul.f32 %v1434, %v1496
  %v1503 = vmul.f32 %v1435, %v1496
  %v1504 = vmul.f32 %v1436, %v1496
  %v1505 = vmul.f32 %v1437, %v1496
  %v1506 = vmul.f32 %v1438, %v1496
  %v1507 = vmul.f32 %v1439, %v1496
  %v1508 = vmul.f32 %v1440, %v1496
  %v1509 = vmul.f32 %v1441, %v1496
  %v1510 = vmul.f32 %v1442, %v1496
  %v1511 = vmul.f32 %v1443, %v1496
  %v1512 = vmul.f32 %v1444, %v1496
  %v1513 = vmul.f32 %v1445, %v1496
  %v1514 = vmul.f32 %v1446, %v1496
  %v1515 = vmul.f32 %v1447, %v1496
  %v1516 = vmul.f32 %v1448, %v1496
  %v1517 = vmul.f32 %v1449, %v1496
  %v1518 = vmul.f32 %v1450, %v1496
  %v1519 = vmul.f32 %v1451, %v1496
  %v1520 = vmul.f32 %v1452, %v1496
  %v1521 = vmul.f32 %v1453, %v1496
  %v1522 = vmul.f32 %v1454, %v1496
  %v1523 = vmul.f32 %v1455, %v1496
  %v1524 = vmul.f32 %v1456, %v1496
  %v1525 = vmul.f32 %v1457, %v1496
  %v1526 = vmul.f32 %v1458, %v1496
  %v1527 = vmul.f32 %v1459, %v1496
  %v1528 = vmul.f32 %v1460, %v1496
  %v1529 = vmul.f32 %v1461, %v1496
  %v1530 = vmul.f32 %v1462, %v1496
  %v1531 = vmul.f32 %v1463, %v1496
  %v1532 = vmul.f32 %v1464, %v1496
  %v1533 = vmul.f32 %v1465, %v1496
  %v1534 = vmul.f32 %v1466, %v1496
  %v1535 = vmul.f32 %v1467, %v1496
  %v1536 = vmul.f32 %v1468, %v1496
  %v1537 = vmul.f32 %v1469, %v1496
  %v1538 = vmul.f32 %v1470, %v1496
  %v1539 = vmul.f32 %v1471, %v1496
  %v1540 = vmul.f32 %v1472, %v1496
  %v1541 = vmul.f32 %v1473, %v1496
  %v1542 = vmul.f32 %v1474, %v1496
  %v1543 = vmul.f32 %v1475, %v1496
  %v1544 = vmul.f32 %v1476, %v1496
  %v1545 = vmul.f32 %v1477, %v1496
  %v1546 = vmul.f32 %v1478, %v1496
  %v1547 = vmul.f32 %v1479, %v1496
  %v1548 = vmul.f32 %v1480, %v1496
  %v1549 = vmul.f32 %v1481, %v1496
  %v1550 = vmul.f32 %v1482, %v1496
  %v1551 = vmul.f32 %v1483, %v1496
  %v1552 = vmul.f32 %v1484, %v1496
  %v1553 = vmul.f32 %v1485, %v1496
  %v1554 = vmul.f32 %v1486, %v1496
  %v1555 = vmul.f32 %v1487, %v1496
  %v1556 = vmul.f32 %v1488, %v1496
  %v1557 = vmul.f32 %v1489, %v1496
  %v1558 = vmul.f32 %v1490, %v1496
  %v1559 = vmul.f32 %v1491, %v1496
  %v1560 = vmul.f32 %v1492, %v1496
  %v1561 = vmul.f32 %v1493, %v1496
  %v1562 = vld [vmem:[%s2] sm:$0x1]
  %v1564 = vperm.slane %v1562, 0
  %v1566 = vadd.f32 %v1498, %v1564
  %v1567 = vadd.f32 %v1499, %v1564
  %v1568 = vadd.f32 %v1500, %v1564
  %v1569 = vadd.f32 %v1501, %v1564
  %v1570 = vadd.f32 %v1502, %v1564
  %v1571 = vadd.f32 %v1503, %v1564
  %v1572 = vadd.f32 %v1504, %v1564
  %v1573 = vadd.f32 %v1505, %v1564
  %v1574 = vadd.f32 %v1506, %v1564
  %v1575 = vadd.f32 %v1507, %v1564
  %v1576 = vadd.f32 %v1508, %v1564
  %v1577 = vadd.f32 %v1509, %v1564
  %v1578 = vadd.f32 %v1510, %v1564
  %v1579 = vadd.f32 %v1511, %v1564
  %v1580 = vadd.f32 %v1512, %v1564
  %v1581 = vadd.f32 %v1513, %v1564
  %v1582 = vadd.f32 %v1514, %v1564
  %v1583 = vadd.f32 %v1515, %v1564
  %v1584 = vadd.f32 %v1516, %v1564
  %v1585 = vadd.f32 %v1517, %v1564
  %v1586 = vadd.f32 %v1518, %v1564
  %v1587 = vadd.f32 %v1519, %v1564
  %v1588 = vadd.f32 %v1520, %v1564
  %v1589 = vadd.f32 %v1521, %v1564
  %v1590 = vadd.f32 %v1522, %v1564
  %v1591 = vadd.f32 %v1523, %v1564
  %v1592 = vadd.f32 %v1524, %v1564
  %v1593 = vadd.f32 %v1525, %v1564
  %v1594 = vadd.f32 %v1526, %v1564
  %v1595 = vadd.f32 %v1527, %v1564
  %v1596 = vadd.f32 %v1528, %v1564
  %v1597 = vadd.f32 %v1529, %v1564
  %v1598 = vadd.f32 %v1530, %v1564
  %v1599 = vadd.f32 %v1531, %v1564
  %v1600 = vadd.f32 %v1532, %v1564
  %v1601 = vadd.f32 %v1533, %v1564
  %v1602 = vadd.f32 %v1534, %v1564
  %v1603 = vadd.f32 %v1535, %v1564
  %v1604 = vadd.f32 %v1536, %v1564
  %v1605 = vadd.f32 %v1537, %v1564
  %v1606 = vadd.f32 %v1538, %v1564
  %v1607 = vadd.f32 %v1539, %v1564
  %v1608 = vadd.f32 %v1540, %v1564
  %v1609 = vadd.f32 %v1541, %v1564
  %v1610 = vadd.f32 %v1542, %v1564
  %v1611 = vadd.f32 %v1543, %v1564
  %v1612 = vadd.f32 %v1544, %v1564
  %v1613 = vadd.f32 %v1545, %v1564
  %v1614 = vadd.f32 %v1546, %v1564
  %v1615 = vadd.f32 %v1547, %v1564
  %v1616 = vadd.f32 %v1548, %v1564
  %v1617 = vadd.f32 %v1549, %v1564
  %v1618 = vadd.f32 %v1550, %v1564
  %v1619 = vadd.f32 %v1551, %v1564
  %v1620 = vadd.f32 %v1552, %v1564
  %v1621 = vadd.f32 %v1553, %v1564
  %v1622 = vadd.f32 %v1554, %v1564
  %v1623 = vadd.f32 %v1555, %v1564
  %v1624 = vadd.f32 %v1556, %v1564
  %v1625 = vadd.f32 %v1557, %v1564
  %v1626 = vadd.f32 %v1558, %v1564
  %v1627 = vadd.f32 %v1559, %v1564
  %v1628 = vadd.f32 %v1560, %v1564
  %v1629 = vadd.f32 %v1561, %v1564
  %1630 = vst.msk [vmem:[%s3] sm:$0xff] %vm78, %v1566
  %1631 = vst.msk [vmem:[%s3 + $0x8] sm:$0xff] %vm78, %v1567
  %1632 = vst.msk [vmem:[%s3 + $0x10] sm:$0xff] %vm78, %v1568
  %1633 = vst.msk [vmem:[%s3 + $0x18] sm:$0xff] %vm78, %v1569
  %1634 = vst.msk [vmem:[%s3 + $0x20] sm:$0xff] %vm78, %v1570
  %1635 = vst.msk [vmem:[%s3 + $0x28] sm:$0xff] %vm78, %v1571
  %1636 = vst.msk [vmem:[%s3 + $0x30] sm:$0xff] %vm78, %v1572
  %1637 = vst.msk [vmem:[%s3 + $0x38] sm:$0xff] %vm78, %v1573
  %1638 = vst.msk [vmem:[%s3 + $0x40] sm:$0xff] %vm78, %v1574
  %1639 = vst.msk [vmem:[%s3 + $0x48] sm:$0xff] %vm78, %v1575
  %1640 = vst.msk [vmem:[%s3 + $0x50] sm:$0xff] %vm78, %v1576
  %1641 = vst.msk [vmem:[%s3 + $0x58] sm:$0xff] %vm78, %v1577
  %1642 = vst.msk [vmem:[%s3 + $0x60] sm:$0xff] %vm78, %v1578
  %1643 = vst.msk [vmem:[%s3 + $0x68] sm:$0xff] %vm78, %v1579
  %1644 = vst.msk [vmem:[%s3 + $0x70] sm:$0xff] %vm78, %v1580
  %1645 = vst.msk [vmem:[%s3 + $0x78] sm:$0xff] %vm78, %v1581
  %1646 = vst.msk [vmem:[%s3 + $0x80] sm:$0xff] %vm78, %v1582
  %1647 = vst.msk [vmem:[%s3 + $0x88] sm:$0xff] %vm78, %v1583
  %1648 = vst.msk [vmem:[%s3 + $0x90] sm:$0xff] %vm78, %v1584
  %1649 = vst.msk [vmem:[%s3 + $0x98] sm:$0xff] %vm78, %v1585
  %1650 = vst.msk [vmem:[%s3 + $0xa0] sm:$0xff] %vm78, %v1586
  %1651 = vst.msk [vmem:[%s3 + $0xa8] sm:$0xff] %vm78, %v1587
  %1652 = vst.msk [vmem:[%s3 + $0xb0] sm:$0xff] %vm78, %v1588
  %1653 = vst.msk [vmem:[%s3 + $0xb8] sm:$0xff] %vm78, %v1589
  %1654 = vst.msk [vmem:[%s3 + $0xc0] sm:$0xff] %vm78, %v1590
  %1655 = vst.msk [vmem:[%s3 + $0xc8] sm:$0xff] %vm78, %v1591
  %1656 = vst.msk [vmem:[%s3 + $0xd0] sm:$0xff] %vm78, %v1592
  %1657 = vst.msk [vmem:[%s3 + $0xd8] sm:$0xff] %vm78, %v1593
  %1658 = vst.msk [vmem:[%s3 + $0xe0] sm:$0xff] %vm78, %v1594
  %1659 = vst.msk [vmem:[%s3 + $0xe8] sm:$0xff] %vm78, %v1595
  %1660 = vst.msk [vmem:[%s3 + $0xf0] sm:$0xff] %vm78, %v1596
  %1661 = vst.msk [vmem:[%s3 + $0xf8] sm:$0xff] %vm78, %v1597
  %1662 = vst.msk [vmem:[%s3 + $0x100] sm:$0xff] %vm78, %v1598
  %1663 = vst.msk [vmem:[%s3 + $0x108] sm:$0xff] %vm78, %v1599
  %1664 = vst.msk [vmem:[%s3 + $0x110] sm:$0xff] %vm78, %v1600
  %1665 = vst.msk [vmem:[%s3 + $0x118] sm:$0xff] %vm78, %v1601
  %1666 = vst.msk [vmem:[%s3 + $0x120] sm:$0xff] %vm78, %v1602
  %1667 = vst.msk [vmem:[%s3 + $0x128] sm:$0xff] %vm78, %v1603
  %1668 = vst.msk [vmem:[%s3 + $0x130] sm:$0xff] %vm78, %v1604
  %1669 = vst.msk [vmem:[%s3 + $0x138] sm:$0xff] %vm78, %v1605
  %1670 = vst.msk [vmem:[%s3 + $0x140] sm:$0xff] %vm78, %v1606
  %1671 = vst.msk [vmem:[%s3 + $0x148] sm:$0xff] %vm78, %v1607
  %1672 = vst.msk [vmem:[%s3 + $0x150] sm:$0xff] %vm78, %v1608
  %1673 = vst.msk [vmem:[%s3 + $0x158] sm:$0xff] %vm78, %v1609
  %1674 = vst.msk [vmem:[%s3 + $0x160] sm:$0xff] %vm78, %v1610
  %1675 = vst.msk [vmem:[%s3 + $0x168] sm:$0xff] %vm78, %v1611
  %1676 = vst.msk [vmem:[%s3 + $0x170] sm:$0xff] %vm78, %v1612
  %1677 = vst.msk [vmem:[%s3 + $0x178] sm:$0xff] %vm78, %v1613
  %1678 = vst.msk [vmem:[%s3 + $0x180] sm:$0xff] %vm78, %v1614
  %1679 = vst.msk [vmem:[%s3 + $0x188] sm:$0xff] %vm78, %v1615
  %1680 = vst.msk [vmem:[%s3 + $0x190] sm:$0xff] %vm78, %v1616
  %1681 = vst.msk [vmem:[%s3 + $0x198] sm:$0xff] %vm78, %v1617
  %1682 = vst.msk [vmem:[%s3 + $0x1a0] sm:$0xff] %vm78, %v1618
  %1683 = vst.msk [vmem:[%s3 + $0x1a8] sm:$0xff] %vm78, %v1619
  %1684 = vst.msk [vmem:[%s3 + $0x1b0] sm:$0xff] %vm78, %v1620
  %1685 = vst.msk [vmem:[%s3 + $0x1b8] sm:$0xff] %vm78, %v1621
  %1686 = vst.msk [vmem:[%s3 + $0x1c0] sm:$0xff] %vm78, %v1622
  %1687 = vst.msk [vmem:[%s3 + $0x1c8] sm:$0xff] %vm78, %v1623
  %1688 = vst.msk [vmem:[%s3 + $0x1d0] sm:$0xff] %vm78, %v1624
  %1689 = vst.msk [vmem:[%s3 + $0x1d8] sm:$0xff] %vm78, %v1625
  %1690 = vst.msk [vmem:[%s3 + $0x1e0] sm:$0xff] %vm78, %v1626
  %1691 = vst.msk [vmem:[%s3 + $0x1e8] sm:$0xff] %vm78, %v1627
  %1692 = vst.msk [vmem:[%s3 + $0x1f0] sm:$0xff] %vm78, %v1628
  %1693 = vst.msk [vmem:[%s3 + $0x1f8] sm:$0xff] %vm78, %v1629
  // Predicated region
  $region14: #{hv_lca_forward.13} parent=0 // pred_check
    _
  $region15: #{hv_lca_forward.13} parent=0 // pred_check_branch
    %1695 = sbr.rel (0) target = $region17
  $region16: #{hv_lca_forward.13} parent=0 // pred_region
    _
  $region17: #{hv_lca_forward.13} parent=0 // pred_fallthru
    _
  // Predicated region
  $region18: #{hv_lca_forward.13} parent=0 // pred_check
    _
  $region19: #{hv_lca_forward.13} parent=0 // pred_check_branch
    %1697 = sbr.rel (0) target = $region21
  $region20: #{hv_lca_forward.13} parent=0 // pred_region
    _
  $region21: #{hv_lca_forward.13} parent=0 // pred_fallthru
    _

// kernel: hv_lca_forward.16
$region0: #{hv_lca_forward.16}
  #allocation0 [shape = 'u32[]', space=smem, size = 0x4, offset = 0x4, fixed_abs, tag = 'smem constant byte address 0x4 - core index']
  #allocation1 [shape = 'u32[72,128]{1,0:T(1,128)}', space=vmem, size = 0x9000, scoped, tag = 'internal scratch']
  %s0 = inlined_call_operand.vmem [shape: f32[512,4], index: 0, kind: input, shape index: {}]
  %s1 = inlined_call_operand.vmem [shape: f32[4,8], index: 1, kind: input, shape index: {}]
  %s2 = inlined_call_operand.vmem [shape: f32[512,8], index: 2, kind: output, shape index: {}]
  %s3 = sld [smem:[#allocation0]]
  $region18: #{hv_lca_forward.16} parent=0
    _
  %s5 = ssub.s32 1, %s3
  %s6 = scalar_select 0, %s5, %s3
  // Predicated region
  $region2: #{hv_lca_forward.16} parent=0 // pred_check
    _
  $region3: #{hv_lca_forward.16} parent=0 // pred_check_branch
    %8 = sbr.rel (0) target = $region5
  $region4: #{hv_lca_forward.16} parent=0 // pred_region
    _
  $region5: #{hv_lca_forward.16} parent=0 // pred_fallthru
    _
  // Predicated region
  $region6: #{hv_lca_forward.16} parent=0 // pred_check
    _
  $region7: #{hv_lca_forward.16} parent=0 // pred_check_branch
    %10 = sbr.rel (0) target = $region9
  $region8: #{hv_lca_forward.16} parent=0 // pred_region
    _
  $region9: #{hv_lca_forward.16} parent=0 // pred_fallthru
    _
  %v11 = vld [vmem:[%s0] sm:$0xff]
  %v12 = vld [vmem:[%s0 + $0x8] sm:$0xff]
  %v13 = vld [vmem:[%s0 + $0x10] sm:$0xff]
  %v14 = vld [vmem:[%s0 + $0x18] sm:$0xff]
  %v15 = vld [vmem:[%s0 + $0x20] sm:$0xff]
  %v16 = vld [vmem:[%s0 + $0x28] sm:$0xff]
  %v17 = vld [vmem:[%s0 + $0x30] sm:$0xff]
  %v18 = vld [vmem:[%s0 + $0x38] sm:$0xff]
  %v19 = vld [vmem:[%s0 + $0x40] sm:$0xff]
  %v20 = vld [vmem:[%s0 + $0x48] sm:$0xff]
  %v21 = vld [vmem:[%s0 + $0x50] sm:$0xff]
  %v22 = vld [vmem:[%s0 + $0x58] sm:$0xff]
  %v23 = vld [vmem:[%s0 + $0x60] sm:$0xff]
  %v24 = vld [vmem:[%s0 + $0x68] sm:$0xff]
  %v25 = vld [vmem:[%s0 + $0x70] sm:$0xff]
  %v26 = vld [vmem:[%s0 + $0x78] sm:$0xff]
  %v27 = vld [vmem:[%s0 + $0x80] sm:$0xff]
  %v28 = vld [vmem:[%s0 + $0x88] sm:$0xff]
  %v29 = vld [vmem:[%s0 + $0x90] sm:$0xff]
  %v30 = vld [vmem:[%s0 + $0x98] sm:$0xff]
  %v31 = vld [vmem:[%s0 + $0xa0] sm:$0xff]
  %v32 = vld [vmem:[%s0 + $0xa8] sm:$0xff]
  %v33 = vld [vmem:[%s0 + $0xb0] sm:$0xff]
  %v34 = vld [vmem:[%s0 + $0xb8] sm:$0xff]
  %v35 = vld [vmem:[%s0 + $0xc0] sm:$0xff]
  %v36 = vld [vmem:[%s0 + $0xc8] sm:$0xff]
  %v37 = vld [vmem:[%s0 + $0xd0] sm:$0xff]
  %v38 = vld [vmem:[%s0 + $0xd8] sm:$0xff]
  %v39 = vld [vmem:[%s0 + $0xe0] sm:$0xff]
  %v40 = vld [vmem:[%s0 + $0xe8] sm:$0xff]
  %v41 = vld [vmem:[%s0 + $0xf0] sm:$0xff]
  %v42 = vld [vmem:[%s0 + $0xf8] sm:$0xff]
  %v43 = vld [vmem:[%s0 + $0x100] sm:$0xff]
  %v44 = vld [vmem:[%s0 + $0x108] sm:$0xff]
  %v45 = vld [vmem:[%s0 + $0x110] sm:$0xff]
  %v46 = vld [vmem:[%s0 + $0x118] sm:$0xff]
  %v47 = vld [vmem:[%s0 + $0x120] sm:$0xff]
  %v48 = vld [vmem:[%s0 + $0x128] sm:$0xff]
  %v49 = vld [vmem:[%s0 + $0x130] sm:$0xff]
  %v50 = vld [vmem:[%s0 + $0x138] sm:$0xff]
  %v51 = vld [vmem:[%s0 + $0x140] sm:$0xff]
  %v52 = vld [vmem:[%s0 + $0x148] sm:$0xff]
  %v53 = vld [vmem:[%s0 + $0x150] sm:$0xff]
  %v54 = vld [vmem:[%s0 + $0x158] sm:$0xff]
  %v55 = vld [vmem:[%s0 + $0x160] sm:$0xff]
  %v56 = vld [vmem:[%s0 + $0x168] sm:$0xff]
  %v57 = vld [vmem:[%s0 + $0x170] sm:$0xff]
  %v58 = vld [vmem:[%s0 + $0x178] sm:$0xff]
  %v59 = vld [vmem:[%s0 + $0x180] sm:$0xff]
  %v60 = vld [vmem:[%s0 + $0x188] sm:$0xff]
  %v61 = vld [vmem:[%s0 + $0x190] sm:$0xff]
  %v62 = vld [vmem:[%s0 + $0x198] sm:$0xff]
  %v63 = vld [vmem:[%s0 + $0x1a0] sm:$0xff]
  %v64 = vld [vmem:[%s0 + $0x1a8] sm:$0xff]
  %v65 = vld [vmem:[%s0 + $0x1b0] sm:$0xff]
  %v66 = vld [vmem:[%s0 + $0x1b8] sm:$0xff]
  %v67 = vld [vmem:[%s0 + $0x1c0] sm:$0xff]
  %v68 = vld [vmem:[%s0 + $0x1c8] sm:$0xff]
  %v69 = vld [vmem:[%s0 + $0x1d0] sm:$0xff]
  %v70 = vld [vmem:[%s0 + $0x1d8] sm:$0xff]
  %v71 = vld [vmem:[%s0 + $0x1e0] sm:$0xff]
  %v72 = vld [vmem:[%s0 + $0x1e8] sm:$0xff]
  %v73 = vld [vmem:[%s0 + $0x1f0] sm:$0xff]
  %v74 = vld [vmem:[%s0 + $0x1f8] sm:$0xff]
  %v75 = vld [vmem:[%s1] sm:$0xf]
  %vm76 = vcmask 31744
  %v78 = vsel %vm76, %v11, 0
  %v81 = vsel %vm76, %v12, 0
  %v84 = vsel %vm76, %v13, 0
  %v87 = vsel %vm76, %v14, 0
  %v90 = vsel %vm76, %v15, 0
  %v93 = vsel %vm76, %v16, 0
  %v96 = vsel %vm76, %v17, 0
  %v99 = vsel %vm76, %v18, 0
  %v102 = vsel %vm76, %v19, 0
  %v105 = vsel %vm76, %v20, 0
  %v108 = vsel %vm76, %v21, 0
  %v111 = vsel %vm76, %v22, 0
  %v114 = vsel %vm76, %v23, 0
  %v117 = vsel %vm76, %v24, 0
  %v120 = vsel %vm76, %v25, 0
  %v123 = vsel %vm76, %v26, 0
  %v126 = vsel %vm76, %v27, 0
  %v129 = vsel %vm76, %v28, 0
  %v132 = vsel %vm76, %v29, 0
  %v135 = vsel %vm76, %v30, 0
  %v138 = vsel %vm76, %v31, 0
  %v141 = vsel %vm76, %v32, 0
  %v144 = vsel %vm76, %v33, 0
  %v147 = vsel %vm76, %v34, 0
  %v150 = vsel %vm76, %v35, 0
  %v153 = vsel %vm76, %v36, 0
  %v156 = vsel %vm76, %v37, 0
  %v159 = vsel %vm76, %v38, 0
  %v162 = vsel %vm76, %v39, 0
  %v165 = vsel %vm76, %v40, 0
  %v168 = vsel %vm76, %v41, 0
  %v171 = vsel %vm76, %v42, 0
  %v174 = vsel %vm76, %v43, 0
  %v177 = vsel %vm76, %v44, 0
  %v180 = vsel %vm76, %v45, 0
  %v183 = vsel %vm76, %v46, 0
  %v186 = vsel %vm76, %v47, 0
  %v189 = vsel %vm76, %v48, 0
  %v192 = vsel %vm76, %v49, 0
  %v195 = vsel %vm76, %v50, 0
  %v198 = vsel %vm76, %v51, 0
  %v201 = vsel %vm76, %v52, 0
  %v204 = vsel %vm76, %v53, 0
  %v207 = vsel %vm76, %v54, 0
  %v210 = vsel %vm76, %v55, 0
  %v213 = vsel %vm76, %v56, 0
  %v216 = vsel %vm76, %v57, 0
  %v219 = vsel %vm76, %v58, 0
  %v222 = vsel %vm76, %v59, 0
  %v225 = vsel %vm76, %v60, 0
  %v228 = vsel %vm76, %v61, 0
  %v231 = vsel %vm76, %v62, 0
  %v234 = vsel %vm76, %v63, 0
  %v237 = vsel %vm76, %v64, 0
  %v240 = vsel %vm76, %v65, 0
  %v243 = vsel %vm76, %v66, 0
  %v246 = vsel %vm76, %v67, 0
  %v249 = vsel %vm76, %v68, 0
  %v252 = vsel %vm76, %v69, 0
  %v255 = vsel %vm76, %v70, 0
  %v258 = vsel %vm76, %v71, 0
  %v261 = vsel %vm76, %v72, 0
  %v264 = vsel %vm76, %v73, 0
  %v267 = vsel %vm76, %v74, 0
  %vm269 = vcmask 1043456
  %v271 = vsel %vm269, %v75, 0
  %273 = vmatpush.msra.mxu0 0.0
  %274 = vmatpush.msra.mxu0 0.0
  %275 = vmatpush.msra.mxu0 0.0
  %276 = vmatpush.msra.mxu0 0.0
  %277 = vmatpush.msra.mxu0 0.0
  %278 = vmatpush.msra.mxu0 0.0
  %279 = vmatpush.msra.mxu0 0.0
  %280 = vmatpush.msra.mxu0 0.0
  %281 = vmatpush.msra.mxu0 0.0
  %282 = vmatpush.msra.mxu0 0.0
  %283 = vmatpush.msra.mxu0 0.0
  %284 = vmatpush.msra.mxu0 0.0
  %285 = vmatpush.msra.mxu0 0.0
  %286 = vmatpush.msra.mxu0 0.0
  %287 = vmatpush.msra.mxu0 0.0
  %288 = vmatpush.msra.mxu0 %v271
  %289 = vmatmul.f32.gmra.mxu0 %v78
  %v290 = vpop.f32.mrf.mxu0
  %v291 = vadd.f32 0.0, %v290
  %292 = vmatmul.f32.gmra.mxu0 %v81
  %v293 = vpop.f32.mrf.mxu0
  %v294 = vadd.f32 0.0, %v293
  %295 = vmatmul.f32.gmra.mxu0 %v84
  %v296 = vpop.f32.mrf.mxu0
  %v297 = vadd.f32 0.0, %v296
  %298 = vmatmul.f32.gmra.mxu0 %v87
  %v299 = vpop.f32.mrf.mxu0
  %v300 = vadd.f32 0.0, %v299
  %301 = vmatmul.f32.gmra.mxu0 %v90
  %v302 = vpop.f32.mrf.mxu0
  %v303 = vadd.f32 0.0, %v302
  %304 = vmatmul.f32.gmra.mxu0 %v93
  %v305 = vpop.f32.mrf.mxu0
  %v306 = vadd.f32 0.0, %v305
  %307 = vmatmul.f32.gmra.mxu0 %v96
  %v308 = vpop.f32.mrf.mxu0
  %v309 = vadd.f32 0.0, %v308
  %310 = vmatmul.f32.gmra.mxu0 %v99
  %v311 = vpop.f32.mrf.mxu0
  %v312 = vadd.f32 0.0, %v311
  %313 = vmatmul.f32.gmra.mxu0 %v102
  %v314 = vpop.f32.mrf.mxu0
  %v315 = vadd.f32 0.0, %v314
  %316 = vmatmul.f32.gmra.mxu0 %v105
  %v317 = vpop.f32.mrf.mxu0
  %v318 = vadd.f32 0.0, %v317
  %319 = vmatmul.f32.gmra.mxu0 %v108
  %v320 = vpop.f32.mrf.mxu0
  %v321 = vadd.f32 0.0, %v320
  %322 = vmatmul.f32.gmra.mxu0 %v111
  %v323 = vpop.f32.mrf.mxu0
  %v324 = vadd.f32 0.0, %v323
  %325 = vmatmul.f32.gmra.mxu0 %v114
  %v326 = vpop.f32.mrf.mxu0
  %v327 = vadd.f32 0.0, %v326
  %328 = vmatmul.f32.gmra.mxu0 %v117
  %v329 = vpop.f32.mrf.mxu0
  %v330 = vadd.f32 0.0, %v329
  %331 = vmatmul.f32.gmra.mxu0 %v120
  %v332 = vpop.f32.mrf.mxu0
  %v333 = vadd.f32 0.0, %v332
  %334 = vmatmul.f32.gmra.mxu0 %v123
  %v335 = vpop.f32.mrf.mxu0
  %v336 = vadd.f32 0.0, %v335
  %337 = vmatmul.f32.gmra.mxu0 %v126
  %v338 = vpop.f32.mrf.mxu0
  %v339 = vadd.f32 0.0, %v338
  %340 = vmatmul.f32.gmra.mxu0 %v129
  %v341 = vpop.f32.mrf.mxu0
  %v342 = vadd.f32 0.0, %v341
  %343 = vmatmul.f32.gmra.mxu0 %v132
  %v344 = vpop.f32.mrf.mxu0
  %v345 = vadd.f32 0.0, %v344
  %346 = vmatmul.f32.gmra.mxu0 %v135
  %v347 = vpop.f32.mrf.mxu0
  %v348 = vadd.f32 0.0, %v347
  %349 = vmatmul.f32.gmra.mxu0 %v138
  %v350 = vpop.f32.mrf.mxu0
  %v351 = vadd.f32 0.0, %v350
  %352 = vmatmul.f32.gmra.mxu0 %v141
  %v353 = vpop.f32.mrf.mxu0
  %v354 = vadd.f32 0.0, %v353
  %355 = vmatmul.f32.gmra.mxu0 %v144
  %v356 = vpop.f32.mrf.mxu0
  %v357 = vadd.f32 0.0, %v356
  %358 = vmatmul.f32.gmra.mxu0 %v147
  %v359 = vpop.f32.mrf.mxu0
  %v360 = vadd.f32 0.0, %v359
  %361 = vmatmul.f32.gmra.mxu0 %v150
  %v362 = vpop.f32.mrf.mxu0
  %v363 = vadd.f32 0.0, %v362
  %364 = vmatmul.f32.gmra.mxu0 %v153
  %v365 = vpop.f32.mrf.mxu0
  %v366 = vadd.f32 0.0, %v365
  %367 = vmatmul.f32.gmra.mxu0 %v156
  %v368 = vpop.f32.mrf.mxu0
  %v369 = vadd.f32 0.0, %v368
  %370 = vmatmul.f32.gmra.mxu0 %v159
  %v371 = vpop.f32.mrf.mxu0
  %v372 = vadd.f32 0.0, %v371
  %373 = vmatmul.f32.gmra.mxu0 %v162
  %v374 = vpop.f32.mrf.mxu0
  %v375 = vadd.f32 0.0, %v374
  %376 = vmatmul.f32.gmra.mxu0 %v165
  %v377 = vpop.f32.mrf.mxu0
  %v378 = vadd.f32 0.0, %v377
  %379 = vmatmul.f32.gmra.mxu0 %v168
  %v380 = vpop.f32.mrf.mxu0
  %v381 = vadd.f32 0.0, %v380
  %382 = vmatmul.f32.gmra.mxu0 %v171
  %v383 = vpop.f32.mrf.mxu0
  %v384 = vadd.f32 0.0, %v383
  %385 = vmatmul.f32.gmra.mxu0 %v174
  %v386 = vpop.f32.mrf.mxu0
  %v387 = vadd.f32 0.0, %v386
  %388 = vmatmul.f32.gmra.mxu0 %v177
  %v389 = vpop.f32.mrf.mxu0
  %v390 = vadd.f32 0.0, %v389
  %391 = vmatmul.f32.gmra.mxu0 %v180
  %v392 = vpop.f32.mrf.mxu0
  %v393 = vadd.f32 0.0, %v392
  %394 = vmatmul.f32.gmra.mxu0 %v183
  %v395 = vpop.f32.mrf.mxu0
  %v396 = vadd.f32 0.0, %v395
  %397 = vmatmul.f32.gmra.mxu0 %v186
  %v398 = vpop.f32.mrf.mxu0
  %v399 = vadd.f32 0.0, %v398
  %400 = vmatmul.f32.gmra.mxu0 %v189
  %v401 = vpop.f32.mrf.mxu0
  %v402 = vadd.f32 0.0, %v401
  %403 = vmatmul.f32.gmra.mxu0 %v192
  %v404 = vpop.f32.mrf.mxu0
  %v405 = vadd.f32 0.0, %v404
  %406 = vmatmul.f32.gmra.mxu0 %v195
  %v407 = vpop.f32.mrf.mxu0
  %v408 = vadd.f32 0.0, %v407
  %409 = vmatmul.f32.gmra.mxu0 %v198
  %v410 = vpop.f32.mrf.mxu0
  %v411 = vadd.f32 0.0, %v410
  %412 = vmatmul.f32.gmra.mxu0 %v201
  %v413 = vpop.f32.mrf.mxu0
  %v414 = vadd.f32 0.0, %v413
  %415 = vmatmul.f32.gmra.mxu0 %v204
  %v416 = vpop.f32.mrf.mxu0
  %v417 = vadd.f32 0.0, %v416
  %418 = vmatmul.f32.gmra.mxu0 %v207
  %v419 = vpop.f32.mrf.mxu0
  %v420 = vadd.f32 0.0, %v419
  %421 = vmatmul.f32.gmra.mxu0 %v210
  %v422 = vpop.f32.mrf.mxu0
  %v423 = vadd.f32 0.0, %v422
  %424 = vmatmul.f32.gmra.mxu0 %v213
  %v425 = vpop.f32.mrf.mxu0
  %v426 = vadd.f32 0.0, %v425
  %427 = vmatmul.f32.gmra.mxu0 %v216
  %v428 = vpop.f32.mrf.mxu0
  %v429 = vadd.f32 0.0, %v428
  %430 = vmatmul.f32.gmra.mxu0 %v219
  %v431 = vpop.f32.mrf.mxu0
  %v432 = vadd.f32 0.0, %v431
  %433 = vmatmul.f32.gmra.mxu0 %v222
  %v434 = vpop.f32.mrf.mxu0
  %v435 = vadd.f32 0.0, %v434
  %436 = vmatmul.f32.gmra.mxu0 %v225
  %v437 = vpop.f32.mrf.mxu0
  %v438 = vadd.f32 0.0, %v437
  %439 = vmatmul.f32.gmra.mxu0 %v228
  %v440 = vpop.f32.mrf.mxu0
  %v441 = vadd.f32 0.0, %v440
  %442 = vmatmul.f32.gmra.mxu0 %v231
  %v443 = vpop.f32.mrf.mxu0
  %v444 = vadd.f32 0.0, %v443
  %445 = vmatmul.f32.gmra.mxu0 %v234
  %v446 = vpop.f32.mrf.mxu0
  %v447 = vadd.f32 0.0, %v446
  %448 = vmatmul.f32.gmra.mxu0 %v237
  %v449 = vpop.f32.mrf.mxu0
  %v450 = vadd.f32 0.0, %v449
  %451 = vmatmul.f32.gmra.mxu0 %v240
  %v452 = vpop.f32.mrf.mxu0
  %v453 = vadd.f32 0.0, %v452
  %454 = vmatmul.f32.gmra.mxu0 %v243
  %v455 = vpop.f32.mrf.mxu0
  %v456 = vadd.f32 0.0, %v455
  %457 = vmatmul.f32.gmra.mxu0 %v246
  %v458 = vpop.f32.mrf.mxu0
  %v459 = vadd.f32 0.0, %v458
  %460 = vmatmul.f32.gmra.mxu0 %v249
  %v461 = vpop.f32.mrf.mxu0
  %v462 = vadd.f32 0.0, %v461
  %463 = vmatmul.f32.gmra.mxu0 %v252
  %v464 = vpop.f32.mrf.mxu0
  %v465 = vadd.f32 0.0, %v464
  %466 = vmatmul.f32.gmra.mxu0 %v255
  %v467 = vpop.f32.mrf.mxu0
  %v468 = vadd.f32 0.0, %v467
  %469 = vmatmul.f32.gmra.mxu0 %v258
  %v470 = vpop.f32.mrf.mxu0
  %v471 = vadd.f32 0.0, %v470
  %472 = vmatmul.f32.gmra.mxu0 %v261
  %v473 = vpop.f32.mrf.mxu0
  %v474 = vadd.f32 0.0, %v473
  %475 = vmatmul.f32.gmra.mxu0 %v264
  %v476 = vpop.f32.mrf.mxu0
  %v477 = vadd.f32 0.0, %v476
  %478 = vmatmul.f32.gmra.mxu0 %v267
  %v479 = vpop.f32.mrf.mxu0
  %v480 = vadd.f32 0.0, %v479
  %481 = vdwg.mxu0
  %vm482 = vcmask 64512
  %483 = vst.msk [vmem:[%s2] sm:$0xff] %vm482, %v291
  %484 = vst.msk [vmem:[%s2 + $0x8] sm:$0xff] %vm482, %v294
  %485 = vst.msk [vmem:[%s2 + $0x10] sm:$0xff] %vm482, %v297
  %486 = vst.msk [vmem:[%s2 + $0x18] sm:$0xff] %vm482, %v300
  %487 = vst.msk [vmem:[%s2 + $0x20] sm:$0xff] %vm482, %v303
  %488 = vst.msk [vmem:[%s2 + $0x28] sm:$0xff] %vm482, %v306
  %489 = vst.msk [vmem:[%s2 + $0x30] sm:$0xff] %vm482, %v309
  %490 = vst.msk [vmem:[%s2 + $0x38] sm:$0xff] %vm482, %v312
  %491 = vst.msk [vmem:[%s2 + $0x40] sm:$0xff] %vm482, %v315
  %492 = vst.msk [vmem:[%s2 + $0x48] sm:$0xff] %vm482, %v318
  %493 = vst.msk [vmem:[%s2 + $0x50] sm:$0xff] %vm482, %v321
  %494 = vst.msk [vmem:[%s2 + $0x58] sm:$0xff] %vm482, %v324
  %495 = vst.msk [vmem:[%s2 + $0x60] sm:$0xff] %vm482, %v327
  %496 = vst.msk [vmem:[%s2 + $0x68] sm:$0xff] %vm482, %v330
  %497 = vst.msk [vmem:[%s2 + $0x70] sm:$0xff] %vm482, %v333
  %498 = vst.msk [vmem:[%s2 + $0x78] sm:$0xff] %vm482, %v336
  %499 = vst.msk [vmem:[%s2 + $0x80] sm:$0xff] %vm482, %v339
  %500 = vst.msk [vmem:[%s2 + $0x88] sm:$0xff] %vm482, %v342
  %501 = vst.msk [vmem:[%s2 + $0x90] sm:$0xff] %vm482, %v345
  %502 = vst.msk [vmem:[%s2 + $0x98] sm:$0xff] %vm482, %v348
  %503 = vst.msk [vmem:[%s2 + $0xa0] sm:$0xff] %vm482, %v351
  %504 = vst.msk [vmem:[%s2 + $0xa8] sm:$0xff] %vm482, %v354
  %505 = vst.msk [vmem:[%s2 + $0xb0] sm:$0xff] %vm482, %v357
  %506 = vst.msk [vmem:[%s2 + $0xb8] sm:$0xff] %vm482, %v360
  %507 = vst.msk [vmem:[%s2 + $0xc0] sm:$0xff] %vm482, %v363
  %508 = vst.msk [vmem:[%s2 + $0xc8] sm:$0xff] %vm482, %v366
  %509 = vst.msk [vmem:[%s2 + $0xd0] sm:$0xff] %vm482, %v369
  %510 = vst.msk [vmem:[%s2 + $0xd8] sm:$0xff] %vm482, %v372
  %511 = vst.msk [vmem:[%s2 + $0xe0] sm:$0xff] %vm482, %v375
  %512 = vst.msk [vmem:[%s2 + $0xe8] sm:$0xff] %vm482, %v378
  %513 = vst.msk [vmem:[%s2 + $0xf0] sm:$0xff] %vm482, %v381
  %514 = vst.msk [vmem:[%s2 + $0xf8] sm:$0xff] %vm482, %v384
  %515 = vst.msk [vmem:[%s2 + $0x100] sm:$0xff] %vm482, %v387
  %516 = vst.msk [vmem:[%s2 + $0x108] sm:$0xff] %vm482, %v390
  %517 = vst.msk [vmem:[%s2 + $0x110] sm:$0xff] %vm482, %v393
  %518 = vst.msk [vmem:[%s2 + $0x118] sm:$0xff] %vm482, %v396
  %519 = vst.msk [vmem:[%s2 + $0x120] sm:$0xff] %vm482, %v399
  %520 = vst.msk [vmem:[%s2 + $0x128] sm:$0xff] %vm482, %v402
  %521 = vst.msk [vmem:[%s2 + $0x130] sm:$0xff] %vm482, %v405
  %522 = vst.msk [vmem:[%s2 + $0x138] sm:$0xff] %vm482, %v408
  %523 = vst.msk [vmem:[%s2 + $0x140] sm:$0xff] %vm482, %v411
  %524 = vst.msk [vmem:[%s2 + $0x148] sm:$0xff] %vm482, %v414
  %525 = vst.msk [vmem:[%s2 + $0x150] sm:$0xff] %vm482, %v417
  %526 = vst.msk [vmem:[%s2 + $0x158] sm:$0xff] %vm482, %v420
  %527 = vst.msk [vmem:[%s2 + $0x160] sm:$0xff] %vm482, %v423
  %528 = vst.msk [vmem:[%s2 + $0x168] sm:$0xff] %vm482, %v426
  %529 = vst.msk [vmem:[%s2 + $0x170] sm:$0xff] %vm482, %v429
  %530 = vst.msk [vmem:[%s2 + $0x178] sm:$0xff] %vm482, %v432
  %531 = vst.msk [vmem:[%s2 + $0x180] sm:$0xff] %vm482, %v435
  %532 = vst.msk [vmem:[%s2 + $0x188] sm:$0xff] %vm482, %v438
  %533 = vst.msk [vmem:[%s2 + $0x190] sm:$0xff] %vm482, %v441
  %534 = vst.msk [vmem:[%s2 + $0x198] sm:$0xff] %vm482, %v444
  %535 = vst.msk [vmem:[%s2 + $0x1a0] sm:$0xff] %vm482, %v447
  %536 = vst.msk [vmem:[%s2 + $0x1a8] sm:$0xff] %vm482, %v450
  %537 = vst.msk [vmem:[%s2 + $0x1b0] sm:$0xff] %vm482, %v453
  %538 = vst.msk [vmem:[%s2 + $0x1b8] sm:$0xff] %vm482, %v456
  %539 = vst.msk [vmem:[%s2 + $0x1c0] sm:$0xff] %vm482, %v459
  %540 = vst.msk [vmem:[%s2 + $0x1c8] sm:$0xff] %vm482, %v462
  %541 = vst.msk [vmem:[%s2 + $0x1d0] sm:$0xff] %vm482, %v465
  %542 = vst.msk [vmem:[%s2 + $0x1d8] sm:$0xff] %vm482, %v468
  %543 = vst.msk [vmem:[%s2 + $0x1e0] sm:$0xff] %vm482, %v471
  %544 = vst.msk [vmem:[%s2 + $0x1e8] sm:$0xff] %vm482, %v474
  %545 = vst.msk [vmem:[%s2 + $0x1f0] sm:$0xff] %vm482, %v477
  %546 = vst.msk [vmem:[%s2 + $0x1f8] sm:$0xff] %vm482, %v480
  // Predicated region
  $region10: #{hv_lca_forward.16} parent=0 // pred_check
    _
  $region11: #{hv_lca_forward.16} parent=0 // pred_check_branch
    %548 = sbr.rel (0) target = $region13
  $region12: #{hv_lca_forward.16} parent=0 // pred_region
    _
  $region13: #{hv_lca_forward.16} parent=0 // pred_fallthru
    _
  // Predicated region
  $region14: #{hv_lca_forward.16} parent=0 // pred_check
    _
  $region15: #{hv_lca_forward.16} parent=0 // pred_check_branch
    %550 = sbr.rel (0) target = $region17
  $region16: #{hv_lca_forward.16} parent=0 // pred_region
    _
  $region17: #{hv_lca_forward.16} parent=0 // pred_fallthru
    _

// kernel: hv_lca_forward.18
$region0: #{hv_lca_forward.18}
  #allocation0 [shape = 'u32[]', space=smem, size = 0x4, offset = 0x4, fixed_abs, tag = 'smem constant byte address 0x4 - core index']
  #allocation1 [shape = 'u32[72,128]{1,0:T(1,128)}', space=vmem, size = 0x9000, scoped, tag = 'internal scratch']
  %s0 = inlined_call_operand.vmem [shape: f32[2,2,2,256], index: 0, kind: input, shape index: {}]
  %s1 = inlined_call_operand.vmem [shape: f32[2,2,2,256], index: 1, kind: input, shape index: {}]
  %s2 = inlined_call_operand.vmem [shape: f32[2,2,2,256], index: 2, kind: input, shape index: {}]
  %s3 = inlined_call_operand.vmem [shape: f32[2,1,1], index: 3, kind: input, shape index: {}]
  %s4 = inlined_call_operand.vmem [shape: f32[2,2,2,256], index: 4, kind: output, shape index: {}]
  %s5 = sld [smem:[#allocation0]]
  $region49: #{hv_lca_forward.18} parent=0
    _
  %s7 = ssub.s32 1, %s5
  %s8 = scalar_select 0, %s7, %s5
  loop: start=0, step=1, limit=6
  $region2: #{hv_lca_forward.18} parent=0 // loop_pre_header
    _
  $region3: #{hv_lca_forward.18} parent=0 // loop_header
    %s10 = sphi 0, %s14
    %p11 = scmp.ge.s32.totalorder %s10, 6
    %s17 = sphi 0, %s29
    %s18 = sphi 0, %s25
    %s19 = sphi 0, %s17
    %s20 = sphi 0, %s18
    %s21 = sphi 0, %s19
    %s22 = sphi 0, %s20
    %s34 = sphi 0, %s36
    %s37 = sphi 0, %s34
    %s38 = sphi 0, %s37
    %s54 = sphi 0, %s38
    %s62 = sphi 0, %s64
    %s65 = sphi 0, %s62
    %s66 = sphi 0, %s65
    %s82 = sphi 0, %s66
    %s90 = sphi 0, %s92
    %s93 = sphi 0, %s90
    %s94 = sphi 0, %s93
    %s110 = sphi 0, %s94
    %s116 = sphi 0, %s118
    %s119 = sphi 0, %s116
    %s120 = sphi 0, %s119
    %s136 = sphi 0, %s120
    %s144 = sphi 0, %s146
    %s147 = sphi 0, %s144
    %s148 = sphi 0, %s147
    %s164 = sphi 0, %s148
  $region4: #{hv_lca_forward.18} parent=0 // loop_header_branch
    %13 = sbr.rel (%p11) target = $region8
  $region5: #{hv_lca_forward.18} parent=0 // loop_body
    %s15 = ssub.s32 %s10, 1
    %s16 = ssub.s32 %s10, 2
    %s23 = sadd.s32 1, %s18
    %p24 = scmp.ge.s32.totalorder %s23, 2
    %s25 = scalar_select %p24, 0, %s23
    %s26 = sadd.s32 1, %s17
    %s27 = scalar_select %p24, %s26, %s17
    %p28 = scmp.ge.s32.totalorder %s27, 2
    %s29 = scalar_select %p28, 0, %s27
    %s30 = ssub.s32 %s17, %s29
    %s31 = ssub.s32 %s18, %s25
    %s32 = sor.u32 %s30, %s31
    %p33 = scmp.eq.s32.totalorder %s32, 0
    %s35 = sadd.s32 %s34, 1
    %s36 = scalar_select %p33, %s34, %s35
    %p39 = pneg %p33
    %p40 = scmp.eq.s32.totalorder %s10, 3
    %p41 = por %p39, %p40
    %p42 = scmp.ne.s32.totalorder %s34, %s37
    %p43 = scmp.eq.s32.totalorder %s10, 0
    %p44 = por %p42, %p43
    %p45 = scmp.ne.s32.totalorder %s34, %s37
    %p46 = scmp.eq.s32.totalorder %s15, 3
    %p47 = por %p45, %p46
    %p48 = scmp.ne.s32.totalorder %s37, %s38
    %p49 = scmp.eq.s32.totalorder %s15, 0
    %p50 = por %p48, %p49
    %p51 = scmp.ne.s32.totalorder %s37, %s38
    %p52 = scmp.eq.s32.totalorder %s16, 3
    %p53 = por %p51, %p52
    %p55 = scmp.ne.s32.totalorder %s38, %s54
    %p56 = scmp.eq.s32.totalorder %s16, 0
    %p57 = por %p55, %p56
    %s58 = ssub.s32 %s17, %s29
    %s59 = ssub.s32 %s18, %s25
    %s60 = sor.u32 %s58, %s59
    %p61 = scmp.eq.s32.totalorder %s60, 0
    %s63 = sadd.s32 %s62, 1
    %s64 = scalar_select %p61, %s62, %s63
    %p67 = pneg %p61
    %p68 = scmp.eq.s32.totalorder %s10, 3
    %p69 = por %p67, %p68
    %p70 = scmp.ne.s32.totalorder %s62, %s65
    %p71 = scmp.eq.s32.totalorder %s10, 0
    %p72 = por %p70, %p71
    %p73 = scmp.ne.s32.totalorder %s62, %s65
    %p74 = scmp.eq.s32.totalorder %s15, 3
    %p75 = por %p73, %p74
    %p76 = scmp.ne.s32.totalorder %s65, %s66
    %p77 = scmp.eq.s32.totalorder %s15, 0
    %p78 = por %p76, %p77
    %p79 = scmp.ne.s32.totalorder %s65, %s66
    %p80 = scmp.eq.s32.totalorder %s16, 3
    %p81 = por %p79, %p80
    %p83 = scmp.ne.s32.totalorder %s66, %s82
    %p84 = scmp.eq.s32.totalorder %s16, 0
    %p85 = por %p83, %p84
    %s86 = ssub.s32 %s17, %s29
    %s87 = ssub.s32 %s18, %s25
    %s88 = sor.u32 %s86, %s87
    %p89 = scmp.eq.s32.totalorder %s88, 0
    %s91 = sadd.s32 %s90, 1
    %s92 = scalar_select %p89, %s90, %s91
    %p95 = pneg %p89
    %p96 = scmp.eq.s32.totalorder %s10, 3
    %p97 = por %p95, %p96
    %p98 = scmp.ne.s32.totalorder %s90, %s93
    %p99 = scmp.eq.s32.totalorder %s10, 0
    %p100 = por %p98, %p99
    %p101 = scmp.ne.s32.totalorder %s90, %s93
    %p102 = scmp.eq.s32.totalorder %s15, 3
    %p103 = por %p101, %p102
    %p104 = scmp.ne.s32.totalorder %s93, %s94
    %p105 = scmp.eq.s32.totalorder %s15, 0
    %p106 = por %p104, %p105
    %p107 = scmp.ne.s32.totalorder %s93, %s94
    %p108 = scmp.eq.s32.totalorder %s16, 3
    %p109 = por %p107, %p108
    %p111 = scmp.ne.s32.totalorder %s94, %s110
    %p112 = scmp.eq.s32.totalorder %s16, 0
    %p113 = por %p111, %p112
    %s114 = ssub.s32 %s18, %s25
    %p115 = scmp.eq.s32.totalorder %s114, 0
    %s117 = sadd.s32 %s116, 1
    %s118 = scalar_select %p115, %s116, %s117
    %p121 = pneg %p115
    %p122 = scmp.eq.s32.totalorder %s10, 3
    %p123 = por %p121, %p122
    %p124 = scmp.ne.s32.totalorder %s116, %s119
    %p125 = scmp.eq.s32.totalorder %s10, 0
    %p126 = por %p124, %p125
    %p127 = scmp.ne.s32.totalorder %s116, %s119
    %p128 = scmp.eq.s32.totalorder %s15, 3
    %p129 = por %p127, %p128
    %p130 = scmp.ne.s32.totalorder %s119, %s120
    %p131 = scmp.eq.s32.totalorder %s15, 0
    %p132 = por %p130, %p131
    %p133 = scmp.ne.s32.totalorder %s119, %s120
    %p134 = scmp.eq.s32.totalorder %s16, 3
    %p135 = por %p133, %p134
    %p137 = scmp.ne.s32.totalorder %s120, %s136
    %p138 = scmp.eq.s32.totalorder %s16, 0
    %p139 = por %p137, %p138
    %s140 = ssub.s32 %s17, %s29
    %s141 = ssub.s32 %s18, %s25
    %s142 = sor.u32 %s140, %s141
    %p143 = scmp.eq.s32.totalorder %s142, 0
    %s145 = sadd.s32 %s144, 1
    %s146 = scalar_select %p143, %s144, %s145
    %p149 = pneg %p143
    %p150 = scmp.eq.s32.totalorder %s10, 3
    %p151 = por %p149, %p150
    %p152 = scmp.ne.s32.totalorder %s144, %s147
    %p153 = scmp.eq.s32.totalorder %s10, 0
    %p154 = por %p152, %p153
    %p155 = scmp.ne.s32.totalorder %s144, %s147
    %p156 = scmp.eq.s32.totalorder %s15, 3
    %p157 = por %p155, %p156
    %p158 = scmp.ne.s32.totalorder %s147, %s148
    %p159 = scmp.eq.s32.totalorder %s15, 0
    %p160 = por %p158, %p159
    %p161 = scmp.ne.s32.totalorder %s147, %s148
    %p162 = scmp.eq.s32.totalorder %s16, 3
    %p163 = por %p161, %p162
    %p165 = scmp.ne.s32.totalorder %s148, %s164
    %p166 = scmp.eq.s32.totalorder %s16, 0
    %p167 = por %p165, %p166
    %p168 = scmp.le.s32.totalorder 1, %s10
    %p169 = scmp.lt.s32.totalorder %s10, 5
    %p170 = pnand %p168, %p169
    %p171 = pneg %p170
    // Predicated region
    $region9: #{hv_lca_forward.18} parent=5 // pred_check
      _
    $region10: #{hv_lca_forward.18} parent=5 // pred_check_branch
      %173 = sbr.rel (%p170) target = $region12
    $region11: #{hv_lca_forward.18} parent=5 // pred_region
      %s174 = ssub.s32 %s10, 1
    $region12: #{hv_lca_forward.18} parent=5 // pred_fallthru
      _
    %p175 = scmp.lt.s32.totalorder %s10, 4
    // Predicated region
    $region13: #{hv_lca_forward.18} parent=5 // pred_check
      %p176 = pneg %p175
    $region14: #{hv_lca_forward.18} parent=5 // pred_check_branch
      %178 = sbr.rel (%p176) target = $region16
    $region15: #{hv_lca_forward.18} parent=5 // pred_region
      // Predicated region
      $region17: #{hv_lca_forward.18} parent=15 // pred_check
        %p179 = pneg %p44
      $region18: #{hv_lca_forward.18} parent=15 // pred_check_branch
        %181 = sbr.rel (%p179) target = $region20
      $region19: #{hv_lca_forward.18} parent=15 // pred_region
        %p182 = scmp.lt.s32.totalorder %s17, 1
        %s183 = scalar_select %p182, %s17, 1
        %p184 = scmp.lt.s32.totalorder %s18, 1
        %s185 = scalar_select %p184, %s18, 1
        %s186 = smul.addr %s185, 2
        %s187 = smul.addr %s183, 4
        %s188 = sadd.s32 %s186, %s187
        %s189 = smul.addr %s188, 2
        %s190 = scalar_lea.vmem %s0, %s189
      $region20: #{hv_lca_forward.18} parent=15 // pred_fallthru
        _
      // Predicated region
      $region21: #{hv_lca_forward.18} parent=15 // pred_check
        %p191 = pneg %p72
      $region22: #{hv_lca_forward.18} parent=15 // pred_check_branch
        %193 = sbr.rel (%p191) target = $region24
      $region23: #{hv_lca_forward.18} parent=15 // pred_region
        %p194 = scmp.lt.s32.totalorder %s17, 1
        %s195 = scalar_select %p194, %s17, 1
        %p196 = scmp.lt.s32.totalorder %s18, 1
        %s197 = scalar_select %p196, %s18, 1
        %s198 = smul.addr %s197, 2
        %s199 = smul.addr %s195, 4
        %s200 = sadd.s32 %s198, %s199
        %s201 = smul.addr %s200, 2
        %s202 = scalar_lea.vmem %s1, %s201
      $region24: #{hv_lca_forward.18} parent=15 // pred_fallthru
        _
      // Predicated region
      $region25: #{hv_lca_forward.18} parent=15 // pred_check
        %p203 = pneg %p100
      $region26: #{hv_lca_forward.18} parent=15 // pred_check_branch
        %205 = sbr.rel (%p203) target = $region28
      $region27: #{hv_lca_forward.18} parent=15 // pred_region
        %p206 = scmp.lt.s32.totalorder %s17, 1
        %s207 = scalar_select %p206, %s17, 1
        %p208 = scmp.lt.s32.totalorder %s18, 1
        %s209 = scalar_select %p208, %s18, 1
        %s210 = smul.addr %s209, 2
        %s211 = smul.addr %s207, 4
        %s212 = sadd.s32 %s210, %s211
        %s213 = smul.addr %s212, 2
        %s214 = scalar_lea.vmem %s2, %s213
      $region28: #{hv_lca_forward.18} parent=15 // pred_fallthru
        _
      // Predicated region
      $region29: #{hv_lca_forward.18} parent=15 // pred_check
        %p215 = pneg %p126
      $region30: #{hv_lca_forward.18} parent=15 // pred_check_branch
        %217 = sbr.rel (%p215) target = $region32
      $region31: #{hv_lca_forward.18} parent=15 // pred_region
        %p218 = scmp.lt.s32.totalorder %s18, 1
        %s219 = scalar_select %p218, %s18, 1
        %s220 = scalar_lea.vmem %s3, %s219
      $region32: #{hv_lca_forward.18} parent=15 // pred_fallthru
        _
    $region16: #{hv_lca_forward.18} parent=5 // pred_fallthru
      _
    %p221 = scmp.le.s32.totalorder 1, %s10
    %p222 = scmp.lt.s32.totalorder %s10, 5
    %p223 = pnand %p221, %p222
    %p224 = pneg %p223
    // Predicated region
    $region33: #{hv_lca_forward.18} parent=5 // pred_check
      _
    $region34: #{hv_lca_forward.18} parent=5 // pred_check_branch
      %226 = sbr.rel (%p223) target = $region36
    $region35: #{hv_lca_forward.18} parent=5 // pred_region
      %s227 = ssub.s32 %s10, 1
      %p228 = scmp.lt.s32.totalorder %s19, 1
      %s229 = scalar_select %p228, %s19, 1
      %p230 = scmp.lt.s32.totalorder %s20, 1
      %s231 = scalar_select %p230, %s20, 1
      %s232 = smul.addr %s231, 2
      %s233 = smul.addr %s229, 4
      %s234 = sadd.s32 %s232, %s233
      %s235 = smul.addr %s234, 2
      %s236 = scalar_lea.vmem %s0, %s235
      %p237 = pneg %p50
      %p238 = pneg %p47
      %p239 = scmp.lt.s32.totalorder %s19, 1
      %s240 = scalar_select %p239, %s19, 1
      %p241 = scmp.lt.s32.totalorder %s20, 1
      %s242 = scalar_select %p241, %s20, 1
      %s243 = smul.addr %s242, 2
      %s244 = smul.addr %s240, 4
      %s245 = sadd.s32 %s243, %s244
      %s246 = smul.addr %s245, 2
      %s247 = scalar_lea.vmem %s1, %s246
      %p248 = pneg %p78
      %p249 = pneg %p75
      %p250 = scmp.lt.s32.totalorder %s19, 1
      %s251 = scalar_select %p250, %s19, 1
      %p252 = scmp.lt.s32.totalorder %s20, 1
      %s253 = scalar_select %p252, %s20, 1
      %s254 = smul.addr %s253, 2
      %s255 = smul.addr %s251, 4
      %s256 = sadd.s32 %s254, %s255
      %s257 = smul.addr %s256, 2
      %s258 = scalar_lea.vmem %s2, %s257
      %p259 = pneg %p106
      %p260 = pneg %p103
      %p261 = scmp.lt.s32.totalorder %s20, 1
      %s262 = scalar_select %p261, %s20, 1
      %s263 = scalar_lea.vmem %s3, %s262
      %p264 = pneg %p132
      %p265 = pneg %p129
      %p266 = pneg %p160
      %p267 = pneg %p157
      %p268 = scmp.lt.s32.totalorder %s19, 1
      %s269 = scalar_select %p268, %s19, 1
      %p270 = scmp.lt.s32.totalorder %s20, 1
      %s271 = scalar_select %p270, %s20, 1
      %s272 = smul.addr %s271, 2
      %s273 = smul.addr %s269, 4
      %s274 = sadd.s32 %s272, %s273
      %s275 = smul.addr %s274, 2
      %s276 = scalar_lea.vmem %s4, %s275
      %p277 = scmp.lt.s32.totalorder %s19, 1
      %s278 = scalar_select %p277, %s19, 1
      %p279 = scmp.lt.s32.totalorder %s20, 1
      %s280 = scalar_select %p279, %s20, 1
      %s281 = smul.addr %s280, 2
      %s282 = smul.addr %s278, 4
      %s283 = sadd.s32 %s281, %s282
      %s284 = smul.addr %s283, 2
      %s285 = scalar_lea.vmem %s0, %s284
      %p286 = scmp.lt.s32.totalorder %s19, 1
      %s287 = scalar_select %p286, %s19, 1
      %p288 = scmp.lt.s32.totalorder %s20, 1
      %s289 = scalar_select %p288, %s20, 1
      %s290 = smul.addr %s289, 2
      %s291 = smul.addr %s287, 4
      %s292 = sadd.s32 %s290, %s291
      %s293 = smul.addr %s292, 2
      %s294 = scalar_lea.vmem %s1, %s293
      %p295 = scmp.lt.s32.totalorder %s19, 1
      %s296 = scalar_select %p295, %s19, 1
      %p297 = scmp.lt.s32.totalorder %s20, 1
      %s298 = scalar_select %p297, %s20, 1
      %s299 = smul.addr %s298, 2
      %s300 = smul.addr %s296, 4
      %s301 = sadd.s32 %s299, %s300
      %s302 = smul.addr %s301, 2
      %s303 = scalar_lea.vmem %s2, %s302
      %p304 = scmp.lt.s32.totalorder %s20, 1
      %s305 = scalar_select %p304, %s20, 1
      %s306 = scalar_lea.vmem %s3, %s305
      %p307 = scmp.lt.s32.totalorder %s19, 1
      %s308 = scalar_select %p307, %s19, 1
      %p309 = scmp.lt.s32.totalorder %s20, 1
      %s310 = scalar_select %p309, %s20, 1
      %s311 = smul.addr %s310, 2
      %s312 = smul.addr %s308, 4
      %s313 = sadd.s32 %s311, %s312
      %s314 = smul.addr %s313, 2
      %s315 = scalar_lea.vmem %s4, %s314
      %v316 = vld [vmem:[%s285] sm:$0xf]
      %v317 = vld [vmem:[%s294] sm:$0xf]
      %v318 = vld [vmem:[%s303] sm:$0xf]
      %v319 = vmul.f32 %v316, %v316
      %321 = vst [vmem:[#allocation1] ss:$4 sm:$0xff] %v319
      %v322 = vld.sshfl [vmem:[#allocation1] sm:$0xff pattern:$0x73625140]
      %v323 = vld.sshfl [vmem:[#allocation1 + $0x8] sm:$0xff pattern:$0x73625140]
      %vm326 = vcmask 1041408
      %v327 = vsel %vm326, %v322, 0.0
      %v328 = vsel %vm326, %v323, 0.0
      %v329 = vadd.f32 %v327, %v328
      %330 = vadd.xlane.f32.xlu0 %v329
      %v331 = vpop.xlane.xlu0 %330
      %v332 = vrsqrt.pop %v331
      %v333 = vmul.f32 %v332, %v331
      %v334 = vmul.f32 %v333, %v332
      %v335 = vmul.f32 0.5, %v334
      %v336 = vsub.f32 1.5, %v335
      %v337 = vmul.f32 %v332, %v336
      %v338 = vmul.f32 %v331, %v337
      %vm339 = vcmp.eq.f32.partialorder %v331, inf
      %v340 = vsel %vm339, %v331, %v338
      %vm341 = vcmp.eq.f32.partialorder %v331, 0.0
      %v342 = vand.u32 %v331, 2147483648
      %v343 = vsel %vm341, %v342, %v340
      %v344 = vmax.f32 %v343, 1e-12
      %v347 = vunpack.c.l.s4 269488144
      %v348 = vunpack.c.0.s8 %v347
      %v349 = vperm.slane %v344, %v348
      %v351 = vrcp.pop %v349
      %v352 = vmul.f32 %v349, %v351
      %v353 = vsub.f32 1.0, %v352
      %v354 = vmul.f32 %v351, %v353
      %v355 = vadd.f32 %v351, %v354
      %vm356 = vweird.f32 %v349
      %vm357 = vweird.f32 %v351
      %vm358 = vmor %vm356, %vm357
      %v359 = vsel %vm358, %v351, %v355
      %v360 = vand.u32 2147483647, %v349
      %vm361 = vcmp.eq.f32.partialorder %v360, 8.507059e+37
      %v362 = vand.u32 %v349, 2147483648
      %v363 = vor.u32 1.1754944e-38, %v362
      %v364 = vsel %vm361, %v363, %v359
      %v365 = vmul.f32 %v316, %v364
      %v366 = vmul.f32 %v317, %v317
      %368 = vst [vmem:[#allocation1] ss:$4 sm:$0xff] %v366
      %v369 = vld.sshfl [vmem:[#allocation1] sm:$0xff pattern:$0x73625140]
      %v370 = vld.sshfl [vmem:[#allocation1 + $0x8] sm:$0xff pattern:$0x73625140]
      %v373 = vsel %vm326, %v369, 0.0
      %v374 = vsel %vm326, %v370, 0.0
      %v375 = vadd.f32 %v373, %v374
      %376 = vadd.xlane.f32.xlu0 %v375
      %v377 = vpop.xlane.xlu0 %376
      %v378 = vrsqrt.pop %v377
      %v379 = vmul.f32 %v378, %v377
      %v380 = vmul.f32 %v379, %v378
      %v381 = vmul.f32 0.5, %v380
      %v382 = vsub.f32 1.5, %v381
      %v383 = vmul.f32 %v378, %v382
      %v384 = vmul.f32 %v377, %v383
      %vm385 = vcmp.eq.f32.partialorder %v377, inf
      %v386 = vsel %vm385, %v377, %v384
      %vm387 = vcmp.eq.f32.partialorder %v377, 0.0
      %v388 = vand.u32 %v377, 2147483648
      %v389 = vsel %vm387, %v388, %v386
      %v390 = vmax.f32 %v389, 1e-12
      %v393 = vunpack.c.l.s4 269488144
      %v394 = vunpack.c.0.s8 %v393
      %v395 = vperm.slane %v390, %v394
      %v397 = vrcp.pop %v395
      %v398 = vmul.f32 %v395, %v397
      %v399 = vsub.f32 1.0, %v398
      %v400 = vmul.f32 %v397, %v399
      %v401 = vadd.f32 %v397, %v400
      %vm402 = vweird.f32 %v395
      %vm403 = vweird.f32 %v397
      %vm404 = vmor %vm402, %vm403
      %v405 = vsel %vm404, %v397, %v401
      %v406 = vand.u32 2147483647, %v395
      %vm407 = vcmp.eq.f32.partialorder %v406, 8.507059e+37
      %v408 = vand.u32 %v395, 2147483648
      %v409 = vor.u32 1.1754944e-38, %v408
      %v410 = vsel %vm407, %v409, %v405
      %v411 = vmul.f32 %v317, %v410
      %413 = vst [vmem:[#allocation1] ss:$4 sm:$0xff] %v365
      %v414 = vld.sshfl [vmem:[#allocation1] sm:$0xff pattern:$0x73625140]
      %v415 = vld.sshfl [vmem:[#allocation1 + $0x8] sm:$0xff pattern:$0x73625140]
      %419 = vst [vmem:[#allocation1] ss:$4 sm:$0xff] %v411
      %v420 = vld.sshfl [vmem:[#allocation1] sm:$0xff pattern:$0x73625140]
      %v421 = vld.sshfl [vmem:[#allocation1 + $0x8] sm:$0xff pattern:$0x73625140]
      %424 = vmatpush.xpose.msra.mxu0 0.0
      %425 = vmatpush.xpose.msra.mxu0 0.0
      %426 = vmatpush.xpose.msra.mxu0 0.0
      %427 = vmatpush.xpose.msra.mxu0 0.0
      %428 = vmatpush.xpose.msra.mxu0 0.0
      %429 = vmatpush.xpose.msra.mxu0 0.0
      %430 = vmatpush.xpose.msra.mxu0 0.0
      %431 = vmatpush.xpose.msra.mxu0 0.0
      %432 = vmatpush.xpose.msra.mxu0 0.0
      %433 = vmatpush.xpose.msra.mxu0 0.0
      %434 = vmatpush.xpose.msra.mxu0 0.0
      %435 = vmatpush.xpose.msra.mxu0 0.0
      %436 = vmatpush.xpose.msra.mxu0 0.0
      %437 = vmatpush.xpose.msra.mxu0 0.0
      %438 = vmatpush.xpose.msra.mxu0 0.0
      %439 = vmatpush.xpose.msra.mxu0 %v420
      %440 = vmatmul.f32.gmra.mxu0 %v414
      %v441 = vpop.f32.mrf.mxu0
      %v442 = vadd.f32 0.0, %v441
      %443 = vdwg.mxu0
      %444 = vmatpush.xpose.msra.mxu0 0.0
      %445 = vmatpush.xpose.msra.mxu0 0.0
      %446 = vmatpush.xpose.msra.mxu0 0.0
      %447 = vmatpush.xpose.msra.mxu0 0.0
      %448 = vmatpush.xpose.msra.mxu0 0.0
      %449 = vmatpush.xpose.msra.mxu0 0.0
      %450 = vmatpush.xpose.msra.mxu0 0.0
      %451 = vmatpush.xpose.msra.mxu0 0.0
      %452 = vmatpush.xpose.msra.mxu0 0.0
      %453 = vmatpush.xpose.msra.mxu0 0.0
      %454 = vmatpush.xpose.msra.mxu0 0.0
      %455 = vmatpush.xpose.msra.mxu0 0.0
      %456 = vmatpush.xpose.msra.mxu0 0.0
      %457 = vmatpush.xpose.msra.mxu0 0.0
      %458 = vmatpush.xpose.msra.mxu0 0.0
      %459 = vmatpush.xpose.msra.mxu0 %v421
      %460 = vmatmul.f32.gmra.mxu0 %v415
      %v461 = vpop.f32.mrf.mxu0
      %v462 = vadd.f32 %v442, %v461
      %463 = vdwg.mxu0
      %v464 = vld [vmem:[%s306] sm:$0x1]
      %v466 = vperm.slane %v464, 0
      %467 = vset.pattern.permute.xlu0 0
      %468 = vperm.xlu0 %467, %v466
      %v469 = vpop.permute.xlu0 %468
      %v471 = vmul.f32 %v462, %v469
      %vm472 = vcmask 9216
      %v473 = vsel %vm472, %v471, -inf
      %474 = vmax.xlane.f32.xlu0 %v473
      %v475 = vpop.xlane.xlu0 %474
      %v476 = vsub.f32 %v471, %v475
      %v477 = vmul.f32 %v476, 1.442695
      %v478 = vpow.pop %v477
      %v479 = vsel %vm472, %v478, 0.0
      %480 = vadd.xlane.f32.xlu0 %v479
      %v481 = vpop.xlane.xlu0 %480
      %v482 = vrcp.pop %v481
      %v483 = vmul.f32 %v481, %v482
      %v484 = vsub.f32 1.0, %v483
      %v485 = vmul.f32 %v482, %v484
      %v486 = vadd.f32 %v482, %v485
      %vm487 = vweird.f32 %v481
      %vm488 = vweird.f32 %v482
      %vm489 = vmor %vm487, %vm488
      %v490 = vsel %vm489, %v482, %v486
      %v491 = vand.u32 2147483647, %v481
      %vm492 = vcmp.eq.f32.partialorder %v491, 8.507059e+37
      %v493 = vand.u32 %v481, 2147483648
      %v494 = vor.u32 1.1754944e-38, %v493
      %v495 = vsel %vm492, %v494, %v490
      %v496 = vmul.f32 %v478, %v495
      %498 = vst [vmem:[#allocation1] ss:$4 sm:$0xff] %v318
      %v499 = vld.sshfl [vmem:[#allocation1] sm:$0xff pattern:$0x73625140]
      %v500 = vld.sshfl [vmem:[#allocation1 + $0x8] sm:$0xff pattern:$0x73625140]
      %vm501 = vcmask 15360
      %v503 = vsel %vm501, %v496, 0
      %v505 = vsel %vm326, %v499, 0
      %v507 = vsel %vm326, %v500, 0
      %509 = vmatpush.msra.mxu0 0.0
      %510 = vmatpush.msra.mxu0 0.0
      %511 = vmatpush.msra.mxu0 0.0
      %512 = vmatpush.msra.mxu0 0.0
      %513 = vmatpush.msra.mxu0 0.0
      %514 = vmatpush.msra.mxu0 0.0
      %515 = vmatpush.msra.mxu0 0.0
      %516 = vmatpush.msra.mxu0 0.0
      %517 = vmatpush.msra.mxu0 0.0
      %518 = vmatpush.msra.mxu0 0.0
      %519 = vmatpush.msra.mxu0 0.0
      %520 = vmatpush.msra.mxu0 0.0
      %521 = vmatpush.msra.mxu0 0.0
      %522 = vmatpush.msra.mxu0 0.0
      %523 = vmatpush.msra.mxu0 0.0
      %524 = vmatpush.msra.mxu0 %v505
      %525 = vmatmul.f32.gmra.mxu0 %v503
      %v526 = vpop.f32.mrf.mxu0
      %v527 = vadd.f32 0.0, %v526
      %528 = vdwg.mxu0
      %529 = vmatpush.msra.mxu0 0.0
      %530 = vmatpush.msra.mxu0 0.0
      %531 = vmatpush.msra.mxu0 0.0
      %532 = vmatpush.msra.mxu0 0.0
      %533 = vmatpush.msra.mxu0 0.0
      %534 = vmatpush.msra.mxu0 0.0
      %535 = vmatpush.msra.mxu0 0.0
      %536 = vmatpush.msra.mxu0 0.0
      %537 = vmatpush.msra.mxu0 0.0
      %538 = vmatpush.msra.mxu0 0.0
      %539 = vmatpush.msra.mxu0 0.0
      %540 = vmatpush.msra.mxu0 0.0
      %541 = vmatpush.msra.mxu0 0.0
      %542 = vmatpush.msra.mxu0 0.0
      %543 = vmatpush.msra.mxu0 0.0
      %544 = vmatpush.msra.mxu0 %v507
      %545 = vmatmul.f32.gmra.mxu0 %v503
      %v546 = vpop.f32.mrf.mxu0
      %v547 = vadd.f32 0.0, %v546
      %548 = vdwg.mxu0
      %v551 = vrot.slane %v547, 6
      %v552 = vsel %vm326, %v527, %v551
      %554 = vst [vmem:[%s315] sm:$0xf] %v552
      %p555 = scmp.lt.s32.totalorder %s19, 1
      %s556 = scalar_select %p555, %s19, 1
      %p557 = scmp.lt.s32.totalorder %s20, 1
      %s558 = scalar_select %p557, %s20, 1
      %s559 = smul.addr %s558, 2
      %s560 = smul.addr %s556, 4
      %s561 = sadd.s32 %s559, %s560
      %s562 = smul.addr %s561, 2
      %s563 = scalar_lea.vmem %s4, %s562
      // Predicated region
      $region37: #{hv_lca_forward.18} parent=35 // pred_check
        %p564 = pneg %p157
      $region38: #{hv_lca_forward.18} parent=35 // pred_check_branch
        %566 = sbr.rel (%p564) target = $region40
      $region39: #{hv_lca_forward.18} parent=35 // pred_region
        _
      $region40: #{hv_lca_forward.18} parent=35 // pred_fallthru
        _
    $region36: #{hv_lca_forward.18} parent=5 // pred_fallthru
      _
    %p567 = scmp.le.s32.totalorder 2, %s10
    // Predicated region
    $region41: #{hv_lca_forward.18} parent=5 // pred_check
      %p568 = pneg %p567
    $region42: #{hv_lca_forward.18} parent=5 // pred_check_branch
      %570 = sbr.rel (%p568) target = $region44
    $region43: #{hv_lca_forward.18} parent=5 // pred_region
      %s571 = ssub.s32 %s10, 2
      // Predicated region
      $region45: #{hv_lca_forward.18} parent=43 // pred_check
        %p572 = pneg %p163
      $region46: #{hv_lca_forward.18} parent=43 // pred_check_branch
        %574 = sbr.rel (%p572) target = $region48
      $region47: #{hv_lca_forward.18} parent=43 // pred_region
        %p575 = scmp.lt.s32.totalorder %s21, 1
        %s576 = scalar_select %p575, %s21, 1
        %p577 = scmp.lt.s32.totalorder %s22, 1
        %s578 = scalar_select %p577, %s22, 1
        %s579 = smul.addr %s578, 2
        %s580 = smul.addr %s576, 4
        %s581 = sadd.s32 %s579, %s580
        %s582 = smul.addr %s581, 2
        %s583 = scalar_lea.vmem %s4, %s582
      $region48: #{hv_lca_forward.18} parent=43 // pred_fallthru
        _
    $region44: #{hv_lca_forward.18} parent=5 // pred_fallthru
      _
  $region6: #{hv_lca_forward.18} parent=0 // loop_footer
    %s14 = sadd.s32 1, %s10
  $region7: #{hv_lca_forward.18} parent=0 // loop_footer_branch
    %9 = sbr.rel target = $region3
  $region8: #{hv_lca_forward.18} parent=0 // loop_exit
    _

// kernel: hv_lca_forward.17
$region0: #{hv_lca_forward.17}
  #allocation0 [shape = 'u32[]', space=smem, size = 0x4, offset = 0x4, fixed_abs, tag = 'smem constant byte address 0x4 - core index']
  #allocation1 [shape = 'u32[72,128]{1,0:T(1,128)}', space=vmem, size = 0x9000, scoped, tag = 'internal scratch']
  %s0 = inlined_call_operand.vmem [shape: f32[2,18,18,12], index: 0, kind: input, shape index: {}]
  %s1 = inlined_call_operand.vmem [shape: f32[3,3,12], index: 1, kind: input, shape index: {}]
  %s2 = inlined_call_operand.vmem [shape: f32[2,16,16,12], index: 2, kind: output, shape index: {}]
  %s3 = sld [smem:[#allocation0]]
  $region41: #{hv_lca_forward.17} parent=0
    _
  %s5 = ssub.s32 1, %s3
  %s6 = scalar_select 0, %s5, %s3
  loop: start=0, step=1, limit=4
  $region2: #{hv_lca_forward.17} parent=0 // loop_pre_header
    _
  $region3: #{hv_lca_forward.17} parent=0 // loop_header
    %s8 = sphi 0, %s12
    %p9 = scmp.ge.s32.totalorder %s8, 4
    %s18 = sphi 0, %s20
    %s21 = sphi 0, %s18
    %s22 = sphi 0, %s21
    %s38 = sphi 0, %s22
    %s42 = sphi 0, %s42
    %s44 = sphi 0, %s42
    %s45 = sphi 0, %s44
    %s59 = sphi 0, %s45
    %s65 = sphi 0, %s67
    %s68 = sphi 0, %s65
    %s69 = sphi 0, %s68
    %s85 = sphi 0, %s69
  $region4: #{hv_lca_forward.17} parent=0 // loop_header_branch
    %11 = sbr.rel (%p9) target = $region8
  $region5: #{hv_lca_forward.17} parent=0 // loop_body
    %s13 = ssub.s32 %s8, 1
    %s14 = ssub.s32 %s8, 2
    %s15 = sadd.s32 %s8, 1
    %s16 = ssub.s32 %s8, %s15
    %p17 = scmp.eq.s32.totalorder %s16, 0
    %s19 = sadd.s32 %s18, 1
    %s20 = scalar_select %p17, %s18, %s19
    %p23 = pneg %p17
    %p24 = scmp.eq.s32.totalorder %s8, 1
    %p25 = por %p23, %p24
    %p26 = scmp.ne.s32.totalorder %s18, %s21
    %p27 = scmp.eq.s32.totalorder %s8, 0
    %p28 = por %p26, %p27
    %p29 = scmp.ne.s32.totalorder %s18, %s21
    %p30 = scmp.eq.s32.totalorder %s13, 1
    %p31 = por %p29, %p30
    %p32 = scmp.ne.s32.totalorder %s21, %s22
    %p33 = scmp.eq.s32.totalorder %s13, 0
    %p34 = por %p32, %p33
    %p35 = scmp.ne.s32.totalorder %s21, %s22
    %p36 = scmp.eq.s32.totalorder %s14, 1
    %p37 = por %p35, %p36
    %p39 = scmp.ne.s32.totalorder %s22, %s38
    %p40 = scmp.eq.s32.totalorder %s14, 0
    %p41 = por %p39, %p40
    %s43 = sadd.s32 %s42, 1
    %p46 = scmp.eq.s32.totalorder %s8, 1
    %p47 = scmp.ne.s32.totalorder %s42, %s44
    %p48 = scmp.eq.s32.totalorder %s8, 0
    %p49 = por %p47, %p48
    %p50 = scmp.ne.s32.totalorder %s42, %s44
    %p51 = scmp.eq.s32.totalorder %s13, 1
    %p52 = por %p50, %p51
    %p53 = scmp.ne.s32.totalorder %s44, %s45
    %p54 = scmp.eq.s32.totalorder %s13, 0
    %p55 = por %p53, %p54
    %p56 = scmp.ne.s32.totalorder %s44, %s45
    %p57 = scmp.eq.s32.totalorder %s14, 1
    %p58 = por %p56, %p57
    %p60 = scmp.ne.s32.totalorder %s45, %s59
    %p61 = scmp.eq.s32.totalorder %s14, 0
    %p62 = por %p60, %p61
    %s63 = ssub.s32 %s8, %s15
    %p64 = scmp.eq.s32.totalorder %s63, 0
    %s66 = sadd.s32 %s65, 1
    %s67 = scalar_select %p64, %s65, %s66
    %p70 = pneg %p64
    %p71 = scmp.eq.s32.totalorder %s8, 1
    %p72 = por %p70, %p71
    %p73 = scmp.ne.s32.totalorder %s65, %s68
    %p74 = scmp.eq.s32.totalorder %s8, 0
    %p75 = por %p73, %p74
    %p76 = scmp.ne.s32.totalorder %s65, %s68
    %p77 = scmp.eq.s32.totalorder %s13, 1
    %p78 = por %p76, %p77
    %p79 = scmp.ne.s32.totalorder %s68, %s69
    %p80 = scmp.eq.s32.totalorder %s13, 0
    %p81 = por %p79, %p80
    %p82 = scmp.ne.s32.totalorder %s68, %s69
    %p83 = scmp.eq.s32.totalorder %s14, 1
    %p84 = por %p82, %p83
    %p86 = scmp.ne.s32.totalorder %s69, %s85
    %p87 = scmp.eq.s32.totalorder %s14, 0
    %p88 = por %p86, %p87
    %p89 = scmp.le.s32.totalorder 1, %s8
    %p90 = scmp.lt.s32.totalorder %s8, 3
    %p91 = pnand %p89, %p90
    %p92 = pneg %p91
    // Predicated region
    $region9: #{hv_lca_forward.17} parent=5 // pred_check
      _
    $region10: #{hv_lca_forward.17} parent=5 // pred_check_branch
      %94 = sbr.rel (%p91) target = $region12
    $region11: #{hv_lca_forward.17} parent=5 // pred_region
      %s95 = ssub.s32 %s8, 1
      // Predicated region
      $region13: #{hv_lca_forward.17} parent=11 // pred_check
        %p96 = pneg %p55
      $region14: #{hv_lca_forward.17} parent=11 // pred_check_branch
        %98 = sbr.rel (%p96) target = $region16
      $region15: #{hv_lca_forward.17} parent=11 // pred_region
        _
      $region16: #{hv_lca_forward.17} parent=11 // pred_fallthru
        _
    $region12: #{hv_lca_forward.17} parent=5 // pred_fallthru
      _
    %p99 = scmp.lt.s32.totalorder %s8, 2
    // Predicated region
    $region17: #{hv_lca_forward.17} parent=5 // pred_check
      %p100 = pneg %p99
    $region18: #{hv_lca_forward.17} parent=5 // pred_check_branch
      %102 = sbr.rel (%p100) target = $region20
    $region19: #{hv_lca_forward.17} parent=5 // pred_region
      // Predicated region
      $region21: #{hv_lca_forward.17} parent=19 // pred_check
        %p103 = pneg %p28
      $region22: #{hv_lca_forward.17} parent=19 // pred_check_branch
        %105 = sbr.rel (%p103) target = $region24
      $region23: #{hv_lca_forward.17} parent=19 // pred_region
        %p106 = scmp.lt.s32.totalorder %s8, 1
        %s107 = scalar_select %p106, %s8, 1
        %s108 = smul.addr %s107, 54
        %s109 = smul.addr %s108, 8
        %s110 = scalar_lea.vmem %s0, %s109
      $region24: #{hv_lca_forward.17} parent=19 // pred_fallthru
        _
    $region20: #{hv_lca_forward.17} parent=5 // pred_fallthru
      _
    %p111 = scmp.le.s32.totalorder 1, %s8
    %p112 = scmp.lt.s32.totalorder %s8, 3
    %p113 = pnand %p111, %p112
    %p114 = pneg %p113
    // Predicated region
    $region25: #{hv_lca_forward.17} parent=5 // pred_check
      _
    $region26: #{hv_lca_forward.17} parent=5 // pred_check_branch
      %116 = sbr.rel (%p113) target = $region28
    $region27: #{hv_lca_forward.17} parent=5 // pred_region
      %s117 = ssub.s32 %s8, 1
      %p118 = scmp.lt.s32.totalorder %s13, 1
      %s119 = scalar_select %p118, %s13, 1
      %s120 = smul.addr %s119, 54
      %s121 = smul.addr %s120, 8
      %s122 = scalar_lea.vmem %s0, %s121
      %p123 = pneg %p34
      %p124 = pneg %p31
      %p125 = pneg %p55
      %p126 = pneg %p52
      %p127 = pneg %p81
      %p128 = pneg %p78
      %p129 = scmp.lt.s32.totalorder %s13, 1
      %s130 = scalar_select %p129, %s13, 1
      %s131 = smul.addr %s130, 32
      %s132 = smul.addr %s131, 8
      %s133 = scalar_lea.vmem %s2, %s132
      %p134 = scmp.lt.s32.totalorder %s13, 1
      %s135 = scalar_select %p134, %s13, 1
      %s136 = smul.addr %s135, 54
      %s137 = smul.addr %s136, 8
      %s138 = scalar_lea.vmem %s0, %s137
      %p139 = scmp.lt.s32.totalorder %s13, 1
      %s140 = scalar_select %p139, %s13, 1
      %s141 = smul.addr %s140, 32
      %s142 = smul.addr %s141, 8
      %s143 = scalar_lea.vmem %s2, %s142
      %v144 = vld [vmem:[%s1] sm:$0x7]
      %v145 = vld [vmem:[%s1 + $0x4] sm:$0x7]
      %v146 = vld [vmem:[%s1 + $0x8] sm:$0x7]
      %v147 = vld [vmem:[%s138] sm:$0xff]
      %v148 = vld [vmem:[%s138 + $0x8] sm:$0xff]
      %v149 = vld [vmem:[%s138 + $0x18] sm:$0xff]
      %v150 = vld [vmem:[%s138 + $0x20] sm:$0xff]
      %v151 = vld [vmem:[%s138 + $0x30] sm:$0xff]
      %v152 = vld [vmem:[%s138 + $0x38] sm:$0xff]
      %v153 = vld [vmem:[%s138 + $0x48] sm:$0xff]
      %v154 = vld [vmem:[%s138 + $0x50] sm:$0xff]
      %v155 = vld [vmem:[%s138 + $0x60] sm:$0xff]
      %v156 = vld [vmem:[%s138 + $0x68] sm:$0xff]
      %v157 = vld [vmem:[%s138 + $0x78] sm:$0xff]
      %v158 = vld [vmem:[%s138 + $0x80] sm:$0xff]
      %v159 = vld [vmem:[%s138 + $0x90] sm:$0xff]
      %v160 = vld [vmem:[%s138 + $0x98] sm:$0xff]
      %v161 = vld [vmem:[%s138 + $0xa8] sm:$0xff]
      %v162 = vld [vmem:[%s138 + $0xb0] sm:$0xff]
      %v163 = vld [vmem:[%s138 + $0xc0] sm:$0xff]
      %v164 = vld [vmem:[%s138 + $0xc8] sm:$0xff]
      %v165 = vld [vmem:[%s138 + $0xd8] sm:$0xff]
      %v166 = vld [vmem:[%s138 + $0xe0] sm:$0xff]
      %v167 = vld [vmem:[%s138 + $0xf0] sm:$0xff]
      %v168 = vld [vmem:[%s138 + $0xf8] sm:$0xff]
      %v169 = vld [vmem:[%s138 + $0x108] sm:$0xff]
      %v170 = vld [vmem:[%s138 + $0x110] sm:$0xff]
      %v171 = vld [vmem:[%s138 + $0x120] sm:$0xff]
      %v172 = vld [vmem:[%s138 + $0x128] sm:$0xff]
      %v173 = vld [vmem:[%s138 + $0x138] sm:$0xff]
      %v174 = vld [vmem:[%s138 + $0x140] sm:$0xff]
      %v175 = vld [vmem:[%s138 + $0x150] sm:$0xff]
      %v176 = vld [vmem:[%s138 + $0x158] sm:$0xff]
      %v177 = vld [vmem:[%s138 + $0x168] sm:$0xff]
      %v178 = vld [vmem:[%s138 + $0x170] sm:$0xff]
      %v179 = vperm.slane %v144, 0
      %v180 = vmul.f32 %v147, %v179
      %v181 = vmul.f32 %v148, %v179
      %v182 = vmul.f32 %v149, %v179
      %v183 = vmul.f32 %v150, %v179
      %v184 = vmul.f32 %v151, %v179
      %v185 = vmul.f32 %v152, %v179
      %v186 = vmul.f32 %v153, %v179
      %v187 = vmul.f32 %v154, %v179
      %v188 = vmul.f32 %v155, %v179
      %v189 = vmul.f32 %v156, %v179
      %v190 = vmul.f32 %v157, %v179
      %v191 = vmul.f32 %v158, %v179
      %v192 = vmul.f32 %v159, %v179
      %v193 = vmul.f32 %v160, %v179
      %v194 = vmul.f32 %v161, %v179
      %v195 = vmul.f32 %v162, %v179
      %v196 = vmul.f32 %v163, %v179
      %v197 = vmul.f32 %v164, %v179
      %v198 = vmul.f32 %v165, %v179
      %v199 = vmul.f32 %v166, %v179
      %v200 = vmul.f32 %v167, %v179
      %v201 = vmul.f32 %v168, %v179
      %v202 = vmul.f32 %v169, %v179
      %v203 = vmul.f32 %v170, %v179
      %v204 = vmul.f32 %v171, %v179
      %v205 = vmul.f32 %v172, %v179
      %v206 = vmul.f32 %v173, %v179
      %v207 = vmul.f32 %v174, %v179
      %v208 = vmul.f32 %v175, %v179
      %v209 = vmul.f32 %v176, %v179
      %v210 = vmul.f32 %v177, %v179
      %v211 = vmul.f32 %v178, %v179
      %v212 = vadd.f32 %v180, 0.0
      %v213 = vadd.f32 %v181, 0.0
      %v214 = vadd.f32 %v182, 0.0
      %v215 = vadd.f32 %v183, 0.0
      %v216 = vadd.f32 %v184, 0.0
      %v217 = vadd.f32 %v185, 0.0
      %v218 = vadd.f32 %v186, 0.0
      %v219 = vadd.f32 %v187, 0.0
      %v220 = vadd.f32 %v188, 0.0
      %v221 = vadd.f32 %v189, 0.0
      %v222 = vadd.f32 %v190, 0.0
      %v223 = vadd.f32 %v191, 0.0
      %v224 = vadd.f32 %v192, 0.0
      %v225 = vadd.f32 %v193, 0.0
      %v226 = vadd.f32 %v194, 0.0
      %v227 = vadd.f32 %v195, 0.0
      %v228 = vadd.f32 %v196, 0.0
      %v229 = vadd.f32 %v197, 0.0
      %v230 = vadd.f32 %v198, 0.0
      %v231 = vadd.f32 %v199, 0.0
      %v232 = vadd.f32 %v200, 0.0
      %v233 = vadd.f32 %v201, 0.0
      %v234 = vadd.f32 %v202, 0.0
      %v235 = vadd.f32 %v203, 0.0
      %v236 = vadd.f32 %v204, 0.0
      %v237 = vadd.f32 %v205, 0.0
      %v238 = vadd.f32 %v206, 0.0
      %v239 = vadd.f32 %v207, 0.0
      %v240 = vadd.f32 %v208, 0.0
      %v241 = vadd.f32 %v209, 0.0
      %v242 = vadd.f32 %v210, 0.0
      %v243 = vadd.f32 %v211, 0.0
      %v244 = vld [vmem:[%s138 + $0x1] sm:$0xff]
      %v245 = vld [vmem:[%s138 + $0x9] sm:$0xff]
      %v246 = vld [vmem:[%s138 + $0x19] sm:$0xff]
      %v247 = vld [vmem:[%s138 + $0x21] sm:$0xff]
      %v248 = vld [vmem:[%s138 + $0x31] sm:$0xff]
      %v249 = vld [vmem:[%s138 + $0x39] sm:$0xff]
      %v250 = vld [vmem:[%s138 + $0x49] sm:$0xff]
      %v251 = vld [vmem:[%s138 + $0x51] sm:$0xff]
      %v252 = vld [vmem:[%s138 + $0x61] sm:$0xff]
      %v253 = vld [vmem:[%s138 + $0x69] sm:$0xff]
      %v254 = vld [vmem:[%s138 + $0x79] sm:$0xff]
      %v255 = vld [vmem:[%s138 + $0x81] sm:$0xff]
      %v256 = vld [vmem:[%s138 + $0x91] sm:$0xff]
      %v257 = vld [vmem:[%s138 + $0x99] sm:$0xff]
      %v258 = vld [vmem:[%s138 + $0xa9] sm:$0xff]
      %v259 = vld [vmem:[%s138 + $0xb1] sm:$0xff]
      %v260 = vld [vmem:[%s138 + $0xc1] sm:$0xff]
      %v261 = vld [vmem:[%s138 + $0xc9] sm:$0xff]
      %v262 = vld [vmem:[%s138 + $0xd9] sm:$0xff]
      %v263 = vld [vmem:[%s138 + $0xe1] sm:$0xff]
      %v264 = vld [vmem:[%s138 + $0xf1] sm:$0xff]
      %v265 = vld [vmem:[%s138 + $0xf9] sm:$0xff]
      %v266 = vld [vmem:[%s138 + $0x109] sm:$0xff]
      %v267 = vld [vmem:[%s138 + $0x111] sm:$0xff]
      %v268 = vld [vmem:[%s138 + $0x121] sm:$0xff]
      %v269 = vld [vmem:[%s138 + $0x129] sm:$0xff]
      %v270 = vld [vmem:[%s138 + $0x139] sm:$0xff]
      %v271 = vld [vmem:[%s138 + $0x141] sm:$0xff]
      %v272 = vld [vmem:[%s138 + $0x151] sm:$0xff]
      %v273 = vld [vmem:[%s138 + $0x159] sm:$0xff]
      %v274 = vld [vmem:[%s138 + $0x169] sm:$0xff]
      %v275 = vld [vmem:[%s138 + $0x171] sm:$0xff]
      %v276 = vperm.slane %v144, 1
      %v277 = vmul.f32 %v244, %v276
      %v278 = vmul.f32 %v245, %v276
      %v279 = vmul.f32 %v246, %v276
      %v280 = vmul.f32 %v247, %v276
      %v281 = vmul.f32 %v248, %v276
      %v282 = vmul.f32 %v249, %v276
      %v283 = vmul.f32 %v250, %v276
      %v284 = vmul.f32 %v251, %v276
      %v285 = vmul.f32 %v252, %v276
      %v286 = vmul.f32 %v253, %v276
      %v287 = vmul.f32 %v254, %v276
      %v288 = vmul.f32 %v255, %v276
      %v289 = vmul.f32 %v256, %v276
      %v290 = vmul.f32 %v257, %v276
      %v291 = vmul.f32 %v258, %v276
      %v292 = vmul.f32 %v259, %v276
      %v293 = vmul.f32 %v260, %v276
      %v294 = vmul.f32 %v261, %v276
      %v295 = vmul.f32 %v262, %v276
      %v296 = vmul.f32 %v263, %v276
      %v297 = vmul.f32 %v264, %v276
      %v298 = vmul.f32 %v265, %v276
      %v299 = vmul.f32 %v266, %v276
      %v300 = vmul.f32 %v267, %v276
      %v301 = vmul.f32 %v268, %v276
      %v302 = vmul.f32 %v269, %v276
      %v303 = vmul.f32 %v270, %v276
      %v304 = vmul.f32 %v271, %v276
      %v305 = vmul.f32 %v272, %v276
      %v306 = vmul.f32 %v273, %v276
      %v307 = vmul.f32 %v274, %v276
      %v308 = vmul.f32 %v275, %v276
      %v309 = vadd.f32 %v212, %v277
      %v310 = vadd.f32 %v213, %v278
      %v311 = vadd.f32 %v214, %v279
      %v312 = vadd.f32 %v215, %v280
      %v313 = vadd.f32 %v216, %v281
      %v314 = vadd.f32 %v217, %v282
      %v315 = vadd.f32 %v218, %v283
      %v316 = vadd.f32 %v219, %v284
      %v317 = vadd.f32 %v220, %v285
      %v318 = vadd.f32 %v221, %v286
      %v319 = vadd.f32 %v222, %v287
      %v320 = vadd.f32 %v223, %v288
      %v321 = vadd.f32 %v224, %v289
      %v322 = vadd.f32 %v225, %v290
      %v323 = vadd.f32 %v226, %v291
      %v324 = vadd.f32 %v227, %v292
      %v325 = vadd.f32 %v228, %v293
      %v326 = vadd.f32 %v229, %v294
      %v327 = vadd.f32 %v230, %v295
      %v328 = vadd.f32 %v231, %v296
      %v329 = vadd.f32 %v232, %v297
      %v330 = vadd.f32 %v233, %v298
      %v331 = vadd.f32 %v234, %v299
      %v332 = vadd.f32 %v235, %v300
      %v333 = vadd.f32 %v236, %v301
      %v334 = vadd.f32 %v237, %v302
      %v335 = vadd.f32 %v238, %v303
      %v336 = vadd.f32 %v239, %v304
      %v337 = vadd.f32 %v240, %v305
      %v338 = vadd.f32 %v241, %v306
      %v339 = vadd.f32 %v242, %v307
      %v340 = vadd.f32 %v243, %v308
      %v341 = vld [vmem:[%s138 + $0x2] sm:$0xff]
      %v342 = vld [vmem:[%s138 + $0xa] sm:$0xff]
      %v343 = vld [vmem:[%s138 + $0x1a] sm:$0xff]
      %v344 = vld [vmem:[%s138 + $0x22] sm:$0xff]
      %v345 = vld [vmem:[%s138 + $0x32] sm:$0xff]
      %v346 = vld [vmem:[%s138 + $0x3a] sm:$0xff]
      %v347 = vld [vmem:[%s138 + $0x4a] sm:$0xff]
      %v348 = vld [vmem:[%s138 + $0x52] sm:$0xff]
      %v349 = vld [vmem:[%s138 + $0x62] sm:$0xff]
      %v350 = vld [vmem:[%s138 + $0x6a] sm:$0xff]
      %v351 = vld [vmem:[%s138 + $0x7a] sm:$0xff]
      %v352 = vld [vmem:[%s138 + $0x82] sm:$0xff]
      %v353 = vld [vmem:[%s138 + $0x92] sm:$0xff]
      %v354 = vld [vmem:[%s138 + $0x9a] sm:$0xff]
      %v355 = vld [vmem:[%s138 + $0xaa] sm:$0xff]
      %v356 = vld [vmem:[%s138 + $0xb2] sm:$0xff]
      %v357 = vld [vmem:[%s138 + $0xc2] sm:$0xff]
      %v358 = vld [vmem:[%s138 + $0xca] sm:$0xff]
      %v359 = vld [vmem:[%s138 + $0xda] sm:$0xff]
      %v360 = vld [vmem:[%s138 + $0xe2] sm:$0xff]
      %v361 = vld [vmem:[%s138 + $0xf2] sm:$0xff]
      %v362 = vld [vmem:[%s138 + $0xfa] sm:$0xff]
      %v363 = vld [vmem:[%s138 + $0x10a] sm:$0xff]
      %v364 = vld [vmem:[%s138 + $0x112] sm:$0xff]
      %v365 = vld [vmem:[%s138 + $0x122] sm:$0xff]
      %v366 = vld [vmem:[%s138 + $0x12a] sm:$0xff]
      %v367 = vld [vmem:[%s138 + $0x13a] sm:$0xff]
      %v368 = vld [vmem:[%s138 + $0x142] sm:$0xff]
      %v369 = vld [vmem:[%s138 + $0x152] sm:$0xff]
      %v370 = vld [vmem:[%s138 + $0x15a] sm:$0xff]
      %v371 = vld [vmem:[%s138 + $0x16a] sm:$0xff]
      %v372 = vld [vmem:[%s138 + $0x172] sm:$0xff]
      %v373 = vperm.slane %v144, 2
      %v374 = vmul.f32 %v341, %v373
      %v375 = vmul.f32 %v342, %v373
      %v376 = vmul.f32 %v343, %v373
      %v377 = vmul.f32 %v344, %v373
      %v378 = vmul.f32 %v345, %v373
      %v379 = vmul.f32 %v346, %v373
      %v380 = vmul.f32 %v347, %v373
      %v381 = vmul.f32 %v348, %v373
      %v382 = vmul.f32 %v349, %v373
      %v383 = vmul.f32 %v350, %v373
      %v384 = vmul.f32 %v351, %v373
      %v385 = vmul.f32 %v352, %v373
      %v386 = vmul.f32 %v353, %v373
      %v387 = vmul.f32 %v354, %v373
      %v388 = vmul.f32 %v355, %v373
      %v389 = vmul.f32 %v356, %v373
      %v390 = vmul.f32 %v357, %v373
      %v391 = vmul.f32 %v358, %v373
      %v392 = vmul.f32 %v359, %v373
      %v393 = vmul.f32 %v360, %v373
      %v394 = vmul.f32 %v361, %v373
      %v395 = vmul.f32 %v362, %v373
      %v396 = vmul.f32 %v363, %v373
      %v397 = vmul.f32 %v364, %v373
      %v398 = vmul.f32 %v365, %v373
      %v399 = vmul.f32 %v366, %v373
      %v400 = vmul.f32 %v367, %v373
      %v401 = vmul.f32 %v368, %v373
      %v402 = vmul.f32 %v369, %v373
      %v403 = vmul.f32 %v370, %v373
      %v404 = vmul.f32 %v371, %v373
      %v405 = vmul.f32 %v372, %v373
      %v406 = vadd.f32 %v309, %v374
      %v407 = vadd.f32 %v310, %v375
      %v408 = vadd.f32 %v311, %v376
      %v409 = vadd.f32 %v312, %v377
      %v410 = vadd.f32 %v313, %v378
      %v411 = vadd.f32 %v314, %v379
      %v412 = vadd.f32 %v315, %v380
      %v413 = vadd.f32 %v316, %v381
      %v414 = vadd.f32 %v317, %v382
      %v415 = vadd.f32 %v318, %v383
      %v416 = vadd.f32 %v319, %v384
      %v417 = vadd.f32 %v320, %v385
      %v418 = vadd.f32 %v321, %v386
      %v419 = vadd.f32 %v322, %v387
      %v420 = vadd.f32 %v323, %v388
      %v421 = vadd.f32 %v324, %v389
      %v422 = vadd.f32 %v325, %v390
      %v423 = vadd.f32 %v326, %v391
      %v424 = vadd.f32 %v327, %v392
      %v425 = vadd.f32 %v328, %v393
      %v426 = vadd.f32 %v329, %v394
      %v427 = vadd.f32 %v330, %v395
      %v428 = vadd.f32 %v331, %v396
      %v429 = vadd.f32 %v332, %v397
      %v430 = vadd.f32 %v333, %v398
      %v431 = vadd.f32 %v334, %v399
      %v432 = vadd.f32 %v335, %v400
      %v433 = vadd.f32 %v336, %v401
      %v434 = vadd.f32 %v337, %v402
      %v435 = vadd.f32 %v338, %v403
      %v436 = vadd.f32 %v339, %v404
      %v437 = vadd.f32 %v340, %v405
      %s438 = scalar_lea.vmem %s138, 24
      %v439 = vld [vmem:[%s438] sm:$0xff]
      %v440 = vld [vmem:[%s438 + $0x8] sm:$0xff]
      %v441 = vld [vmem:[%s438 + $0x18] sm:$0xff]
      %v442 = vld [vmem:[%s438 + $0x20] sm:$0xff]
      %v443 = vld [vmem:[%s438 + $0x30] sm:$0xff]
      %v444 = vld [vmem:[%s438 + $0x38] sm:$0xff]
      %v445 = vld [vmem:[%s438 + $0x48] sm:$0xff]
      %v446 = vld [vmem:[%s438 + $0x50] sm:$0xff]
      %v447 = vld [vmem:[%s438 + $0x60] sm:$0xff]
      %v448 = vld [vmem:[%s438 + $0x68] sm:$0xff]
      %v449 = vld [vmem:[%s438 + $0x78] sm:$0xff]
      %v450 = vld [vmem:[%s438 + $0x80] sm:$0xff]
      %v451 = vld [vmem:[%s438 + $0x90] sm:$0xff]
      %v452 = vld [vmem:[%s438 + $0x98] sm:$0xff]
      %v453 = vld [vmem:[%s438 + $0xa8] sm:$0xff]
      %v454 = vld [vmem:[%s438 + $0xb0] sm:$0xff]
      %v455 = vld [vmem:[%s438 + $0xc0] sm:$0xff]
      %v456 = vld [vmem:[%s438 + $0xc8] sm:$0xff]
      %v457 = vld [vmem:[%s438 + $0xd8] sm:$0xff]
      %v458 = vld [vmem:[%s438 + $0xe0] sm:$0xff]
      %v459 = vld [vmem:[%s438 + $0xf0] sm:$0xff]
      %v460 = vld [vmem:[%s438 + $0xf8] sm:$0xff]
      %v461 = vld [vmem:[%s438 + $0x108] sm:$0xff]
      %v462 = vld [vmem:[%s438 + $0x110] sm:$0xff]
      %v463 = vld [vmem:[%s438 + $0x120] sm:$0xff]
      %v464 = vld [vmem:[%s438 + $0x128] sm:$0xff]
      %v465 = vld [vmem:[%s438 + $0x138] sm:$0xff]
      %v466 = vld [vmem:[%s438 + $0x140] sm:$0xff]
      %v467 = vld [vmem:[%s438 + $0x150] sm:$0xff]
      %v468 = vld [vmem:[%s438 + $0x158] sm:$0xff]
      %v469 = vld [vmem:[%s438 + $0x168] sm:$0xff]
      %v470 = vld [vmem:[%s438 + $0x170] sm:$0xff]
      %v471 = vperm.slane %v145, 0
      %v472 = vmul.f32 %v439, %v471
      %v473 = vmul.f32 %v440, %v471
      %v474 = vmul.f32 %v441, %v471
      %v475 = vmul.f32 %v442, %v471
      %v476 = vmul.f32 %v443, %v471
      %v477 = vmul.f32 %v444, %v471
      %v478 = vmul.f32 %v445, %v471
      %v479 = vmul.f32 %v446, %v471
      %v480 = vmul.f32 %v447, %v471
      %v481 = vmul.f32 %v448, %v471
      %v482 = vmul.f32 %v449, %v471
      %v483 = vmul.f32 %v450, %v471
      %v484 = vmul.f32 %v451, %v471
      %v485 = vmul.f32 %v452, %v471
      %v486 = vmul.f32 %v453, %v471
      %v487 = vmul.f32 %v454, %v471
      %v488 = vmul.f32 %v455, %v471
      %v489 = vmul.f32 %v456, %v471
      %v490 = vmul.f32 %v457, %v471
      %v491 = vmul.f32 %v458, %v471
      %v492 = vmul.f32 %v459, %v471
      %v493 = vmul.f32 %v460, %v471
      %v494 = vmul.f32 %v461, %v471
      %v495 = vmul.f32 %v462, %v471
      %v496 = vmul.f32 %v463, %v471
      %v497 = vmul.f32 %v464, %v471
      %v498 = vmul.f32 %v465, %v471
      %v499 = vmul.f32 %v466, %v471
      %v500 = vmul.f32 %v467, %v471
      %v501 = vmul.f32 %v468, %v471
      %v502 = vmul.f32 %v469, %v471
      %v503 = vmul.f32 %v470, %v471
      %v504 = vadd.f32 %v406, %v472
      %v505 = vadd.f32 %v407, %v473
      %v506 = vadd.f32 %v408, %v474
      %v507 = vadd.f32 %v409, %v475
      %v508 = vadd.f32 %v410, %v476
      %v509 = vadd.f32 %v411, %v477
      %v510 = vadd.f32 %v412, %v478
      %v511 = vadd.f32 %v413, %v479
      %v512 = vadd.f32 %v414, %v480
      %v513 = vadd.f32 %v415, %v481
      %v514 = vadd.f32 %v416, %v482
      %v515 = vadd.f32 %v417, %v483
      %v516 = vadd.f32 %v418, %v484
      %v517 = vadd.f32 %v419, %v485
      %v518 = vadd.f32 %v420, %v486
      %v519 = vadd.f32 %v421, %v487
      %v520 = vadd.f32 %v422, %v488
      %v521 = vadd.f32 %v423, %v489
      %v522 = vadd.f32 %v424, %v490
      %v523 = vadd.f32 %v425, %v491
      %v524 = vadd.f32 %v426, %v492
      %v525 = vadd.f32 %v427, %v493
      %v526 = vadd.f32 %v428, %v494
      %v527 = vadd.f32 %v429, %v495
      %v528 = vadd.f32 %v430, %v496
      %v529 = vadd.f32 %v431, %v497
      %v530 = vadd.f32 %v432, %v498
      %v531 = vadd.f32 %v433, %v499
      %v532 = vadd.f32 %v434, %v500
      %v533 = vadd.f32 %v435, %v501
      %v534 = vadd.f32 %v436, %v502
      %v535 = vadd.f32 %v437, %v503
      %v536 = vld [vmem:[%s438 + $0x1] sm:$0xff]
      %v537 = vld [vmem:[%s438 + $0x9] sm:$0xff]
      %v538 = vld [vmem:[%s438 + $0x19] sm:$0xff]
      %v539 = vld [vmem:[%s438 + $0x21] sm:$0xff]
      %v540 = vld [vmem:[%s438 + $0x31] sm:$0xff]
      %v541 = vld [vmem:[%s438 + $0x39] sm:$0xff]
      %v542 = vld [vmem:[%s438 + $0x49] sm:$0xff]
      %v543 = vld [vmem:[%s438 + $0x51] sm:$0xff]
      %v544 = vld [vmem:[%s438 + $0x61] sm:$0xff]
      %v545 = vld [vmem:[%s438 + $0x69] sm:$0xff]
      %v546 = vld [vmem:[%s438 + $0x79] sm:$0xff]
      %v547 = vld [vmem:[%s438 + $0x81] sm:$0xff]
      %v548 = vld [vmem:[%s438 + $0x91] sm:$0xff]
      %v549 = vld [vmem:[%s438 + $0x99] sm:$0xff]
      %v550 = vld [vmem:[%s438 + $0xa9] sm:$0xff]
      %v551 = vld [vmem:[%s438 + $0xb1] sm:$0xff]
      %v552 = vld [vmem:[%s438 + $0xc1] sm:$0xff]
      %v553 = vld [vmem:[%s438 + $0xc9] sm:$0xff]
      %v554 = vld [vmem:[%s438 + $0xd9] sm:$0xff]
      %v555 = vld [vmem:[%s438 + $0xe1] sm:$0xff]
      %v556 = vld [vmem:[%s438 + $0xf1] sm:$0xff]
      %v557 = vld [vmem:[%s438 + $0xf9] sm:$0xff]
      %v558 = vld [vmem:[%s438 + $0x109] sm:$0xff]
      %v559 = vld [vmem:[%s438 + $0x111] sm:$0xff]
      %v560 = vld [vmem:[%s438 + $0x121] sm:$0xff]
      %v561 = vld [vmem:[%s438 + $0x129] sm:$0xff]
      %v562 = vld [vmem:[%s438 + $0x139] sm:$0xff]
      %v563 = vld [vmem:[%s438 + $0x141] sm:$0xff]
      %v564 = vld [vmem:[%s438 + $0x151] sm:$0xff]
      %v565 = vld [vmem:[%s438 + $0x159] sm:$0xff]
      %v566 = vld [vmem:[%s438 + $0x169] sm:$0xff]
      %v567 = vld [vmem:[%s438 + $0x171] sm:$0xff]
      %v568 = vperm.slane %v145, 1
      %v569 = vmul.f32 %v536, %v568
      %v570 = vmul.f32 %v537, %v568
      %v571 = vmul.f32 %v538, %v568
      %v572 = vmul.f32 %v539, %v568
      %v573 = vmul.f32 %v540, %v568
      %v574 = vmul.f32 %v541, %v568
      %v575 = vmul.f32 %v542, %v568
      %v576 = vmul.f32 %v543, %v568
      %v577 = vmul.f32 %v544, %v568
      %v578 = vmul.f32 %v545, %v568
      %v579 = vmul.f32 %v546, %v568
      %v580 = vmul.f32 %v547, %v568
      %v581 = vmul.f32 %v548, %v568
      %v582 = vmul.f32 %v549, %v568
      %v583 = vmul.f32 %v550, %v568
      %v584 = vmul.f32 %v551, %v568
      %v585 = vmul.f32 %v552, %v568
      %v586 = vmul.f32 %v553, %v568
      %v587 = vmul.f32 %v554, %v568
      %v588 = vmul.f32 %v555, %v568
      %v589 = vmul.f32 %v556, %v568
      %v590 = vmul.f32 %v557, %v568
      %v591 = vmul.f32 %v558, %v568
      %v592 = vmul.f32 %v559, %v568
      %v593 = vmul.f32 %v560, %v568
      %v594 = vmul.f32 %v561, %v568
      %v595 = vmul.f32 %v562, %v568
      %v596 = vmul.f32 %v563, %v568
      %v597 = vmul.f32 %v564, %v568
      %v598 = vmul.f32 %v565, %v568
      %v599 = vmul.f32 %v566, %v568
      %v600 = vmul.f32 %v567, %v568
      %v601 = vadd.f32 %v504, %v569
      %v602 = vadd.f32 %v505, %v570
      %v603 = vadd.f32 %v506, %v571
      %v604 = vadd.f32 %v507, %v572
      %v605 = vadd.f32 %v508, %v573
      %v606 = vadd.f32 %v509, %v574
      %v607 = vadd.f32 %v510, %v575
      %v608 = vadd.f32 %v511, %v576
      %v609 = vadd.f32 %v512, %v577
      %v610 = vadd.f32 %v513, %v578
      %v611 = vadd.f32 %v514, %v579
      %v612 = vadd.f32 %v515, %v580
      %v613 = vadd.f32 %v516, %v581
      %v614 = vadd.f32 %v517, %v582
      %v615 = vadd.f32 %v518, %v583
      %v616 = vadd.f32 %v519, %v584
      %v617 = vadd.f32 %v520, %v585
      %v618 = vadd.f32 %v521, %v586
      %v619 = vadd.f32 %v522, %v587
      %v620 = vadd.f32 %v523, %v588
      %v621 = vadd.f32 %v524, %v589
      %v622 = vadd.f32 %v525, %v590
      %v623 = vadd.f32 %v526, %v591
      %v624 = vadd.f32 %v527, %v592
      %v625 = vadd.f32 %v528, %v593
      %v626 = vadd.f32 %v529, %v594
      %v627 = vadd.f32 %v530, %v595
      %v628 = vadd.f32 %v531, %v596
      %v629 = vadd.f32 %v532, %v597
      %v630 = vadd.f32 %v533, %v598
      %v631 = vadd.f32 %v534, %v599
      %v632 = vadd.f32 %v535, %v600
      %v633 = vld [vmem:[%s438 + $0x2] sm:$0xff]
      %v634 = vld [vmem:[%s438 + $0xa] sm:$0xff]
      %v635 = vld [vmem:[%s438 + $0x1a] sm:$0xff]
      %v636 = vld [vmem:[%s438 + $0x22] sm:$0xff]
      %v637 = vld [vmem:[%s438 + $0x32] sm:$0xff]
      %v638 = vld [vmem:[%s438 + $0x3a] sm:$0xff]
      %v639 = vld [vmem:[%s438 + $0x4a] sm:$0xff]
      %v640 = vld [vmem:[%s438 + $0x52] sm:$0xff]
      %v641 = vld [vmem:[%s438 + $0x62] sm:$0xff]
      %v642 = vld [vmem:[%s438 + $0x6a] sm:$0xff]
      %v643 = vld [vmem:[%s438 + $0x7a] sm:$0xff]
      %v644 = vld [vmem:[%s438 + $0x82] sm:$0xff]
      %v645 = vld [vmem:[%s438 + $0x92] sm:$0xff]
      %v646 = vld [vmem:[%s438 + $0x9a] sm:$0xff]
      %v647 = vld [vmem:[%s438 + $0xaa] sm:$0xff]
      %v648 = vld [vmem:[%s438 + $0xb2] sm:$0xff]
      %v649 = vld [vmem:[%s438 + $0xc2] sm:$0xff]
      %v650 = vld [vmem:[%s438 + $0xca] sm:$0xff]
      %v651 = vld [vmem:[%s438 + $0xda] sm:$0xff]
      %v652 = vld [vmem:[%s438 + $0xe2] sm:$0xff]
      %v653 = vld [vmem:[%s438 + $0xf2] sm:$0xff]
      %v654 = vld [vmem:[%s438 + $0xfa] sm:$0xff]
      %v655 = vld [vmem:[%s438 + $0x10a] sm:$0xff]
      %v656 = vld [vmem:[%s438 + $0x112] sm:$0xff]
      %v657 = vld [vmem:[%s438 + $0x122] sm:$0xff]
      %v658 = vld [vmem:[%s438 + $0x12a] sm:$0xff]
      %v659 = vld [vmem:[%s438 + $0x13a] sm:$0xff]
      %v660 = vld [vmem:[%s438 + $0x142] sm:$0xff]
      %v661 = vld [vmem:[%s438 + $0x152] sm:$0xff]
      %v662 = vld [vmem:[%s438 + $0x15a] sm:$0xff]
      %v663 = vld [vmem:[%s438 + $0x16a] sm:$0xff]
      %v664 = vld [vmem:[%s438 + $0x172] sm:$0xff]
      %v665 = vperm.slane %v145, 2
      %v666 = vmul.f32 %v633, %v665
      %v667 = vmul.f32 %v634, %v665
      %v668 = vmul.f32 %v635, %v665
      %v669 = vmul.f32 %v636, %v665
      %v670 = vmul.f32 %v637, %v665
      %v671 = vmul.f32 %v638, %v665
      %v672 = vmul.f32 %v639, %v665
      %v673 = vmul.f32 %v640, %v665
      %v674 = vmul.f32 %v641, %v665
      %v675 = vmul.f32 %v642, %v665
      %v676 = vmul.f32 %v643, %v665
      %v677 = vmul.f32 %v644, %v665
      %v678 = vmul.f32 %v645, %v665
      %v679 = vmul.f32 %v646, %v665
      %v680 = vmul.f32 %v647, %v665
      %v681 = vmul.f32 %v648, %v665
      %v682 = vmul.f32 %v649, %v665
      %v683 = vmul.f32 %v650, %v665
      %v684 = vmul.f32 %v651, %v665
      %v685 = vmul.f32 %v652, %v665
      %v686 = vmul.f32 %v653, %v665
      %v687 = vmul.f32 %v654, %v665
      %v688 = vmul.f32 %v655, %v665
      %v689 = vmul.f32 %v656, %v665
      %v690 = vmul.f32 %v657, %v665
      %v691 = vmul.f32 %v658, %v665
      %v692 = vmul.f32 %v659, %v665
      %v693 = vmul.f32 %v660, %v665
      %v694 = vmul.f32 %v661, %v665
      %v695 = vmul.f32 %v662, %v665
      %v696 = vmul.f32 %v663, %v665
      %v697 = vmul.f32 %v664, %v665
      %v698 = vadd.f32 %v601, %v666
      %v699 = vadd.f32 %v602, %v667
      %v700 = vadd.f32 %v603, %v668
      %v701 = vadd.f32 %v604, %v669
      %v702 = vadd.f32 %v605, %v670
      %v703 = vadd.f32 %v606, %v671
      %v704 = vadd.f32 %v607, %v672
      %v705 = vadd.f32 %v608, %v673
      %v706 = vadd.f32 %v609, %v674
      %v707 = vadd.f32 %v610, %v675
      %v708 = vadd.f32 %v611, %v676
      %v709 = vadd.f32 %v612, %v677
      %v710 = vadd.f32 %v613, %v678
      %v711 = vadd.f32 %v614, %v679
      %v712 = vadd.f32 %v615, %v680
      %v713 = vadd.f32 %v616, %v681
      %v714 = vadd.f32 %v617, %v682
      %v715 = vadd.f32 %v618, %v683
      %v716 = vadd.f32 %v619, %v684
      %v717 = vadd.f32 %v620, %v685
      %v718 = vadd.f32 %v621, %v686
      %v719 = vadd.f32 %v622, %v687
      %v720 = vadd.f32 %v623, %v688
      %v721 = vadd.f32 %v624, %v689
      %v722 = vadd.f32 %v625, %v690
      %v723 = vadd.f32 %v626, %v691
      %v724 = vadd.f32 %v627, %v692
      %v725 = vadd.f32 %v628, %v693
      %v726 = vadd.f32 %v629, %v694
      %v727 = vadd.f32 %v630, %v695
      %v728 = vadd.f32 %v631, %v696
      %v729 = vadd.f32 %v632, %v697
      %s730 = scalar_lea.vmem %s138, 48
      %v731 = vld [vmem:[%s730] sm:$0xff]
      %v732 = vld [vmem:[%s730 + $0x8] sm:$0xff]
      %v733 = vld [vmem:[%s730 + $0x18] sm:$0xff]
      %v734 = vld [vmem:[%s730 + $0x20] sm:$0xff]
      %v735 = vld [vmem:[%s730 + $0x30] sm:$0xff]
      %v736 = vld [vmem:[%s730 + $0x38] sm:$0xff]
      %v737 = vld [vmem:[%s730 + $0x48] sm:$0xff]
      %v738 = vld [vmem:[%s730 + $0x50] sm:$0xff]
      %v739 = vld [vmem:[%s730 + $0x60] sm:$0xff]
      %v740 = vld [vmem:[%s730 + $0x68] sm:$0xff]
      %v741 = vld [vmem:[%s730 + $0x78] sm:$0xff]
      %v742 = vld [vmem:[%s730 + $0x80] sm:$0xff]
      %v743 = vld [vmem:[%s730 + $0x90] sm:$0xff]
      %v744 = vld [vmem:[%s730 + $0x98] sm:$0xff]
      %v745 = vld [vmem:[%s730 + $0xa8] sm:$0xff]
      %v746 = vld [vmem:[%s730 + $0xb0] sm:$0xff]
      %v747 = vld [vmem:[%s730 + $0xc0] sm:$0xff]
      %v748 = vld [vmem:[%s730 + $0xc8] sm:$0xff]
      %v749 = vld [vmem:[%s730 + $0xd8] sm:$0xff]
      %v750 = vld [vmem:[%s730 + $0xe0] sm:$0xff]
      %v751 = vld [vmem:[%s730 + $0xf0] sm:$0xff]
      %v752 = vld [vmem:[%s730 + $0xf8] sm:$0xff]
      %v753 = vld [vmem:[%s730 + $0x108] sm:$0xff]
      %v754 = vld [vmem:[%s730 + $0x110] sm:$0xff]
      %v755 = vld [vmem:[%s730 + $0x120] sm:$0xff]
      %v756 = vld [vmem:[%s730 + $0x128] sm:$0xff]
      %v757 = vld [vmem:[%s730 + $0x138] sm:$0xff]
      %v758 = vld [vmem:[%s730 + $0x140] sm:$0xff]
      %v759 = vld [vmem:[%s730 + $0x150] sm:$0xff]
      %v760 = vld [vmem:[%s730 + $0x158] sm:$0xff]
      %v761 = vld [vmem:[%s730 + $0x168] sm:$0xff]
      %v762 = vld [vmem:[%s730 + $0x170] sm:$0xff]
      %v763 = vperm.slane %v146, 0
      %v764 = vmul.f32 %v731, %v763
      %v765 = vmul.f32 %v732, %v763
      %v766 = vmul.f32 %v733, %v763
      %v767 = vmul.f32 %v734, %v763
      %v768 = vmul.f32 %v735, %v763
      %v769 = vmul.f32 %v736, %v763
      %v770 = vmul.f32 %v737, %v763
      %v771 = vmul.f32 %v738, %v763
      %v772 = vmul.f32 %v739, %v763
      %v773 = vmul.f32 %v740, %v763
      %v774 = vmul.f32 %v741, %v763
      %v775 = vmul.f32 %v742, %v763
      %v776 = vmul.f32 %v743, %v763
      %v777 = vmul.f32 %v744, %v763
      %v778 = vmul.f32 %v745, %v763
      %v779 = vmul.f32 %v746, %v763
      %v780 = vmul.f32 %v747, %v763
      %v781 = vmul.f32 %v748, %v763
      %v782 = vmul.f32 %v749, %v763
      %v783 = vmul.f32 %v750, %v763
      %v784 = vmul.f32 %v751, %v763
      %v785 = vmul.f32 %v752, %v763
      %v786 = vmul.f32 %v753, %v763
      %v787 = vmul.f32 %v754, %v763
      %v788 = vmul.f32 %v755, %v763
      %v789 = vmul.f32 %v756, %v763
      %v790 = vmul.f32 %v757, %v763
      %v791 = vmul.f32 %v758, %v763
      %v792 = vmul.f32 %v759, %v763
      %v793 = vmul.f32 %v760, %v763
      %v794 = vmul.f32 %v761, %v763
      %v795 = vmul.f32 %v762, %v763
      %v796 = vadd.f32 %v698, %v764
      %v797 = vadd.f32 %v699, %v765
      %v798 = vadd.f32 %v700, %v766
      %v799 = vadd.f32 %v701, %v767
      %v800 = vadd.f32 %v702, %v768
      %v801 = vadd.f32 %v703, %v769
      %v802 = vadd.f32 %v704, %v770
      %v803 = vadd.f32 %v705, %v771
      %v804 = vadd.f32 %v706, %v772
      %v805 = vadd.f32 %v707, %v773
      %v806 = vadd.f32 %v708, %v774
      %v807 = vadd.f32 %v709, %v775
      %v808 = vadd.f32 %v710, %v776
      %v809 = vadd.f32 %v711, %v777
      %v810 = vadd.f32 %v712, %v778
      %v811 = vadd.f32 %v713, %v779
      %v812 = vadd.f32 %v714, %v780
      %v813 = vadd.f32 %v715, %v781
      %v814 = vadd.f32 %v716, %v782
      %v815 = vadd.f32 %v717, %v783
      %v816 = vadd.f32 %v718, %v784
      %v817 = vadd.f32 %v719, %v785
      %v818 = vadd.f32 %v720, %v786
      %v819 = vadd.f32 %v721, %v787
      %v820 = vadd.f32 %v722, %v788
      %v821 = vadd.f32 %v723, %v789
      %v822 = vadd.f32 %v724, %v790
      %v823 = vadd.f32 %v725, %v791
      %v824 = vadd.f32 %v726, %v792
      %v825 = vadd.f32 %v727, %v793
      %v826 = vadd.f32 %v728, %v794
      %v827 = vadd.f32 %v729, %v795
      %v828 = vld [vmem:[%s730 + $0x1] sm:$0xff]
      %v829 = vld [vmem:[%s730 + $0x9] sm:$0xff]
      %v830 = vld [vmem:[%s730 + $0x19] sm:$0xff]
      %v831 = vld [vmem:[%s730 + $0x21] sm:$0xff]
      %v832 = vld [vmem:[%s730 + $0x31] sm:$0xff]
      %v833 = vld [vmem:[%s730 + $0x39] sm:$0xff]
      %v834 = vld [vmem:[%s730 + $0x49] sm:$0xff]
      %v835 = vld [vmem:[%s730 + $0x51] sm:$0xff]
      %v836 = vld [vmem:[%s730 + $0x61] sm:$0xff]
      %v837 = vld [vmem:[%s730 + $0x69] sm:$0xff]
      %v838 = vld [vmem:[%s730 + $0x79] sm:$0xff]
      %v839 = vld [vmem:[%s730 + $0x81] sm:$0xff]
      %v840 = vld [vmem:[%s730 + $0x91] sm:$0xff]
      %v841 = vld [vmem:[%s730 + $0x99] sm:$0xff]
      %v842 = vld [vmem:[%s730 + $0xa9] sm:$0xff]
      %v843 = vld [vmem:[%s730 + $0xb1] sm:$0xff]
      %v844 = vld [vmem:[%s730 + $0xc1] sm:$0xff]
      %v845 = vld [vmem:[%s730 + $0xc9] sm:$0xff]
      %v846 = vld [vmem:[%s730 + $0xd9] sm:$0xff]
      %v847 = vld [vmem:[%s730 + $0xe1] sm:$0xff]
      %v848 = vld [vmem:[%s730 + $0xf1] sm:$0xff]
      %v849 = vld [vmem:[%s730 + $0xf9] sm:$0xff]
      %v850 = vld [vmem:[%s730 + $0x109] sm:$0xff]
      %v851 = vld [vmem:[%s730 + $0x111] sm:$0xff]
      %v852 = vld [vmem:[%s730 + $0x121] sm:$0xff]
      %v853 = vld [vmem:[%s730 + $0x129] sm:$0xff]
      %v854 = vld [vmem:[%s730 + $0x139] sm:$0xff]
      %v855 = vld [vmem:[%s730 + $0x141] sm:$0xff]
      %v856 = vld [vmem:[%s730 + $0x151] sm:$0xff]
      %v857 = vld [vmem:[%s730 + $0x159] sm:$0xff]
      %v858 = vld [vmem:[%s730 + $0x169] sm:$0xff]
      %v859 = vld [vmem:[%s730 + $0x171] sm:$0xff]
      %v860 = vperm.slane %v146, 1
      %v861 = vmul.f32 %v828, %v860
      %v862 = vmul.f32 %v829, %v860
      %v863 = vmul.f32 %v830, %v860
      %v864 = vmul.f32 %v831, %v860
      %v865 = vmul.f32 %v832, %v860
      %v866 = vmul.f32 %v833, %v860
      %v867 = vmul.f32 %v834, %v860
      %v868 = vmul.f32 %v835, %v860
      %v869 = vmul.f32 %v836, %v860
      %v870 = vmul.f32 %v837, %v860
      %v871 = vmul.f32 %v838, %v860
      %v872 = vmul.f32 %v839, %v860
      %v873 = vmul.f32 %v840, %v860
      %v874 = vmul.f32 %v841, %v860
      %v875 = vmul.f32 %v842, %v860
      %v876 = vmul.f32 %v843, %v860
      %v877 = vmul.f32 %v844, %v860
      %v878 = vmul.f32 %v845, %v860
      %v879 = vmul.f32 %v846, %v860
      %v880 = vmul.f32 %v847, %v860
      %v881 = vmul.f32 %v848, %v860
      %v882 = vmul.f32 %v849, %v860
      %v883 = vmul.f32 %v850, %v860
      %v884 = vmul.f32 %v851, %v860
      %v885 = vmul.f32 %v852, %v860
      %v886 = vmul.f32 %v853, %v860
      %v887 = vmul.f32 %v854, %v860
      %v888 = vmul.f32 %v855, %v860
      %v889 = vmul.f32 %v856, %v860
      %v890 = vmul.f32 %v857, %v860
      %v891 = vmul.f32 %v858, %v860
      %v892 = vmul.f32 %v859, %v860
      %v893 = vadd.f32 %v796, %v861
      %v894 = vadd.f32 %v797, %v862
      %v895 = vadd.f32 %v798, %v863
      %v896 = vadd.f32 %v799, %v864
      %v897 = vadd.f32 %v800, %v865
      %v898 = vadd.f32 %v801, %v866
      %v899 = vadd.f32 %v802, %v867
      %v900 = vadd.f32 %v803, %v868
      %v901 = vadd.f32 %v804, %v869
      %v902 = vadd.f32 %v805, %v870
      %v903 = vadd.f32 %v806, %v871
      %v904 = vadd.f32 %v807, %v872
      %v905 = vadd.f32 %v808, %v873
      %v906 = vadd.f32 %v809, %v874
      %v907 = vadd.f32 %v810, %v875
      %v908 = vadd.f32 %v811, %v876
      %v909 = vadd.f32 %v812, %v877
      %v910 = vadd.f32 %v813, %v878
      %v911 = vadd.f32 %v814, %v879
      %v912 = vadd.f32 %v815, %v880
      %v913 = vadd.f32 %v816, %v881
      %v914 = vadd.f32 %v817, %v882
      %v915 = vadd.f32 %v818, %v883
      %v916 = vadd.f32 %v819, %v884
      %v917 = vadd.f32 %v820, %v885
      %v918 = vadd.f32 %v821, %v886
      %v919 = vadd.f32 %v822, %v887
      %v920 = vadd.f32 %v823, %v888
      %v921 = vadd.f32 %v824, %v889
      %v922 = vadd.f32 %v825, %v890
      %v923 = vadd.f32 %v826, %v891
      %v924 = vadd.f32 %v827, %v892
      %v925 = vld [vmem:[%s730 + $0x2] sm:$0xff]
      %v926 = vld [vmem:[%s730 + $0xa] sm:$0xff]
      %v927 = vld [vmem:[%s730 + $0x1a] sm:$0xff]
      %v928 = vld [vmem:[%s730 + $0x22] sm:$0xff]
      %v929 = vld [vmem:[%s730 + $0x32] sm:$0xff]
      %v930 = vld [vmem:[%s730 + $0x3a] sm:$0xff]
      %v931 = vld [vmem:[%s730 + $0x4a] sm:$0xff]
      %v932 = vld [vmem:[%s730 + $0x52] sm:$0xff]
      %v933 = vld [vmem:[%s730 + $0x62] sm:$0xff]
      %v934 = vld [vmem:[%s730 + $0x6a] sm:$0xff]
      %v935 = vld [vmem:[%s730 + $0x7a] sm:$0xff]
      %v936 = vld [vmem:[%s730 + $0x82] sm:$0xff]
      %v937 = vld [vmem:[%s730 + $0x92] sm:$0xff]
      %v938 = vld [vmem:[%s730 + $0x9a] sm:$0xff]
      %v939 = vld [vmem:[%s730 + $0xaa] sm:$0xff]
      %v940 = vld [vmem:[%s730 + $0xb2] sm:$0xff]
      %v941 = vld [vmem:[%s730 + $0xc2] sm:$0xff]
      %v942 = vld [vmem:[%s730 + $0xca] sm:$0xff]
      %v943 = vld [vmem:[%s730 + $0xda] sm:$0xff]
      %v944 = vld [vmem:[%s730 + $0xe2] sm:$0xff]
      %v945 = vld [vmem:[%s730 + $0xf2] sm:$0xff]
      %v946 = vld [vmem:[%s730 + $0xfa] sm:$0xff]
      %v947 = vld [vmem:[%s730 + $0x10a] sm:$0xff]
      %v948 = vld [vmem:[%s730 + $0x112] sm:$0xff]
      %v949 = vld [vmem:[%s730 + $0x122] sm:$0xff]
      %v950 = vld [vmem:[%s730 + $0x12a] sm:$0xff]
      %v951 = vld [vmem:[%s730 + $0x13a] sm:$0xff]
      %v952 = vld [vmem:[%s730 + $0x142] sm:$0xff]
      %v953 = vld [vmem:[%s730 + $0x152] sm:$0xff]
      %v954 = vld [vmem:[%s730 + $0x15a] sm:$0xff]
      %v955 = vld [vmem:[%s730 + $0x16a] sm:$0xff]
      %v956 = vld [vmem:[%s730 + $0x172] sm:$0xff]
      %v957 = vperm.slane %v146, 2
      %v958 = vmul.f32 %v925, %v957
      %v959 = vmul.f32 %v926, %v957
      %v960 = vmul.f32 %v927, %v957
      %v961 = vmul.f32 %v928, %v957
      %v962 = vmul.f32 %v929, %v957
      %v963 = vmul.f32 %v930, %v957
      %v964 = vmul.f32 %v931, %v957
      %v965 = vmul.f32 %v932, %v957
      %v966 = vmul.f32 %v933, %v957
      %v967 = vmul.f32 %v934, %v957
      %v968 = vmul.f32 %v935, %v957
      %v969 = vmul.f32 %v936, %v957
      %v970 = vmul.f32 %v937, %v957
      %v971 = vmul.f32 %v938, %v957
      %v972 = vmul.f32 %v939, %v957
      %v973 = vmul.f32 %v940, %v957
      %v974 = vmul.f32 %v941, %v957
      %v975 = vmul.f32 %v942, %v957
      %v976 = vmul.f32 %v943, %v957
      %v977 = vmul.f32 %v944, %v957
      %v978 = vmul.f32 %v945, %v957
      %v979 = vmul.f32 %v946, %v957
      %v980 = vmul.f32 %v947, %v957
      %v981 = vmul.f32 %v948, %v957
      %v982 = vmul.f32 %v949, %v957
      %v983 = vmul.f32 %v950, %v957
      %v984 = vmul.f32 %v951, %v957
      %v985 = vmul.f32 %v952, %v957
      %v986 = vmul.f32 %v953, %v957
      %v987 = vmul.f32 %v954, %v957
      %v988 = vmul.f32 %v955, %v957
      %v989 = vmul.f32 %v956, %v957
      %v990 = vadd.f32 %v893, %v958
      %v991 = vadd.f32 %v894, %v959
      %v992 = vadd.f32 %v895, %v960
      %v993 = vadd.f32 %v896, %v961
      %v994 = vadd.f32 %v897, %v962
      %v995 = vadd.f32 %v898, %v963
      %v996 = vadd.f32 %v899, %v964
      %v997 = vadd.f32 %v900, %v965
      %v998 = vadd.f32 %v901, %v966
      %v999 = vadd.f32 %v902, %v967
      %v1000 = vadd.f32 %v903, %v968
      %v1001 = vadd.f32 %v904, %v969
      %v1002 = vadd.f32 %v905, %v970
      %v1003 = vadd.f32 %v906, %v971
      %v1004 = vadd.f32 %v907, %v972
      %v1005 = vadd.f32 %v908, %v973
      %v1006 = vadd.f32 %v909, %v974
      %v1007 = vadd.f32 %v910, %v975
      %v1008 = vadd.f32 %v911, %v976
      %v1009 = vadd.f32 %v912, %v977
      %v1010 = vadd.f32 %v913, %v978
      %v1011 = vadd.f32 %v914, %v979
      %v1012 = vadd.f32 %v915, %v980
      %v1013 = vadd.f32 %v916, %v981
      %v1014 = vadd.f32 %v917, %v982
      %v1015 = vadd.f32 %v918, %v983
      %v1016 = vadd.f32 %v919, %v984
      %v1017 = vadd.f32 %v920, %v985
      %v1018 = vadd.f32 %v921, %v986
      %v1019 = vadd.f32 %v922, %v987
      %v1020 = vadd.f32 %v923, %v988
      %v1021 = vadd.f32 %v924, %v989
      %vm1022 = vcmask 97280
      %1023 = vst.msk [vmem:[%s143] sm:$0xff] %vm1022, %v990
      %1024 = vst.msk [vmem:[%s143 + $0x8] sm:$0xff] %vm1022, %v991
      %1025 = vst.msk [vmem:[%s143 + $0x10] sm:$0xff] %vm1022, %v992
      %1026 = vst.msk [vmem:[%s143 + $0x18] sm:$0xff] %vm1022, %v993
      %1027 = vst.msk [vmem:[%s143 + $0x20] sm:$0xff] %vm1022, %v994
      %1028 = vst.msk [vmem:[%s143 + $0x28] sm:$0xff] %vm1022, %v995
      %1029 = vst.msk [vmem:[%s143 + $0x30] sm:$0xff] %vm1022, %v996
      %1030 = vst.msk [vmem:[%s143 + $0x38] sm:$0xff] %vm1022, %v997
      %1031 = vst.msk [vmem:[%s143 + $0x40] sm:$0xff] %vm1022, %v998
      %1032 = vst.msk [vmem:[%s143 + $0x48] sm:$0xff] %vm1022, %v999
      %1033 = vst.msk [vmem:[%s143 + $0x50] sm:$0xff] %vm1022, %v1000
      %1034 = vst.msk [vmem:[%s143 + $0x58] sm:$0xff] %vm1022, %v1001
      %1035 = vst.msk [vmem:[%s143 + $0x60] sm:$0xff] %vm1022, %v1002
      %1036 = vst.msk [vmem:[%s143 + $0x68] sm:$0xff] %vm1022, %v1003
      %1037 = vst.msk [vmem:[%s143 + $0x70] sm:$0xff] %vm1022, %v1004
      %1038 = vst.msk [vmem:[%s143 + $0x78] sm:$0xff] %vm1022, %v1005
      %1039 = vst.msk [vmem:[%s143 + $0x80] sm:$0xff] %vm1022, %v1006
      %1040 = vst.msk [vmem:[%s143 + $0x88] sm:$0xff] %vm1022, %v1007
      %1041 = vst.msk [vmem:[%s143 + $0x90] sm:$0xff] %vm1022, %v1008
      %1042 = vst.msk [vmem:[%s143 + $0x98] sm:$0xff] %vm1022, %v1009
      %1043 = vst.msk [vmem:[%s143 + $0xa0] sm:$0xff] %vm1022, %v1010
      %1044 = vst.msk [vmem:[%s143 + $0xa8] sm:$0xff] %vm1022, %v1011
      %1045 = vst.msk [vmem:[%s143 + $0xb0] sm:$0xff] %vm1022, %v1012
      %1046 = vst.msk [vmem:[%s143 + $0xb8] sm:$0xff] %vm1022, %v1013
      %1047 = vst.msk [vmem:[%s143 + $0xc0] sm:$0xff] %vm1022, %v1014
      %1048 = vst.msk [vmem:[%s143 + $0xc8] sm:$0xff] %vm1022, %v1015
      %1049 = vst.msk [vmem:[%s143 + $0xd0] sm:$0xff] %vm1022, %v1016
      %1050 = vst.msk [vmem:[%s143 + $0xd8] sm:$0xff] %vm1022, %v1017
      %1051 = vst.msk [vmem:[%s143 + $0xe0] sm:$0xff] %vm1022, %v1018
      %1052 = vst.msk [vmem:[%s143 + $0xe8] sm:$0xff] %vm1022, %v1019
      %1053 = vst.msk [vmem:[%s143 + $0xf0] sm:$0xff] %vm1022, %v1020
      %1054 = vst.msk [vmem:[%s143 + $0xf8] sm:$0xff] %vm1022, %v1021
      %p1055 = scmp.lt.s32.totalorder %s13, 1
      %s1056 = scalar_select %p1055, %s13, 1
      %s1057 = smul.addr %s1056, 32
      %s1058 = smul.addr %s1057, 8
      %s1059 = scalar_lea.vmem %s2, %s1058
      // Predicated region
      $region29: #{hv_lca_forward.17} parent=27 // pred_check
        %p1060 = pneg %p78
      $region30: #{hv_lca_forward.17} parent=27 // pred_check_branch
        %1062 = sbr.rel (%p1060) target = $region32
      $region31: #{hv_lca_forward.17} parent=27 // pred_region
        _
      $region32: #{hv_lca_forward.17} parent=27 // pred_fallthru
        _
    $region28: #{hv_lca_forward.17} parent=5 // pred_fallthru
      _
    %p1063 = scmp.le.s32.totalorder 2, %s8
    // Predicated region
    $region33: #{hv_lca_forward.17} parent=5 // pred_check
      %p1064 = pneg %p1063
    $region34: #{hv_lca_forward.17} parent=5 // pred_check_branch
      %1066 = sbr.rel (%p1064) target = $region36
    $region35: #{hv_lca_forward.17} parent=5 // pred_region
      %s1067 = ssub.s32 %s8, 2
      // Predicated region
      $region37: #{hv_lca_forward.17} parent=35 // pred_check
        %p1068 = pneg %p84
      $region38: #{hv_lca_forward.17} parent=35 // pred_check_branch
        %1070 = sbr.rel (%p1068) target = $region40
      $region39: #{hv_lca_forward.17} parent=35 // pred_region
        %p1071 = scmp.lt.s32.totalorder %s14, 1
        %s1072 = scalar_select %p1071, %s14, 1
        %s1073 = smul.addr %s1072, 32
        %s1074 = smul.addr %s1073, 8
        %s1075 = scalar_lea.vmem %s2, %s1074
      $region40: #{hv_lca_forward.17} parent=35 // pred_fallthru
        _
    $region36: #{hv_lca_forward.17} parent=5 // pred_fallthru
      _
  $region6: #{hv_lca_forward.17} parent=0 // loop_footer
    %s12 = sadd.s32 1, %s8
  $region7: #{hv_lca_forward.17} parent=0 // loop_footer_branch
    %7 = sbr.rel target = $region3
  $region8: #{hv_lca_forward.17} parent=0 // loop_exit
    _

// kernel: hv_lca_forward.19
$region0: #{hv_lca_forward.19}
  #allocation0 [shape = 'u32[]', space=smem, size = 0x4, offset = 0x4, fixed_abs, tag = 'smem constant byte address 0x4 - core index']
  #allocation1 [shape = 'u32[72,128]{1,0:T(1,128)}', space=vmem, size = 0x9000, scoped, tag = 'internal scratch']
  %s0 = inlined_call_operand.vmem [shape: f32[512,4], index: 0, kind: input, shape index: {}]
  %s1 = inlined_call_operand.vmem [shape: f32[4,4], index: 1, kind: input, shape index: {}]
  %s2 = inlined_call_operand.vmem [shape: f32[512,4], index: 2, kind: input, shape index: {}]
  %s3 = inlined_call_operand.vmem [shape: f32[512,4], index: 3, kind: output, shape index: {}]
  %s4 = sld [smem:[#allocation0]]
  $region22: #{hv_lca_forward.19} parent=0
    _
  %s6 = ssub.s32 1, %s4
  %s7 = scalar_select 0, %s6, %s4
  // Predicated region
  $region2: #{hv_lca_forward.19} parent=0 // pred_check
    _
  $region3: #{hv_lca_forward.19} parent=0 // pred_check_branch
    %9 = sbr.rel (0) target = $region5
  $region4: #{hv_lca_forward.19} parent=0 // pred_region
    _
  $region5: #{hv_lca_forward.19} parent=0 // pred_fallthru
    _
  // Predicated region
  $region6: #{hv_lca_forward.19} parent=0 // pred_check
    _
  $region7: #{hv_lca_forward.19} parent=0 // pred_check_branch
    %11 = sbr.rel (0) target = $region9
  $region8: #{hv_lca_forward.19} parent=0 // pred_region
    _
  $region9: #{hv_lca_forward.19} parent=0 // pred_fallthru
    _
  // Predicated region
  $region10: #{hv_lca_forward.19} parent=0 // pred_check
    _
  $region11: #{hv_lca_forward.19} parent=0 // pred_check_branch
    %13 = sbr.rel (0) target = $region13
  $region12: #{hv_lca_forward.19} parent=0 // pred_region
    _
  $region13: #{hv_lca_forward.19} parent=0 // pred_fallthru
    _
  %v14 = vld [vmem:[%s0] sm:$0xff]
  %v15 = vld [vmem:[%s0 + $0x8] sm:$0xff]
  %v16 = vld [vmem:[%s0 + $0x10] sm:$0xff]
  %v17 = vld [vmem:[%s0 + $0x18] sm:$0xff]
  %v18 = vld [vmem:[%s0 + $0x20] sm:$0xff]
  %v19 = vld [vmem:[%s0 + $0x28] sm:$0xff]
  %v20 = vld [vmem:[%s0 + $0x30] sm:$0xff]
  %v21 = vld [vmem:[%s0 + $0x38] sm:$0xff]
  %v22 = vld [vmem:[%s0 + $0x40] sm:$0xff]
  %v23 = vld [vmem:[%s0 + $0x48] sm:$0xff]
  %v24 = vld [vmem:[%s0 + $0x50] sm:$0xff]
  %v25 = vld [vmem:[%s0 + $0x58] sm:$0xff]
  %v26 = vld [vmem:[%s0 + $0x60] sm:$0xff]
  %v27 = vld [vmem:[%s0 + $0x68] sm:$0xff]
  %v28 = vld [vmem:[%s0 + $0x70] sm:$0xff]
  %v29 = vld [vmem:[%s0 + $0x78] sm:$0xff]
  %v30 = vld [vmem:[%s0 + $0x80] sm:$0xff]
  %v31 = vld [vmem:[%s0 + $0x88] sm:$0xff]
  %v32 = vld [vmem:[%s0 + $0x90] sm:$0xff]
  %v33 = vld [vmem:[%s0 + $0x98] sm:$0xff]
  %v34 = vld [vmem:[%s0 + $0xa0] sm:$0xff]
  %v35 = vld [vmem:[%s0 + $0xa8] sm:$0xff]
  %v36 = vld [vmem:[%s0 + $0xb0] sm:$0xff]
  %v37 = vld [vmem:[%s0 + $0xb8] sm:$0xff]
  %v38 = vld [vmem:[%s0 + $0xc0] sm:$0xff]
  %v39 = vld [vmem:[%s0 + $0xc8] sm:$0xff]
  %v40 = vld [vmem:[%s0 + $0xd0] sm:$0xff]
  %v41 = vld [vmem:[%s0 + $0xd8] sm:$0xff]
  %v42 = vld [vmem:[%s0 + $0xe0] sm:$0xff]
  %v43 = vld [vmem:[%s0 + $0xe8] sm:$0xff]
  %v44 = vld [vmem:[%s0 + $0xf0] sm:$0xff]
  %v45 = vld [vmem:[%s0 + $0xf8] sm:$0xff]
  %v46 = vld [vmem:[%s0 + $0x100] sm:$0xff]
  %v47 = vld [vmem:[%s0 + $0x108] sm:$0xff]
  %v48 = vld [vmem:[%s0 + $0x110] sm:$0xff]
  %v49 = vld [vmem:[%s0 + $0x118] sm:$0xff]
  %v50 = vld [vmem:[%s0 + $0x120] sm:$0xff]
  %v51 = vld [vmem:[%s0 + $0x128] sm:$0xff]
  %v52 = vld [vmem:[%s0 + $0x130] sm:$0xff]
  %v53 = vld [vmem:[%s0 + $0x138] sm:$0xff]
  %v54 = vld [vmem:[%s0 + $0x140] sm:$0xff]
  %v55 = vld [vmem:[%s0 + $0x148] sm:$0xff]
  %v56 = vld [vmem:[%s0 + $0x150] sm:$0xff]
  %v57 = vld [vmem:[%s0 + $0x158] sm:$0xff]
  %v58 = vld [vmem:[%s0 + $0x160] sm:$0xff]
  %v59 = vld [vmem:[%s0 + $0x168] sm:$0xff]
  %v60 = vld [vmem:[%s0 + $0x170] sm:$0xff]
  %v61 = vld [vmem:[%s0 + $0x178] sm:$0xff]
  %v62 = vld [vmem:[%s0 + $0x180] sm:$0xff]
  %v63 = vld [vmem:[%s0 + $0x188] sm:$0xff]
  %v64 = vld [vmem:[%s0 + $0x190] sm:$0xff]
  %v65 = vld [vmem:[%s0 + $0x198] sm:$0xff]
  %v66 = vld [vmem:[%s0 + $0x1a0] sm:$0xff]
  %v67 = vld [vmem:[%s0 + $0x1a8] sm:$0xff]
  %v68 = vld [vmem:[%s0 + $0x1b0] sm:$0xff]
  %v69 = vld [vmem:[%s0 + $0x1b8] sm:$0xff]
  %v70 = vld [vmem:[%s0 + $0x1c0] sm:$0xff]
  %v71 = vld [vmem:[%s0 + $0x1c8] sm:$0xff]
  %v72 = vld [vmem:[%s0 + $0x1d0] sm:$0xff]
  %v73 = vld [vmem:[%s0 + $0x1d8] sm:$0xff]
  %v74 = vld [vmem:[%s0 + $0x1e0] sm:$0xff]
  %v75 = vld [vmem:[%s0 + $0x1e8] sm:$0xff]
  %v76 = vld [vmem:[%s0 + $0x1f0] sm:$0xff]
  %v77 = vld [vmem:[%s0 + $0x1f8] sm:$0xff]
  %v78 = vld [vmem:[%s1] sm:$0xf]
  %v79 = vld [vmem:[%s2] sm:$0xff]
  %v80 = vld [vmem:[%s2 + $0x8] sm:$0xff]
  %v81 = vld [vmem:[%s2 + $0x10] sm:$0xff]
  %v82 = vld [vmem:[%s2 + $0x18] sm:$0xff]
  %v83 = vld [vmem:[%s2 + $0x20] sm:$0xff]
  %v84 = vld [vmem:[%s2 + $0x28] sm:$0xff]
  %v85 = vld [vmem:[%s2 + $0x30] sm:$0xff]
  %v86 = vld [vmem:[%s2 + $0x38] sm:$0xff]
  %v87 = vld [vmem:[%s2 + $0x40] sm:$0xff]
  %v88 = vld [vmem:[%s2 + $0x48] sm:$0xff]
  %v89 = vld [vmem:[%s2 + $0x50] sm:$0xff]
  %v90 = vld [vmem:[%s2 + $0x58] sm:$0xff]
  %v91 = vld [vmem:[%s2 + $0x60] sm:$0xff]
  %v92 = vld [vmem:[%s2 + $0x68] sm:$0xff]
  %v93 = vld [vmem:[%s2 + $0x70] sm:$0xff]
  %v94 = vld [vmem:[%s2 + $0x78] sm:$0xff]
  %v95 = vld [vmem:[%s2 + $0x80] sm:$0xff]
  %v96 = vld [vmem:[%s2 + $0x88] sm:$0xff]
  %v97 = vld [vmem:[%s2 + $0x90] sm:$0xff]
  %v98 = vld [vmem:[%s2 + $0x98] sm:$0xff]
  %v99 = vld [vmem:[%s2 + $0xa0] sm:$0xff]
  %v100 = vld [vmem:[%s2 + $0xa8] sm:$0xff]
  %v101 = vld [vmem:[%s2 + $0xb0] sm:$0xff]
  %v102 = vld [vmem:[%s2 + $0xb8] sm:$0xff]
  %v103 = vld [vmem:[%s2 + $0xc0] sm:$0xff]
  %v104 = vld [vmem:[%s2 + $0xc8] sm:$0xff]
  %v105 = vld [vmem:[%s2 + $0xd0] sm:$0xff]
  %v106 = vld [vmem:[%s2 + $0xd8] sm:$0xff]
  %v107 = vld [vmem:[%s2 + $0xe0] sm:$0xff]
  %v108 = vld [vmem:[%s2 + $0xe8] sm:$0xff]
  %v109 = vld [vmem:[%s2 + $0xf0] sm:$0xff]
  %v110 = vld [vmem:[%s2 + $0xf8] sm:$0xff]
  %v111 = vld [vmem:[%s2 + $0x100] sm:$0xff]
  %v112 = vld [vmem:[%s2 + $0x108] sm:$0xff]
  %v113 = vld [vmem:[%s2 + $0x110] sm:$0xff]
  %v114 = vld [vmem:[%s2 + $0x118] sm:$0xff]
  %v115 = vld [vmem:[%s2 + $0x120] sm:$0xff]
  %v116 = vld [vmem:[%s2 + $0x128] sm:$0xff]
  %v117 = vld [vmem:[%s2 + $0x130] sm:$0xff]
  %v118 = vld [vmem:[%s2 + $0x138] sm:$0xff]
  %v119 = vld [vmem:[%s2 + $0x140] sm:$0xff]
  %v120 = vld [vmem:[%s2 + $0x148] sm:$0xff]
  %v121 = vld [vmem:[%s2 + $0x150] sm:$0xff]
  %v122 = vld [vmem:[%s2 + $0x158] sm:$0xff]
  %v123 = vld [vmem:[%s2 + $0x160] sm:$0xff]
  %v124 = vld [vmem:[%s2 + $0x168] sm:$0xff]
  %v125 = vld [vmem:[%s2 + $0x170] sm:$0xff]
  %v126 = vld [vmem:[%s2 + $0x178] sm:$0xff]
  %v127 = vld [vmem:[%s2 + $0x180] sm:$0xff]
  %v128 = vld [vmem:[%s2 + $0x188] sm:$0xff]
  %v129 = vld [vmem:[%s2 + $0x190] sm:$0xff]
  %v130 = vld [vmem:[%s2 + $0x198] sm:$0xff]
  %v131 = vld [vmem:[%s2 + $0x1a0] sm:$0xff]
  %v132 = vld [vmem:[%s2 + $0x1a8] sm:$0xff]
  %v133 = vld [vmem:[%s2 + $0x1b0] sm:$0xff]
  %v134 = vld [vmem:[%s2 + $0x1b8] sm:$0xff]
  %v135 = vld [vmem:[%s2 + $0x1c0] sm:$0xff]
  %v136 = vld [vmem:[%s2 + $0x1c8] sm:$0xff]
  %v137 = vld [vmem:[%s2 + $0x1d0] sm:$0xff]
  %v138 = vld [vmem:[%s2 + $0x1d8] sm:$0xff]
  %v139 = vld [vmem:[%s2 + $0x1e0] sm:$0xff]
  %v140 = vld [vmem:[%s2 + $0x1e8] sm:$0xff]
  %v141 = vld [vmem:[%s2 + $0x1f0] sm:$0xff]
  %v142 = vld [vmem:[%s2 + $0x1f8] sm:$0xff]
  %vm143 = vcmask 31744
  %v145 = vsel %vm143, %v14, 0
  %v148 = vsel %vm143, %v15, 0
  %v151 = vsel %vm143, %v16, 0
  %v154 = vsel %vm143, %v17, 0
  %v157 = vsel %vm143, %v18, 0
  %v160 = vsel %vm143, %v19, 0
  %v163 = vsel %vm143, %v20, 0
  %v166 = vsel %vm143, %v21, 0
  %v169 = vsel %vm143, %v22, 0
  %v172 = vsel %vm143, %v23, 0
  %v175 = vsel %vm143, %v24, 0
  %v178 = vsel %vm143, %v25, 0
  %v181 = vsel %vm143, %v26, 0
  %v184 = vsel %vm143, %v27, 0
  %v187 = vsel %vm143, %v28, 0
  %v190 = vsel %vm143, %v29, 0
  %v193 = vsel %vm143, %v30, 0
  %v196 = vsel %vm143, %v31, 0
  %v199 = vsel %vm143, %v32, 0
  %v202 = vsel %vm143, %v33, 0
  %v205 = vsel %vm143, %v34, 0
  %v208 = vsel %vm143, %v35, 0
  %v211 = vsel %vm143, %v36, 0
  %v214 = vsel %vm143, %v37, 0
  %v217 = vsel %vm143, %v38, 0
  %v220 = vsel %vm143, %v39, 0
  %v223 = vsel %vm143, %v40, 0
  %v226 = vsel %vm143, %v41, 0
  %v229 = vsel %vm143, %v42, 0
  %v232 = vsel %vm143, %v43, 0
  %v235 = vsel %vm143, %v44, 0
  %v238 = vsel %vm143, %v45, 0
  %v241 = vsel %vm143, %v46, 0
  %v244 = vsel %vm143, %v47, 0
  %v247 = vsel %vm143, %v48, 0
  %v250 = vsel %vm143, %v49, 0
  %v253 = vsel %vm143, %v50, 0
  %v256 = vsel %vm143, %v51, 0
  %v259 = vsel %vm143, %v52, 0
  %v262 = vsel %vm143, %v53, 0
  %v265 = vsel %vm143, %v54, 0
  %v268 = vsel %vm143, %v55, 0
  %v271 = vsel %vm143, %v56, 0
  %v274 = vsel %vm143, %v57, 0
  %v277 = vsel %vm143, %v58, 0
  %v280 = vsel %vm143, %v59, 0
  %v283 = vsel %vm143, %v60, 0
  %v286 = vsel %vm143, %v61, 0
  %v289 = vsel %vm143, %v62, 0
  %v292 = vsel %vm143, %v63, 0
  %v295 = vsel %vm143, %v64, 0
  %v298 = vsel %vm143, %v65, 0
  %v301 = vsel %vm143, %v66, 0
  %v304 = vsel %vm143, %v67, 0
  %v307 = vsel %vm143, %v68, 0
  %v310 = vsel %vm143, %v69, 0
  %v313 = vsel %vm143, %v70, 0
  %v316 = vsel %vm143, %v71, 0
  %v319 = vsel %vm143, %v72, 0
  %v322 = vsel %vm143, %v73, 0
  %v325 = vsel %vm143, %v74, 0
  %v328 = vsel %vm143, %v75, 0
  %v331 = vsel %vm143, %v76, 0
  %v334 = vsel %vm143, %v77, 0
  %vm336 = vcmask 1043456
  %v338 = vsel %vm336, %v78, 0
  %340 = vmatpush.msra.mxu0 0.0
  %341 = vmatpush.msra.mxu0 0.0
  %342 = vmatpush.msra.mxu0 0.0
  %343 = vmatpush.msra.mxu0 0.0
  %344 = vmatpush.msra.mxu0 0.0
  %345 = vmatpush.msra.mxu0 0.0
  %346 = vmatpush.msra.mxu0 0.0
  %347 = vmatpush.msra.mxu0 0.0
  %348 = vmatpush.msra.mxu0 0.0
  %349 = vmatpush.msra.mxu0 0.0
  %350 = vmatpush.msra.mxu0 0.0
  %351 = vmatpush.msra.mxu0 0.0
  %352 = vmatpush.msra.mxu0 0.0
  %353 = vmatpush.msra.mxu0 0.0
  %354 = vmatpush.msra.mxu0 0.0
  %355 = vmatpush.msra.mxu0 %v338
  %356 = vmatmul.f32.gmra.mxu0 %v145
  %v357 = vpop.f32.mrf.mxu0
  %v358 = vadd.f32 %v79, %v357
  %359 = vmatmul.f32.gmra.mxu0 %v148
  %v360 = vpop.f32.mrf.mxu0
  %v361 = vadd.f32 %v80, %v360
  %362 = vmatmul.f32.gmra.mxu0 %v151
  %v363 = vpop.f32.mrf.mxu0
  %v364 = vadd.f32 %v81, %v363
  %365 = vmatmul.f32.gmra.mxu0 %v154
  %v366 = vpop.f32.mrf.mxu0
  %v367 = vadd.f32 %v82, %v366
  %368 = vmatmul.f32.gmra.mxu0 %v157
  %v369 = vpop.f32.mrf.mxu0
  %v370 = vadd.f32 %v83, %v369
  %371 = vmatmul.f32.gmra.mxu0 %v160
  %v372 = vpop.f32.mrf.mxu0
  %v373 = vadd.f32 %v84, %v372
  %374 = vmatmul.f32.gmra.mxu0 %v163
  %v375 = vpop.f32.mrf.mxu0
  %v376 = vadd.f32 %v85, %v375
  %377 = vmatmul.f32.gmra.mxu0 %v166
  %v378 = vpop.f32.mrf.mxu0
  %v379 = vadd.f32 %v86, %v378
  %380 = vmatmul.f32.gmra.mxu0 %v169
  %v381 = vpop.f32.mrf.mxu0
  %v382 = vadd.f32 %v87, %v381
  %383 = vmatmul.f32.gmra.mxu0 %v172
  %v384 = vpop.f32.mrf.mxu0
  %v385 = vadd.f32 %v88, %v384
  %386 = vmatmul.f32.gmra.mxu0 %v175
  %v387 = vpop.f32.mrf.mxu0
  %v388 = vadd.f32 %v89, %v387
  %389 = vmatmul.f32.gmra.mxu0 %v178
  %v390 = vpop.f32.mrf.mxu0
  %v391 = vadd.f32 %v90, %v390
  %392 = vmatmul.f32.gmra.mxu0 %v181
  %v393 = vpop.f32.mrf.mxu0
  %v394 = vadd.f32 %v91, %v393
  %395 = vmatmul.f32.gmra.mxu0 %v184
  %v396 = vpop.f32.mrf.mxu0
  %v397 = vadd.f32 %v92, %v396
  %398 = vmatmul.f32.gmra.mxu0 %v187
  %v399 = vpop.f32.mrf.mxu0
  %v400 = vadd.f32 %v93, %v399
  %401 = vmatmul.f32.gmra.mxu0 %v190
  %v402 = vpop.f32.mrf.mxu0
  %v403 = vadd.f32 %v94, %v402
  %404 = vmatmul.f32.gmra.mxu0 %v193
  %v405 = vpop.f32.mrf.mxu0
  %v406 = vadd.f32 %v95, %v405
  %407 = vmatmul.f32.gmra.mxu0 %v196
  %v408 = vpop.f32.mrf.mxu0
  %v409 = vadd.f32 %v96, %v408
  %410 = vmatmul.f32.gmra.mxu0 %v199
  %v411 = vpop.f32.mrf.mxu0
  %v412 = vadd.f32 %v97, %v411
  %413 = vmatmul.f32.gmra.mxu0 %v202
  %v414 = vpop.f32.mrf.mxu0
  %v415 = vadd.f32 %v98, %v414
  %416 = vmatmul.f32.gmra.mxu0 %v205
  %v417 = vpop.f32.mrf.mxu0
  %v418 = vadd.f32 %v99, %v417
  %419 = vmatmul.f32.gmra.mxu0 %v208
  %v420 = vpop.f32.mrf.mxu0
  %v421 = vadd.f32 %v100, %v420
  %422 = vmatmul.f32.gmra.mxu0 %v211
  %v423 = vpop.f32.mrf.mxu0
  %v424 = vadd.f32 %v101, %v423
  %425 = vmatmul.f32.gmra.mxu0 %v214
  %v426 = vpop.f32.mrf.mxu0
  %v427 = vadd.f32 %v102, %v426
  %428 = vmatmul.f32.gmra.mxu0 %v217
  %v429 = vpop.f32.mrf.mxu0
  %v430 = vadd.f32 %v103, %v429
  %431 = vmatmul.f32.gmra.mxu0 %v220
  %v432 = vpop.f32.mrf.mxu0
  %v433 = vadd.f32 %v104, %v432
  %434 = vmatmul.f32.gmra.mxu0 %v223
  %v435 = vpop.f32.mrf.mxu0
  %v436 = vadd.f32 %v105, %v435
  %437 = vmatmul.f32.gmra.mxu0 %v226
  %v438 = vpop.f32.mrf.mxu0
  %v439 = vadd.f32 %v106, %v438
  %440 = vmatmul.f32.gmra.mxu0 %v229
  %v441 = vpop.f32.mrf.mxu0
  %v442 = vadd.f32 %v107, %v441
  %443 = vmatmul.f32.gmra.mxu0 %v232
  %v444 = vpop.f32.mrf.mxu0
  %v445 = vadd.f32 %v108, %v444
  %446 = vmatmul.f32.gmra.mxu0 %v235
  %v447 = vpop.f32.mrf.mxu0
  %v448 = vadd.f32 %v109, %v447
  %449 = vmatmul.f32.gmra.mxu0 %v238
  %v450 = vpop.f32.mrf.mxu0
  %v451 = vadd.f32 %v110, %v450
  %452 = vmatmul.f32.gmra.mxu0 %v241
  %v453 = vpop.f32.mrf.mxu0
  %v454 = vadd.f32 %v111, %v453
  %455 = vmatmul.f32.gmra.mxu0 %v244
  %v456 = vpop.f32.mrf.mxu0
  %v457 = vadd.f32 %v112, %v456
  %458 = vmatmul.f32.gmra.mxu0 %v247
  %v459 = vpop.f32.mrf.mxu0
  %v460 = vadd.f32 %v113, %v459
  %461 = vmatmul.f32.gmra.mxu0 %v250
  %v462 = vpop.f32.mrf.mxu0
  %v463 = vadd.f32 %v114, %v462
  %464 = vmatmul.f32.gmra.mxu0 %v253
  %v465 = vpop.f32.mrf.mxu0
  %v466 = vadd.f32 %v115, %v465
  %467 = vmatmul.f32.gmra.mxu0 %v256
  %v468 = vpop.f32.mrf.mxu0
  %v469 = vadd.f32 %v116, %v468
  %470 = vmatmul.f32.gmra.mxu0 %v259
  %v471 = vpop.f32.mrf.mxu0
  %v472 = vadd.f32 %v117, %v471
  %473 = vmatmul.f32.gmra.mxu0 %v262
  %v474 = vpop.f32.mrf.mxu0
  %v475 = vadd.f32 %v118, %v474
  %476 = vmatmul.f32.gmra.mxu0 %v265
  %v477 = vpop.f32.mrf.mxu0
  %v478 = vadd.f32 %v119, %v477
  %479 = vmatmul.f32.gmra.mxu0 %v268
  %v480 = vpop.f32.mrf.mxu0
  %v481 = vadd.f32 %v120, %v480
  %482 = vmatmul.f32.gmra.mxu0 %v271
  %v483 = vpop.f32.mrf.mxu0
  %v484 = vadd.f32 %v121, %v483
  %485 = vmatmul.f32.gmra.mxu0 %v274
  %v486 = vpop.f32.mrf.mxu0
  %v487 = vadd.f32 %v122, %v486
  %488 = vmatmul.f32.gmra.mxu0 %v277
  %v489 = vpop.f32.mrf.mxu0
  %v490 = vadd.f32 %v123, %v489
  %491 = vmatmul.f32.gmra.mxu0 %v280
  %v492 = vpop.f32.mrf.mxu0
  %v493 = vadd.f32 %v124, %v492
  %494 = vmatmul.f32.gmra.mxu0 %v283
  %v495 = vpop.f32.mrf.mxu0
  %v496 = vadd.f32 %v125, %v495
  %497 = vmatmul.f32.gmra.mxu0 %v286
  %v498 = vpop.f32.mrf.mxu0
  %v499 = vadd.f32 %v126, %v498
  %500 = vmatmul.f32.gmra.mxu0 %v289
  %v501 = vpop.f32.mrf.mxu0
  %v502 = vadd.f32 %v127, %v501
  %503 = vmatmul.f32.gmra.mxu0 %v292
  %v504 = vpop.f32.mrf.mxu0
  %v505 = vadd.f32 %v128, %v504
  %506 = vmatmul.f32.gmra.mxu0 %v295
  %v507 = vpop.f32.mrf.mxu0
  %v508 = vadd.f32 %v129, %v507
  %509 = vmatmul.f32.gmra.mxu0 %v298
  %v510 = vpop.f32.mrf.mxu0
  %v511 = vadd.f32 %v130, %v510
  %512 = vmatmul.f32.gmra.mxu0 %v301
  %v513 = vpop.f32.mrf.mxu0
  %v514 = vadd.f32 %v131, %v513
  %515 = vmatmul.f32.gmra.mxu0 %v304
  %v516 = vpop.f32.mrf.mxu0
  %v517 = vadd.f32 %v132, %v516
  %518 = vmatmul.f32.gmra.mxu0 %v307
  %v519 = vpop.f32.mrf.mxu0
  %v520 = vadd.f32 %v133, %v519
  %521 = vmatmul.f32.gmra.mxu0 %v310
  %v522 = vpop.f32.mrf.mxu0
  %v523 = vadd.f32 %v134, %v522
  %524 = vmatmul.f32.gmra.mxu0 %v313
  %v525 = vpop.f32.mrf.mxu0
  %v526 = vadd.f32 %v135, %v525
  %527 = vmatmul.f32.gmra.mxu0 %v316
  %v528 = vpop.f32.mrf.mxu0
  %v529 = vadd.f32 %v136, %v528
  %530 = vmatmul.f32.gmra.mxu0 %v319
  %v531 = vpop.f32.mrf.mxu0
  %v532 = vadd.f32 %v137, %v531
  %533 = vmatmul.f32.gmra.mxu0 %v322
  %v534 = vpop.f32.mrf.mxu0
  %v535 = vadd.f32 %v138, %v534
  %536 = vmatmul.f32.gmra.mxu0 %v325
  %v537 = vpop.f32.mrf.mxu0
  %v538 = vadd.f32 %v139, %v537
  %539 = vmatmul.f32.gmra.mxu0 %v328
  %v540 = vpop.f32.mrf.mxu0
  %v541 = vadd.f32 %v140, %v540
  %542 = vmatmul.f32.gmra.mxu0 %v331
  %v543 = vpop.f32.mrf.mxu0
  %v544 = vadd.f32 %v141, %v543
  %545 = vmatmul.f32.gmra.mxu0 %v334
  %v546 = vpop.f32.mrf.mxu0
  %v547 = vadd.f32 %v142, %v546
  %548 = vdwg.mxu0
  %549 = vst.msk [vmem:[%s3] sm:$0xff] %vm143, %v358
  %550 = vst.msk [vmem:[%s3 + $0x8] sm:$0xff] %vm143, %v361
  %551 = vst.msk [vmem:[%s3 + $0x10] sm:$0xff] %vm143, %v364
  %552 = vst.msk [vmem:[%s3 + $0x18] sm:$0xff] %vm143, %v367
  %553 = vst.msk [vmem:[%s3 + $0x20] sm:$0xff] %vm143, %v370
  %554 = vst.msk [vmem:[%s3 + $0x28] sm:$0xff] %vm143, %v373
  %555 = vst.msk [vmem:[%s3 + $0x30] sm:$0xff] %vm143, %v376
  %556 = vst.msk [vmem:[%s3 + $0x38] sm:$0xff] %vm143, %v379
  %557 = vst.msk [vmem:[%s3 + $0x40] sm:$0xff] %vm143, %v382
  %558 = vst.msk [vmem:[%s3 + $0x48] sm:$0xff] %vm143, %v385
  %559 = vst.msk [vmem:[%s3 + $0x50] sm:$0xff] %vm143, %v388
  %560 = vst.msk [vmem:[%s3 + $0x58] sm:$0xff] %vm143, %v391
  %561 = vst.msk [vmem:[%s3 + $0x60] sm:$0xff] %vm143, %v394
  %562 = vst.msk [vmem:[%s3 + $0x68] sm:$0xff] %vm143, %v397
  %563 = vst.msk [vmem:[%s3 + $0x70] sm:$0xff] %vm143, %v400
  %564 = vst.msk [vmem:[%s3 + $0x78] sm:$0xff] %vm143, %v403
  %565 = vst.msk [vmem:[%s3 + $0x80] sm:$0xff] %vm143, %v406
  %566 = vst.msk [vmem:[%s3 + $0x88] sm:$0xff] %vm143, %v409
  %567 = vst.msk [vmem:[%s3 + $0x90] sm:$0xff] %vm143, %v412
  %568 = vst.msk [vmem:[%s3 + $0x98] sm:$0xff] %vm143, %v415
  %569 = vst.msk [vmem:[%s3 + $0xa0] sm:$0xff] %vm143, %v418
  %570 = vst.msk [vmem:[%s3 + $0xa8] sm:$0xff] %vm143, %v421
  %571 = vst.msk [vmem:[%s3 + $0xb0] sm:$0xff] %vm143, %v424
  %572 = vst.msk [vmem:[%s3 + $0xb8] sm:$0xff] %vm143, %v427
  %573 = vst.msk [vmem:[%s3 + $0xc0] sm:$0xff] %vm143, %v430
  %574 = vst.msk [vmem:[%s3 + $0xc8] sm:$0xff] %vm143, %v433
  %575 = vst.msk [vmem:[%s3 + $0xd0] sm:$0xff] %vm143, %v436
  %576 = vst.msk [vmem:[%s3 + $0xd8] sm:$0xff] %vm143, %v439
  %577 = vst.msk [vmem:[%s3 + $0xe0] sm:$0xff] %vm143, %v442
  %578 = vst.msk [vmem:[%s3 + $0xe8] sm:$0xff] %vm143, %v445
  %579 = vst.msk [vmem:[%s3 + $0xf0] sm:$0xff] %vm143, %v448
  %580 = vst.msk [vmem:[%s3 + $0xf8] sm:$0xff] %vm143, %v451
  %581 = vst.msk [vmem:[%s3 + $0x100] sm:$0xff] %vm143, %v454
  %582 = vst.msk [vmem:[%s3 + $0x108] sm:$0xff] %vm143, %v457
  %583 = vst.msk [vmem:[%s3 + $0x110] sm:$0xff] %vm143, %v460
  %584 = vst.msk [vmem:[%s3 + $0x118] sm:$0xff] %vm143, %v463
  %585 = vst.msk [vmem:[%s3 + $0x120] sm:$0xff] %vm143, %v466
  %586 = vst.msk [vmem:[%s3 + $0x128] sm:$0xff] %vm143, %v469
  %587 = vst.msk [vmem:[%s3 + $0x130] sm:$0xff] %vm143, %v472
  %588 = vst.msk [vmem:[%s3 + $0x138] sm:$0xff] %vm143, %v475
  %589 = vst.msk [vmem:[%s3 + $0x140] sm:$0xff] %vm143, %v478
  %590 = vst.msk [vmem:[%s3 + $0x148] sm:$0xff] %vm143, %v481
  %591 = vst.msk [vmem:[%s3 + $0x150] sm:$0xff] %vm143, %v484
  %592 = vst.msk [vmem:[%s3 + $0x158] sm:$0xff] %vm143, %v487
  %593 = vst.msk [vmem:[%s3 + $0x160] sm:$0xff] %vm143, %v490
  %594 = vst.msk [vmem:[%s3 + $0x168] sm:$0xff] %vm143, %v493
  %595 = vst.msk [vmem:[%s3 + $0x170] sm:$0xff] %vm143, %v496
  %596 = vst.msk [vmem:[%s3 + $0x178] sm:$0xff] %vm143, %v499
  %597 = vst.msk [vmem:[%s3 + $0x180] sm:$0xff] %vm143, %v502
  %598 = vst.msk [vmem:[%s3 + $0x188] sm:$0xff] %vm143, %v505
  %599 = vst.msk [vmem:[%s3 + $0x190] sm:$0xff] %vm143, %v508
  %600 = vst.msk [vmem:[%s3 + $0x198] sm:$0xff] %vm143, %v511
  %601 = vst.msk [vmem:[%s3 + $0x1a0] sm:$0xff] %vm143, %v514
  %602 = vst.msk [vmem:[%s3 + $0x1a8] sm:$0xff] %vm143, %v517
  %603 = vst.msk [vmem:[%s3 + $0x1b0] sm:$0xff] %vm143, %v520
  %604 = vst.msk [vmem:[%s3 + $0x1b8] sm:$0xff] %vm143, %v523
  %605 = vst.msk [vmem:[%s3 + $0x1c0] sm:$0xff] %vm143, %v526
  %606 = vst.msk [vmem:[%s3 + $0x1c8] sm:$0xff] %vm143, %v529
  %607 = vst.msk [vmem:[%s3 + $0x1d0] sm:$0xff] %vm143, %v532
  %608 = vst.msk [vmem:[%s3 + $0x1d8] sm:$0xff] %vm143, %v535
  %609 = vst.msk [vmem:[%s3 + $0x1e0] sm:$0xff] %vm143, %v538
  %610 = vst.msk [vmem:[%s3 + $0x1e8] sm:$0xff] %vm143, %v541
  %611 = vst.msk [vmem:[%s3 + $0x1f0] sm:$0xff] %vm143, %v544
  %612 = vst.msk [vmem:[%s3 + $0x1f8] sm:$0xff] %vm143, %v547
  // Predicated region
  $region14: #{hv_lca_forward.19} parent=0 // pred_check
    _
  $region15: #{hv_lca_forward.19} parent=0 // pred_check_branch
    %614 = sbr.rel (0) target = $region17
  $region16: #{hv_lca_forward.19} parent=0 // pred_region
    _
  $region17: #{hv_lca_forward.19} parent=0 // pred_fallthru
    _
  // Predicated region
  $region18: #{hv_lca_forward.19} parent=0 // pred_check
    _
  $region19: #{hv_lca_forward.19} parent=0 // pred_check_branch
    %616 = sbr.rel (0) target = $region21
  $region20: #{hv_lca_forward.19} parent=0 // pred_region
    _
  $region21: #{hv_lca_forward.19} parent=0 // pred_fallthru
    _

// kernel: hv_lca_forward.21
$region0: #{hv_lca_forward.21}
  #allocation0 [shape = 'u32[]', space=smem, size = 0x4, offset = 0x4, fixed_abs, tag = 'smem constant byte address 0x4 - core index']
  #allocation1 [shape = 'u32[72,128]{1,0:T(1,128)}', space=vmem, size = 0x9000, scoped, tag = 'internal scratch']
  %s0 = inlined_call_operand.vmem [shape: f32[512,4], index: 0, kind: input, shape index: {}]
  %s1 = inlined_call_operand.vmem [shape: f32[4,20], index: 1, kind: input, shape index: {}]
  %s2 = inlined_call_operand.vmem [shape: f32[512,20], index: 2, kind: output, shape index: {}]
  %s3 = sld [smem:[#allocation0]]
  $region18: #{hv_lca_forward.21} parent=0
    _
  %s5 = ssub.s32 1, %s3
  %s6 = scalar_select 0, %s5, %s3
  // Predicated region
  $region2: #{hv_lca_forward.21} parent=0 // pred_check
    _
  $region3: #{hv_lca_forward.21} parent=0 // pred_check_branch
    %8 = sbr.rel (0) target = $region5
  $region4: #{hv_lca_forward.21} parent=0 // pred_region
    _
  $region5: #{hv_lca_forward.21} parent=0 // pred_fallthru
    _
  // Predicated region
  $region6: #{hv_lca_forward.21} parent=0 // pred_check
    _
  $region7: #{hv_lca_forward.21} parent=0 // pred_check_branch
    %10 = sbr.rel (0) target = $region9
  $region8: #{hv_lca_forward.21} parent=0 // pred_region
    _
  $region9: #{hv_lca_forward.21} parent=0 // pred_fallthru
    _
  %v11 = vld [vmem:[%s0] sm:$0xff]
  %v12 = vld [vmem:[%s0 + $0x8] sm:$0xff]
  %v13 = vld [vmem:[%s0 + $0x10] sm:$0xff]
  %v14 = vld [vmem:[%s0 + $0x18] sm:$0xff]
  %v15 = vld [vmem:[%s0 + $0x20] sm:$0xff]
  %v16 = vld [vmem:[%s0 + $0x28] sm:$0xff]
  %v17 = vld [vmem:[%s0 + $0x30] sm:$0xff]
  %v18 = vld [vmem:[%s0 + $0x38] sm:$0xff]
  %v19 = vld [vmem:[%s0 + $0x40] sm:$0xff]
  %v20 = vld [vmem:[%s0 + $0x48] sm:$0xff]
  %v21 = vld [vmem:[%s0 + $0x50] sm:$0xff]
  %v22 = vld [vmem:[%s0 + $0x58] sm:$0xff]
  %v23 = vld [vmem:[%s0 + $0x60] sm:$0xff]
  %v24 = vld [vmem:[%s0 + $0x68] sm:$0xff]
  %v25 = vld [vmem:[%s0 + $0x70] sm:$0xff]
  %v26 = vld [vmem:[%s0 + $0x78] sm:$0xff]
  %v27 = vld [vmem:[%s0 + $0x80] sm:$0xff]
  %v28 = vld [vmem:[%s0 + $0x88] sm:$0xff]
  %v29 = vld [vmem:[%s0 + $0x90] sm:$0xff]
  %v30 = vld [vmem:[%s0 + $0x98] sm:$0xff]
  %v31 = vld [vmem:[%s0 + $0xa0] sm:$0xff]
  %v32 = vld [vmem:[%s0 + $0xa8] sm:$0xff]
  %v33 = vld [vmem:[%s0 + $0xb0] sm:$0xff]
  %v34 = vld [vmem:[%s0 + $0xb8] sm:$0xff]
  %v35 = vld [vmem:[%s0 + $0xc0] sm:$0xff]
  %v36 = vld [vmem:[%s0 + $0xc8] sm:$0xff]
  %v37 = vld [vmem:[%s0 + $0xd0] sm:$0xff]
  %v38 = vld [vmem:[%s0 + $0xd8] sm:$0xff]
  %v39 = vld [vmem:[%s0 + $0xe0] sm:$0xff]
  %v40 = vld [vmem:[%s0 + $0xe8] sm:$0xff]
  %v41 = vld [vmem:[%s0 + $0xf0] sm:$0xff]
  %v42 = vld [vmem:[%s0 + $0xf8] sm:$0xff]
  %v43 = vld [vmem:[%s0 + $0x100] sm:$0xff]
  %v44 = vld [vmem:[%s0 + $0x108] sm:$0xff]
  %v45 = vld [vmem:[%s0 + $0x110] sm:$0xff]
  %v46 = vld [vmem:[%s0 + $0x118] sm:$0xff]
  %v47 = vld [vmem:[%s0 + $0x120] sm:$0xff]
  %v48 = vld [vmem:[%s0 + $0x128] sm:$0xff]
  %v49 = vld [vmem:[%s0 + $0x130] sm:$0xff]
  %v50 = vld [vmem:[%s0 + $0x138] sm:$0xff]
  %v51 = vld [vmem:[%s0 + $0x140] sm:$0xff]
  %v52 = vld [vmem:[%s0 + $0x148] sm:$0xff]
  %v53 = vld [vmem:[%s0 + $0x150] sm:$0xff]
  %v54 = vld [vmem:[%s0 + $0x158] sm:$0xff]
  %v55 = vld [vmem:[%s0 + $0x160] sm:$0xff]
  %v56 = vld [vmem:[%s0 + $0x168] sm:$0xff]
  %v57 = vld [vmem:[%s0 + $0x170] sm:$0xff]
  %v58 = vld [vmem:[%s0 + $0x178] sm:$0xff]
  %v59 = vld [vmem:[%s0 + $0x180] sm:$0xff]
  %v60 = vld [vmem:[%s0 + $0x188] sm:$0xff]
  %v61 = vld [vmem:[%s0 + $0x190] sm:$0xff]
  %v62 = vld [vmem:[%s0 + $0x198] sm:$0xff]
  %v63 = vld [vmem:[%s0 + $0x1a0] sm:$0xff]
  %v64 = vld [vmem:[%s0 + $0x1a8] sm:$0xff]
  %v65 = vld [vmem:[%s0 + $0x1b0] sm:$0xff]
  %v66 = vld [vmem:[%s0 + $0x1b8] sm:$0xff]
  %v67 = vld [vmem:[%s0 + $0x1c0] sm:$0xff]
  %v68 = vld [vmem:[%s0 + $0x1c8] sm:$0xff]
  %v69 = vld [vmem:[%s0 + $0x1d0] sm:$0xff]
  %v70 = vld [vmem:[%s0 + $0x1d8] sm:$0xff]
  %v71 = vld [vmem:[%s0 + $0x1e0] sm:$0xff]
  %v72 = vld [vmem:[%s0 + $0x1e8] sm:$0xff]
  %v73 = vld [vmem:[%s0 + $0x1f0] sm:$0xff]
  %v74 = vld [vmem:[%s0 + $0x1f8] sm:$0xff]
  %v75 = vld [vmem:[%s1] sm:$0xf]
  %vm76 = vcmask 31744
  %v78 = vsel %vm76, %v11, 0
  %v81 = vsel %vm76, %v12, 0
  %v84 = vsel %vm76, %v13, 0
  %v87 = vsel %vm76, %v14, 0
  %v90 = vsel %vm76, %v15, 0
  %v93 = vsel %vm76, %v16, 0
  %v96 = vsel %vm76, %v17, 0
  %v99 = vsel %vm76, %v18, 0
  %v102 = vsel %vm76, %v19, 0
  %v105 = vsel %vm76, %v20, 0
  %v108 = vsel %vm76, %v21, 0
  %v111 = vsel %vm76, %v22, 0
  %v114 = vsel %vm76, %v23, 0
  %v117 = vsel %vm76, %v24, 0
  %v120 = vsel %vm76, %v25, 0
  %v123 = vsel %vm76, %v26, 0
  %v126 = vsel %vm76, %v27, 0
  %v129 = vsel %vm76, %v28, 0
  %v132 = vsel %vm76, %v29, 0
  %v135 = vsel %vm76, %v30, 0
  %v138 = vsel %vm76, %v31, 0
  %v141 = vsel %vm76, %v32, 0
  %v144 = vsel %vm76, %v33, 0
  %v147 = vsel %vm76, %v34, 0
  %v150 = vsel %vm76, %v35, 0
  %v153 = vsel %vm76, %v36, 0
  %v156 = vsel %vm76, %v37, 0
  %v159 = vsel %vm76, %v38, 0
  %v162 = vsel %vm76, %v39, 0
  %v165 = vsel %vm76, %v40, 0
  %v168 = vsel %vm76, %v41, 0
  %v171 = vsel %vm76, %v42, 0
  %v174 = vsel %vm76, %v43, 0
  %v177 = vsel %vm76, %v44, 0
  %v180 = vsel %vm76, %v45, 0
  %v183 = vsel %vm76, %v46, 0
  %v186 = vsel %vm76, %v47, 0
  %v189 = vsel %vm76, %v48, 0
  %v192 = vsel %vm76, %v49, 0
  %v195 = vsel %vm76, %v50, 0
  %v198 = vsel %vm76, %v51, 0
  %v201 = vsel %vm76, %v52, 0
  %v204 = vsel %vm76, %v53, 0
  %v207 = vsel %vm76, %v54, 0
  %v210 = vsel %vm76, %v55, 0
  %v213 = vsel %vm76, %v56, 0
  %v216 = vsel %vm76, %v57, 0
  %v219 = vsel %vm76, %v58, 0
  %v222 = vsel %vm76, %v59, 0
  %v225 = vsel %vm76, %v60, 0
  %v228 = vsel %vm76, %v61, 0
  %v231 = vsel %vm76, %v62, 0
  %v234 = vsel %vm76, %v63, 0
  %v237 = vsel %vm76, %v64, 0
  %v240 = vsel %vm76, %v65, 0
  %v243 = vsel %vm76, %v66, 0
  %v246 = vsel %vm76, %v67, 0
  %v249 = vsel %vm76, %v68, 0
  %v252 = vsel %vm76, %v69, 0
  %v255 = vsel %vm76, %v70, 0
  %v258 = vsel %vm76, %v71, 0
  %v261 = vsel %vm76, %v72, 0
  %v264 = vsel %vm76, %v73, 0
  %v267 = vsel %vm76, %v74, 0
  %vm269 = vcmask 1043456
  %v271 = vsel %vm269, %v75, 0
  %273 = vmatpush.msra.mxu0 0.0
  %274 = vmatpush.msra.mxu0 0.0
  %275 = vmatpush.msra.mxu0 0.0
  %276 = vmatpush.msra.mxu0 0.0
  %277 = vmatpush.msra.mxu0 0.0
  %278 = vmatpush.msra.mxu0 0.0
  %279 = vmatpush.msra.mxu0 0.0
  %280 = vmatpush.msra.mxu0 0.0
  %281 = vmatpush.msra.mxu0 0.0
  %282 = vmatpush.msra.mxu0 0.0
  %283 = vmatpush.msra.mxu0 0.0
  %284 = vmatpush.msra.mxu0 0.0
  %285 = vmatpush.msra.mxu0 0.0
  %286 = vmatpush.msra.mxu0 0.0
  %287 = vmatpush.msra.mxu0 0.0
  %288 = vmatpush.msra.mxu0 %v271
  %289 = vmatmul.f32.gmra.mxu0 %v78
  %v290 = vpop.f32.mrf.mxu0
  %v291 = vadd.f32 0.0, %v290
  %292 = vmatmul.f32.gmra.mxu0 %v81
  %v293 = vpop.f32.mrf.mxu0
  %v294 = vadd.f32 0.0, %v293
  %295 = vmatmul.f32.gmra.mxu0 %v84
  %v296 = vpop.f32.mrf.mxu0
  %v297 = vadd.f32 0.0, %v296
  %298 = vmatmul.f32.gmra.mxu0 %v87
  %v299 = vpop.f32.mrf.mxu0
  %v300 = vadd.f32 0.0, %v299
  %301 = vmatmul.f32.gmra.mxu0 %v90
  %v302 = vpop.f32.mrf.mxu0
  %v303 = vadd.f32 0.0, %v302
  %304 = vmatmul.f32.gmra.mxu0 %v93
  %v305 = vpop.f32.mrf.mxu0
  %v306 = vadd.f32 0.0, %v305
  %307 = vmatmul.f32.gmra.mxu0 %v96
  %v308 = vpop.f32.mrf.mxu0
  %v309 = vadd.f32 0.0, %v308
  %310 = vmatmul.f32.gmra.mxu0 %v99
  %v311 = vpop.f32.mrf.mxu0
  %v312 = vadd.f32 0.0, %v311
  %313 = vmatmul.f32.gmra.mxu0 %v102
  %v314 = vpop.f32.mrf.mxu0
  %v315 = vadd.f32 0.0, %v314
  %316 = vmatmul.f32.gmra.mxu0 %v105
  %v317 = vpop.f32.mrf.mxu0
  %v318 = vadd.f32 0.0, %v317
  %319 = vmatmul.f32.gmra.mxu0 %v108
  %v320 = vpop.f32.mrf.mxu0
  %v321 = vadd.f32 0.0, %v320
  %322 = vmatmul.f32.gmra.mxu0 %v111
  %v323 = vpop.f32.mrf.mxu0
  %v324 = vadd.f32 0.0, %v323
  %325 = vmatmul.f32.gmra.mxu0 %v114
  %v326 = vpop.f32.mrf.mxu0
  %v327 = vadd.f32 0.0, %v326
  %328 = vmatmul.f32.gmra.mxu0 %v117
  %v329 = vpop.f32.mrf.mxu0
  %v330 = vadd.f32 0.0, %v329
  %331 = vmatmul.f32.gmra.mxu0 %v120
  %v332 = vpop.f32.mrf.mxu0
  %v333 = vadd.f32 0.0, %v332
  %334 = vmatmul.f32.gmra.mxu0 %v123
  %v335 = vpop.f32.mrf.mxu0
  %v336 = vadd.f32 0.0, %v335
  %337 = vmatmul.f32.gmra.mxu0 %v126
  %v338 = vpop.f32.mrf.mxu0
  %v339 = vadd.f32 0.0, %v338
  %340 = vmatmul.f32.gmra.mxu0 %v129
  %v341 = vpop.f32.mrf.mxu0
  %v342 = vadd.f32 0.0, %v341
  %343 = vmatmul.f32.gmra.mxu0 %v132
  %v344 = vpop.f32.mrf.mxu0
  %v345 = vadd.f32 0.0, %v344
  %346 = vmatmul.f32.gmra.mxu0 %v135
  %v347 = vpop.f32.mrf.mxu0
  %v348 = vadd.f32 0.0, %v347
  %349 = vmatmul.f32.gmra.mxu0 %v138
  %v350 = vpop.f32.mrf.mxu0
  %v351 = vadd.f32 0.0, %v350
  %352 = vmatmul.f32.gmra.mxu0 %v141
  %v353 = vpop.f32.mrf.mxu0
  %v354 = vadd.f32 0.0, %v353
  %355 = vmatmul.f32.gmra.mxu0 %v144
  %v356 = vpop.f32.mrf.mxu0
  %v357 = vadd.f32 0.0, %v356
  %358 = vmatmul.f32.gmra.mxu0 %v147
  %v359 = vpop.f32.mrf.mxu0
  %v360 = vadd.f32 0.0, %v359
  %361 = vmatmul.f32.gmra.mxu0 %v150
  %v362 = vpop.f32.mrf.mxu0
  %v363 = vadd.f32 0.0, %v362
  %364 = vmatmul.f32.gmra.mxu0 %v153
  %v365 = vpop.f32.mrf.mxu0
  %v366 = vadd.f32 0.0, %v365
  %367 = vmatmul.f32.gmra.mxu0 %v156
  %v368 = vpop.f32.mrf.mxu0
  %v369 = vadd.f32 0.0, %v368
  %370 = vmatmul.f32.gmra.mxu0 %v159
  %v371 = vpop.f32.mrf.mxu0
  %v372 = vadd.f32 0.0, %v371
  %373 = vmatmul.f32.gmra.mxu0 %v162
  %v374 = vpop.f32.mrf.mxu0
  %v375 = vadd.f32 0.0, %v374
  %376 = vmatmul.f32.gmra.mxu0 %v165
  %v377 = vpop.f32.mrf.mxu0
  %v378 = vadd.f32 0.0, %v377
  %379 = vmatmul.f32.gmra.mxu0 %v168
  %v380 = vpop.f32.mrf.mxu0
  %v381 = vadd.f32 0.0, %v380
  %382 = vmatmul.f32.gmra.mxu0 %v171
  %v383 = vpop.f32.mrf.mxu0
  %v384 = vadd.f32 0.0, %v383
  %385 = vmatmul.f32.gmra.mxu0 %v174
  %v386 = vpop.f32.mrf.mxu0
  %v387 = vadd.f32 0.0, %v386
  %388 = vmatmul.f32.gmra.mxu0 %v177
  %v389 = vpop.f32.mrf.mxu0
  %v390 = vadd.f32 0.0, %v389
  %391 = vmatmul.f32.gmra.mxu0 %v180
  %v392 = vpop.f32.mrf.mxu0
  %v393 = vadd.f32 0.0, %v392
  %394 = vmatmul.f32.gmra.mxu0 %v183
  %v395 = vpop.f32.mrf.mxu0
  %v396 = vadd.f32 0.0, %v395
  %397 = vmatmul.f32.gmra.mxu0 %v186
  %v398 = vpop.f32.mrf.mxu0
  %v399 = vadd.f32 0.0, %v398
  %400 = vmatmul.f32.gmra.mxu0 %v189
  %v401 = vpop.f32.mrf.mxu0
  %v402 = vadd.f32 0.0, %v401
  %403 = vmatmul.f32.gmra.mxu0 %v192
  %v404 = vpop.f32.mrf.mxu0
  %v405 = vadd.f32 0.0, %v404
  %406 = vmatmul.f32.gmra.mxu0 %v195
  %v407 = vpop.f32.mrf.mxu0
  %v408 = vadd.f32 0.0, %v407
  %409 = vmatmul.f32.gmra.mxu0 %v198
  %v410 = vpop.f32.mrf.mxu0
  %v411 = vadd.f32 0.0, %v410
  %412 = vmatmul.f32.gmra.mxu0 %v201
  %v413 = vpop.f32.mrf.mxu0
  %v414 = vadd.f32 0.0, %v413
  %415 = vmatmul.f32.gmra.mxu0 %v204
  %v416 = vpop.f32.mrf.mxu0
  %v417 = vadd.f32 0.0, %v416
  %418 = vmatmul.f32.gmra.mxu0 %v207
  %v419 = vpop.f32.mrf.mxu0
  %v420 = vadd.f32 0.0, %v419
  %421 = vmatmul.f32.gmra.mxu0 %v210
  %v422 = vpop.f32.mrf.mxu0
  %v423 = vadd.f32 0.0, %v422
  %424 = vmatmul.f32.gmra.mxu0 %v213
  %v425 = vpop.f32.mrf.mxu0
  %v426 = vadd.f32 0.0, %v425
  %427 = vmatmul.f32.gmra.mxu0 %v216
  %v428 = vpop.f32.mrf.mxu0
  %v429 = vadd.f32 0.0, %v428
  %430 = vmatmul.f32.gmra.mxu0 %v219
  %v431 = vpop.f32.mrf.mxu0
  %v432 = vadd.f32 0.0, %v431
  %433 = vmatmul.f32.gmra.mxu0 %v222
  %v434 = vpop.f32.mrf.mxu0
  %v435 = vadd.f32 0.0, %v434
  %436 = vmatmul.f32.gmra.mxu0 %v225
  %v437 = vpop.f32.mrf.mxu0
  %v438 = vadd.f32 0.0, %v437
  %439 = vmatmul.f32.gmra.mxu0 %v228
  %v440 = vpop.f32.mrf.mxu0
  %v441 = vadd.f32 0.0, %v440
  %442 = vmatmul.f32.gmra.mxu0 %v231
  %v443 = vpop.f32.mrf.mxu0
  %v444 = vadd.f32 0.0, %v443
  %445 = vmatmul.f32.gmra.mxu0 %v234
  %v446 = vpop.f32.mrf.mxu0
  %v447 = vadd.f32 0.0, %v446
  %448 = vmatmul.f32.gmra.mxu0 %v237
  %v449 = vpop.f32.mrf.mxu0
  %v450 = vadd.f32 0.0, %v449
  %451 = vmatmul.f32.gmra.mxu0 %v240
  %v452 = vpop.f32.mrf.mxu0
  %v453 = vadd.f32 0.0, %v452
  %454 = vmatmul.f32.gmra.mxu0 %v243
  %v455 = vpop.f32.mrf.mxu0
  %v456 = vadd.f32 0.0, %v455
  %457 = vmatmul.f32.gmra.mxu0 %v246
  %v458 = vpop.f32.mrf.mxu0
  %v459 = vadd.f32 0.0, %v458
  %460 = vmatmul.f32.gmra.mxu0 %v249
  %v461 = vpop.f32.mrf.mxu0
  %v462 = vadd.f32 0.0, %v461
  %463 = vmatmul.f32.gmra.mxu0 %v252
  %v464 = vpop.f32.mrf.mxu0
  %v465 = vadd.f32 0.0, %v464
  %466 = vmatmul.f32.gmra.mxu0 %v255
  %v467 = vpop.f32.mrf.mxu0
  %v468 = vadd.f32 0.0, %v467
  %469 = vmatmul.f32.gmra.mxu0 %v258
  %v470 = vpop.f32.mrf.mxu0
  %v471 = vadd.f32 0.0, %v470
  %472 = vmatmul.f32.gmra.mxu0 %v261
  %v473 = vpop.f32.mrf.mxu0
  %v474 = vadd.f32 0.0, %v473
  %475 = vmatmul.f32.gmra.mxu0 %v264
  %v476 = vpop.f32.mrf.mxu0
  %v477 = vadd.f32 0.0, %v476
  %478 = vmatmul.f32.gmra.mxu0 %v267
  %v479 = vpop.f32.mrf.mxu0
  %v480 = vadd.f32 0.0, %v479
  %481 = vdwg.mxu0
  %vm482 = vcmask 162816
  %483 = vst.msk [vmem:[%s2] sm:$0xff] %vm482, %v291
  %484 = vst.msk [vmem:[%s2 + $0x8] sm:$0xff] %vm482, %v294
  %485 = vst.msk [vmem:[%s2 + $0x10] sm:$0xff] %vm482, %v297
  %486 = vst.msk [vmem:[%s2 + $0x18] sm:$0xff] %vm482, %v300
  %487 = vst.msk [vmem:[%s2 + $0x20] sm:$0xff] %vm482, %v303
  %488 = vst.msk [vmem:[%s2 + $0x28] sm:$0xff] %vm482, %v306
  %489 = vst.msk [vmem:[%s2 + $0x30] sm:$0xff] %vm482, %v309
  %490 = vst.msk [vmem:[%s2 + $0x38] sm:$0xff] %vm482, %v312
  %491 = vst.msk [vmem:[%s2 + $0x40] sm:$0xff] %vm482, %v315
  %492 = vst.msk [vmem:[%s2 + $0x48] sm:$0xff] %vm482, %v318
  %493 = vst.msk [vmem:[%s2 + $0x50] sm:$0xff] %vm482, %v321
  %494 = vst.msk [vmem:[%s2 + $0x58] sm:$0xff] %vm482, %v324
  %495 = vst.msk [vmem:[%s2 + $0x60] sm:$0xff] %vm482, %v327
  %496 = vst.msk [vmem:[%s2 + $0x68] sm:$0xff] %vm482, %v330
  %497 = vst.msk [vmem:[%s2 + $0x70] sm:$0xff] %vm482, %v333
  %498 = vst.msk [vmem:[%s2 + $0x78] sm:$0xff] %vm482, %v336
  %499 = vst.msk [vmem:[%s2 + $0x80] sm:$0xff] %vm482, %v339
  %500 = vst.msk [vmem:[%s2 + $0x88] sm:$0xff] %vm482, %v342
  %501 = vst.msk [vmem:[%s2 + $0x90] sm:$0xff] %vm482, %v345
  %502 = vst.msk [vmem:[%s2 + $0x98] sm:$0xff] %vm482, %v348
  %503 = vst.msk [vmem:[%s2 + $0xa0] sm:$0xff] %vm482, %v351
  %504 = vst.msk [vmem:[%s2 + $0xa8] sm:$0xff] %vm482, %v354
  %505 = vst.msk [vmem:[%s2 + $0xb0] sm:$0xff] %vm482, %v357
  %506 = vst.msk [vmem:[%s2 + $0xb8] sm:$0xff] %vm482, %v360
  %507 = vst.msk [vmem:[%s2 + $0xc0] sm:$0xff] %vm482, %v363
  %508 = vst.msk [vmem:[%s2 + $0xc8] sm:$0xff] %vm482, %v366
  %509 = vst.msk [vmem:[%s2 + $0xd0] sm:$0xff] %vm482, %v369
  %510 = vst.msk [vmem:[%s2 + $0xd8] sm:$0xff] %vm482, %v372
  %511 = vst.msk [vmem:[%s2 + $0xe0] sm:$0xff] %vm482, %v375
  %512 = vst.msk [vmem:[%s2 + $0xe8] sm:$0xff] %vm482, %v378
  %513 = vst.msk [vmem:[%s2 + $0xf0] sm:$0xff] %vm482, %v381
  %514 = vst.msk [vmem:[%s2 + $0xf8] sm:$0xff] %vm482, %v384
  %515 = vst.msk [vmem:[%s2 + $0x100] sm:$0xff] %vm482, %v387
  %516 = vst.msk [vmem:[%s2 + $0x108] sm:$0xff] %vm482, %v390
  %517 = vst.msk [vmem:[%s2 + $0x110] sm:$0xff] %vm482, %v393
  %518 = vst.msk [vmem:[%s2 + $0x118] sm:$0xff] %vm482, %v396
  %519 = vst.msk [vmem:[%s2 + $0x120] sm:$0xff] %vm482, %v399
  %520 = vst.msk [vmem:[%s2 + $0x128] sm:$0xff] %vm482, %v402
  %521 = vst.msk [vmem:[%s2 + $0x130] sm:$0xff] %vm482, %v405
  %522 = vst.msk [vmem:[%s2 + $0x138] sm:$0xff] %vm482, %v408
  %523 = vst.msk [vmem:[%s2 + $0x140] sm:$0xff] %vm482, %v411
  %524 = vst.msk [vmem:[%s2 + $0x148] sm:$0xff] %vm482, %v414
  %525 = vst.msk [vmem:[%s2 + $0x150] sm:$0xff] %vm482, %v417
  %526 = vst.msk [vmem:[%s2 + $0x158] sm:$0xff] %vm482, %v420
  %527 = vst.msk [vmem:[%s2 + $0x160] sm:$0xff] %vm482, %v423
  %528 = vst.msk [vmem:[%s2 + $0x168] sm:$0xff] %vm482, %v426
  %529 = vst.msk [vmem:[%s2 + $0x170] sm:$0xff] %vm482, %v429
  %530 = vst.msk [vmem:[%s2 + $0x178] sm:$0xff] %vm482, %v432
  %531 = vst.msk [vmem:[%s2 + $0x180] sm:$0xff] %vm482, %v435
  %532 = vst.msk [vmem:[%s2 + $0x188] sm:$0xff] %vm482, %v438
  %533 = vst.msk [vmem:[%s2 + $0x190] sm:$0xff] %vm482, %v441
  %534 = vst.msk [vmem:[%s2 + $0x198] sm:$0xff] %vm482, %v444
  %535 = vst.msk [vmem:[%s2 + $0x1a0] sm:$0xff] %vm482, %v447
  %536 = vst.msk [vmem:[%s2 + $0x1a8] sm:$0xff] %vm482, %v450
  %537 = vst.msk [vmem:[%s2 + $0x1b0] sm:$0xff] %vm482, %v453
  %538 = vst.msk [vmem:[%s2 + $0x1b8] sm:$0xff] %vm482, %v456
  %539 = vst.msk [vmem:[%s2 + $0x1c0] sm:$0xff] %vm482, %v459
  %540 = vst.msk [vmem:[%s2 + $0x1c8] sm:$0xff] %vm482, %v462
  %541 = vst.msk [vmem:[%s2 + $0x1d0] sm:$0xff] %vm482, %v465
  %542 = vst.msk [vmem:[%s2 + $0x1d8] sm:$0xff] %vm482, %v468
  %543 = vst.msk [vmem:[%s2 + $0x1e0] sm:$0xff] %vm482, %v471
  %544 = vst.msk [vmem:[%s2 + $0x1e8] sm:$0xff] %vm482, %v474
  %545 = vst.msk [vmem:[%s2 + $0x1f0] sm:$0xff] %vm482, %v477
  %546 = vst.msk [vmem:[%s2 + $0x1f8] sm:$0xff] %vm482, %v480
  // Predicated region
  $region10: #{hv_lca_forward.21} parent=0 // pred_check
    _
  $region11: #{hv_lca_forward.21} parent=0 // pred_check_branch
    %548 = sbr.rel (0) target = $region13
  $region12: #{hv_lca_forward.21} parent=0 // pred_region
    _
  $region13: #{hv_lca_forward.21} parent=0 // pred_fallthru
    _
  // Predicated region
  $region14: #{hv_lca_forward.21} parent=0 // pred_check
    _
  $region15: #{hv_lca_forward.21} parent=0 // pred_check_branch
    %550 = sbr.rel (0) target = $region17
  $region16: #{hv_lca_forward.21} parent=0 // pred_region
    _
  $region17: #{hv_lca_forward.21} parent=0 // pred_fallthru
    _

// kernel: hv_lca_forward.24
$region0: #{hv_lca_forward.24}
  #allocation0 [shape = 'u32[]', space=smem, size = 0x4, offset = 0x4, fixed_abs, tag = 'smem constant byte address 0x4 - core index']
  #allocation1 [shape = 'u32[72,128]{1,0:T(1,128)}', space=vmem, size = 0x9000, scoped, tag = 'internal scratch']
  %s0 = inlined_call_operand.vmem [shape: f32[512,20], index: 0, kind: input, shape index: {}]
  %s1 = inlined_call_operand.vmem [shape: f32[512,20], index: 1, kind: input, shape index: {}]
  %s2 = inlined_call_operand.vmem [shape: f32[512,10], index: 2, kind: output, shape index: {}]
  %s3 = sld [smem:[#allocation0]]
  $region18: #{hv_lca_forward.24} parent=0
    _
  %s5 = ssub.s32 1, %s3
  %s6 = scalar_select 0, %s5, %s3
  // Predicated region
  $region2: #{hv_lca_forward.24} parent=0 // pred_check
    _
  $region3: #{hv_lca_forward.24} parent=0 // pred_check_branch
    %8 = sbr.rel (0) target = $region5
  $region4: #{hv_lca_forward.24} parent=0 // pred_region
    _
  $region5: #{hv_lca_forward.24} parent=0 // pred_fallthru
    _
  // Predicated region
  $region6: #{hv_lca_forward.24} parent=0 // pred_check
    _
  $region7: #{hv_lca_forward.24} parent=0 // pred_check_branch
    %10 = sbr.rel (0) target = $region9
  $region8: #{hv_lca_forward.24} parent=0 // pred_region
    _
  $region9: #{hv_lca_forward.24} parent=0 // pred_fallthru
    _
  %v11 = vld [vmem:[%s0] sm:$0xff]
  %v12 = vld [vmem:[%s0 + $0x8] sm:$0xff]
  %v13 = vld [vmem:[%s0 + $0x10] sm:$0xff]
  %v14 = vld [vmem:[%s0 + $0x18] sm:$0xff]
  %v15 = vld [vmem:[%s0 + $0x20] sm:$0xff]
  %v16 = vld [vmem:[%s0 + $0x28] sm:$0xff]
  %v17 = vld [vmem:[%s0 + $0x30] sm:$0xff]
  %v18 = vld [vmem:[%s0 + $0x38] sm:$0xff]
  %v19 = vld [vmem:[%s0 + $0x40] sm:$0xff]
  %v20 = vld [vmem:[%s0 + $0x48] sm:$0xff]
  %v21 = vld [vmem:[%s0 + $0x50] sm:$0xff]
  %v22 = vld [vmem:[%s0 + $0x58] sm:$0xff]
  %v23 = vld [vmem:[%s0 + $0x60] sm:$0xff]
  %v24 = vld [vmem:[%s0 + $0x68] sm:$0xff]
  %v25 = vld [vmem:[%s0 + $0x70] sm:$0xff]
  %v26 = vld [vmem:[%s0 + $0x78] sm:$0xff]
  %v27 = vld [vmem:[%s0 + $0x80] sm:$0xff]
  %v28 = vld [vmem:[%s0 + $0x88] sm:$0xff]
  %v29 = vld [vmem:[%s0 + $0x90] sm:$0xff]
  %v30 = vld [vmem:[%s0 + $0x98] sm:$0xff]
  %v31 = vld [vmem:[%s0 + $0xa0] sm:$0xff]
  %v32 = vld [vmem:[%s0 + $0xa8] sm:$0xff]
  %v33 = vld [vmem:[%s0 + $0xb0] sm:$0xff]
  %v34 = vld [vmem:[%s0 + $0xb8] sm:$0xff]
  %v35 = vld [vmem:[%s0 + $0xc0] sm:$0xff]
  %v36 = vld [vmem:[%s0 + $0xc8] sm:$0xff]
  %v37 = vld [vmem:[%s0 + $0xd0] sm:$0xff]
  %v38 = vld [vmem:[%s0 + $0xd8] sm:$0xff]
  %v39 = vld [vmem:[%s0 + $0xe0] sm:$0xff]
  %v40 = vld [vmem:[%s0 + $0xe8] sm:$0xff]
  %v41 = vld [vmem:[%s0 + $0xf0] sm:$0xff]
  %v42 = vld [vmem:[%s0 + $0xf8] sm:$0xff]
  %v43 = vld [vmem:[%s0 + $0x100] sm:$0xff]
  %v44 = vld [vmem:[%s0 + $0x108] sm:$0xff]
  %v45 = vld [vmem:[%s0 + $0x110] sm:$0xff]
  %v46 = vld [vmem:[%s0 + $0x118] sm:$0xff]
  %v47 = vld [vmem:[%s0 + $0x120] sm:$0xff]
  %v48 = vld [vmem:[%s0 + $0x128] sm:$0xff]
  %v49 = vld [vmem:[%s0 + $0x130] sm:$0xff]
  %v50 = vld [vmem:[%s0 + $0x138] sm:$0xff]
  %v51 = vld [vmem:[%s0 + $0x140] sm:$0xff]
  %v52 = vld [vmem:[%s0 + $0x148] sm:$0xff]
  %v53 = vld [vmem:[%s0 + $0x150] sm:$0xff]
  %v54 = vld [vmem:[%s0 + $0x158] sm:$0xff]
  %v55 = vld [vmem:[%s0 + $0x160] sm:$0xff]
  %v56 = vld [vmem:[%s0 + $0x168] sm:$0xff]
  %v57 = vld [vmem:[%s0 + $0x170] sm:$0xff]
  %v58 = vld [vmem:[%s0 + $0x178] sm:$0xff]
  %v59 = vld [vmem:[%s0 + $0x180] sm:$0xff]
  %v60 = vld [vmem:[%s0 + $0x188] sm:$0xff]
  %v61 = vld [vmem:[%s0 + $0x190] sm:$0xff]
  %v62 = vld [vmem:[%s0 + $0x198] sm:$0xff]
  %v63 = vld [vmem:[%s0 + $0x1a0] sm:$0xff]
  %v64 = vld [vmem:[%s0 + $0x1a8] sm:$0xff]
  %v65 = vld [vmem:[%s0 + $0x1b0] sm:$0xff]
  %v66 = vld [vmem:[%s0 + $0x1b8] sm:$0xff]
  %v67 = vld [vmem:[%s0 + $0x1c0] sm:$0xff]
  %v68 = vld [vmem:[%s0 + $0x1c8] sm:$0xff]
  %v69 = vld [vmem:[%s0 + $0x1d0] sm:$0xff]
  %v70 = vld [vmem:[%s0 + $0x1d8] sm:$0xff]
  %v71 = vld [vmem:[%s0 + $0x1e0] sm:$0xff]
  %v72 = vld [vmem:[%s0 + $0x1e8] sm:$0xff]
  %v73 = vld [vmem:[%s0 + $0x1f0] sm:$0xff]
  %v74 = vld [vmem:[%s0 + $0x1f8] sm:$0xff]
  %v75 = vtanh.pop %v11
  %v76 = vtanh.pop %v12
  %v77 = vtanh.pop %v13
  %v78 = vtanh.pop %v14
  %v79 = vtanh.pop %v15
  %v80 = vtanh.pop %v16
  %v81 = vtanh.pop %v17
  %v82 = vtanh.pop %v18
  %v83 = vtanh.pop %v19
  %v84 = vtanh.pop %v20
  %v85 = vtanh.pop %v21
  %v86 = vtanh.pop %v22
  %v87 = vtanh.pop %v23
  %v88 = vtanh.pop %v24
  %v89 = vtanh.pop %v25
  %v90 = vtanh.pop %v26
  %v91 = vtanh.pop %v27
  %v92 = vtanh.pop %v28
  %v93 = vtanh.pop %v29
  %v94 = vtanh.pop %v30
  %v95 = vtanh.pop %v31
  %v96 = vtanh.pop %v32
  %v97 = vtanh.pop %v33
  %v98 = vtanh.pop %v34
  %v99 = vtanh.pop %v35
  %v100 = vtanh.pop %v36
  %v101 = vtanh.pop %v37
  %v102 = vtanh.pop %v38
  %v103 = vtanh.pop %v39
  %v104 = vtanh.pop %v40
  %v105 = vtanh.pop %v41
  %v106 = vtanh.pop %v42
  %v107 = vtanh.pop %v43
  %v108 = vtanh.pop %v44
  %v109 = vtanh.pop %v45
  %v110 = vtanh.pop %v46
  %v111 = vtanh.pop %v47
  %v112 = vtanh.pop %v48
  %v113 = vtanh.pop %v49
  %v114 = vtanh.pop %v50
  %v115 = vtanh.pop %v51
  %v116 = vtanh.pop %v52
  %v117 = vtanh.pop %v53
  %v118 = vtanh.pop %v54
  %v119 = vtanh.pop %v55
  %v120 = vtanh.pop %v56
  %v121 = vtanh.pop %v57
  %v122 = vtanh.pop %v58
  %v123 = vtanh.pop %v59
  %v124 = vtanh.pop %v60
  %v125 = vtanh.pop %v61
  %v126 = vtanh.pop %v62
  %v127 = vtanh.pop %v63
  %v128 = vtanh.pop %v64
  %v129 = vtanh.pop %v65
  %v130 = vtanh.pop %v66
  %v131 = vtanh.pop %v67
  %v132 = vtanh.pop %v68
  %v133 = vtanh.pop %v69
  %v134 = vtanh.pop %v70
  %v135 = vtanh.pop %v71
  %v136 = vtanh.pop %v72
  %v137 = vtanh.pop %v73
  %v138 = vtanh.pop %v74
  %v139 = vld [vmem:[%s1] sm:$0xff]
  %v140 = vld [vmem:[%s1 + $0x8] sm:$0xff]
  %v141 = vld [vmem:[%s1 + $0x10] sm:$0xff]
  %v142 = vld [vmem:[%s1 + $0x18] sm:$0xff]
  %v143 = vld [vmem:[%s1 + $0x20] sm:$0xff]
  %v144 = vld [vmem:[%s1 + $0x28] sm:$0xff]
  %v145 = vld [vmem:[%s1 + $0x30] sm:$0xff]
  %v146 = vld [vmem:[%s1 + $0x38] sm:$0xff]
  %v147 = vld [vmem:[%s1 + $0x40] sm:$0xff]
  %v148 = vld [vmem:[%s1 + $0x48] sm:$0xff]
  %v149 = vld [vmem:[%s1 + $0x50] sm:$0xff]
  %v150 = vld [vmem:[%s1 + $0x58] sm:$0xff]
  %v151 = vld [vmem:[%s1 + $0x60] sm:$0xff]
  %v152 = vld [vmem:[%s1 + $0x68] sm:$0xff]
  %v153 = vld [vmem:[%s1 + $0x70] sm:$0xff]
  %v154 = vld [vmem:[%s1 + $0x78] sm:$0xff]
  %v155 = vld [vmem:[%s1 + $0x80] sm:$0xff]
  %v156 = vld [vmem:[%s1 + $0x88] sm:$0xff]
  %v157 = vld [vmem:[%s1 + $0x90] sm:$0xff]
  %v158 = vld [vmem:[%s1 + $0x98] sm:$0xff]
  %v159 = vld [vmem:[%s1 + $0xa0] sm:$0xff]
  %v160 = vld [vmem:[%s1 + $0xa8] sm:$0xff]
  %v161 = vld [vmem:[%s1 + $0xb0] sm:$0xff]
  %v162 = vld [vmem:[%s1 + $0xb8] sm:$0xff]
  %v163 = vld [vmem:[%s1 + $0xc0] sm:$0xff]
  %v164 = vld [vmem:[%s1 + $0xc8] sm:$0xff]
  %v165 = vld [vmem:[%s1 + $0xd0] sm:$0xff]
  %v166 = vld [vmem:[%s1 + $0xd8] sm:$0xff]
  %v167 = vld [vmem:[%s1 + $0xe0] sm:$0xff]
  %v168 = vld [vmem:[%s1 + $0xe8] sm:$0xff]
  %v169 = vld [vmem:[%s1 + $0xf0] sm:$0xff]
  %v170 = vld [vmem:[%s1 + $0xf8] sm:$0xff]
  %v171 = vld [vmem:[%s1 + $0x100] sm:$0xff]
  %v172 = vld [vmem:[%s1 + $0x108] sm:$0xff]
  %v173 = vld [vmem:[%s1 + $0x110] sm:$0xff]
  %v174 = vld [vmem:[%s1 + $0x118] sm:$0xff]
  %v175 = vld [vmem:[%s1 + $0x120] sm:$0xff]
  %v176 = vld [vmem:[%s1 + $0x128] sm:$0xff]
  %v177 = vld [vmem:[%s1 + $0x130] sm:$0xff]
  %v178 = vld [vmem:[%s1 + $0x138] sm:$0xff]
  %v179 = vld [vmem:[%s1 + $0x140] sm:$0xff]
  %v180 = vld [vmem:[%s1 + $0x148] sm:$0xff]
  %v181 = vld [vmem:[%s1 + $0x150] sm:$0xff]
  %v182 = vld [vmem:[%s1 + $0x158] sm:$0xff]
  %v183 = vld [vmem:[%s1 + $0x160] sm:$0xff]
  %v184 = vld [vmem:[%s1 + $0x168] sm:$0xff]
  %v185 = vld [vmem:[%s1 + $0x170] sm:$0xff]
  %v186 = vld [vmem:[%s1 + $0x178] sm:$0xff]
  %v187 = vld [vmem:[%s1 + $0x180] sm:$0xff]
  %v188 = vld [vmem:[%s1 + $0x188] sm:$0xff]
  %v189 = vld [vmem:[%s1 + $0x190] sm:$0xff]
  %v190 = vld [vmem:[%s1 + $0x198] sm:$0xff]
  %v191 = vld [vmem:[%s1 + $0x1a0] sm:$0xff]
  %v192 = vld [vmem:[%s1 + $0x1a8] sm:$0xff]
  %v193 = vld [vmem:[%s1 + $0x1b0] sm:$0xff]
  %v194 = vld [vmem:[%s1 + $0x1b8] sm:$0xff]
  %v195 = vld [vmem:[%s1 + $0x1c0] sm:$0xff]
  %v196 = vld [vmem:[%s1 + $0x1c8] sm:$0xff]
  %v197 = vld [vmem:[%s1 + $0x1d0] sm:$0xff]
  %v198 = vld [vmem:[%s1 + $0x1d8] sm:$0xff]
  %v199 = vld [vmem:[%s1 + $0x1e0] sm:$0xff]
  %v200 = vld [vmem:[%s1 + $0x1e8] sm:$0xff]
  %v201 = vld [vmem:[%s1 + $0x1f0] sm:$0xff]
  %v202 = vld [vmem:[%s1 + $0x1f8] sm:$0xff]
  %v203 = vadd.f32 %v75, %v139
  %v204 = vadd.f32 %v76, %v140
  %v205 = vadd.f32 %v77, %v141
  %v206 = vadd.f32 %v78, %v142
  %v207 = vadd.f32 %v79, %v143
  %v208 = vadd.f32 %v80, %v144
  %v209 = vadd.f32 %v81, %v145
  %v210 = vadd.f32 %v82, %v146
  %v211 = vadd.f32 %v83, %v147
  %v212 = vadd.f32 %v84, %v148
  %v213 = vadd.f32 %v85, %v149
  %v214 = vadd.f32 %v86, %v150
  %v215 = vadd.f32 %v87, %v151
  %v216 = vadd.f32 %v88, %v152
  %v217 = vadd.f32 %v89, %v153
  %v218 = vadd.f32 %v90, %v154
  %v219 = vadd.f32 %v91, %v155
  %v220 = vadd.f32 %v92, %v156
  %v221 = vadd.f32 %v93, %v157
  %v222 = vadd.f32 %v94, %v158
  %v223 = vadd.f32 %v95, %v159
  %v224 = vadd.f32 %v96, %v160
  %v225 = vadd.f32 %v97, %v161
  %v226 = vadd.f32 %v98, %v162
  %v227 = vadd.f32 %v99, %v163
  %v228 = vadd.f32 %v100, %v164
  %v229 = vadd.f32 %v101, %v165
  %v230 = vadd.f32 %v102, %v166
  %v231 = vadd.f32 %v103, %v167
  %v232 = vadd.f32 %v104, %v168
  %v233 = vadd.f32 %v105, %v169
  %v234 = vadd.f32 %v106, %v170
  %v235 = vadd.f32 %v107, %v171
  %v236 = vadd.f32 %v108, %v172
  %v237 = vadd.f32 %v109, %v173
  %v238 = vadd.f32 %v110, %v174
  %v239 = vadd.f32 %v111, %v175
  %v240 = vadd.f32 %v112, %v176
  %v241 = vadd.f32 %v113, %v177
  %v242 = vadd.f32 %v114, %v178
  %v243 = vadd.f32 %v115, %v179
  %v244 = vadd.f32 %v116, %v180
  %v245 = vadd.f32 %v117, %v181
  %v246 = vadd.f32 %v118, %v182
  %v247 = vadd.f32 %v119, %v183
  %v248 = vadd.f32 %v120, %v184
  %v249 = vadd.f32 %v121, %v185
  %v250 = vadd.f32 %v122, %v186
  %v251 = vadd.f32 %v123, %v187
  %v252 = vadd.f32 %v124, %v188
  %v253 = vadd.f32 %v125, %v189
  %v254 = vadd.f32 %v126, %v190
  %v255 = vadd.f32 %v127, %v191
  %v256 = vadd.f32 %v128, %v192
  %v257 = vadd.f32 %v129, %v193
  %v258 = vadd.f32 %v130, %v194
  %v259 = vadd.f32 %v131, %v195
  %v260 = vadd.f32 %v132, %v196
  %v261 = vadd.f32 %v133, %v197
  %v262 = vadd.f32 %v134, %v198
  %v263 = vadd.f32 %v135, %v199
  %v264 = vadd.f32 %v136, %v200
  %v265 = vadd.f32 %v137, %v201
  %v266 = vadd.f32 %v138, %v202
  %331 = vrot.lane.b32.xlu0 %v203, 118
  %v332 = vpop.permute.xlu0 %331
  %333 = vrot.lane.b32.xlu0 %v204, 118
  %v334 = vpop.permute.xlu0 %333
  %335 = vrot.lane.b32.xlu0 %v205, 118
  %v336 = vpop.permute.xlu0 %335
  %337 = vrot.lane.b32.xlu0 %v206, 118
  %v338 = vpop.permute.xlu0 %337
  %339 = vrot.lane.b32.xlu0 %v207, 118
  %v340 = vpop.permute.xlu0 %339
  %341 = vrot.lane.b32.xlu0 %v208, 118
  %v342 = vpop.permute.xlu0 %341
  %343 = vrot.lane.b32.xlu0 %v209, 118
  %v344 = vpop.permute.xlu0 %343
  %345 = vrot.lane.b32.xlu0 %v210, 118
  %v346 = vpop.permute.xlu0 %345
  %347 = vrot.lane.b32.xlu0 %v211, 118
  %v348 = vpop.permute.xlu0 %347
  %349 = vrot.lane.b32.xlu0 %v212, 118
  %v350 = vpop.permute.xlu0 %349
  %351 = vrot.lane.b32.xlu0 %v213, 118
  %v352 = vpop.permute.xlu0 %351
  %353 = vrot.lane.b32.xlu0 %v214, 118
  %v354 = vpop.permute.xlu0 %353
  %355 = vrot.lane.b32.xlu0 %v215, 118
  %v356 = vpop.permute.xlu0 %355
  %357 = vrot.lane.b32.xlu0 %v216, 118
  %v358 = vpop.permute.xlu0 %357
  %359 = vrot.lane.b32.xlu0 %v217, 118
  %v360 = vpop.permute.xlu0 %359
  %361 = vrot.lane.b32.xlu0 %v218, 118
  %v362 = vpop.permute.xlu0 %361
  %363 = vrot.lane.b32.xlu0 %v219, 118
  %v364 = vpop.permute.xlu0 %363
  %365 = vrot.lane.b32.xlu0 %v220, 118
  %v366 = vpop.permute.xlu0 %365
  %367 = vrot.lane.b32.xlu0 %v221, 118
  %v368 = vpop.permute.xlu0 %367
  %369 = vrot.lane.b32.xlu0 %v222, 118
  %v370 = vpop.permute.xlu0 %369
  %371 = vrot.lane.b32.xlu0 %v223, 118
  %v372 = vpop.permute.xlu0 %371
  %373 = vrot.lane.b32.xlu0 %v224, 118
  %v374 = vpop.permute.xlu0 %373
  %375 = vrot.lane.b32.xlu0 %v225, 118
  %v376 = vpop.permute.xlu0 %375
  %377 = vrot.lane.b32.xlu0 %v226, 118
  %v378 = vpop.permute.xlu0 %377
  %379 = vrot.lane.b32.xlu0 %v227, 118
  %v380 = vpop.permute.xlu0 %379
  %381 = vrot.lane.b32.xlu0 %v228, 118
  %v382 = vpop.permute.xlu0 %381
  %383 = vrot.lane.b32.xlu0 %v229, 118
  %v384 = vpop.permute.xlu0 %383
  %385 = vrot.lane.b32.xlu0 %v230, 118
  %v386 = vpop.permute.xlu0 %385
  %387 = vrot.lane.b32.xlu0 %v231, 118
  %v388 = vpop.permute.xlu0 %387
  %389 = vrot.lane.b32.xlu0 %v232, 118
  %v390 = vpop.permute.xlu0 %389
  %391 = vrot.lane.b32.xlu0 %v233, 118
  %v392 = vpop.permute.xlu0 %391
  %393 = vrot.lane.b32.xlu0 %v234, 118
  %v394 = vpop.permute.xlu0 %393
  %395 = vrot.lane.b32.xlu0 %v235, 118
  %v396 = vpop.permute.xlu0 %395
  %397 = vrot.lane.b32.xlu0 %v236, 118
  %v398 = vpop.permute.xlu0 %397
  %399 = vrot.lane.b32.xlu0 %v237, 118
  %v400 = vpop.permute.xlu0 %399
  %401 = vrot.lane.b32.xlu0 %v238, 118
  %v402 = vpop.permute.xlu0 %401
  %403 = vrot.lane.b32.xlu0 %v239, 118
  %v404 = vpop.permute.xlu0 %403
  %405 = vrot.lane.b32.xlu0 %v240, 118
  %v406 = vpop.permute.xlu0 %405
  %407 = vrot.lane.b32.xlu0 %v241, 118
  %v408 = vpop.permute.xlu0 %407
  %409 = vrot.lane.b32.xlu0 %v242, 118
  %v410 = vpop.permute.xlu0 %409
  %411 = vrot.lane.b32.xlu0 %v243, 118
  %v412 = vpop.permute.xlu0 %411
  %413 = vrot.lane.b32.xlu0 %v244, 118
  %v414 = vpop.permute.xlu0 %413
  %415 = vrot.lane.b32.xlu0 %v245, 118
  %v416 = vpop.permute.xlu0 %415
  %417 = vrot.lane.b32.xlu0 %v246, 118
  %v418 = vpop.permute.xlu0 %417
  %419 = vrot.lane.b32.xlu0 %v247, 118
  %v420 = vpop.permute.xlu0 %419
  %421 = vrot.lane.b32.xlu0 %v248, 118
  %v422 = vpop.permute.xlu0 %421
  %423 = vrot.lane.b32.xlu0 %v249, 118
  %v424 = vpop.permute.xlu0 %423
  %425 = vrot.lane.b32.xlu0 %v250, 118
  %v426 = vpop.permute.xlu0 %425
  %427 = vrot.lane.b32.xlu0 %v251, 118
  %v428 = vpop.permute.xlu0 %427
  %429 = vrot.lane.b32.xlu0 %v252, 118
  %v430 = vpop.permute.xlu0 %429
  %431 = vrot.lane.b32.xlu0 %v253, 118
  %v432 = vpop.permute.xlu0 %431
  %433 = vrot.lane.b32.xlu0 %v254, 118
  %v434 = vpop.permute.xlu0 %433
  %435 = vrot.lane.b32.xlu0 %v255, 118
  %v436 = vpop.permute.xlu0 %435
  %437 = vrot.lane.b32.xlu0 %v256, 118
  %v438 = vpop.permute.xlu0 %437
  %439 = vrot.lane.b32.xlu0 %v257, 118
  %v440 = vpop.permute.xlu0 %439
  %441 = vrot.lane.b32.xlu0 %v258, 118
  %v442 = vpop.permute.xlu0 %441
  %443 = vrot.lane.b32.xlu0 %v259, 118
  %v444 = vpop.permute.xlu0 %443
  %445 = vrot.lane.b32.xlu0 %v260, 118
  %v446 = vpop.permute.xlu0 %445
  %447 = vrot.lane.b32.xlu0 %v261, 118
  %v448 = vpop.permute.xlu0 %447
  %449 = vrot.lane.b32.xlu0 %v262, 118
  %v450 = vpop.permute.xlu0 %449
  %451 = vrot.lane.b32.xlu0 %v263, 118
  %v452 = vpop.permute.xlu0 %451
  %453 = vrot.lane.b32.xlu0 %v264, 118
  %v454 = vpop.permute.xlu0 %453
  %455 = vrot.lane.b32.xlu0 %v265, 118
  %v456 = vpop.permute.xlu0 %455
  %457 = vrot.lane.b32.xlu0 %v266, 118
  %v458 = vpop.permute.xlu0 %457
  %v523 = vmul.f32 %v203, %v332
  %v524 = vmul.f32 %v204, %v334
  %v525 = vmul.f32 %v205, %v336
  %v526 = vmul.f32 %v206, %v338
  %v527 = vmul.f32 %v207, %v340
  %v528 = vmul.f32 %v208, %v342
  %v529 = vmul.f32 %v209, %v344
  %v530 = vmul.f32 %v210, %v346
  %v531 = vmul.f32 %v211, %v348
  %v532 = vmul.f32 %v212, %v350
  %v533 = vmul.f32 %v213, %v352
  %v534 = vmul.f32 %v214, %v354
  %v535 = vmul.f32 %v215, %v356
  %v536 = vmul.f32 %v216, %v358
  %v537 = vmul.f32 %v217, %v360
  %v538 = vmul.f32 %v218, %v362
  %v539 = vmul.f32 %v219, %v364
  %v540 = vmul.f32 %v220, %v366
  %v541 = vmul.f32 %v221, %v368
  %v542 = vmul.f32 %v222, %v370
  %v543 = vmul.f32 %v223, %v372
  %v544 = vmul.f32 %v224, %v374
  %v545 = vmul.f32 %v225, %v376
  %v546 = vmul.f32 %v226, %v378
  %v547 = vmul.f32 %v227, %v380
  %v548 = vmul.f32 %v228, %v382
  %v549 = vmul.f32 %v229, %v384
  %v550 = vmul.f32 %v230, %v386
  %v551 = vmul.f32 %v231, %v388
  %v552 = vmul.f32 %v232, %v390
  %v553 = vmul.f32 %v233, %v392
  %v554 = vmul.f32 %v234, %v394
  %v555 = vmul.f32 %v235, %v396
  %v556 = vmul.f32 %v236, %v398
  %v557 = vmul.f32 %v237, %v400
  %v558 = vmul.f32 %v238, %v402
  %v559 = vmul.f32 %v239, %v404
  %v560 = vmul.f32 %v240, %v406
  %v561 = vmul.f32 %v241, %v408
  %v562 = vmul.f32 %v242, %v410
  %v563 = vmul.f32 %v243, %v412
  %v564 = vmul.f32 %v244, %v414
  %v565 = vmul.f32 %v245, %v416
  %v566 = vmul.f32 %v246, %v418
  %v567 = vmul.f32 %v247, %v420
  %v568 = vmul.f32 %v248, %v422
  %v569 = vmul.f32 %v249, %v424
  %v570 = vmul.f32 %v250, %v426
  %v571 = vmul.f32 %v251, %v428
  %v572 = vmul.f32 %v252, %v430
  %v573 = vmul.f32 %v253, %v432
  %v574 = vmul.f32 %v254, %v434
  %v575 = vmul.f32 %v255, %v436
  %v576 = vmul.f32 %v256, %v438
  %v577 = vmul.f32 %v257, %v440
  %v578 = vmul.f32 %v258, %v442
  %v579 = vmul.f32 %v259, %v444
  %v580 = vmul.f32 %v260, %v446
  %v581 = vmul.f32 %v261, %v448
  %v582 = vmul.f32 %v262, %v450
  %v583 = vmul.f32 %v263, %v452
  %v584 = vmul.f32 %v264, %v454
  %v585 = vmul.f32 %v265, %v456
  %v586 = vmul.f32 %v266, %v458
  %vm587 = vcmask 80896
  %588 = vst.msk [vmem:[%s2] sm:$0xff] %vm587, %v523
  %589 = vst.msk [vmem:[%s2 + $0x8] sm:$0xff] %vm587, %v524
  %590 = vst.msk [vmem:[%s2 + $0x10] sm:$0xff] %vm587, %v525
  %591 = vst.msk [vmem:[%s2 + $0x18] sm:$0xff] %vm587, %v526
  %592 = vst.msk [vmem:[%s2 + $0x20] sm:$0xff] %vm587, %v527
  %593 = vst.msk [vmem:[%s2 + $0x28] sm:$0xff] %vm587, %v528
  %594 = vst.msk [vmem:[%s2 + $0x30] sm:$0xff] %vm587, %v529
  %595 = vst.msk [vmem:[%s2 + $0x38] sm:$0xff] %vm587, %v530
  %596 = vst.msk [vmem:[%s2 + $0x40] sm:$0xff] %vm587, %v531
  %597 = vst.msk [vmem:[%s2 + $0x48] sm:$0xff] %vm587, %v532
  %598 = vst.msk [vmem:[%s2 + $0x50] sm:$0xff] %vm587, %v533
  %599 = vst.msk [vmem:[%s2 + $0x58] sm:$0xff] %vm587, %v534
  %600 = vst.msk [vmem:[%s2 + $0x60] sm:$0xff] %vm587, %v535
  %601 = vst.msk [vmem:[%s2 + $0x68] sm:$0xff] %vm587, %v536
  %602 = vst.msk [vmem:[%s2 + $0x70] sm:$0xff] %vm587, %v537
  %603 = vst.msk [vmem:[%s2 + $0x78] sm:$0xff] %vm587, %v538
  %604 = vst.msk [vmem:[%s2 + $0x80] sm:$0xff] %vm587, %v539
  %605 = vst.msk [vmem:[%s2 + $0x88] sm:$0xff] %vm587, %v540
  %606 = vst.msk [vmem:[%s2 + $0x90] sm:$0xff] %vm587, %v541
  %607 = vst.msk [vmem:[%s2 + $0x98] sm:$0xff] %vm587, %v542
  %608 = vst.msk [vmem:[%s2 + $0xa0] sm:$0xff] %vm587, %v543
  %609 = vst.msk [vmem:[%s2 + $0xa8] sm:$0xff] %vm587, %v544
  %610 = vst.msk [vmem:[%s2 + $0xb0] sm:$0xff] %vm587, %v545
  %611 = vst.msk [vmem:[%s2 + $0xb8] sm:$0xff] %vm587, %v546
  %612 = vst.msk [vmem:[%s2 + $0xc0] sm:$0xff] %vm587, %v547
  %613 = vst.msk [vmem:[%s2 + $0xc8] sm:$0xff] %vm587, %v548
  %614 = vst.msk [vmem:[%s2 + $0xd0] sm:$0xff] %vm587, %v549
  %615 = vst.msk [vmem:[%s2 + $0xd8] sm:$0xff] %vm587, %v550
  %616 = vst.msk [vmem:[%s2 + $0xe0] sm:$0xff] %vm587, %v551
  %617 = vst.msk [vmem:[%s2 + $0xe8] sm:$0xff] %vm587, %v552
  %618 = vst.msk [vmem:[%s2 + $0xf0] sm:$0xff] %vm587, %v553
  %619 = vst.msk [vmem:[%s2 + $0xf8] sm:$0xff] %vm587, %v554
  %620 = vst.msk [vmem:[%s2 + $0x100] sm:$0xff] %vm587, %v555
  %621 = vst.msk [vmem:[%s2 + $0x108] sm:$0xff] %vm587, %v556
  %622 = vst.msk [vmem:[%s2 + $0x110] sm:$0xff] %vm587, %v557
  %623 = vst.msk [vmem:[%s2 + $0x118] sm:$0xff] %vm587, %v558
  %624 = vst.msk [vmem:[%s2 + $0x120] sm:$0xff] %vm587, %v559
  %625 = vst.msk [vmem:[%s2 + $0x128] sm:$0xff] %vm587, %v560
  %626 = vst.msk [vmem:[%s2 + $0x130] sm:$0xff] %vm587, %v561
  %627 = vst.msk [vmem:[%s2 + $0x138] sm:$0xff] %vm587, %v562
  %628 = vst.msk [vmem:[%s2 + $0x140] sm:$0xff] %vm587, %v563
  %629 = vst.msk [vmem:[%s2 + $0x148] sm:$0xff] %vm587, %v564
  %630 = vst.msk [vmem:[%s2 + $0x150] sm:$0xff] %vm587, %v565
  %631 = vst.msk [vmem:[%s2 + $0x158] sm:$0xff] %vm587, %v566
  %632 = vst.msk [vmem:[%s2 + $0x160] sm:$0xff] %vm587, %v567
  %633 = vst.msk [vmem:[%s2 + $0x168] sm:$0xff] %vm587, %v568
  %634 = vst.msk [vmem:[%s2 + $0x170] sm:$0xff] %vm587, %v569
  %635 = vst.msk [vmem:[%s2 + $0x178] sm:$0xff] %vm587, %v570
  %636 = vst.msk [vmem:[%s2 + $0x180] sm:$0xff] %vm587, %v571
  %637 = vst.msk [vmem:[%s2 + $0x188] sm:$0xff] %vm587, %v572
  %638 = vst.msk [vmem:[%s2 + $0x190] sm:$0xff] %vm587, %v573
  %639 = vst.msk [vmem:[%s2 + $0x198] sm:$0xff] %vm587, %v574
  %640 = vst.msk [vmem:[%s2 + $0x1a0] sm:$0xff] %vm587, %v575
  %641 = vst.msk [vmem:[%s2 + $0x1a8] sm:$0xff] %vm587, %v576
  %642 = vst.msk [vmem:[%s2 + $0x1b0] sm:$0xff] %vm587, %v577
  %643 = vst.msk [vmem:[%s2 + $0x1b8] sm:$0xff] %vm587, %v578
  %644 = vst.msk [vmem:[%s2 + $0x1c0] sm:$0xff] %vm587, %v579
  %645 = vst.msk [vmem:[%s2 + $0x1c8] sm:$0xff] %vm587, %v580
  %646 = vst.msk [vmem:[%s2 + $0x1d0] sm:$0xff] %vm587, %v581
  %647 = vst.msk [vmem:[%s2 + $0x1d8] sm:$0xff] %vm587, %v582
  %648 = vst.msk [vmem:[%s2 + $0x1e0] sm:$0xff] %vm587, %v583
  %649 = vst.msk [vmem:[%s2 + $0x1e8] sm:$0xff] %vm587, %v584
  %650 = vst.msk [vmem:[%s2 + $0x1f0] sm:$0xff] %vm587, %v585
  %651 = vst.msk [vmem:[%s2 + $0x1f8] sm:$0xff] %vm587, %v586
  // Predicated region
  $region10: #{hv_lca_forward.24} parent=0 // pred_check
    _
  $region11: #{hv_lca_forward.24} parent=0 // pred_check_branch
    %653 = sbr.rel (0) target = $region13
  $region12: #{hv_lca_forward.24} parent=0 // pred_region
    _
  $region13: #{hv_lca_forward.24} parent=0 // pred_fallthru
    _
  // Predicated region
  $region14: #{hv_lca_forward.24} parent=0 // pred_check
    _
  $region15: #{hv_lca_forward.24} parent=0 // pred_check_branch
    %655 = sbr.rel (0) target = $region17
  $region16: #{hv_lca_forward.24} parent=0 // pred_region
    _
  $region17: #{hv_lca_forward.24} parent=0 // pred_fallthru
    _

// kernel: hv_lca_forward.25
$region0: #{hv_lca_forward.25}
  #allocation0 [shape = 'u32[]', space=smem, size = 0x4, offset = 0x4, fixed_abs, tag = 'smem constant byte address 0x4 - core index']
  #allocation1 [shape = 'u32[72,128]{1,0:T(1,128)}', space=vmem, size = 0x9000, scoped, tag = 'internal scratch']
  %s0 = inlined_call_operand.vmem [shape: f32[512,10], index: 0, kind: input, shape index: {}]
  %s1 = inlined_call_operand.vmem [shape: f32[10,4], index: 1, kind: input, shape index: {}]
  %s2 = inlined_call_operand.vmem [shape: f32[512,4], index: 2, kind: output, shape index: {}]
  %s3 = sld [smem:[#allocation0]]
  $region18: #{hv_lca_forward.25} parent=0
    _
  %s5 = ssub.s32 1, %s3
  %s6 = scalar_select 0, %s5, %s3
  // Predicated region
  $region2: #{hv_lca_forward.25} parent=0 // pred_check
    _
  $region3: #{hv_lca_forward.25} parent=0 // pred_check_branch
    %8 = sbr.rel (0) target = $region5
  $region4: #{hv_lca_forward.25} parent=0 // pred_region
    _
  $region5: #{hv_lca_forward.25} parent=0 // pred_fallthru
    _
  // Predicated region
  $region6: #{hv_lca_forward.25} parent=0 // pred_check
    _
  $region7: #{hv_lca_forward.25} parent=0 // pred_check_branch
    %10 = sbr.rel (0) target = $region9
  $region8: #{hv_lca_forward.25} parent=0 // pred_region
    _
  $region9: #{hv_lca_forward.25} parent=0 // pred_fallthru
    _
  %v11 = vld [vmem:[%s0] sm:$0xff]
  %v12 = vld [vmem:[%s0 + $0x8] sm:$0xff]
  %v13 = vld [vmem:[%s0 + $0x10] sm:$0xff]
  %v14 = vld [vmem:[%s0 + $0x18] sm:$0xff]
  %v15 = vld [vmem:[%s0 + $0x20] sm:$0xff]
  %v16 = vld [vmem:[%s0 + $0x28] sm:$0xff]
  %v17 = vld [vmem:[%s0 + $0x30] sm:$0xff]
  %v18 = vld [vmem:[%s0 + $0x38] sm:$0xff]
  %v19 = vld [vmem:[%s0 + $0x40] sm:$0xff]
  %v20 = vld [vmem:[%s0 + $0x48] sm:$0xff]
  %v21 = vld [vmem:[%s0 + $0x50] sm:$0xff]
  %v22 = vld [vmem:[%s0 + $0x58] sm:$0xff]
  %v23 = vld [vmem:[%s0 + $0x60] sm:$0xff]
  %v24 = vld [vmem:[%s0 + $0x68] sm:$0xff]
  %v25 = vld [vmem:[%s0 + $0x70] sm:$0xff]
  %v26 = vld [vmem:[%s0 + $0x78] sm:$0xff]
  %v27 = vld [vmem:[%s0 + $0x80] sm:$0xff]
  %v28 = vld [vmem:[%s0 + $0x88] sm:$0xff]
  %v29 = vld [vmem:[%s0 + $0x90] sm:$0xff]
  %v30 = vld [vmem:[%s0 + $0x98] sm:$0xff]
  %v31 = vld [vmem:[%s0 + $0xa0] sm:$0xff]
  %v32 = vld [vmem:[%s0 + $0xa8] sm:$0xff]
  %v33 = vld [vmem:[%s0 + $0xb0] sm:$0xff]
  %v34 = vld [vmem:[%s0 + $0xb8] sm:$0xff]
  %v35 = vld [vmem:[%s0 + $0xc0] sm:$0xff]
  %v36 = vld [vmem:[%s0 + $0xc8] sm:$0xff]
  %v37 = vld [vmem:[%s0 + $0xd0] sm:$0xff]
  %v38 = vld [vmem:[%s0 + $0xd8] sm:$0xff]
  %v39 = vld [vmem:[%s0 + $0xe0] sm:$0xff]
  %v40 = vld [vmem:[%s0 + $0xe8] sm:$0xff]
  %v41 = vld [vmem:[%s0 + $0xf0] sm:$0xff]
  %v42 = vld [vmem:[%s0 + $0xf8] sm:$0xff]
  %v43 = vld [vmem:[%s0 + $0x100] sm:$0xff]
  %v44 = vld [vmem:[%s0 + $0x108] sm:$0xff]
  %v45 = vld [vmem:[%s0 + $0x110] sm:$0xff]
  %v46 = vld [vmem:[%s0 + $0x118] sm:$0xff]
  %v47 = vld [vmem:[%s0 + $0x120] sm:$0xff]
  %v48 = vld [vmem:[%s0 + $0x128] sm:$0xff]
  %v49 = vld [vmem:[%s0 + $0x130] sm:$0xff]
  %v50 = vld [vmem:[%s0 + $0x138] sm:$0xff]
  %v51 = vld [vmem:[%s0 + $0x140] sm:$0xff]
  %v52 = vld [vmem:[%s0 + $0x148] sm:$0xff]
  %v53 = vld [vmem:[%s0 + $0x150] sm:$0xff]
  %v54 = vld [vmem:[%s0 + $0x158] sm:$0xff]
  %v55 = vld [vmem:[%s0 + $0x160] sm:$0xff]
  %v56 = vld [vmem:[%s0 + $0x168] sm:$0xff]
  %v57 = vld [vmem:[%s0 + $0x170] sm:$0xff]
  %v58 = vld [vmem:[%s0 + $0x178] sm:$0xff]
  %v59 = vld [vmem:[%s0 + $0x180] sm:$0xff]
  %v60 = vld [vmem:[%s0 + $0x188] sm:$0xff]
  %v61 = vld [vmem:[%s0 + $0x190] sm:$0xff]
  %v62 = vld [vmem:[%s0 + $0x198] sm:$0xff]
  %v63 = vld [vmem:[%s0 + $0x1a0] sm:$0xff]
  %v64 = vld [vmem:[%s0 + $0x1a8] sm:$0xff]
  %v65 = vld [vmem:[%s0 + $0x1b0] sm:$0xff]
  %v66 = vld [vmem:[%s0 + $0x1b8] sm:$0xff]
  %v67 = vld [vmem:[%s0 + $0x1c0] sm:$0xff]
  %v68 = vld [vmem:[%s0 + $0x1c8] sm:$0xff]
  %v69 = vld [vmem:[%s0 + $0x1d0] sm:$0xff]
  %v70 = vld [vmem:[%s0 + $0x1d8] sm:$0xff]
  %v71 = vld [vmem:[%s0 + $0x1e0] sm:$0xff]
  %v72 = vld [vmem:[%s0 + $0x1e8] sm:$0xff]
  %v73 = vld [vmem:[%s0 + $0x1f0] sm:$0xff]
  %v74 = vld [vmem:[%s0 + $0x1f8] sm:$0xff]
  %v75 = vld [vmem:[%s1] sm:$0xff]
  %v76 = vld [vmem:[%s1 + $0x8] sm:$0x3]
  %vm77 = vcmask 80896
  %v79 = vsel %vm77, %v11, 0
  %v82 = vsel %vm77, %v12, 0
  %v85 = vsel %vm77, %v13, 0
  %v88 = vsel %vm77, %v14, 0
  %v91 = vsel %vm77, %v15, 0
  %v94 = vsel %vm77, %v16, 0
  %v97 = vsel %vm77, %v17, 0
  %v100 = vsel %vm77, %v18, 0
  %v103 = vsel %vm77, %v19, 0
  %v106 = vsel %vm77, %v20, 0
  %v109 = vsel %vm77, %v21, 0
  %v112 = vsel %vm77, %v22, 0
  %v115 = vsel %vm77, %v23, 0
  %v118 = vsel %vm77, %v24, 0
  %v121 = vsel %vm77, %v25, 0
  %v124 = vsel %vm77, %v26, 0
  %v127 = vsel %vm77, %v27, 0
  %v130 = vsel %vm77, %v28, 0
  %v133 = vsel %vm77, %v29, 0
  %v136 = vsel %vm77, %v30, 0
  %v139 = vsel %vm77, %v31, 0
  %v142 = vsel %vm77, %v32, 0
  %v145 = vsel %vm77, %v33, 0
  %v148 = vsel %vm77, %v34, 0
  %v151 = vsel %vm77, %v35, 0
  %v154 = vsel %vm77, %v36, 0
  %v157 = vsel %vm77, %v37, 0
  %v160 = vsel %vm77, %v38, 0
  %v163 = vsel %vm77, %v39, 0
  %v166 = vsel %vm77, %v40, 0
  %v169 = vsel %vm77, %v41, 0
  %v172 = vsel %vm77, %v42, 0
  %v175 = vsel %vm77, %v43, 0
  %v178 = vsel %vm77, %v44, 0
  %v181 = vsel %vm77, %v45, 0
  %v184 = vsel %vm77, %v46, 0
  %v187 = vsel %vm77, %v47, 0
  %v190 = vsel %vm77, %v48, 0
  %v193 = vsel %vm77, %v49, 0
  %v196 = vsel %vm77, %v50, 0
  %v199 = vsel %vm77, %v51, 0
  %v202 = vsel %vm77, %v52, 0
  %v205 = vsel %vm77, %v53, 0
  %v208 = vsel %vm77, %v54, 0
  %v211 = vsel %vm77, %v55, 0
  %v214 = vsel %vm77, %v56, 0
  %v217 = vsel %vm77, %v57, 0
  %v220 = vsel %vm77, %v58, 0
  %v223 = vsel %vm77, %v59, 0
  %v226 = vsel %vm77, %v60, 0
  %v229 = vsel %vm77, %v61, 0
  %v232 = vsel %vm77, %v62, 0
  %v235 = vsel %vm77, %v63, 0
  %v238 = vsel %vm77, %v64, 0
  %v241 = vsel %vm77, %v65, 0
  %v244 = vsel %vm77, %v66, 0
  %v247 = vsel %vm77, %v67, 0
  %v250 = vsel %vm77, %v68, 0
  %v253 = vsel %vm77, %v69, 0
  %v256 = vsel %vm77, %v70, 0
  %v259 = vsel %vm77, %v71, 0
  %v262 = vsel %vm77, %v72, 0
  %v265 = vsel %vm77, %v73, 0
  %v268 = vsel %vm77, %v74, 0
  %vm270 = vcmask 1041408
  %v272 = vsel %vm270, %v76, 0
  %274 = vmatpush.msra.mxu0 0.0
  %275 = vmatpush.msra.mxu0 0.0
  %276 = vmatpush.msra.mxu0 0.0
  %277 = vmatpush.msra.mxu0 0.0
  %278 = vmatpush.msra.mxu0 0.0
  %279 = vmatpush.msra.mxu0 0.0
  %280 = vmatpush.msra.mxu0 0.0
  %281 = vmatpush.msra.mxu0 0.0
  %282 = vmatpush.msra.mxu0 0.0
  %283 = vmatpush.msra.mxu0 0.0
  %284 = vmatpush.msra.mxu0 0.0
  %285 = vmatpush.msra.mxu0 0.0
  %286 = vmatpush.msra.mxu0 0.0
  %287 = vmatpush.msra.mxu0 0.0
  %288 = vmatpush.msra.mxu0 %v272
  %289 = vmatpush.msra.mxu0 %v75
  %290 = vmatmul.f32.gmra.mxu0 %v79
  %v291 = vpop.f32.mrf.mxu0
  %v292 = vadd.f32 0.0, %v291
  %293 = vmatmul.f32.gmra.mxu0 %v82
  %v294 = vpop.f32.mrf.mxu0
  %v295 = vadd.f32 0.0, %v294
  %296 = vmatmul.f32.gmra.mxu0 %v85
  %v297 = vpop.f32.mrf.mxu0
  %v298 = vadd.f32 0.0, %v297
  %299 = vmatmul.f32.gmra.mxu0 %v88
  %v300 = vpop.f32.mrf.mxu0
  %v301 = vadd.f32 0.0, %v300
  %302 = vmatmul.f32.gmra.mxu0 %v91
  %v303 = vpop.f32.mrf.mxu0
  %v304 = vadd.f32 0.0, %v303
  %305 = vmatmul.f32.gmra.mxu0 %v94
  %v306 = vpop.f32.mrf.mxu0
  %v307 = vadd.f32 0.0, %v306
  %308 = vmatmul.f32.gmra.mxu0 %v97
  %v309 = vpop.f32.mrf.mxu0
  %v310 = vadd.f32 0.0, %v309
  %311 = vmatmul.f32.gmra.mxu0 %v100
  %v312 = vpop.f32.mrf.mxu0
  %v313 = vadd.f32 0.0, %v312
  %314 = vmatmul.f32.gmra.mxu0 %v103
  %v315 = vpop.f32.mrf.mxu0
  %v316 = vadd.f32 0.0, %v315
  %317 = vmatmul.f32.gmra.mxu0 %v106
  %v318 = vpop.f32.mrf.mxu0
  %v319 = vadd.f32 0.0, %v318
  %320 = vmatmul.f32.gmra.mxu0 %v109
  %v321 = vpop.f32.mrf.mxu0
  %v322 = vadd.f32 0.0, %v321
  %323 = vmatmul.f32.gmra.mxu0 %v112
  %v324 = vpop.f32.mrf.mxu0
  %v325 = vadd.f32 0.0, %v324
  %326 = vmatmul.f32.gmra.mxu0 %v115
  %v327 = vpop.f32.mrf.mxu0
  %v328 = vadd.f32 0.0, %v327
  %329 = vmatmul.f32.gmra.mxu0 %v118
  %v330 = vpop.f32.mrf.mxu0
  %v331 = vadd.f32 0.0, %v330
  %332 = vmatmul.f32.gmra.mxu0 %v121
  %v333 = vpop.f32.mrf.mxu0
  %v334 = vadd.f32 0.0, %v333
  %335 = vmatmul.f32.gmra.mxu0 %v124
  %v336 = vpop.f32.mrf.mxu0
  %v337 = vadd.f32 0.0, %v336
  %338 = vmatmul.f32.gmra.mxu0 %v127
  %v339 = vpop.f32.mrf.mxu0
  %v340 = vadd.f32 0.0, %v339
  %341 = vmatmul.f32.gmra.mxu0 %v130
  %v342 = vpop.f32.mrf.mxu0
  %v343 = vadd.f32 0.0, %v342
  %344 = vmatmul.f32.gmra.mxu0 %v133
  %v345 = vpop.f32.mrf.mxu0
  %v346 = vadd.f32 0.0, %v345
  %347 = vmatmul.f32.gmra.mxu0 %v136
  %v348 = vpop.f32.mrf.mxu0
  %v349 = vadd.f32 0.0, %v348
  %350 = vmatmul.f32.gmra.mxu0 %v139
  %v351 = vpop.f32.mrf.mxu0
  %v352 = vadd.f32 0.0, %v351
  %353 = vmatmul.f32.gmra.mxu0 %v142
  %v354 = vpop.f32.mrf.mxu0
  %v355 = vadd.f32 0.0, %v354
  %356 = vmatmul.f32.gmra.mxu0 %v145
  %v357 = vpop.f32.mrf.mxu0
  %v358 = vadd.f32 0.0, %v357
  %359 = vmatmul.f32.gmra.mxu0 %v148
  %v360 = vpop.f32.mrf.mxu0
  %v361 = vadd.f32 0.0, %v360
  %362 = vmatmul.f32.gmra.mxu0 %v151
  %v363 = vpop.f32.mrf.mxu0
  %v364 = vadd.f32 0.0, %v363
  %365 = vmatmul.f32.gmra.mxu0 %v154
  %v366 = vpop.f32.mrf.mxu0
  %v367 = vadd.f32 0.0, %v366
  %368 = vmatmul.f32.gmra.mxu0 %v157
  %v369 = vpop.f32.mrf.mxu0
  %v370 = vadd.f32 0.0, %v369
  %371 = vmatmul.f32.gmra.mxu0 %v160
  %v372 = vpop.f32.mrf.mxu0
  %v373 = vadd.f32 0.0, %v372
  %374 = vmatmul.f32.gmra.mxu0 %v163
  %v375 = vpop.f32.mrf.mxu0
  %v376 = vadd.f32 0.0, %v375
  %377 = vmatmul.f32.gmra.mxu0 %v166
  %v378 = vpop.f32.mrf.mxu0
  %v379 = vadd.f32 0.0, %v378
  %380 = vmatmul.f32.gmra.mxu0 %v169
  %v381 = vpop.f32.mrf.mxu0
  %v382 = vadd.f32 0.0, %v381
  %383 = vmatmul.f32.gmra.mxu0 %v172
  %v384 = vpop.f32.mrf.mxu0
  %v385 = vadd.f32 0.0, %v384
  %386 = vmatmul.f32.gmra.mxu0 %v175
  %v387 = vpop.f32.mrf.mxu0
  %v388 = vadd.f32 0.0, %v387
  %389 = vmatmul.f32.gmra.mxu0 %v178
  %v390 = vpop.f32.mrf.mxu0
  %v391 = vadd.f32 0.0, %v390
  %392 = vmatmul.f32.gmra.mxu0 %v181
  %v393 = vpop.f32.mrf.mxu0
  %v394 = vadd.f32 0.0, %v393
  %395 = vmatmul.f32.gmra.mxu0 %v184
  %v396 = vpop.f32.mrf.mxu0
  %v397 = vadd.f32 0.0, %v396
  %398 = vmatmul.f32.gmra.mxu0 %v187
  %v399 = vpop.f32.mrf.mxu0
  %v400 = vadd.f32 0.0, %v399
  %401 = vmatmul.f32.gmra.mxu0 %v190
  %v402 = vpop.f32.mrf.mxu0
  %v403 = vadd.f32 0.0, %v402
  %404 = vmatmul.f32.gmra.mxu0 %v193
  %v405 = vpop.f32.mrf.mxu0
  %v406 = vadd.f32 0.0, %v405
  %407 = vmatmul.f32.gmra.mxu0 %v196
  %v408 = vpop.f32.mrf.mxu0
  %v409 = vadd.f32 0.0, %v408
  %410 = vmatmul.f32.gmra.mxu0 %v199
  %v411 = vpop.f32.mrf.mxu0
  %v412 = vadd.f32 0.0, %v411
  %413 = vmatmul.f32.gmra.mxu0 %v202
  %v414 = vpop.f32.mrf.mxu0
  %v415 = vadd.f32 0.0, %v414
  %416 = vmatmul.f32.gmra.mxu0 %v205
  %v417 = vpop.f32.mrf.mxu0
  %v418 = vadd.f32 0.0, %v417
  %419 = vmatmul.f32.gmra.mxu0 %v208
  %v420 = vpop.f32.mrf.mxu0
  %v421 = vadd.f32 0.0, %v420
  %422 = vmatmul.f32.gmra.mxu0 %v211
  %v423 = vpop.f32.mrf.mxu0
  %v424 = vadd.f32 0.0, %v423
  %425 = vmatmul.f32.gmra.mxu0 %v214
  %v426 = vpop.f32.mrf.mxu0
  %v427 = vadd.f32 0.0, %v426
  %428 = vmatmul.f32.gmra.mxu0 %v217
  %v429 = vpop.f32.mrf.mxu0
  %v430 = vadd.f32 0.0, %v429
  %431 = vmatmul.f32.gmra.mxu0 %v220
  %v432 = vpop.f32.mrf.mxu0
  %v433 = vadd.f32 0.0, %v432
  %434 = vmatmul.f32.gmra.mxu0 %v223
  %v435 = vpop.f32.mrf.mxu0
  %v436 = vadd.f32 0.0, %v435
  %437 = vmatmul.f32.gmra.mxu0 %v226
  %v438 = vpop.f32.mrf.mxu0
  %v439 = vadd.f32 0.0, %v438
  %440 = vmatmul.f32.gmra.mxu0 %v229
  %v441 = vpop.f32.mrf.mxu0
  %v442 = vadd.f32 0.0, %v441
  %443 = vmatmul.f32.gmra.mxu0 %v232
  %v444 = vpop.f32.mrf.mxu0
  %v445 = vadd.f32 0.0, %v444
  %446 = vmatmul.f32.gmra.mxu0 %v235
  %v447 = vpop.f32.mrf.mxu0
  %v448 = vadd.f32 0.0, %v447
  %449 = vmatmul.f32.gmra.mxu0 %v238
  %v450 = vpop.f32.mrf.mxu0
  %v451 = vadd.f32 0.0, %v450
  %452 = vmatmul.f32.gmra.mxu0 %v241
  %v453 = vpop.f32.mrf.mxu0
  %v454 = vadd.f32 0.0, %v453
  %455 = vmatmul.f32.gmra.mxu0 %v244
  %v456 = vpop.f32.mrf.mxu0
  %v457 = vadd.f32 0.0, %v456
  %458 = vmatmul.f32.gmra.mxu0 %v247
  %v459 = vpop.f32.mrf.mxu0
  %v460 = vadd.f32 0.0, %v459
  %461 = vmatmul.f32.gmra.mxu0 %v250
  %v462 = vpop.f32.mrf.mxu0
  %v463 = vadd.f32 0.0, %v462
  %464 = vmatmul.f32.gmra.mxu0 %v253
  %v465 = vpop.f32.mrf.mxu0
  %v466 = vadd.f32 0.0, %v465
  %467 = vmatmul.f32.gmra.mxu0 %v256
  %v468 = vpop.f32.mrf.mxu0
  %v469 = vadd.f32 0.0, %v468
  %470 = vmatmul.f32.gmra.mxu0 %v259
  %v471 = vpop.f32.mrf.mxu0
  %v472 = vadd.f32 0.0, %v471
  %473 = vmatmul.f32.gmra.mxu0 %v262
  %v474 = vpop.f32.mrf.mxu0
  %v475 = vadd.f32 0.0, %v474
  %476 = vmatmul.f32.gmra.mxu0 %v265
  %v477 = vpop.f32.mrf.mxu0
  %v478 = vadd.f32 0.0, %v477
  %479 = vmatmul.f32.gmra.mxu0 %v268
  %v480 = vpop.f32.mrf.mxu0
  %v481 = vadd.f32 0.0, %v480
  %482 = vdwg.mxu0
  %vm483 = vcmask 31744
  %484 = vst.msk [vmem:[%s2] sm:$0xff] %vm483, %v292
  %485 = vst.msk [vmem:[%s2 + $0x8] sm:$0xff] %vm483, %v295
  %486 = vst.msk [vmem:[%s2 + $0x10] sm:$0xff] %vm483, %v298
  %487 = vst.msk [vmem:[%s2 + $0x18] sm:$0xff] %vm483, %v301
  %488 = vst.msk [vmem:[%s2 + $0x20] sm:$0xff] %vm483, %v304
  %489 = vst.msk [vmem:[%s2 + $0x28] sm:$0xff] %vm483, %v307
  %490 = vst.msk [vmem:[%s2 + $0x30] sm:$0xff] %vm483, %v310
  %491 = vst.msk [vmem:[%s2 + $0x38] sm:$0xff] %vm483, %v313
  %492 = vst.msk [vmem:[%s2 + $0x40] sm:$0xff] %vm483, %v316
  %493 = vst.msk [vmem:[%s2 + $0x48] sm:$0xff] %vm483, %v319
  %494 = vst.msk [vmem:[%s2 + $0x50] sm:$0xff] %vm483, %v322
  %495 = vst.msk [vmem:[%s2 + $0x58] sm:$0xff] %vm483, %v325
  %496 = vst.msk [vmem:[%s2 + $0x60] sm:$0xff] %vm483, %v328
  %497 = vst.msk [vmem:[%s2 + $0x68] sm:$0xff] %vm483, %v331
  %498 = vst.msk [vmem:[%s2 + $0x70] sm:$0xff] %vm483, %v334
  %499 = vst.msk [vmem:[%s2 + $0x78] sm:$0xff] %vm483, %v337
  %500 = vst.msk [vmem:[%s2 + $0x80] sm:$0xff] %vm483, %v340
  %501 = vst.msk [vmem:[%s2 + $0x88] sm:$0xff] %vm483, %v343
  %502 = vst.msk [vmem:[%s2 + $0x90] sm:$0xff] %vm483, %v346
  %503 = vst.msk [vmem:[%s2 + $0x98] sm:$0xff] %vm483, %v349
  %504 = vst.msk [vmem:[%s2 + $0xa0] sm:$0xff] %vm483, %v352
  %505 = vst.msk [vmem:[%s2 + $0xa8] sm:$0xff] %vm483, %v355
  %506 = vst.msk [vmem:[%s2 + $0xb0] sm:$0xff] %vm483, %v358
  %507 = vst.msk [vmem:[%s2 + $0xb8] sm:$0xff] %vm483, %v361
  %508 = vst.msk [vmem:[%s2 + $0xc0] sm:$0xff] %vm483, %v364
  %509 = vst.msk [vmem:[%s2 + $0xc8] sm:$0xff] %vm483, %v367
  %510 = vst.msk [vmem:[%s2 + $0xd0] sm:$0xff] %vm483, %v370
  %511 = vst.msk [vmem:[%s2 + $0xd8] sm:$0xff] %vm483, %v373
  %512 = vst.msk [vmem:[%s2 + $0xe0] sm:$0xff] %vm483, %v376
  %513 = vst.msk [vmem:[%s2 + $0xe8] sm:$0xff] %vm483, %v379
  %514 = vst.msk [vmem:[%s2 + $0xf0] sm:$0xff] %vm483, %v382
  %515 = vst.msk [vmem:[%s2 + $0xf8] sm:$0xff] %vm483, %v385
  %516 = vst.msk [vmem:[%s2 + $0x100] sm:$0xff] %vm483, %v388
  %517 = vst.msk [vmem:[%s2 + $0x108] sm:$0xff] %vm483, %v391
  %518 = vst.msk [vmem:[%s2 + $0x110] sm:$0xff] %vm483, %v394
  %519 = vst.msk [vmem:[%s2 + $0x118] sm:$0xff] %vm483, %v397
  %520 = vst.msk [vmem:[%s2 + $0x120] sm:$0xff] %vm483, %v400
  %521 = vst.msk [vmem:[%s2 + $0x128] sm:$0xff] %vm483, %v403
  %522 = vst.msk [vmem:[%s2 + $0x130] sm:$0xff] %vm483, %v406
  %523 = vst.msk [vmem:[%s2 + $0x138] sm:$0xff] %vm483, %v409
  %524 = vst.msk [vmem:[%s2 + $0x140] sm:$0xff] %vm483, %v412
  %525 = vst.msk [vmem:[%s2 + $0x148] sm:$0xff] %vm483, %v415
  %526 = vst.msk [vmem:[%s2 + $0x150] sm:$0xff] %vm483, %v418
  %527 = vst.msk [vmem:[%s2 + $0x158] sm:$0xff] %vm483, %v421
  %528 = vst.msk [vmem:[%s2 + $0x160] sm:$0xff] %vm483, %v424
  %529 = vst.msk [vmem:[%s2 + $0x168] sm:$0xff] %vm483, %v427
  %530 = vst.msk [vmem:[%s2 + $0x170] sm:$0xff] %vm483, %v430
  %531 = vst.msk [vmem:[%s2 + $0x178] sm:$0xff] %vm483, %v433
  %532 = vst.msk [vmem:[%s2 + $0x180] sm:$0xff] %vm483, %v436
  %533 = vst.msk [vmem:[%s2 + $0x188] sm:$0xff] %vm483, %v439
  %534 = vst.msk [vmem:[%s2 + $0x190] sm:$0xff] %vm483, %v442
  %535 = vst.msk [vmem:[%s2 + $0x198] sm:$0xff] %vm483, %v445
  %536 = vst.msk [vmem:[%s2 + $0x1a0] sm:$0xff] %vm483, %v448
  %537 = vst.msk [vmem:[%s2 + $0x1a8] sm:$0xff] %vm483, %v451
  %538 = vst.msk [vmem:[%s2 + $0x1b0] sm:$0xff] %vm483, %v454
  %539 = vst.msk [vmem:[%s2 + $0x1b8] sm:$0xff] %vm483, %v457
  %540 = vst.msk [vmem:[%s2 + $0x1c0] sm:$0xff] %vm483, %v460
  %541 = vst.msk [vmem:[%s2 + $0x1c8] sm:$0xff] %vm483, %v463
  %542 = vst.msk [vmem:[%s2 + $0x1d0] sm:$0xff] %vm483, %v466
  %543 = vst.msk [vmem:[%s2 + $0x1d8] sm:$0xff] %vm483, %v469
  %544 = vst.msk [vmem:[%s2 + $0x1e0] sm:$0xff] %vm483, %v472
  %545 = vst.msk [vmem:[%s2 + $0x1e8] sm:$0xff] %vm483, %v475
  %546 = vst.msk [vmem:[%s2 + $0x1f0] sm:$0xff] %vm483, %v478
  %547 = vst.msk [vmem:[%s2 + $0x1f8] sm:$0xff] %vm483, %v481
  // Predicated region
  $region10: #{hv_lca_forward.25} parent=0 // pred_check
    _
  $region11: #{hv_lca_forward.25} parent=0 // pred_check_branch
    %549 = sbr.rel (0) target = $region13
  $region12: #{hv_lca_forward.25} parent=0 // pred_region
    _
  $region13: #{hv_lca_forward.25} parent=0 // pred_fallthru
    _
  // Predicated region
  $region14: #{hv_lca_forward.25} parent=0 // pred_check
    _
  $region15: #{hv_lca_forward.25} parent=0 // pred_check_branch
    %551 = sbr.rel (0) target = $region17
  $region16: #{hv_lca_forward.25} parent=0 // pred_region
    _
  $region17: #{hv_lca_forward.25} parent=0 // pred_fallthru
    _

// kernel: hv_lca_forward.22
$region0: #{hv_lca_forward.22}
  #allocation0 [shape = 'u32[]', space=smem, size = 0x4, offset = 0x4, fixed_abs, tag = 'smem constant byte address 0x4 - core index']
  #allocation1 [shape = 'u32[72,128]{1,0:T(1,128)}', space=vmem, size = 0x9000, scoped, tag = 'internal scratch']
  %s0 = inlined_call_operand.vmem [shape: f32[2,18,18,20], index: 0, kind: input, shape index: {}]
  %s1 = inlined_call_operand.vmem [shape: f32[3,3,20], index: 1, kind: input, shape index: {}]
  %s2 = inlined_call_operand.vmem [shape: f32[2,16,16,20], index: 2, kind: output, shape index: {}]
  %s3 = sld [smem:[#allocation0]]
  $region41: #{hv_lca_forward.22} parent=0
    _
  %s5 = ssub.s32 1, %s3
  %s6 = scalar_select 0, %s5, %s3
  loop: start=0, step=1, limit=4
  $region2: #{hv_lca_forward.22} parent=0 // loop_pre_header
    _
  $region3: #{hv_lca_forward.22} parent=0 // loop_header
    %s8 = sphi 0, %s12
    %p9 = scmp.ge.s32.totalorder %s8, 4
    %s18 = sphi 0, %s20
    %s21 = sphi 0, %s18
    %s22 = sphi 0, %s21
    %s38 = sphi 0, %s22
    %s42 = sphi 0, %s42
    %s44 = sphi 0, %s42
    %s45 = sphi 0, %s44
    %s59 = sphi 0, %s45
    %s65 = sphi 0, %s67
    %s68 = sphi 0, %s65
    %s69 = sphi 0, %s68
    %s85 = sphi 0, %s69
  $region4: #{hv_lca_forward.22} parent=0 // loop_header_branch
    %11 = sbr.rel (%p9) target = $region8
  $region5: #{hv_lca_forward.22} parent=0 // loop_body
    %s13 = ssub.s32 %s8, 1
    %s14 = ssub.s32 %s8, 2
    %s15 = sadd.s32 %s8, 1
    %s16 = ssub.s32 %s8, %s15
    %p17 = scmp.eq.s32.totalorder %s16, 0
    %s19 = sadd.s32 %s18, 1
    %s20 = scalar_select %p17, %s18, %s19
    %p23 = pneg %p17
    %p24 = scmp.eq.s32.totalorder %s8, 1
    %p25 = por %p23, %p24
    %p26 = scmp.ne.s32.totalorder %s18, %s21
    %p27 = scmp.eq.s32.totalorder %s8, 0
    %p28 = por %p26, %p27
    %p29 = scmp.ne.s32.totalorder %s18, %s21
    %p30 = scmp.eq.s32.totalorder %s13, 1
    %p31 = por %p29, %p30
    %p32 = scmp.ne.s32.totalorder %s21, %s22
    %p33 = scmp.eq.s32.totalorder %s13, 0
    %p34 = por %p32, %p33
    %p35 = scmp.ne.s32.totalorder %s21, %s22
    %p36 = scmp.eq.s32.totalorder %s14, 1
    %p37 = por %p35, %p36
    %p39 = scmp.ne.s32.totalorder %s22, %s38
    %p40 = scmp.eq.s32.totalorder %s14, 0
    %p41 = por %p39, %p40
    %s43 = sadd.s32 %s42, 1
    %p46 = scmp.eq.s32.totalorder %s8, 1
    %p47 = scmp.ne.s32.totalorder %s42, %s44
    %p48 = scmp.eq.s32.totalorder %s8, 0
    %p49 = por %p47, %p48
    %p50 = scmp.ne.s32.totalorder %s42, %s44
    %p51 = scmp.eq.s32.totalorder %s13, 1
    %p52 = por %p50, %p51
    %p53 = scmp.ne.s32.totalorder %s44, %s45
    %p54 = scmp.eq.s32.totalorder %s13, 0
    %p55 = por %p53, %p54
    %p56 = scmp.ne.s32.totalorder %s44, %s45
    %p57 = scmp.eq.s32.totalorder %s14, 1
    %p58 = por %p56, %p57
    %p60 = scmp.ne.s32.totalorder %s45, %s59
    %p61 = scmp.eq.s32.totalorder %s14, 0
    %p62 = por %p60, %p61
    %s63 = ssub.s32 %s8, %s15
    %p64 = scmp.eq.s32.totalorder %s63, 0
    %s66 = sadd.s32 %s65, 1
    %s67 = scalar_select %p64, %s65, %s66
    %p70 = pneg %p64
    %p71 = scmp.eq.s32.totalorder %s8, 1
    %p72 = por %p70, %p71
    %p73 = scmp.ne.s32.totalorder %s65, %s68
    %p74 = scmp.eq.s32.totalorder %s8, 0
    %p75 = por %p73, %p74
    %p76 = scmp.ne.s32.totalorder %s65, %s68
    %p77 = scmp.eq.s32.totalorder %s13, 1
    %p78 = por %p76, %p77
    %p79 = scmp.ne.s32.totalorder %s68, %s69
    %p80 = scmp.eq.s32.totalorder %s13, 0
    %p81 = por %p79, %p80
    %p82 = scmp.ne.s32.totalorder %s68, %s69
    %p83 = scmp.eq.s32.totalorder %s14, 1
    %p84 = por %p82, %p83
    %p86 = scmp.ne.s32.totalorder %s69, %s85
    %p87 = scmp.eq.s32.totalorder %s14, 0
    %p88 = por %p86, %p87
    %p89 = scmp.le.s32.totalorder 1, %s8
    %p90 = scmp.lt.s32.totalorder %s8, 3
    %p91 = pnand %p89, %p90
    %p92 = pneg %p91
    // Predicated region
    $region9: #{hv_lca_forward.22} parent=5 // pred_check
      _
    $region10: #{hv_lca_forward.22} parent=5 // pred_check_branch
      %94 = sbr.rel (%p91) target = $region12
    $region11: #{hv_lca_forward.22} parent=5 // pred_region
      %s95 = ssub.s32 %s8, 1
      // Predicated region
      $region13: #{hv_lca_forward.22} parent=11 // pred_check
        %p96 = pneg %p55
      $region14: #{hv_lca_forward.22} parent=11 // pred_check_branch
        %98 = sbr.rel (%p96) target = $region16
      $region15: #{hv_lca_forward.22} parent=11 // pred_region
        _
      $region16: #{hv_lca_forward.22} parent=11 // pred_fallthru
        _
    $region12: #{hv_lca_forward.22} parent=5 // pred_fallthru
      _
    %p99 = scmp.lt.s32.totalorder %s8, 2
    // Predicated region
    $region17: #{hv_lca_forward.22} parent=5 // pred_check
      %p100 = pneg %p99
    $region18: #{hv_lca_forward.22} parent=5 // pred_check_branch
      %102 = sbr.rel (%p100) target = $region20
    $region19: #{hv_lca_forward.22} parent=5 // pred_region
      // Predicated region
      $region21: #{hv_lca_forward.22} parent=19 // pred_check
        %p103 = pneg %p28
      $region22: #{hv_lca_forward.22} parent=19 // pred_check_branch
        %105 = sbr.rel (%p103) target = $region24
      $region23: #{hv_lca_forward.22} parent=19 // pred_region
        %p106 = scmp.lt.s32.totalorder %s8, 1
        %s107 = scalar_select %p106, %s8, 1
        %s108 = smul.addr %s107, 54
        %s109 = smul.addr %s108, 8
        %s110 = scalar_lea.vmem %s0, %s109
      $region24: #{hv_lca_forward.22} parent=19 // pred_fallthru
        _
    $region20: #{hv_lca_forward.22} parent=5 // pred_fallthru
      _
    %p111 = scmp.le.s32.totalorder 1, %s8
    %p112 = scmp.lt.s32.totalorder %s8, 3
    %p113 = pnand %p111, %p112
    %p114 = pneg %p113
    // Predicated region
    $region25: #{hv_lca_forward.22} parent=5 // pred_check
      _
    $region26: #{hv_lca_forward.22} parent=5 // pred_check_branch
      %116 = sbr.rel (%p113) target = $region28
    $region27: #{hv_lca_forward.22} parent=5 // pred_region
      %s117 = ssub.s32 %s8, 1
      %p118 = scmp.lt.s32.totalorder %s13, 1
      %s119 = scalar_select %p118, %s13, 1
      %s120 = smul.addr %s119, 54
      %s121 = smul.addr %s120, 8
      %s122 = scalar_lea.vmem %s0, %s121
      %p123 = pneg %p34
      %p124 = pneg %p31
      %p125 = pneg %p55
      %p126 = pneg %p52
      %p127 = pneg %p81
      %p128 = pneg %p78
      %p129 = scmp.lt.s32.totalorder %s13, 1
      %s130 = scalar_select %p129, %s13, 1
      %s131 = smul.addr %s130, 32
      %s132 = smul.addr %s131, 8
      %s133 = scalar_lea.vmem %s2, %s132
      %p134 = scmp.lt.s32.totalorder %s13, 1
      %s135 = scalar_select %p134, %s13, 1
      %s136 = smul.addr %s135, 54
      %s137 = smul.addr %s136, 8
      %s138 = scalar_lea.vmem %s0, %s137
      %p139 = scmp.lt.s32.totalorder %s13, 1
      %s140 = scalar_select %p139, %s13, 1
      %s141 = smul.addr %s140, 32
      %s142 = smul.addr %s141, 8
      %s143 = scalar_lea.vmem %s2, %s142
      %v144 = vld [vmem:[%s1] sm:$0x7]
      %v145 = vld [vmem:[%s1 + $0x4] sm:$0x7]
      %v146 = vld [vmem:[%s1 + $0x8] sm:$0x7]
      %v147 = vld [vmem:[%s138] sm:$0xff]
      %v148 = vld [vmem:[%s138 + $0x8] sm:$0xff]
      %v149 = vld [vmem:[%s138 + $0x18] sm:$0xff]
      %v150 = vld [vmem:[%s138 + $0x20] sm:$0xff]
      %v151 = vld [vmem:[%s138 + $0x30] sm:$0xff]
      %v152 = vld [vmem:[%s138 + $0x38] sm:$0xff]
      %v153 = vld [vmem:[%s138 + $0x48] sm:$0xff]
      %v154 = vld [vmem:[%s138 + $0x50] sm:$0xff]
      %v155 = vld [vmem:[%s138 + $0x60] sm:$0xff]
      %v156 = vld [vmem:[%s138 + $0x68] sm:$0xff]
      %v157 = vld [vmem:[%s138 + $0x78] sm:$0xff]
      %v158 = vld [vmem:[%s138 + $0x80] sm:$0xff]
      %v159 = vld [vmem:[%s138 + $0x90] sm:$0xff]
      %v160 = vld [vmem:[%s138 + $0x98] sm:$0xff]
      %v161 = vld [vmem:[%s138 + $0xa8] sm:$0xff]
      %v162 = vld [vmem:[%s138 + $0xb0] sm:$0xff]
      %v163 = vld [vmem:[%s138 + $0xc0] sm:$0xff]
      %v164 = vld [vmem:[%s138 + $0xc8] sm:$0xff]
      %v165 = vld [vmem:[%s138 + $0xd8] sm:$0xff]
      %v166 = vld [vmem:[%s138 + $0xe0] sm:$0xff]
      %v167 = vld [vmem:[%s138 + $0xf0] sm:$0xff]
      %v168 = vld [vmem:[%s138 + $0xf8] sm:$0xff]
      %v169 = vld [vmem:[%s138 + $0x108] sm:$0xff]
      %v170 = vld [vmem:[%s138 + $0x110] sm:$0xff]
      %v171 = vld [vmem:[%s138 + $0x120] sm:$0xff]
      %v172 = vld [vmem:[%s138 + $0x128] sm:$0xff]
      %v173 = vld [vmem:[%s138 + $0x138] sm:$0xff]
      %v174 = vld [vmem:[%s138 + $0x140] sm:$0xff]
      %v175 = vld [vmem:[%s138 + $0x150] sm:$0xff]
      %v176 = vld [vmem:[%s138 + $0x158] sm:$0xff]
      %v177 = vld [vmem:[%s138 + $0x168] sm:$0xff]
      %v178 = vld [vmem:[%s138 + $0x170] sm:$0xff]
      %v179 = vperm.slane %v144, 0
      %v180 = vmul.f32 %v147, %v179
      %v181 = vmul.f32 %v148, %v179
      %v182 = vmul.f32 %v149, %v179
      %v183 = vmul.f32 %v150, %v179
      %v184 = vmul.f32 %v151, %v179
      %v185 = vmul.f32 %v152, %v179
      %v186 = vmul.f32 %v153, %v179
      %v187 = vmul.f32 %v154, %v179
      %v188 = vmul.f32 %v155, %v179
      %v189 = vmul.f32 %v156, %v179
      %v190 = vmul.f32 %v157, %v179
      %v191 = vmul.f32 %v158, %v179
      %v192 = vmul.f32 %v159, %v179
      %v193 = vmul.f32 %v160, %v179
      %v194 = vmul.f32 %v161, %v179
      %v195 = vmul.f32 %v162, %v179
      %v196 = vmul.f32 %v163, %v179
      %v197 = vmul.f32 %v164, %v179
      %v198 = vmul.f32 %v165, %v179
      %v199 = vmul.f32 %v166, %v179
      %v200 = vmul.f32 %v167, %v179
      %v201 = vmul.f32 %v168, %v179
      %v202 = vmul.f32 %v169, %v179
      %v203 = vmul.f32 %v170, %v179
      %v204 = vmul.f32 %v171, %v179
      %v205 = vmul.f32 %v172, %v179
      %v206 = vmul.f32 %v173, %v179
      %v207 = vmul.f32 %v174, %v179
      %v208 = vmul.f32 %v175, %v179
      %v209 = vmul.f32 %v176, %v179
      %v210 = vmul.f32 %v177, %v179
      %v211 = vmul.f32 %v178, %v179
      %v212 = vadd.f32 %v180, 0.0
      %v213 = vadd.f32 %v181, 0.0
      %v214 = vadd.f32 %v182, 0.0
      %v215 = vadd.f32 %v183, 0.0
      %v216 = vadd.f32 %v184, 0.0
      %v217 = vadd.f32 %v185, 0.0
      %v218 = vadd.f32 %v186, 0.0
      %v219 = vadd.f32 %v187, 0.0
      %v220 = vadd.f32 %v188, 0.0
      %v221 = vadd.f32 %v189, 0.0
      %v222 = vadd.f32 %v190, 0.0
      %v223 = vadd.f32 %v191, 0.0
      %v224 = vadd.f32 %v192, 0.0
      %v225 = vadd.f32 %v193, 0.0
      %v226 = vadd.f32 %v194, 0.0
      %v227 = vadd.f32 %v195, 0.0
      %v228 = vadd.f32 %v196, 0.0
      %v229 = vadd.f32 %v197, 0.0
      %v230 = vadd.f32 %v198, 0.0
      %v231 = vadd.f32 %v199, 0.0
      %v232 = vadd.f32 %v200, 0.0
      %v233 = vadd.f32 %v201, 0.0
      %v234 = vadd.f32 %v202, 0.0
      %v235 = vadd.f32 %v203, 0.0
      %v236 = vadd.f32 %v204, 0.0
      %v237 = vadd.f32 %v205, 0.0
      %v238 = vadd.f32 %v206, 0.0
      %v239 = vadd.f32 %v207, 0.0
      %v240 = vadd.f32 %v208, 0.0
      %v241 = vadd.f32 %v209, 0.0
      %v242 = vadd.f32 %v210, 0.0
      %v243 = vadd.f32 %v211, 0.0
      %v244 = vld [vmem:[%s138 + $0x1] sm:$0xff]
      %v245 = vld [vmem:[%s138 + $0x9] sm:$0xff]
      %v246 = vld [vmem:[%s138 + $0x19] sm:$0xff]
      %v247 = vld [vmem:[%s138 + $0x21] sm:$0xff]
      %v248 = vld [vmem:[%s138 + $0x31] sm:$0xff]
      %v249 = vld [vmem:[%s138 + $0x39] sm:$0xff]
      %v250 = vld [vmem:[%s138 + $0x49] sm:$0xff]
      %v251 = vld [vmem:[%s138 + $0x51] sm:$0xff]
      %v252 = vld [vmem:[%s138 + $0x61] sm:$0xff]
      %v253 = vld [vmem:[%s138 + $0x69] sm:$0xff]
      %v254 = vld [vmem:[%s138 + $0x79] sm:$0xff]
      %v255 = vld [vmem:[%s138 + $0x81] sm:$0xff]
      %v256 = vld [vmem:[%s138 + $0x91] sm:$0xff]
      %v257 = vld [vmem:[%s138 + $0x99] sm:$0xff]
      %v258 = vld [vmem:[%s138 + $0xa9] sm:$0xff]
      %v259 = vld [vmem:[%s138 + $0xb1] sm:$0xff]
      %v260 = vld [vmem:[%s138 + $0xc1] sm:$0xff]
      %v261 = vld [vmem:[%s138 + $0xc9] sm:$0xff]
      %v262 = vld [vmem:[%s138 + $0xd9] sm:$0xff]
      %v263 = vld [vmem:[%s138 + $0xe1] sm:$0xff]
      %v264 = vld [vmem:[%s138 + $0xf1] sm:$0xff]
      %v265 = vld [vmem:[%s138 + $0xf9] sm:$0xff]
      %v266 = vld [vmem:[%s138 + $0x109] sm:$0xff]
      %v267 = vld [vmem:[%s138 + $0x111] sm:$0xff]
      %v268 = vld [vmem:[%s138 + $0x121] sm:$0xff]
      %v269 = vld [vmem:[%s138 + $0x129] sm:$0xff]
      %v270 = vld [vmem:[%s138 + $0x139] sm:$0xff]
      %v271 = vld [vmem:[%s138 + $0x141] sm:$0xff]
      %v272 = vld [vmem:[%s138 + $0x151] sm:$0xff]
      %v273 = vld [vmem:[%s138 + $0x159] sm:$0xff]
      %v274 = vld [vmem:[%s138 + $0x169] sm:$0xff]
      %v275 = vld [vmem:[%s138 + $0x171] sm:$0xff]
      %v276 = vperm.slane %v144, 1
      %v277 = vmul.f32 %v244, %v276
      %v278 = vmul.f32 %v245, %v276
      %v279 = vmul.f32 %v246, %v276
      %v280 = vmul.f32 %v247, %v276
      %v281 = vmul.f32 %v248, %v276
      %v282 = vmul.f32 %v249, %v276
      %v283 = vmul.f32 %v250, %v276
      %v284 = vmul.f32 %v251, %v276
      %v285 = vmul.f32 %v252, %v276
      %v286 = vmul.f32 %v253, %v276
      %v287 = vmul.f32 %v254, %v276
      %v288 = vmul.f32 %v255, %v276
      %v289 = vmul.f32 %v256, %v276
      %v290 = vmul.f32 %v257, %v276
      %v291 = vmul.f32 %v258, %v276
      %v292 = vmul.f32 %v259, %v276
      %v293 = vmul.f32 %v260, %v276
      %v294 = vmul.f32 %v261, %v276
      %v295 = vmul.f32 %v262, %v276
      %v296 = vmul.f32 %v263, %v276
      %v297 = vmul.f32 %v264, %v276
      %v298 = vmul.f32 %v265, %v276
      %v299 = vmul.f32 %v266, %v276
      %v300 = vmul.f32 %v267, %v276
      %v301 = vmul.f32 %v268, %v276
      %v302 = vmul.f32 %v269, %v276
      %v303 = vmul.f32 %v270, %v276
      %v304 = vmul.f32 %v271, %v276
      %v305 = vmul.f32 %v272, %v276
      %v306 = vmul.f32 %v273, %v276
      %v307 = vmul.f32 %v274, %v276
      %v308 = vmul.f32 %v275, %v276
      %v309 = vadd.f32 %v212, %v277
      %v310 = vadd.f32 %v213, %v278
      %v311 = vadd.f32 %v214, %v279
      %v312 = vadd.f32 %v215, %v280
      %v313 = vadd.f32 %v216, %v281
      %v314 = vadd.f32 %v217, %v282
      %v315 = vadd.f32 %v218, %v283
      %v316 = vadd.f32 %v219, %v284
      %v317 = vadd.f32 %v220, %v285
      %v318 = vadd.f32 %v221, %v286
      %v319 = vadd.f32 %v222, %v287
      %v320 = vadd.f32 %v223, %v288
      %v321 = vadd.f32 %v224, %v289
      %v322 = vadd.f32 %v225, %v290
      %v323 = vadd.f32 %v226, %v291
      %v324 = vadd.f32 %v227, %v292
      %v325 = vadd.f32 %v228, %v293
      %v326 = vadd.f32 %v229, %v294
      %v327 = vadd.f32 %v230, %v295
      %v328 = vadd.f32 %v231, %v296
      %v329 = vadd.f32 %v232, %v297
      %v330 = vadd.f32 %v233, %v298
      %v331 = vadd.f32 %v234, %v299
      %v332 = vadd.f32 %v235, %v300
      %v333 = vadd.f32 %v236, %v301
      %v334 = vadd.f32 %v237, %v302
      %v335 = vadd.f32 %v238, %v303
      %v336 = vadd.f32 %v239, %v304
      %v337 = vadd.f32 %v240, %v305
      %v338 = vadd.f32 %v241, %v306
      %v339 = vadd.f32 %v242, %v307
      %v340 = vadd.f32 %v243, %v308
      %v341 = vld [vmem:[%s138 + $0x2] sm:$0xff]
      %v342 = vld [vmem:[%s138 + $0xa] sm:$0xff]
      %v343 = vld [vmem:[%s138 + $0x1a] sm:$0xff]
      %v344 = vld [vmem:[%s138 + $0x22] sm:$0xff]
      %v345 = vld [vmem:[%s138 + $0x32] sm:$0xff]
      %v346 = vld [vmem:[%s138 + $0x3a] sm:$0xff]
      %v347 = vld [vmem:[%s138 + $0x4a] sm:$0xff]
      %v348 = vld [vmem:[%s138 + $0x52] sm:$0xff]
      %v349 = vld [vmem:[%s138 + $0x62] sm:$0xff]
      %v350 = vld [vmem:[%s138 + $0x6a] sm:$0xff]
      %v351 = vld [vmem:[%s138 + $0x7a] sm:$0xff]
      %v352 = vld [vmem:[%s138 + $0x82] sm:$0xff]
      %v353 = vld [vmem:[%s138 + $0x92] sm:$0xff]
      %v354 = vld [vmem:[%s138 + $0x9a] sm:$0xff]
      %v355 = vld [vmem:[%s138 + $0xaa] sm:$0xff]
      %v356 = vld [vmem:[%s138 + $0xb2] sm:$0xff]
      %v357 = vld [vmem:[%s138 + $0xc2] sm:$0xff]
      %v358 = vld [vmem:[%s138 + $0xca] sm:$0xff]
      %v359 = vld [vmem:[%s138 + $0xda] sm:$0xff]
      %v360 = vld [vmem:[%s138 + $0xe2] sm:$0xff]
      %v361 = vld [vmem:[%s138 + $0xf2] sm:$0xff]
      %v362 = vld [vmem:[%s138 + $0xfa] sm:$0xff]
      %v363 = vld [vmem:[%s138 + $0x10a] sm:$0xff]
      %v364 = vld [vmem:[%s138 + $0x112] sm:$0xff]
      %v365 = vld [vmem:[%s138 + $0x122] sm:$0xff]
      %v366 = vld [vmem:[%s138 + $0x12a] sm:$0xff]
      %v367 = vld [vmem:[%s138 + $0x13a] sm:$0xff]
      %v368 = vld [vmem:[%s138 + $0x142] sm:$0xff]
      %v369 = vld [vmem:[%s138 + $0x152] sm:$0xff]
      %v370 = vld [vmem:[%s138 + $0x15a] sm:$0xff]
      %v371 = vld [vmem:[%s138 + $0x16a] sm:$0xff]
      %v372 = vld [vmem:[%s138 + $0x172] sm:$0xff]
      %v373 = vperm.slane %v144, 2
      %v374 = vmul.f32 %v341, %v373
      %v375 = vmul.f32 %v342, %v373
      %v376 = vmul.f32 %v343, %v373
      %v377 = vmul.f32 %v344, %v373
      %v378 = vmul.f32 %v345, %v373
      %v379 = vmul.f32 %v346, %v373
      %v380 = vmul.f32 %v347, %v373
      %v381 = vmul.f32 %v348, %v373
      %v382 = vmul.f32 %v349, %v373
      %v383 = vmul.f32 %v350, %v373
      %v384 = vmul.f32 %v351, %v373
      %v385 = vmul.f32 %v352, %v373
      %v386 = vmul.f32 %v353, %v373
      %v387 = vmul.f32 %v354, %v373
      %v388 = vmul.f32 %v355, %v373
      %v389 = vmul.f32 %v356, %v373
      %v390 = vmul.f32 %v357, %v373
      %v391 = vmul.f32 %v358, %v373
      %v392 = vmul.f32 %v359, %v373
      %v393 = vmul.f32 %v360, %v373
      %v394 = vmul.f32 %v361, %v373
      %v395 = vmul.f32 %v362, %v373
      %v396 = vmul.f32 %v363, %v373
      %v397 = vmul.f32 %v364, %v373
      %v398 = vmul.f32 %v365, %v373
      %v399 = vmul.f32 %v366, %v373
      %v400 = vmul.f32 %v367, %v373
      %v401 = vmul.f32 %v368, %v373
      %v402 = vmul.f32 %v369, %v373
      %v403 = vmul.f32 %v370, %v373
      %v404 = vmul.f32 %v371, %v373
      %v405 = vmul.f32 %v372, %v373
      %v406 = vadd.f32 %v309, %v374
      %v407 = vadd.f32 %v310, %v375
      %v408 = vadd.f32 %v311, %v376
      %v409 = vadd.f32 %v312, %v377
      %v410 = vadd.f32 %v313, %v378
      %v411 = vadd.f32 %v314, %v379
      %v412 = vadd.f32 %v315, %v380
      %v413 = vadd.f32 %v316, %v381
      %v414 = vadd.f32 %v317, %v382
      %v415 = vadd.f32 %v318, %v383
      %v416 = vadd.f32 %v319, %v384
      %v417 = vadd.f32 %v320, %v385
      %v418 = vadd.f32 %v321, %v386
      %v419 = vadd.f32 %v322, %v387
      %v420 = vadd.f32 %v323, %v388
      %v421 = vadd.f32 %v324, %v389
      %v422 = vadd.f32 %v325, %v390
      %v423 = vadd.f32 %v326, %v391
      %v424 = vadd.f32 %v327, %v392
      %v425 = vadd.f32 %v328, %v393
      %v426 = vadd.f32 %v329, %v394
      %v427 = vadd.f32 %v330, %v395
      %v428 = vadd.f32 %v331, %v396
      %v429 = vadd.f32 %v332, %v397
      %v430 = vadd.f32 %v333, %v398
      %v431 = vadd.f32 %v334, %v399
      %v432 = vadd.f32 %v335, %v400
      %v433 = vadd.f32 %v336, %v401
      %v434 = vadd.f32 %v337, %v402
      %v435 = vadd.f32 %v338, %v403
      %v436 = vadd.f32 %v339, %v404
      %v437 = vadd.f32 %v340, %v405
      %s438 = scalar_lea.vmem %s138, 24
      %v439 = vld [vmem:[%s438] sm:$0xff]
      %v440 = vld [vmem:[%s438 + $0x8] sm:$0xff]
      %v441 = vld [vmem:[%s438 + $0x18] sm:$0xff]
      %v442 = vld [vmem:[%s438 + $0x20] sm:$0xff]
      %v443 = vld [vmem:[%s438 + $0x30] sm:$0xff]
      %v444 = vld [vmem:[%s438 + $0x38] sm:$0xff]
      %v445 = vld [vmem:[%s438 + $0x48] sm:$0xff]
      %v446 = vld [vmem:[%s438 + $0x50] sm:$0xff]
      %v447 = vld [vmem:[%s438 + $0x60] sm:$0xff]
      %v448 = vld [vmem:[%s438 + $0x68] sm:$0xff]
      %v449 = vld [vmem:[%s438 + $0x78] sm:$0xff]
      %v450 = vld [vmem:[%s438 + $0x80] sm:$0xff]
      %v451 = vld [vmem:[%s438 + $0x90] sm:$0xff]
      %v452 = vld [vmem:[%s438 + $0x98] sm:$0xff]
      %v453 = vld [vmem:[%s438 + $0xa8] sm:$0xff]
      %v454 = vld [vmem:[%s438 + $0xb0] sm:$0xff]
      %v455 = vld [vmem:[%s438 + $0xc0] sm:$0xff]
      %v456 = vld [vmem:[%s438 + $0xc8] sm:$0xff]
      %v457 = vld [vmem:[%s438 + $0xd8] sm:$0xff]
      %v458 = vld [vmem:[%s438 + $0xe0] sm:$0xff]
      %v459 = vld [vmem:[%s438 + $0xf0] sm:$0xff]
      %v460 = vld [vmem:[%s438 + $0xf8] sm:$0xff]
      %v461 = vld [vmem:[%s438 + $0x108] sm:$0xff]
      %v462 = vld [vmem:[%s438 + $0x110] sm:$0xff]
      %v463 = vld [vmem:[%s438 + $0x120] sm:$0xff]
      %v464 = vld [vmem:[%s438 + $0x128] sm:$0xff]
      %v465 = vld [vmem:[%s438 + $0x138] sm:$0xff]
      %v466 = vld [vmem:[%s438 + $0x140] sm:$0xff]
      %v467 = vld [vmem:[%s438 + $0x150] sm:$0xff]
      %v468 = vld [vmem:[%s438 + $0x158] sm:$0xff]
      %v469 = vld [vmem:[%s438 + $0x168] sm:$0xff]
      %v470 = vld [vmem:[%s438 + $0x170] sm:$0xff]
      %v471 = vperm.slane %v145, 0
      %v472 = vmul.f32 %v439, %v471
      %v473 = vmul.f32 %v440, %v471
      %v474 = vmul.f32 %v441, %v471
      %v475 = vmul.f32 %v442, %v471
      %v476 = vmul.f32 %v443, %v471
      %v477 = vmul.f32 %v444, %v471
      %v478 = vmul.f32 %v445, %v471
      %v479 = vmul.f32 %v446, %v471
      %v480 = vmul.f32 %v447, %v471
      %v481 = vmul.f32 %v448, %v471
      %v482 = vmul.f32 %v449, %v471
      %v483 = vmul.f32 %v450, %v471
      %v484 = vmul.f32 %v451, %v471
      %v485 = vmul.f32 %v452, %v471
      %v486 = vmul.f32 %v453, %v471
      %v487 = vmul.f32 %v454, %v471
      %v488 = vmul.f32 %v455, %v471
      %v489 = vmul.f32 %v456, %v471
      %v490 = vmul.f32 %v457, %v471
      %v491 = vmul.f32 %v458, %v471
      %v492 = vmul.f32 %v459, %v471
      %v493 = vmul.f32 %v460, %v471
      %v494 = vmul.f32 %v461, %v471
      %v495 = vmul.f32 %v462, %v471
      %v496 = vmul.f32 %v463, %v471
      %v497 = vmul.f32 %v464, %v471
      %v498 = vmul.f32 %v465, %v471
      %v499 = vmul.f32 %v466, %v471
      %v500 = vmul.f32 %v467, %v471
      %v501 = vmul.f32 %v468, %v471
      %v502 = vmul.f32 %v469, %v471
      %v503 = vmul.f32 %v470, %v471
      %v504 = vadd.f32 %v406, %v472
      %v505 = vadd.f32 %v407, %v473
      %v506 = vadd.f32 %v408, %v474
      %v507 = vadd.f32 %v409, %v475
      %v508 = vadd.f32 %v410, %v476
      %v509 = vadd.f32 %v411, %v477
      %v510 = vadd.f32 %v412, %v478
      %v511 = vadd.f32 %v413, %v479
      %v512 = vadd.f32 %v414, %v480
      %v513 = vadd.f32 %v415, %v481
      %v514 = vadd.f32 %v416, %v482
      %v515 = vadd.f32 %v417, %v483
      %v516 = vadd.f32 %v418, %v484
      %v517 = vadd.f32 %v419, %v485
      %v518 = vadd.f32 %v420, %v486
      %v519 = vadd.f32 %v421, %v487
      %v520 = vadd.f32 %v422, %v488
      %v521 = vadd.f32 %v423, %v489
      %v522 = vadd.f32 %v424, %v490
      %v523 = vadd.f32 %v425, %v491
      %v524 = vadd.f32 %v426, %v492
      %v525 = vadd.f32 %v427, %v493
      %v526 = vadd.f32 %v428, %v494
      %v527 = vadd.f32 %v429, %v495
      %v528 = vadd.f32 %v430, %v496
      %v529 = vadd.f32 %v431, %v497
      %v530 = vadd.f32 %v432, %v498
      %v531 = vadd.f32 %v433, %v499
      %v532 = vadd.f32 %v434, %v500
      %v533 = vadd.f32 %v435, %v501
      %v534 = vadd.f32 %v436, %v502
      %v535 = vadd.f32 %v437, %v503
      %v536 = vld [vmem:[%s438 + $0x1] sm:$0xff]
      %v537 = vld [vmem:[%s438 + $0x9] sm:$0xff]
      %v538 = vld [vmem:[%s438 + $0x19] sm:$0xff]
      %v539 = vld [vmem:[%s438 + $0x21] sm:$0xff]
      %v540 = vld [vmem:[%s438 + $0x31] sm:$0xff]
      %v541 = vld [vmem:[%s438 + $0x39] sm:$0xff]
      %v542 = vld [vmem:[%s438 + $0x49] sm:$0xff]
      %v543 = vld [vmem:[%s438 + $0x51] sm:$0xff]
      %v544 = vld [vmem:[%s438 + $0x61] sm:$0xff]
      %v545 = vld [vmem:[%s438 + $0x69] sm:$0xff]
      %v546 = vld [vmem:[%s438 + $0x79] sm:$0xff]
      %v547 = vld [vmem:[%s438 + $0x81] sm:$0xff]
      %v548 = vld [vmem:[%s438 + $0x91] sm:$0xff]
      %v549 = vld [vmem:[%s438 + $0x99] sm:$0xff]
      %v550 = vld [vmem:[%s438 + $0xa9] sm:$0xff]
      %v551 = vld [vmem:[%s438 + $0xb1] sm:$0xff]
      %v552 = vld [vmem:[%s438 + $0xc1] sm:$0xff]
      %v553 = vld [vmem:[%s438 + $0xc9] sm:$0xff]
      %v554 = vld [vmem:[%s438 + $0xd9] sm:$0xff]
      %v555 = vld [vmem:[%s438 + $0xe1] sm:$0xff]
      %v556 = vld [vmem:[%s438 + $0xf1] sm:$0xff]
      %v557 = vld [vmem:[%s438 + $0xf9] sm:$0xff]
      %v558 = vld [vmem:[%s438 + $0x109] sm:$0xff]
      %v559 = vld [vmem:[%s438 + $0x111] sm:$0xff]
      %v560 = vld [vmem:[%s438 + $0x121] sm:$0xff]
      %v561 = vld [vmem:[%s438 + $0x129] sm:$0xff]
      %v562 = vld [vmem:[%s438 + $0x139] sm:$0xff]
      %v563 = vld [vmem:[%s438 + $0x141] sm:$0xff]
      %v564 = vld [vmem:[%s438 + $0x151] sm:$0xff]
      %v565 = vld [vmem:[%s438 + $0x159] sm:$0xff]
      %v566 = vld [vmem:[%s438 + $0x169] sm:$0xff]
      %v567 = vld [vmem:[%s438 + $0x171] sm:$0xff]
      %v568 = vperm.slane %v145, 1
      %v569 = vmul.f32 %v536, %v568
      %v570 = vmul.f32 %v537, %v568
      %v571 = vmul.f32 %v538, %v568
      %v572 = vmul.f32 %v539, %v568
      %v573 = vmul.f32 %v540, %v568
      %v574 = vmul.f32 %v541, %v568
      %v575 = vmul.f32 %v542, %v568
      %v576 = vmul.f32 %v543, %v568
      %v577 = vmul.f32 %v544, %v568
      %v578 = vmul.f32 %v545, %v568
      %v579 = vmul.f32 %v546, %v568
      %v580 = vmul.f32 %v547, %v568
      %v581 = vmul.f32 %v548, %v568
      %v582 = vmul.f32 %v549, %v568
      %v583 = vmul.f32 %v550, %v568
      %v584 = vmul.f32 %v551, %v568
      %v585 = vmul.f32 %v552, %v568
      %v586 = vmul.f32 %v553, %v568
      %v587 = vmul.f32 %v554, %v568
      %v588 = vmul.f32 %v555, %v568
      %v589 = vmul.f32 %v556, %v568
      %v590 = vmul.f32 %v557, %v568
      %v591 = vmul.f32 %v558, %v568
      %v592 = vmul.f32 %v559, %v568
      %v593 = vmul.f32 %v560, %v568
      %v594 = vmul.f32 %v561, %v568
      %v595 = vmul.f32 %v562, %v568
      %v596 = vmul.f32 %v563, %v568
      %v597 = vmul.f32 %v564, %v568
      %v598 = vmul.f32 %v565, %v568
      %v599 = vmul.f32 %v566, %v568
      %v600 = vmul.f32 %v567, %v568
      %v601 = vadd.f32 %v504, %v569
      %v602 = vadd.f32 %v505, %v570
      %v603 = vadd.f32 %v506, %v571
      %v604 = vadd.f32 %v507, %v572
      %v605 = vadd.f32 %v508, %v573
      %v606 = vadd.f32 %v509, %v574
      %v607 = vadd.f32 %v510, %v575
      %v608 = vadd.f32 %v511, %v576
      %v609 = vadd.f32 %v512, %v577
      %v610 = vadd.f32 %v513, %v578
      %v611 = vadd.f32 %v514, %v579
      %v612 = vadd.f32 %v515, %v580
      %v613 = vadd.f32 %v516, %v581
      %v614 = vadd.f32 %v517, %v582
      %v615 = vadd.f32 %v518, %v583
      %v616 = vadd.f32 %v519, %v584
      %v617 = vadd.f32 %v520, %v585
      %v618 = vadd.f32 %v521, %v586
      %v619 = vadd.f32 %v522, %v587
      %v620 = vadd.f32 %v523, %v588
      %v621 = vadd.f32 %v524, %v589
      %v622 = vadd.f32 %v525, %v590
      %v623 = vadd.f32 %v526, %v591
      %v624 = vadd.f32 %v527, %v592
      %v625 = vadd.f32 %v528, %v593
      %v626 = vadd.f32 %v529, %v594
      %v627 = vadd.f32 %v530, %v595
      %v628 = vadd.f32 %v531, %v596
      %v629 = vadd.f32 %v532, %v597
      %v630 = vadd.f32 %v533, %v598
      %v631 = vadd.f32 %v534, %v599
      %v632 = vadd.f32 %v535, %v600
      %v633 = vld [vmem:[%s438 + $0x2] sm:$0xff]
      %v634 = vld [vmem:[%s438 + $0xa] sm:$0xff]
      %v635 = vld [vmem:[%s438 + $0x1a] sm:$0xff]
      %v636 = vld [vmem:[%s438 + $0x22] sm:$0xff]
      %v637 = vld [vmem:[%s438 + $0x32] sm:$0xff]
      %v638 = vld [vmem:[%s438 + $0x3a] sm:$0xff]
      %v639 = vld [vmem:[%s438 + $0x4a] sm:$0xff]
      %v640 = vld [vmem:[%s438 + $0x52] sm:$0xff]
      %v641 = vld [vmem:[%s438 + $0x62] sm:$0xff]
      %v642 = vld [vmem:[%s438 + $0x6a] sm:$0xff]
      %v643 = vld [vmem:[%s438 + $0x7a] sm:$0xff]
      %v644 = vld [vmem:[%s438 + $0x82] sm:$0xff]
      %v645 = vld [vmem:[%s438 + $0x92] sm:$0xff]
      %v646 = vld [vmem:[%s438 + $0x9a] sm:$0xff]
      %v647 = vld [vmem:[%s438 + $0xaa] sm:$0xff]
      %v648 = vld [vmem:[%s438 + $0xb2] sm:$0xff]
      %v649 = vld [vmem:[%s438 + $0xc2] sm:$0xff]
      %v650 = vld [vmem:[%s438 + $0xca] sm:$0xff]
      %v651 = vld [vmem:[%s438 + $0xda] sm:$0xff]
      %v652 = vld [vmem:[%s438 + $0xe2] sm:$0xff]
      %v653 = vld [vmem:[%s438 + $0xf2] sm:$0xff]
      %v654 = vld [vmem:[%s438 + $0xfa] sm:$0xff]
      %v655 = vld [vmem:[%s438 + $0x10a] sm:$0xff]
      %v656 = vld [vmem:[%s438 + $0x112] sm:$0xff]
      %v657 = vld [vmem:[%s438 + $0x122] sm:$0xff]
      %v658 = vld [vmem:[%s438 + $0x12a] sm:$0xff]
      %v659 = vld [vmem:[%s438 + $0x13a] sm:$0xff]
      %v660 = vld [vmem:[%s438 + $0x142] sm:$0xff]
      %v661 = vld [vmem:[%s438 + $0x152] sm:$0xff]
      %v662 = vld [vmem:[%s438 + $0x15a] sm:$0xff]
      %v663 = vld [vmem:[%s438 + $0x16a] sm:$0xff]
      %v664 = vld [vmem:[%s438 + $0x172] sm:$0xff]
      %v665 = vperm.slane %v145, 2
      %v666 = vmul.f32 %v633, %v665
      %v667 = vmul.f32 %v634, %v665
      %v668 = vmul.f32 %v635, %v665
      %v669 = vmul.f32 %v636, %v665
      %v670 = vmul.f32 %v637, %v665
      %v671 = vmul.f32 %v638, %v665
      %v672 = vmul.f32 %v639, %v665
      %v673 = vmul.f32 %v640, %v665
      %v674 = vmul.f32 %v641, %v665
      %v675 = vmul.f32 %v642, %v665
      %v676 = vmul.f32 %v643, %v665
      %v677 = vmul.f32 %v644, %v665
      %v678 = vmul.f32 %v645, %v665
      %v679 = vmul.f32 %v646, %v665
      %v680 = vmul.f32 %v647, %v665
      %v681 = vmul.f32 %v648, %v665
      %v682 = vmul.f32 %v649, %v665
      %v683 = vmul.f32 %v650, %v665
      %v684 = vmul.f32 %v651, %v665
      %v685 = vmul.f32 %v652, %v665
      %v686 = vmul.f32 %v653, %v665
      %v687 = vmul.f32 %v654, %v665
      %v688 = vmul.f32 %v655, %v665
      %v689 = vmul.f32 %v656, %v665
      %v690 = vmul.f32 %v657, %v665
      %v691 = vmul.f32 %v658, %v665
      %v692 = vmul.f32 %v659, %v665
      %v693 = vmul.f32 %v660, %v665
      %v694 = vmul.f32 %v661, %v665
      %v695 = vmul.f32 %v662, %v665
      %v696 = vmul.f32 %v663, %v665
      %v697 = vmul.f32 %v664, %v665
      %v698 = vadd.f32 %v601, %v666
      %v699 = vadd.f32 %v602, %v667
      %v700 = vadd.f32 %v603, %v668
      %v701 = vadd.f32 %v604, %v669
      %v702 = vadd.f32 %v605, %v670
      %v703 = vadd.f32 %v606, %v671
      %v704 = vadd.f32 %v607, %v672
      %v705 = vadd.f32 %v608, %v673
      %v706 = vadd.f32 %v609, %v674
      %v707 = vadd.f32 %v610, %v675
      %v708 = vadd.f32 %v611, %v676
      %v709 = vadd.f32 %v612, %v677
      %v710 = vadd.f32 %v613, %v678
      %v711 = vadd.f32 %v614, %v679
      %v712 = vadd.f32 %v615, %v680
      %v713 = vadd.f32 %v616, %v681
      %v714 = vadd.f32 %v617, %v682
      %v715 = vadd.f32 %v618, %v683
      %v716 = vadd.f32 %v619, %v684
      %v717 = vadd.f32 %v620, %v685
      %v718 = vadd.f32 %v621, %v686
      %v719 = vadd.f32 %v622, %v687
      %v720 = vadd.f32 %v623, %v688
      %v721 = vadd.f32 %v624, %v689
      %v722 = vadd.f32 %v625, %v690
      %v723 = vadd.f32 %v626, %v691
      %v724 = vadd.f32 %v627, %v692
      %v725 = vadd.f32 %v628, %v693
      %v726 = vadd.f32 %v629, %v694
      %v727 = vadd.f32 %v630, %v695
      %v728 = vadd.f32 %v631, %v696
      %v729 = vadd.f32 %v632, %v697
      %s730 = scalar_lea.vmem %s138, 48
      %v731 = vld [vmem:[%s730] sm:$0xff]
      %v732 = vld [vmem:[%s730 + $0x8] sm:$0xff]
      %v733 = vld [vmem:[%s730 + $0x18] sm:$0xff]
      %v734 = vld [vmem:[%s730 + $0x20] sm:$0xff]
      %v735 = vld [vmem:[%s730 + $0x30] sm:$0xff]
      %v736 = vld [vmem:[%s730 + $0x38] sm:$0xff]
      %v737 = vld [vmem:[%s730 + $0x48] sm:$0xff]
      %v738 = vld [vmem:[%s730 + $0x50] sm:$0xff]
      %v739 = vld [vmem:[%s730 + $0x60] sm:$0xff]
      %v740 = vld [vmem:[%s730 + $0x68] sm:$0xff]
      %v741 = vld [vmem:[%s730 + $0x78] sm:$0xff]
      %v742 = vld [vmem:[%s730 + $0x80] sm:$0xff]
      %v743 = vld [vmem:[%s730 + $0x90] sm:$0xff]
      %v744 = vld [vmem:[%s730 + $0x98] sm:$0xff]
      %v745 = vld [vmem:[%s730 + $0xa8] sm:$0xff]
      %v746 = vld [vmem:[%s730 + $0xb0] sm:$0xff]
      %v747 = vld [vmem:[%s730 + $0xc0] sm:$0xff]
      %v748 = vld [vmem:[%s730 + $0xc8] sm:$0xff]
      %v749 = vld [vmem:[%s730 + $0xd8] sm:$0xff]
      %v750 = vld [vmem:[%s730 + $0xe0] sm:$0xff]
      %v751 = vld [vmem:[%s730 + $0xf0] sm:$0xff]
      %v752 = vld [vmem:[%s730 + $0xf8] sm:$0xff]
      %v753 = vld [vmem:[%s730 + $0x108] sm:$0xff]
      %v754 = vld [vmem:[%s730 + $0x110] sm:$0xff]
      %v755 = vld [vmem:[%s730 + $0x120] sm:$0xff]
      %v756 = vld [vmem:[%s730 + $0x128] sm:$0xff]
      %v757 = vld [vmem:[%s730 + $0x138] sm:$0xff]
      %v758 = vld [vmem:[%s730 + $0x140] sm:$0xff]
      %v759 = vld [vmem:[%s730 + $0x150] sm:$0xff]
      %v760 = vld [vmem:[%s730 + $0x158] sm:$0xff]
      %v761 = vld [vmem:[%s730 + $0x168] sm:$0xff]
      %v762 = vld [vmem:[%s730 + $0x170] sm:$0xff]
      %v763 = vperm.slane %v146, 0
      %v764 = vmul.f32 %v731, %v763
      %v765 = vmul.f32 %v732, %v763
      %v766 = vmul.f32 %v733, %v763
      %v767 = vmul.f32 %v734, %v763
      %v768 = vmul.f32 %v735, %v763
      %v769 = vmul.f32 %v736, %v763
      %v770 = vmul.f32 %v737, %v763
      %v771 = vmul.f32 %v738, %v763
      %v772 = vmul.f32 %v739, %v763
      %v773 = vmul.f32 %v740, %v763
      %v774 = vmul.f32 %v741, %v763
      %v775 = vmul.f32 %v742, %v763
      %v776 = vmul.f32 %v743, %v763
      %v777 = vmul.f32 %v744, %v763
      %v778 = vmul.f32 %v745, %v763
      %v779 = vmul.f32 %v746, %v763
      %v780 = vmul.f32 %v747, %v763
      %v781 = vmul.f32 %v748, %v763
      %v782 = vmul.f32 %v749, %v763
      %v783 = vmul.f32 %v750, %v763
      %v784 = vmul.f32 %v751, %v763
      %v785 = vmul.f32 %v752, %v763
      %v786 = vmul.f32 %v753, %v763
      %v787 = vmul.f32 %v754, %v763
      %v788 = vmul.f32 %v755, %v763
      %v789 = vmul.f32 %v756, %v763
      %v790 = vmul.f32 %v757, %v763
      %v791 = vmul.f32 %v758, %v763
      %v792 = vmul.f32 %v759, %v763
      %v793 = vmul.f32 %v760, %v763
      %v794 = vmul.f32 %v761, %v763
      %v795 = vmul.f32 %v762, %v763
      %v796 = vadd.f32 %v698, %v764
      %v797 = vadd.f32 %v699, %v765
      %v798 = vadd.f32 %v700, %v766
      %v799 = vadd.f32 %v701, %v767
      %v800 = vadd.f32 %v702, %v768
      %v801 = vadd.f32 %v703, %v769
      %v802 = vadd.f32 %v704, %v770
      %v803 = vadd.f32 %v705, %v771
      %v804 = vadd.f32 %v706, %v772
      %v805 = vadd.f32 %v707, %v773
      %v806 = vadd.f32 %v708, %v774
      %v807 = vadd.f32 %v709, %v775
      %v808 = vadd.f32 %v710, %v776
      %v809 = vadd.f32 %v711, %v777
      %v810 = vadd.f32 %v712, %v778
      %v811 = vadd.f32 %v713, %v779
      %v812 = vadd.f32 %v714, %v780
      %v813 = vadd.f32 %v715, %v781
      %v814 = vadd.f32 %v716, %v782
      %v815 = vadd.f32 %v717, %v783
      %v816 = vadd.f32 %v718, %v784
      %v817 = vadd.f32 %v719, %v785
      %v818 = vadd.f32 %v720, %v786
      %v819 = vadd.f32 %v721, %v787
      %v820 = vadd.f32 %v722, %v788
      %v821 = vadd.f32 %v723, %v789
      %v822 = vadd.f32 %v724, %v790
      %v823 = vadd.f32 %v725, %v791
      %v824 = vadd.f32 %v726, %v792
      %v825 = vadd.f32 %v727, %v793
      %v826 = vadd.f32 %v728, %v794
      %v827 = vadd.f32 %v729, %v795
      %v828 = vld [vmem:[%s730 + $0x1] sm:$0xff]
      %v829 = vld [vmem:[%s730 + $0x9] sm:$0xff]
      %v830 = vld [vmem:[%s730 + $0x19] sm:$0xff]
      %v831 = vld [vmem:[%s730 + $0x21] sm:$0xff]
      %v832 = vld [vmem:[%s730 + $0x31] sm:$0xff]
      %v833 = vld [vmem:[%s730 + $0x39] sm:$0xff]
      %v834 = vld [vmem:[%s730 + $0x49] sm:$0xff]
      %v835 = vld [vmem:[%s730 + $0x51] sm:$0xff]
      %v836 = vld [vmem:[%s730 + $0x61] sm:$0xff]
      %v837 = vld [vmem:[%s730 + $0x69] sm:$0xff]
      %v838 = vld [vmem:[%s730 + $0x79] sm:$0xff]
      %v839 = vld [vmem:[%s730 + $0x81] sm:$0xff]
      %v840 = vld [vmem:[%s730 + $0x91] sm:$0xff]
      %v841 = vld [vmem:[%s730 + $0x99] sm:$0xff]
      %v842 = vld [vmem:[%s730 + $0xa9] sm:$0xff]
      %v843 = vld [vmem:[%s730 + $0xb1] sm:$0xff]
      %v844 = vld [vmem:[%s730 + $0xc1] sm:$0xff]
      %v845 = vld [vmem:[%s730 + $0xc9] sm:$0xff]
      %v846 = vld [vmem:[%s730 + $0xd9] sm:$0xff]
      %v847 = vld [vmem:[%s730 + $0xe1] sm:$0xff]
      %v848 = vld [vmem:[%s730 + $0xf1] sm:$0xff]
      %v849 = vld [vmem:[%s730 + $0xf9] sm:$0xff]
      %v850 = vld [vmem:[%s730 + $0x109] sm:$0xff]
      %v851 = vld [vmem:[%s730 + $0x111] sm:$0xff]
      %v852 = vld [vmem:[%s730 + $0x121] sm:$0xff]
      %v853 = vld [vmem:[%s730 + $0x129] sm:$0xff]
      %v854 = vld [vmem:[%s730 + $0x139] sm:$0xff]
      %v855 = vld [vmem:[%s730 + $0x141] sm:$0xff]
      %v856 = vld [vmem:[%s730 + $0x151] sm:$0xff]
      %v857 = vld [vmem:[%s730 + $0x159] sm:$0xff]
      %v858 = vld [vmem:[%s730 + $0x169] sm:$0xff]
      %v859 = vld [vmem:[%s730 + $0x171] sm:$0xff]
      %v860 = vperm.slane %v146, 1
      %v861 = vmul.f32 %v828, %v860
      %v862 = vmul.f32 %v829, %v860
      %v863 = vmul.f32 %v830, %v860
      %v864 = vmul.f32 %v831, %v860
      %v865 = vmul.f32 %v832, %v860
      %v866 = vmul.f32 %v833, %v860
      %v867 = vmul.f32 %v834, %v860
      %v868 = vmul.f32 %v835, %v860
      %v869 = vmul.f32 %v836, %v860
      %v870 = vmul.f32 %v837, %v860
      %v871 = vmul.f32 %v838, %v860
      %v872 = vmul.f32 %v839, %v860
      %v873 = vmul.f32 %v840, %v860
      %v874 = vmul.f32 %v841, %v860
      %v875 = vmul.f32 %v842, %v860
      %v876 = vmul.f32 %v843, %v860
      %v877 = vmul.f32 %v844, %v860
      %v878 = vmul.f32 %v845, %v860
      %v879 = vmul.f32 %v846, %v860
      %v880 = vmul.f32 %v847, %v860
      %v881 = vmul.f32 %v848, %v860
      %v882 = vmul.f32 %v849, %v860
      %v883 = vmul.f32 %v850, %v860
      %v884 = vmul.f32 %v851, %v860
      %v885 = vmul.f32 %v852, %v860
      %v886 = vmul.f32 %v853, %v860
      %v887 = vmul.f32 %v854, %v860
      %v888 = vmul.f32 %v855, %v860
      %v889 = vmul.f32 %v856, %v860
      %v890 = vmul.f32 %v857, %v860
      %v891 = vmul.f32 %v858, %v860
      %v892 = vmul.f32 %v859, %v860
      %v893 = vadd.f32 %v796, %v861
      %v894 = vadd.f32 %v797, %v862
      %v895 = vadd.f32 %v798, %v863
      %v896 = vadd.f32 %v799, %v864
      %v897 = vadd.f32 %v800, %v865
      %v898 = vadd.f32 %v801, %v866
      %v899 = vadd.f32 %v802, %v867
      %v900 = vadd.f32 %v803, %v868
      %v901 = vadd.f32 %v804, %v869
      %v902 = vadd.f32 %v805, %v870
      %v903 = vadd.f32 %v806, %v871
      %v904 = vadd.f32 %v807, %v872
      %v905 = vadd.f32 %v808, %v873
      %v906 = vadd.f32 %v809, %v874
      %v907 = vadd.f32 %v810, %v875
      %v908 = vadd.f32 %v811, %v876
      %v909 = vadd.f32 %v812, %v877
      %v910 = vadd.f32 %v813, %v878
      %v911 = vadd.f32 %v814, %v879
      %v912 = vadd.f32 %v815, %v880
      %v913 = vadd.f32 %v816, %v881
      %v914 = vadd.f32 %v817, %v882
      %v915 = vadd.f32 %v818, %v883
      %v916 = vadd.f32 %v819, %v884
      %v917 = vadd.f32 %v820, %v885
      %v918 = vadd.f32 %v821, %v886
      %v919 = vadd.f32 %v822, %v887
      %v920 = vadd.f32 %v823, %v888
      %v921 = vadd.f32 %v824, %v889
      %v922 = vadd.f32 %v825, %v890
      %v923 = vadd.f32 %v826, %v891
      %v924 = vadd.f32 %v827, %v892
      %v925 = vld [vmem:[%s730 + $0x2] sm:$0xff]
      %v926 = vld [vmem:[%s730 + $0xa] sm:$0xff]
      %v927 = vld [vmem:[%s730 + $0x1a] sm:$0xff]
      %v928 = vld [vmem:[%s730 + $0x22] sm:$0xff]
      %v929 = vld [vmem:[%s730 + $0x32] sm:$0xff]
      %v930 = vld [vmem:[%s730 + $0x3a] sm:$0xff]
      %v931 = vld [vmem:[%s730 + $0x4a] sm:$0xff]
      %v932 = vld [vmem:[%s730 + $0x52] sm:$0xff]
      %v933 = vld [vmem:[%s730 + $0x62] sm:$0xff]
      %v934 = vld [vmem:[%s730 + $0x6a] sm:$0xff]
      %v935 = vld [vmem:[%s730 + $0x7a] sm:$0xff]
      %v936 = vld [vmem:[%s730 + $0x82] sm:$0xff]
      %v937 = vld [vmem:[%s730 + $0x92] sm:$0xff]
      %v938 = vld [vmem:[%s730 + $0x9a] sm:$0xff]
      %v939 = vld [vmem:[%s730 + $0xaa] sm:$0xff]
      %v940 = vld [vmem:[%s730 + $0xb2] sm:$0xff]
      %v941 = vld [vmem:[%s730 + $0xc2] sm:$0xff]
      %v942 = vld [vmem:[%s730 + $0xca] sm:$0xff]
      %v943 = vld [vmem:[%s730 + $0xda] sm:$0xff]
      %v944 = vld [vmem:[%s730 + $0xe2] sm:$0xff]
      %v945 = vld [vmem:[%s730 + $0xf2] sm:$0xff]
      %v946 = vld [vmem:[%s730 + $0xfa] sm:$0xff]
      %v947 = vld [vmem:[%s730 + $0x10a] sm:$0xff]
      %v948 = vld [vmem:[%s730 + $0x112] sm:$0xff]
      %v949 = vld [vmem:[%s730 + $0x122] sm:$0xff]
      %v950 = vld [vmem:[%s730 + $0x12a] sm:$0xff]
      %v951 = vld [vmem:[%s730 + $0x13a] sm:$0xff]
      %v952 = vld [vmem:[%s730 + $0x142] sm:$0xff]
      %v953 = vld [vmem:[%s730 + $0x152] sm:$0xff]
      %v954 = vld [vmem:[%s730 + $0x15a] sm:$0xff]
      %v955 = vld [vmem:[%s730 + $0x16a] sm:$0xff]
      %v956 = vld [vmem:[%s730 + $0x172] sm:$0xff]
      %v957 = vperm.slane %v146, 2
      %v958 = vmul.f32 %v925, %v957
      %v959 = vmul.f32 %v926, %v957
      %v960 = vmul.f32 %v927, %v957
      %v961 = vmul.f32 %v928, %v957
      %v962 = vmul.f32 %v929, %v957
      %v963 = vmul.f32 %v930, %v957
      %v964 = vmul.f32 %v931, %v957
      %v965 = vmul.f32 %v932, %v957
      %v966 = vmul.f32 %v933, %v957
      %v967 = vmul.f32 %v934, %v957
      %v968 = vmul.f32 %v935, %v957
      %v969 = vmul.f32 %v936, %v957
      %v970 = vmul.f32 %v937, %v957
      %v971 = vmul.f32 %v938, %v957
      %v972 = vmul.f32 %v939, %v957
      %v973 = vmul.f32 %v940, %v957
      %v974 = vmul.f32 %v941, %v957
      %v975 = vmul.f32 %v942, %v957
      %v976 = vmul.f32 %v943, %v957
      %v977 = vmul.f32 %v944, %v957
      %v978 = vmul.f32 %v945, %v957
      %v979 = vmul.f32 %v946, %v957
      %v980 = vmul.f32 %v947, %v957
      %v981 = vmul.f32 %v948, %v957
      %v982 = vmul.f32 %v949, %v957
      %v983 = vmul.f32 %v950, %v957
      %v984 = vmul.f32 %v951, %v957
      %v985 = vmul.f32 %v952, %v957
      %v986 = vmul.f32 %v953, %v957
      %v987 = vmul.f32 %v954, %v957
      %v988 = vmul.f32 %v955, %v957
      %v989 = vmul.f32 %v956, %v957
      %v990 = vadd.f32 %v893, %v958
      %v991 = vadd.f32 %v894, %v959
      %v992 = vadd.f32 %v895, %v960
      %v993 = vadd.f32 %v896, %v961
      %v994 = vadd.f32 %v897, %v962
      %v995 = vadd.f32 %v898, %v963
      %v996 = vadd.f32 %v899, %v964
      %v997 = vadd.f32 %v900, %v965
      %v998 = vadd.f32 %v901, %v966
      %v999 = vadd.f32 %v902, %v967
      %v1000 = vadd.f32 %v903, %v968
      %v1001 = vadd.f32 %v904, %v969
      %v1002 = vadd.f32 %v905, %v970
      %v1003 = vadd.f32 %v906, %v971
      %v1004 = vadd.f32 %v907, %v972
      %v1005 = vadd.f32 %v908, %v973
      %v1006 = vadd.f32 %v909, %v974
      %v1007 = vadd.f32 %v910, %v975
      %v1008 = vadd.f32 %v911, %v976
      %v1009 = vadd.f32 %v912, %v977
      %v1010 = vadd.f32 %v913, %v978
      %v1011 = vadd.f32 %v914, %v979
      %v1012 = vadd.f32 %v915, %v980
      %v1013 = vadd.f32 %v916, %v981
      %v1014 = vadd.f32 %v917, %v982
      %v1015 = vadd.f32 %v918, %v983
      %v1016 = vadd.f32 %v919, %v984
      %v1017 = vadd.f32 %v920, %v985
      %v1018 = vadd.f32 %v921, %v986
      %v1019 = vadd.f32 %v922, %v987
      %v1020 = vadd.f32 %v923, %v988
      %v1021 = vadd.f32 %v924, %v989
      %vm1022 = vcmask 162816
      %1023 = vst.msk [vmem:[%s143] sm:$0xff] %vm1022, %v990
      %1024 = vst.msk [vmem:[%s143 + $0x8] sm:$0xff] %vm1022, %v991
      %1025 = vst.msk [vmem:[%s143 + $0x10] sm:$0xff] %vm1022, %v992
      %1026 = vst.msk [vmem:[%s143 + $0x18] sm:$0xff] %vm1022, %v993
      %1027 = vst.msk [vmem:[%s143 + $0x20] sm:$0xff] %vm1022, %v994
      %1028 = vst.msk [vmem:[%s143 + $0x28] sm:$0xff] %vm1022, %v995
      %1029 = vst.msk [vmem:[%s143 + $0x30] sm:$0xff] %vm1022, %v996
      %1030 = vst.msk [vmem:[%s143 + $0x38] sm:$0xff] %vm1022, %v997
      %1031 = vst.msk [vmem:[%s143 + $0x40] sm:$0xff] %vm1022, %v998
      %1032 = vst.msk [vmem:[%s143 + $0x48] sm:$0xff] %vm1022, %v999
      %1033 = vst.msk [vmem:[%s143 + $0x50] sm:$0xff] %vm1022, %v1000
      %1034 = vst.msk [vmem:[%s143 + $0x58] sm:$0xff] %vm1022, %v1001
      %1035 = vst.msk [vmem:[%s143 + $0x60] sm:$0xff] %vm1022, %v1002
      %1036 = vst.msk [vmem:[%s143 + $0x68] sm:$0xff] %vm1022, %v1003
      %1037 = vst.msk [vmem:[%s143 + $0x70] sm:$0xff] %vm1022, %v1004
      %1038 = vst.msk [vmem:[%s143 + $0x78] sm:$0xff] %vm1022, %v1005
      %1039 = vst.msk [vmem:[%s143 + $0x80] sm:$0xff] %vm1022, %v1006
      %1040 = vst.msk [vmem:[%s143 + $0x88] sm:$0xff] %vm1022, %v1007
      %1041 = vst.msk [vmem:[%s143 + $0x90] sm:$0xff] %vm1022, %v1008
      %1042 = vst.msk [vmem:[%s143 + $0x98] sm:$0xff] %vm1022, %v1009
      %1043 = vst.msk [vmem:[%s143 + $0xa0] sm:$0xff] %vm1022, %v1010
      %1044 = vst.msk [vmem:[%s143 + $0xa8] sm:$0xff] %vm1022, %v1011
      %1045 = vst.msk [vmem:[%s143 + $0xb0] sm:$0xff] %vm1022, %v1012
      %1046 = vst.msk [vmem:[%s143 + $0xb8] sm:$0xff] %vm1022, %v1013
      %1047 = vst.msk [vmem:[%s143 + $0xc0] sm:$0xff] %vm1022, %v1014
      %1048 = vst.msk [vmem:[%s143 + $0xc8] sm:$0xff] %vm1022, %v1015
      %1049 = vst.msk [vmem:[%s143 + $0xd0] sm:$0xff] %vm1022, %v1016
      %1050 = vst.msk [vmem:[%s143 + $0xd8] sm:$0xff] %vm1022, %v1017
      %1051 = vst.msk [vmem:[%s143 + $0xe0] sm:$0xff] %vm1022, %v1018
      %1052 = vst.msk [vmem:[%s143 + $0xe8] sm:$0xff] %vm1022, %v1019
      %1053 = vst.msk [vmem:[%s143 + $0xf0] sm:$0xff] %vm1022, %v1020
      %1054 = vst.msk [vmem:[%s143 + $0xf8] sm:$0xff] %vm1022, %v1021
      %p1055 = scmp.lt.s32.totalorder %s13, 1
      %s1056 = scalar_select %p1055, %s13, 1
      %s1057 = smul.addr %s1056, 32
      %s1058 = smul.addr %s1057, 8
      %s1059 = scalar_lea.vmem %s2, %s1058
      // Predicated region
      $region29: #{hv_lca_forward.22} parent=27 // pred_check
        %p1060 = pneg %p78
      $region30: #{hv_lca_forward.22} parent=27 // pred_check_branch
        %1062 = sbr.rel (%p1060) target = $region32
      $region31: #{hv_lca_forward.22} parent=27 // pred_region
        _
      $region32: #{hv_lca_forward.22} parent=27 // pred_fallthru
        _
    $region28: #{hv_lca_forward.22} parent=5 // pred_fallthru
      _
    %p1063 = scmp.le.s32.totalorder 2, %s8
    // Predicated region
    $region33: #{hv_lca_forward.22} parent=5 // pred_check
      %p1064 = pneg %p1063
    $region34: #{hv_lca_forward.22} parent=5 // pred_check_branch
      %1066 = sbr.rel (%p1064) target = $region36
    $region35: #{hv_lca_forward.22} parent=5 // pred_region
      %s1067 = ssub.s32 %s8, 2
      // Predicated region
      $region37: #{hv_lca_forward.22} parent=35 // pred_check
        %p1068 = pneg %p84
      $region38: #{hv_lca_forward.22} parent=35 // pred_check_branch
        %1070 = sbr.rel (%p1068) target = $region40
      $region39: #{hv_lca_forward.22} parent=35 // pred_region
        %p1071 = scmp.lt.s32.totalorder %s14, 1
        %s1072 = scalar_select %p1071, %s14, 1
        %s1073 = smul.addr %s1072, 32
        %s1074 = smul.addr %s1073, 8
        %s1075 = scalar_lea.vmem %s2, %s1074
      $region40: #{hv_lca_forward.22} parent=35 // pred_fallthru
        _
    $region36: #{hv_lca_forward.22} parent=5 // pred_fallthru
      _
  $region6: #{hv_lca_forward.22} parent=0 // loop_footer
    %s12 = sadd.s32 1, %s8
  $region7: #{hv_lca_forward.22} parent=0 // loop_footer_branch
    %7 = sbr.rel target = $region3
  $region8: #{hv_lca_forward.22} parent=0 // loop_exit
    _

</llo_original>
